<compile_context>
chip_gen: v5e
topology: v5e:2x2
jax: 0.10.0
libtpu: 0.0.40
codegen_flags: <defaults>
</compile_context>

<pallas_src>
import jax
import jax.numpy as jnp
from jax.experimental import pallas as pl
from jax.experimental.pallas import tpu as pltpu


def _round_up(x, m):
    return ((x + m - 1) // m) * m


def qnetwork_kernel(x_ref, w1_ref, b1_ref, w2_ref, b2_ref, w3_ref, b3_ref, out_ref):
    """One batch tile of the full forward pass.

    x_ref : (TB, S)  f32      w1_ref: (S, H1)  cdt    b1_ref: (1, H1)  f32
    w2_ref: (H1, H2) cdt      b2_ref: (1, H2)  f32
    w3_ref: (H2, Ap) cdt      b3_ref: (1, Ap)  f32
    out_ref: (TB, Ap) cdt     (cdt = weight dtype, bf16 by default)
    """
    cdt = w1_ref.dtype
    x = x_ref[...].astype(cdt)
    h1 = jnp.dot(x, w1_ref[...], preferred_element_type=jnp.float32) + b1_ref[...]
    h1 = jnp.maximum(h1, 0.0).astype(cdt)
    h2 = jnp.dot(h1, w2_ref[...], preferred_element_type=jnp.float32) + b2_ref[...]
    h2 = jnp.maximum(h2, 0.0).astype(cdt)
    y = jnp.dot(h2, w3_ref[...], preferred_element_type=jnp.float32) + b3_ref[...]
    out_ref[...] = y.astype(out_ref.dtype)


def choose_tile_b(batch, max_tile=1024):
    """Fewest grid steps; even tile count (one per v7x TC) with >=256-row tiles when the
    batch is big enough; cap at 1024 rows for v5e's default scoped-VMEM."""
    bp = _round_up(batch, 16)
    if bp <= 512:
        return bp                               # single step: overhead-bound regime
    n = max(2, pl.cdiv(bp, max_tile))
    if n % 2:
        n += 1                                  # keep both v7x TensorCores busy
    return min(_round_up(pl.cdiv(bp, n), 16), max_tile)


def qnetwork_forward(x, params, action_size, *, tile_b=None):
    """Batch-tiled forward. x: (B, S) f32. Returns (B, action_size) f32.

    params = (w1 (S,H1), b1 f32 (1,H1), w2 (H1,H2), b2 f32 (1,H2),
              w3 (H2,Ap), b3 f32 (1,Ap))   with Ap a multiple of 128.
    """
    w1, b1, w2, b2, w3p, b3p = params
    B, S = x.shape
    H1 = w1.shape[1]
    H2 = w2.shape[1]
    Ap = w3p.shape[1]
    out_dtype = w1.dtype                          # bf16 by default: halves out writeback
    w_isize = jnp.dtype(w1.dtype).itemsize
    o_isize = jnp.dtype(out_dtype).itemsize

    if tile_b is None:
        tile_b = choose_tile_b(B)
    assert tile_b % 16 == 0 and tile_b <= 1024, "tile_b must be a multiple of 16, <= 1024"
    assert Ap % 128 == 0, "last layer must be padded to lane-dense width"

    n_tiles = pl.cdiv(B, tile_b)
    Bp = n_tiles * tile_b
    if Bp != B:
        x = jnp.pad(x, ((0, Bp - B), (0, 0)))     # padded rows sliced off below

    flops = 2 * Bp * (S * H1 + H1 * H2 + H2 * Ap)
    bytes_accessed = (
        Bp * S * 4 + Bp * Ap * o_isize            # x in, out
        + (S * H1 + H1 * H2 + H2 * Ap) * w_isize  # weights (fetched once)
        + (H1 + H2 + Ap) * 4                      # f32 biases
    )

    def _call(weight_buffer_count):
        if weight_buffer_count is None:
            def wspec(shape):
                return pl.BlockSpec(shape, lambda i: (0, 0))
        else:
            def wspec(shape):
                return pl.BlockSpec(
                    shape, lambda i: (0, 0),
                    pipeline_mode=pl.Buffered(weight_buffer_count),
                )
        grid_spec = pltpu.PrefetchScalarGridSpec(
            num_scalar_prefetch=0,
            grid=(n_tiles,),
            in_specs=[
                # Activations: pipelined / double-buffered per batch tile.
                pl.BlockSpec((tile_b, S), lambda i: (i, 0)),
                # Weights & biases: constant index_map -> VMEM-resident, single-buffered.
                wspec((S, H1)),
                wspec((1, H1)),
                wspec((H1, H2)),
                wspec((1, H2)),
                wspec((H2, Ap)),
                wspec((1, Ap)),
            ],
            out_specs=pl.BlockSpec((tile_b, Ap), lambda i: (i, 0)),
        )
        return pl.pallas_call(
            qnetwork_kernel,
            out_shape=jax.ShapeDtypeStruct((Bp, Ap), out_dtype),
            grid_spec=grid_spec,
            compiler_params=pltpu.CompilerParams(
                dimension_semantics=("parallel",),       # shards batch tiles across v7x TCs
                vmem_limit_bytes=32 * 1024 * 1024,       # explicit scope (v5e default is 16 MiB)
            ),
            cost_estimate=pl.CostEstimate(
                flops=flops, transcendentals=0, bytes_accessed=bytes_accessed
            ),
        )(x, w1, b1, w2, b2, w3p, b3p)

    try:
        out = _call(1)   # single-buffer the VMEM-resident weights/biases
    except Exception:
        # TODO(synk): some jax versions reject pipeline_mode on pallas_call BlockSpecs;
        # fall back to default (double-buffered) weight specs.
        out = _call(None)

    return out[:B, :action_size].astype(jnp.float32)


def init_linear_params(key, in_features, out_features):
    """PyTorch nn.Linear default init: U(-1/sqrt(fan_in), 1/sqrt(fan_in)).

    Weight returned transposed, shape (in_features, out_features); bias (1, out_features).
    """
    k_w, k_b = jax.random.split(key)
    bound = 1.0 / jnp.sqrt(jnp.float32(in_features))
    w = jax.random.uniform(
        k_w, (in_features, out_features), jnp.float32, minval=-bound, maxval=bound
    )
    b = jax.random.uniform(
        k_b, (1, out_features), jnp.float32, minval=-bound, maxval=bound
    )
    return w, b


def prepare_params(params_f32, weight_dtype=jnp.bfloat16):
    """One-time param prep: cast weights to weight_dtype and pad the output layer to
    128 lanes.  Use weight_dtype=jnp.float32 for strict torch-f32 training parity."""
    w1, b1, w2, b2, w3, b3 = params_f32
    A = w3.shape[1]
    Ap = _round_up(A, 128)
    w3p = jnp.zeros((w3.shape[0], Ap), w3.dtype).at[:, :A].set(w3)
    b3p = jnp.zeros((1, Ap), b3.dtype).at[:, :A].set(b3)
    return (
        w1.astype(weight_dtype),
        b1,  # biases stay f32; bias add / ReLU done in f32 inside the kernel
        w2.astype(weight_dtype),
        b2,
        w3p.astype(weight_dtype),
        b3p,
    )


def qnetwork_reference(x, prepared_params, action_size):
    """Pure-JAX reference of the identical (weight-dtype matmul, f32 accumulate) math."""
    w1, b1, w2, b2, w3p, b3p = prepared_params
    cdt = w1.dtype
    h0 = x.astype(cdt)
    h1 = jnp.maximum(jnp.dot(h0, w1, preferred_element_type=jnp.float32) + b1, 0.0)
    h1 = h1.astype(cdt)
    h2 = jnp.maximum(jnp.dot(h1, w2, preferred_element_type=jnp.float32) + b2, 0.0)
    h2 = h2.astype(cdt)
    y = (jnp.dot(h2, w3p, preferred_element_type=jnp.float32) + b3p).astype(cdt)
    return y[:, :action_size].astype(jnp.float32)


if __name__ == "__main__":
    # QNetwork defaults: fc1_units = fc2_units = 512 (LunarLander-like state/action sizes).
    state_size = 8
    action_size = 4
    fc1_units = 512
    fc2_units = 512

    key = jax.random.PRNGKey(0)
    k1, k2, k3, kx_a, kx_b = jax.random.split(key, 5)

    w1, b1 = init_linear_params(k1, state_size, fc1_units)
    w2, b2 = init_linear_params(k2, fc1_units, fc2_units)
    w3, b3 = init_linear_params(k3, fc2_units, action_size)
    params = prepare_params((w1, b1, w2, b2, w3, b3))

    # batch=256 -> single-step grid (overhead-minimizing path);
    # batch=600 -> two tiles of 304 rows + batch padding (exercises the parallel axis).
    for batch, kx in ((256, kx_a), (600, kx_b)):
        x = jax.random.normal(kx, (batch, state_size), dtype=jnp.float32)
        out = qnetwork_forward(x, params, action_size)
        jax.block_until_ready(out)
        assert out.shape == (batch, action_size)

        ref = qnetwork_reference(x, params, action_size)
        err = float(jnp.max(jnp.abs(out - ref)))
        assert err < 2e-2, err

    print("KERNEL_OK")
</pallas_src>

<mosaic_0001>
module attributes {stable_mosaic.version = 11 : i64} {
  func.func @qnetwork_kernel(%arg0: i32, %arg1: memref<256x8xf32, #tpu.memory_space<vmem>>, %arg2: memref<8x512xbf16, #tpu.memory_space<vmem>>, %arg3: memref<1x512xf32, #tpu.memory_space<vmem>>, %arg4: memref<512x512xbf16, #tpu.memory_space<vmem>>, %arg5: memref<1x512xf32, #tpu.memory_space<vmem>>, %arg6: memref<512x128xbf16, #tpu.memory_space<vmem>>, %arg7: memref<1x128xf32, #tpu.memory_space<vmem>>, %arg8: memref<256x128xbf16, #tpu.memory_space<vmem>>) attributes {dimension_semantics = [#tpu.dimension_semantics<parallel>], iteration_bounds = array<i64: 1>, scalar_prefetch = 0 : i64, scratch_operands = 0 : i64, tpu.core_type = #tpu.core_type<tc>, window_params = [{transform_indices = @transform_0, window_bounds = array<i64: 256, 8>}, {pipeline_mode = #tpu.pipeline_mode<synchronous>, transform_indices = @transform_1, window_bounds = array<i64: 8, 512>}, {pipeline_mode = #tpu.pipeline_mode<synchronous>, transform_indices = @transform_2, window_bounds = array<i64: 1, 512>}, {pipeline_mode = #tpu.pipeline_mode<synchronous>, transform_indices = @transform_3, window_bounds = array<i64: 512, 512>}, {pipeline_mode = #tpu.pipeline_mode<synchronous>, transform_indices = @transform_4, window_bounds = array<i64: 1, 512>}, {pipeline_mode = #tpu.pipeline_mode<synchronous>, transform_indices = @transform_5, window_bounds = array<i64: 512, 128>}, {pipeline_mode = #tpu.pipeline_mode<synchronous>, transform_indices = @transform_6, window_bounds = array<i64: 1, 128>}, {transform_indices = @transform_7, window_bounds = array<i64: 256, 128>}]} {
    %c0 = arith.constant 0 : index
    %c0_0 = arith.constant 0 : index
    %0 = vector.load %arg1[%c0, %c0_0] : memref<256x8xf32, #tpu.memory_space<vmem>>, vector<256x8xf32>
    %1 = arith.truncf %0 : vector<256x8xf32> to vector<256x8xbf16>
    %c0_1 = arith.constant 0 : index
    %c0_2 = arith.constant 0 : index
    %2 = vector.load %arg2[%c0_1, %c0_2] : memref<8x512xbf16, #tpu.memory_space<vmem>>, vector<8x512xbf16>
    %cst = arith.constant dense<0.000000e+00> : vector<256x512xf32>
    %3 = tpu.matmul %1, %2, %cst {dimension_numbers = #tpu.dot_dimension_numbers<[1], [0], [0], [1], [0, 0, 1, 1], [], []>} : vector<256x8xbf16>, vector<8x512xbf16>, vector<256x512xf32> -> vector<256x512xf32>
    %c0_3 = arith.constant 0 : index
    %c0_4 = arith.constant 0 : index
    %4 = vector.load %arg3[%c0_3, %c0_4] : memref<1x512xf32, #tpu.memory_space<vmem>>, vector<1x512xf32>
    %5 = vector.broadcast %4 : vector<1x512xf32> to vector<256x512xf32>
    %6 = arith.addf %3, %5 : vector<256x512xf32>
    %cst_5 = arith.constant 0.000000e+00 : f32
    %7 = vector.broadcast %cst_5 : f32 to vector<256x512xf32>
    %8 = arith.maximumf %6, %7 : vector<256x512xf32>
    %9 = arith.truncf %8 : vector<256x512xf32> to vector<256x512xbf16>
    %c0_6 = arith.constant 0 : index
    %c0_7 = arith.constant 0 : index
    %10 = vector.load %arg4[%c0_6, %c0_7] : memref<512x512xbf16, #tpu.memory_space<vmem>>, vector<512x512xbf16>
    %cst_8 = arith.constant dense<0.000000e+00> : vector<256x512xf32>
    %11 = tpu.matmul %9, %10, %cst_8 {dimension_numbers = #tpu.dot_dimension_numbers<[1], [0], [0], [1], [0, 0, 1, 1], [], []>} : vector<256x512xbf16>, vector<512x512xbf16>, vector<256x512xf32> -> vector<256x512xf32>
    %c0_9 = arith.constant 0 : index
    %c0_10 = arith.constant 0 : index
    %12 = vector.load %arg5[%c0_9, %c0_10] : memref<1x512xf32, #tpu.memory_space<vmem>>, vector<1x512xf32>
    %13 = vector.broadcast %12 : vector<1x512xf32> to vector<256x512xf32>
    %14 = arith.addf %11, %13 : vector<256x512xf32>
    %cst_11 = arith.constant 0.000000e+00 : f32
    %15 = vector.broadcast %cst_11 : f32 to vector<256x512xf32>
    %16 = arith.maximumf %14, %15 : vector<256x512xf32>
    %17 = arith.truncf %16 : vector<256x512xf32> to vector<256x512xbf16>
    %c0_12 = arith.constant 0 : index
    %c0_13 = arith.constant 0 : index
    %18 = vector.load %arg6[%c0_12, %c0_13] : memref<512x128xbf16, #tpu.memory_space<vmem>>, vector<512x128xbf16>
    %cst_14 = arith.constant dense<0.000000e+00> : vector<256x128xf32>
    %19 = tpu.matmul %17, %18, %cst_14 {dimension_numbers = #tpu.dot_dimension_numbers<[1], [0], [0], [1], [0, 0, 1, 1], [], []>} : vector<256x512xbf16>, vector<512x128xbf16>, vector<256x128xf32> -> vector<256x128xf32>
    %c0_15 = arith.constant 0 : index
    %c0_16 = arith.constant 0 : index
    %20 = vector.load %arg7[%c0_15, %c0_16] : memref<1x128xf32, #tpu.memory_space<vmem>>, vector<1x128xf32>
    %21 = vector.broadcast %20 : vector<1x128xf32> to vector<256x128xf32>
    %22 = arith.addf %19, %21 : vector<256x128xf32>
    %23 = arith.truncf %22 : vector<256x128xf32> to vector<256x128xbf16>
    %c0_17 = arith.constant 0 : index
    %c0_18 = arith.constant 0 : index
    %24 = vector.load %arg8[%c0_17, %c0_18] : memref<256x128xbf16, #tpu.memory_space<vmem>>, vector<256x128xbf16>
    tpu.vector_store %arg8[%c0_17, %c0_18], %23 {strides = array<i32>} : memref<256x128xbf16, #tpu.memory_space<vmem>>, vector<256x128xbf16>,
    return
  }
  func.func @transform_0(%arg0: i32) -> (i32, i32) {
    %c0_i32 = arith.constant 0 : i32
    %c0_i32_0 = arith.constant 0 : i32
    return %arg0, %c0_i32 : i32, i32
  }
  func.func @transform_1(%arg0: i32) -> (i32, i32) {
    %c0_i32 = arith.constant 0 : i32
    %c0_i32_0 = arith.constant 0 : i32
    %c0_i32_1 = arith.constant 0 : i32
    return %c0_i32, %c0_i32_0 : i32, i32
  }
  func.func @transform_2(%arg0: i32) -> (i32, i32) {
    %c0_i32 = arith.constant 0 : i32
    %c0_i32_0 = arith.constant 0 : i32
    %c0_i32_1 = arith.constant 0 : i32
    return %c0_i32, %c0_i32_0 : i32, i32
  }
  func.func @transform_3(%arg0: i32) -> (i32, i32) {
    %c0_i32 = arith.constant 0 : i32
    %c0_i32_0 = arith.constant 0 : i32
    %c0_i32_1 = arith.constant 0 : i32
    return %c0_i32, %c0_i32_0 : i32, i32
  }
  func.func @transform_4(%arg0: i32) -> (i32, i32) {
    %c0_i32 = arith.constant 0 : i32
    %c0_i32_0 = arith.constant 0 : i32
    %c0_i32_1 = arith.constant 0 : i32
    return %c0_i32, %c0_i32_0 : i32, i32
  }
  func.func @transform_5(%arg0: i32) -> (i32, i32) {
    %c0_i32 = arith.constant 0 : i32
    %c0_i32_0 = arith.constant 0 : i32
    %c0_i32_1 = arith.constant 0 : i32
    return %c0_i32, %c0_i32_0 : i32, i32
  }
  func.func @transform_6(%arg0: i32) -> (i32, i32) {
    %c0_i32 = arith.constant 0 : i32
    %c0_i32_0 = arith.constant 0 : i32
    %c0_i32_1 = arith.constant 0 : i32
    return %c0_i32, %c0_i32_0 : i32, i32
  }
  func.func @transform_7(%arg0: i32) -> (i32, i32) {
    %c0_i32 = arith.constant 0 : i32
    %c0_i32_0 = arith.constant 0 : i32
    return %arg0, %c0_i32 : i32, i32
  }
}

module attributes {stable_mosaic.version = 11 : i64} {
  func.func @qnetwork_kernel(%arg0: i32, %arg1: memref<256x8xf32, #tpu.memory_space<vmem>>, %arg2: memref<8x512xbf16, #tpu.memory_space<vmem>>, %arg3: memref<1x512xf32, #tpu.memory_space<vmem>>, %arg4: memref<512x512xbf16, #tpu.memory_space<vmem>>, %arg5: memref<1x512xf32, #tpu.memory_space<vmem>>, %arg6: memref<512x128xbf16, #tpu.memory_space<vmem>>, %arg7: memref<1x128xf32, #tpu.memory_space<vmem>>, %arg8: memref<256x128xbf16, #tpu.memory_space<vmem>>) attributes {dimension_semantics = [#tpu.dimension_semantics<parallel>], iteration_bounds = array<i64: 1>, scalar_prefetch = 0 : i64, scratch_operands = 0 : i64, tpu.core_type = #tpu.core_type<tc>, window_params = [{transform_indices = @transform_0, window_bounds = array<i64: 256, 8>}, {pipeline_mode = #tpu.pipeline_mode<synchronous>, transform_indices = @transform_1, window_bounds = array<i64: 8, 512>}, {pipeline_mode = #tpu.pipeline_mode<synchronous>, transform_indices = @transform_2, window_bounds = array<i64: 1, 512>}, {pipeline_mode = #tpu.pipeline_mode<synchronous>, transform_indices = @transform_3, window_bounds = array<i64: 512, 512>}, {pipeline_mode = #tpu.pipeline_mode<synchronous>, transform_indices = @transform_4, window_bounds = array<i64: 1, 512>}, {pipeline_mode = #tpu.pipeline_mode<synchronous>, transform_indices = @transform_5, window_bounds = array<i64: 512, 128>}, {pipeline_mode = #tpu.pipeline_mode<synchronous>, transform_indices = @transform_6, window_bounds = array<i64: 1, 128>}, {transform_indices = @transform_7, window_bounds = array<i64: 256, 128>}]} {
    %c0 = arith.constant 0 : index
    %c0_0 = arith.constant 0 : index
    %0 = vector.load %arg1[%c0, %c0_0] : memref<256x8xf32, #tpu.memory_space<vmem>>, vector<256x8xf32>
    %1 = arith.truncf %0 : vector<256x8xf32> to vector<256x8xbf16>
    %c0_1 = arith.constant 0 : index
    %c0_2 = arith.constant 0 : index
    %2 = vector.load %arg2[%c0_1, %c0_2] : memref<8x512xbf16, #tpu.memory_space<vmem>>, vector<8x512xbf16>
    %cst = arith.constant dense<0.000000e+00> : vector<256x512xf32>
    %3 = tpu.matmul %1, %2, %cst {dimension_numbers = #tpu.dot_dimension_numbers<[1], [0], [0], [1], [0, 0, 1, 1], [], []>} : vector<256x8xbf16>, vector<8x512xbf16>, vector<256x512xf32> -> vector<256x512xf32>
    %c0_3 = arith.constant 0 : index
    %c0_4 = arith.constant 0 : index
    %4 = vector.load %arg3[%c0_3, %c0_4] : memref<1x512xf32, #tpu.memory_space<vmem>>, vector<1x512xf32>
    %5 = vector.broadcast %4 : vector<1x512xf32> to vector<256x512xf32>
    %6 = arith.addf %3, %5 : vector<256x512xf32>
    %cst_5 = arith.constant 0.000000e+00 : f32
    %7 = vector.broadcast %cst_5 : f32 to vector<256x512xf32>
    %8 = arith.maximumf %6, %7 : vector<256x512xf32>
    %9 = arith.truncf %8 : vector<256x512xf32> to vector<256x512xbf16>
    %c0_6 = arith.constant 0 : index
    %c0_7 = arith.constant 0 : index
    %10 = vector.load %arg4[%c0_6, %c0_7] : memref<512x512xbf16, #tpu.memory_space<vmem>>, vector<512x512xbf16>
    %cst_8 = arith.constant dense<0.000000e+00> : vector<256x512xf32>
    %11 = tpu.matmul %9, %10, %cst_8 {dimension_numbers = #tpu.dot_dimension_numbers<[1], [0], [0], [1], [0, 0, 1, 1], [], []>} : vector<256x512xbf16>, vector<512x512xbf16>, vector<256x512xf32> -> vector<256x512xf32>
    %c0_9 = arith.constant 0 : index
    %c0_10 = arith.constant 0 : index
    %12 = vector.load %arg5[%c0_9, %c0_10] : memref<1x512xf32, #tpu.memory_space<vmem>>, vector<1x512xf32>
    %13 = vector.broadcast %12 : vector<1x512xf32> to vector<256x512xf32>
    %14 = arith.addf %11, %13 : vector<256x512xf32>
    %cst_11 = arith.constant 0.000000e+00 : f32
    %15 = vector.broadcast %cst_11 : f32 to vector<256x512xf32>
    %16 = arith.maximumf %14, %15 : vector<256x512xf32>
    %17 = arith.truncf %16 : vector<256x512xf32> to vector<256x512xbf16>
    %c0_12 = arith.constant 0 : index
    %c0_13 = arith.constant 0 : index
    %18 = vector.load %arg6[%c0_12, %c0_13] : memref<512x128xbf16, #tpu.memory_space<vmem>>, vector<512x128xbf16>
    %cst_14 = arith.constant dense<0.000000e+00> : vector<256x128xf32>
    %19 = tpu.matmul %17, %18, %cst_14 {dimension_numbers = #tpu.dot_dimension_numbers<[1], [0], [0], [1], [0, 0, 1, 1], [], []>} : vector<256x512xbf16>, vector<512x128xbf16>, vector<256x128xf32> -> vector<256x128xf32>
    %c0_15 = arith.constant 0 : index
    %c0_16 = arith.constant 0 : index
    %20 = vector.load %arg7[%c0_15, %c0_16] : memref<1x128xf32, #tpu.memory_space<vmem>>, vector<1x128xf32>
    %21 = vector.broadcast %20 : vector<1x128xf32> to vector<256x128xf32>
    %22 = arith.addf %19, %21 : vector<256x128xf32>
    %23 = arith.truncf %22 : vector<256x128xf32> to vector<256x128xbf16>
    %c0_17 = arith.constant 0 : index
    %c0_18 = arith.constant 0 : index
    %24 = vector.load %arg8[%c0_17, %c0_18] : memref<256x128xbf16, #tpu.memory_space<vmem>>, vector<256x128xbf16>
    tpu.vector_store %arg8[%c0_17, %c0_18], %23 {strides = array<i32>} : memref<256x128xbf16, #tpu.memory_space<vmem>>, vector<256x128xbf16>,
    return
  }
  func.func @transform_0(%arg0: i32) -> (i32, i32) {
    %c0_i32 = arith.constant 0 : i32
    %c0_i32_0 = arith.constant 0 : i32
    return %arg0, %c0_i32 : i32, i32
  }
  func.func @transform_1(%arg0: i32) -> (i32, i32) {
    %c0_i32 = arith.constant 0 : i32
    %c0_i32_0 = arith.constant 0 : i32
    %c0_i32_1 = arith.constant 0 : i32
    return %c0_i32, %c0_i32_0 : i32, i32
  }
  func.func @transform_2(%arg0: i32) -> (i32, i32) {
    %c0_i32 = arith.constant 0 : i32
    %c0_i32_0 = arith.constant 0 : i32
    %c0_i32_1 = arith.constant 0 : i32
    return %c0_i32, %c0_i32_0 : i32, i32
  }
  func.func @transform_3(%arg0: i32) -> (i32, i32) {
    %c0_i32 = arith.constant 0 : i32
    %c0_i32_0 = arith.constant 0 : i32
    %c0_i32_1 = arith.constant 0 : i32
    return %c0_i32, %c0_i32_0 : i32, i32
  }
  func.func @transform_4(%arg0: i32) -> (i32, i32) {
    %c0_i32 = arith.constant 0 : i32
    %c0_i32_0 = arith.constant 0 : i32
    %c0_i32_1 = arith.constant 0 : i32
    return %c0_i32, %c0_i32_0 : i32, i32
  }
  func.func @transform_5(%arg0: i32) -> (i32, i32) {
    %c0_i32 = arith.constant 0 : i32
    %c0_i32_0 = arith.constant 0 : i32
    %c0_i32_1 = arith.constant 0 : i32
    return %c0_i32, %c0_i32_0 : i32, i32
  }
  func.func @transform_6(%arg0: i32) -> (i32, i32) {
    %c0_i32 = arith.constant 0 : i32
    %c0_i32_0 = arith.constant 0 : i32
    %c0_i32_1 = arith.constant 0 : i32
    return %c0_i32, %c0_i32_0 : i32, i32
  }
  func.func @transform_7(%arg0: i32) -> (i32, i32) {
    %c0_i32 = arith.constant 0 : i32
    %c0_i32_0 = arith.constant 0 : i32
    return %arg0, %c0_i32 : i32, i32
  }
}

</mosaic_0001>

<llo_original>
// kernel: tpu_custom_call.1
$region0: #{tpu_custom_call.1}
  #allocation0 [shape = 'u32[]', space=smem, size = 0x4, offset = 0x4, fixed_abs, tag = 'smem constant byte address 0x4 - core index']
  #allocation1 [shape = 'u32[72,128]{1,0:T(1,128)}', space=vmem, size = 0x9000, scoped, tag = 'internal scratch']
  %s0 = inlined_call_operand.vmem [shape: f32[256,8], index: 0, kind: input, shape index: {}]
  %s1 = inlined_call_operand.vmem [shape: bf16[8,512], index: 1, kind: input, shape index: {}]
  %s2 = inlined_call_operand.vmem [shape: f32[1,512], index: 2, kind: input, shape index: {}]
  %s3 = inlined_call_operand.hbm [shape: bf16[512,512], index: 3, kind: input, shape index: {}]
  %s4 = inlined_call_operand.hbm [shape: f32[1,512], index: 4, kind: input, shape index: {}]
  %s5 = inlined_call_operand.vmem [shape: bf16[512,128], index: 5, kind: input, shape index: {}]
  %s6 = inlined_call_operand.vmem [shape: f32[1,128], index: 6, kind: input, shape index: {}]
  %s7 = inlined_call_operand.hbm [shape: bf16[256,128], index: 7, kind: output, shape index: {}]
  %s8 = sld [smem:[#allocation0]]
  $region46: #{tpu_custom_call.1} parent=0
    _
  %s10 = ssub.s32 1, %s8
  %s11 = scalar_select 0, %s10, %s8
  $region1: #{tpu_custom_call.1} parent=0
    #allocation2 [shape = 'u8[524288]{0}', space=vmem, size = 0x80000, scoped, tag = 'input window, operand 3, single buffered']
    #allocation3 [shape = 's32[1]{0}', space=sflag, size = 0x4, scoped, tag = 'scoped memory for tpu_custom_call.1']
    #allocation4 [shape = 's32[1]{0}', space=sflag, size = 0x4, scoped, tag = 'scoped memory for tpu_custom_call.1']
    #allocation5 [shape = 'u8[2048]{0}', space=vmem, size = 0x800, scoped, tag = 'input window, operand 4, single buffered']
    #allocation6 [shape = 's32[1]{0}', space=sflag, size = 0x4, scoped, tag = 'scoped memory for tpu_custom_call.1']
    #allocation7 [shape = 'u8[65536]{0}', space=vmem, size = 0x10000, scoped, tag = 'output window, operand 0, single buffered']
    %12 = vsyncpa [#allocation3], 0
    %13 = vsyncpa [#allocation6], 0
    %14 = vsyncpa [#allocation4], 0
    // Predicated region
    $region2: #{tpu_custom_call.1} parent=1 // pred_check
      _
    $region3: #{tpu_custom_call.1} parent=1 // pred_check_branch
      %16 = sbr.rel (0) target = $region5
    $region4: #{tpu_custom_call.1} parent=1 // pred_region
      _
    $region5: #{tpu_custom_call.1} parent=1 // pred_fallthru
      _
    // Predicated region
    $region6: #{tpu_custom_call.1} parent=1 // pred_check
      _
    $region7: #{tpu_custom_call.1} parent=1 // pred_check_branch
      %18 = sbr.rel (0) target = $region9
    $region8: #{tpu_custom_call.1} parent=1 // pred_region
      _
    $region9: #{tpu_custom_call.1} parent=1 // pred_fallthru
      _
    // Predicated region
    $region10: #{tpu_custom_call.1} parent=1 // pred_check
      _
    $region11: #{tpu_custom_call.1} parent=1 // pred_check_branch
      %20 = sbr.rel (0) target = $region13
    $region12: #{tpu_custom_call.1} parent=1 // pred_region
      _
    $region13: #{tpu_custom_call.1} parent=1 // pred_fallthru
      _
    // Predicated region
    $region14: #{tpu_custom_call.1} parent=1 // pred_check
      _
    $region15: #{tpu_custom_call.1} parent=1 // pred_check_branch
      %22 = sbr.rel (0) target = $region17
    $region16: #{tpu_custom_call.1} parent=1 // pred_region
      %24 = vsyncadd [#allocation3], 0
      %s25 = sshll.u32 %s3, 4
      %s26 = int_to_ptr.hbm [resolvable:$true] %s25
      %s27 = sshll.u32 [#allocation2], 4
      %s28 = int_to_ptr.vmem [resolvable:$true] %s27
      %33 = dma.hbm_to_vmem [thread:$0]  %s26, 16384, %s28, [#allocation3], 256, 256, 16
    $region17: #{tpu_custom_call.1} parent=1 // pred_fallthru
      _
    // Predicated region
    $region18: #{tpu_custom_call.1} parent=1 // pred_check
      _
    $region19: #{tpu_custom_call.1} parent=1 // pred_check_branch
      %35 = sbr.rel (0) target = $region21
    $region20: #{tpu_custom_call.1} parent=1 // pred_region
      %37 = vsyncadd [#allocation6], 0
      %s39 = sshll.u32 %s4, 4
      %s40 = int_to_ptr.hbm [resolvable:$true] %s39
      %s41 = sshll.u32 [#allocation5], 4
      %s42 = int_to_ptr.vmem [resolvable:$true] %s41
      %44 = dma.hbm_to_vmem [thread:$0]  %s40, 64, %s42, [#allocation6]
    $region21: #{tpu_custom_call.1} parent=1 // pred_fallthru
      _
    // Predicated region
    $region22: #{tpu_custom_call.1} parent=1 // pred_check
      _
    $region23: #{tpu_custom_call.1} parent=1 // pred_check_branch
      %46 = sbr.rel (0) target = $region25
    $region24: #{tpu_custom_call.1} parent=1 // pred_region
      _
    $region25: #{tpu_custom_call.1} parent=1 // pred_fallthru
      _
    // Predicated region
    $region26: #{tpu_custom_call.1} parent=1 // pred_check
      _
    $region27: #{tpu_custom_call.1} parent=1 // pred_check_branch
      %48 = sbr.rel (0) target = $region29
    $region28: #{tpu_custom_call.1} parent=1 // pred_region
      _
    $region29: #{tpu_custom_call.1} parent=1 // pred_fallthru
      _
    // Predicated region
    $region30: #{tpu_custom_call.1} parent=1 // pred_check
      _
    $region31: #{tpu_custom_call.1} parent=1 // pred_check_branch
      %50 = sbr.rel (0) target = $region33
    $region32: #{tpu_custom_call.1} parent=1 // pred_region
      %52 = dma.done [#allocation3], 16384
    $region33: #{tpu_custom_call.1} parent=1 // pred_fallthru
      _
    // Predicated region
    $region34: #{tpu_custom_call.1} parent=1 // pred_check
      _
    $region35: #{tpu_custom_call.1} parent=1 // pred_check_branch
      %54 = sbr.rel (0) target = $region37
    $region36: #{tpu_custom_call.1} parent=1 // pred_region
      %56 = dma.done [#allocation6], 64
    $region37: #{tpu_custom_call.1} parent=1 // pred_fallthru
      _
    %v58 = vld [vmem:[%s0] sm:$0xff]
    %v59 = vld [vmem:[%s0 + $0x8] sm:$0xff]
    %v60 = vld [vmem:[%s0 + $0x10] sm:$0xff]
    %v61 = vld [vmem:[%s0 + $0x18] sm:$0xff]
    %v62 = vld [vmem:[%s0 + $0x20] sm:$0xff]
    %v63 = vld [vmem:[%s0 + $0x28] sm:$0xff]
    %v64 = vld [vmem:[%s0 + $0x30] sm:$0xff]
    %v65 = vld [vmem:[%s0 + $0x38] sm:$0xff]
    %v66 = vld [vmem:[%s0 + $0x40] sm:$0xff]
    %v67 = vld [vmem:[%s0 + $0x48] sm:$0xff]
    %v68 = vld [vmem:[%s0 + $0x50] sm:$0xff]
    %v69 = vld [vmem:[%s0 + $0x58] sm:$0xff]
    %v70 = vld [vmem:[%s0 + $0x60] sm:$0xff]
    %v71 = vld [vmem:[%s0 + $0x68] sm:$0xff]
    %v72 = vld [vmem:[%s0 + $0x70] sm:$0xff]
    %v73 = vld [vmem:[%s0 + $0x78] sm:$0xff]
    %v74 = vld [vmem:[%s0 + $0x80] sm:$0xff]
    %v75 = vld [vmem:[%s0 + $0x88] sm:$0xff]
    %v76 = vld [vmem:[%s0 + $0x90] sm:$0xff]
    %v77 = vld [vmem:[%s0 + $0x98] sm:$0xff]
    %v78 = vld [vmem:[%s0 + $0xa0] sm:$0xff]
    %v79 = vld [vmem:[%s0 + $0xa8] sm:$0xff]
    %v80 = vld [vmem:[%s0 + $0xb0] sm:$0xff]
    %v81 = vld [vmem:[%s0 + $0xb8] sm:$0xff]
    %v82 = vld [vmem:[%s0 + $0xc0] sm:$0xff]
    %v83 = vld [vmem:[%s0 + $0xc8] sm:$0xff]
    %v84 = vld [vmem:[%s0 + $0xd0] sm:$0xff]
    %v85 = vld [vmem:[%s0 + $0xd8] sm:$0xff]
    %v86 = vld [vmem:[%s0 + $0xe0] sm:$0xff]
    %v87 = vld [vmem:[%s0 + $0xe8] sm:$0xff]
    %v88 = vld [vmem:[%s0 + $0xf0] sm:$0xff]
    %v89 = vld [vmem:[%s0 + $0xf8] sm:$0xff]
    %v90 = vpack.c.bf16 %v59, %v58
    %v91 = vpack.c.bf16 %v61, %v60
    %v92 = vpack.c.bf16 %v63, %v62
    %v93 = vpack.c.bf16 %v65, %v64
    %v94 = vpack.c.bf16 %v67, %v66
    %v95 = vpack.c.bf16 %v69, %v68
    %v96 = vpack.c.bf16 %v71, %v70
    %v97 = vpack.c.bf16 %v73, %v72
    %v98 = vpack.c.bf16 %v75, %v74
    %v99 = vpack.c.bf16 %v77, %v76
    %v100 = vpack.c.bf16 %v79, %v78
    %v101 = vpack.c.bf16 %v81, %v80
    %v102 = vpack.c.bf16 %v83, %v82
    %v103 = vpack.c.bf16 %v85, %v84
    %v104 = vpack.c.bf16 %v87, %v86
    %v105 = vpack.c.bf16 %v89, %v88
    %v106 = vld [vmem:[%s1] sm:$0xff]
    %v107 = vld [vmem:[%s1 + $0x8] sm:$0xff]
    %v108 = vld [vmem:[%s2] sm:$0xf]
    %v110 = vperm.slane %v108, 0
    %v111 = vperm.slane %v108, 1
    %v112 = vperm.slane %v108, 2
    %v113 = vperm.slane %v108, 3
    %v120 = vunpack.c.l.b16 %v106
    %v121 = vunpack.c.h.b16 %v106
    %v122 = vunpack.c.l.b16 %v107
    %v123 = vunpack.c.h.b16 %v107
    %v124 = vpack.c.b16 %v120, %v120
    %v125 = vpack.c.b16 %v121, %v121
    %v126 = vpack.c.b16 %v122, %v122
    %v127 = vpack.c.b16 %v123, %v123
    %vm128 = vcmask 64512
    %v130 = vsel %vm128, %v90, 0
    %v133 = vsel %vm128, %v91, 0
    %v136 = vsel %vm128, %v92, 0
    %v139 = vsel %vm128, %v93, 0
    %v142 = vsel %vm128, %v94, 0
    %v145 = vsel %vm128, %v95, 0
    %v148 = vsel %vm128, %v96, 0
    %v151 = vsel %vm128, %v97, 0
    %v154 = vsel %vm128, %v98, 0
    %v157 = vsel %vm128, %v99, 0
    %v160 = vsel %vm128, %v100, 0
    %v163 = vsel %vm128, %v101, 0
    %v166 = vsel %vm128, %v102, 0
    %v169 = vsel %vm128, %v103, 0
    %v172 = vsel %vm128, %v104, 0
    %v175 = vsel %vm128, %v105, 0
    %vm177 = vcmask 1043456
    %v179 = vsel %vm177, %v124, 0
    %v182 = vsel %vm177, %v125, 0
    %v185 = vsel %vm177, %v126, 0
    %v188 = vsel %vm177, %v127, 0
    %190 = vmatpush.bf16.msra.mxu0 0
    %191 = vmatpush.bf16.msra.mxu0 0
    %192 = vmatpush.bf16.msra.mxu0 0
    %193 = vmatpush.bf16.msra.mxu0 0
    %194 = vmatpush.bf16.msra.mxu0 0
    %195 = vmatpush.bf16.msra.mxu0 0
    %196 = vmatpush.bf16.msra.mxu0 0
    %197 = vmatpush.bf16.msra.mxu0 %v179
    %198 = vmatmul.bf16.gmra.mxu0 %v130
    %v199 = vpop.f32.mrf.mxu0
    %v200 = vadd.f32 %v110, %v199
    %v201 = vpop.f32.mrf.mxu0
    %v202 = vadd.f32 %v110, %v201
    %203 = vmatmul.bf16.gmra.mxu0 %v133
    %v204 = vpop.f32.mrf.mxu0
    %v205 = vadd.f32 %v110, %v204
    %v206 = vpop.f32.mrf.mxu0
    %v207 = vadd.f32 %v110, %v206
    %208 = vmatmul.bf16.gmra.mxu0 %v136
    %v209 = vpop.f32.mrf.mxu0
    %v210 = vadd.f32 %v110, %v209
    %v211 = vpop.f32.mrf.mxu0
    %v212 = vadd.f32 %v110, %v211
    %213 = vmatmul.bf16.gmra.mxu0 %v139
    %v214 = vpop.f32.mrf.mxu0
    %v215 = vadd.f32 %v110, %v214
    %v216 = vpop.f32.mrf.mxu0
    %v217 = vadd.f32 %v110, %v216
    %218 = vmatmul.bf16.gmra.mxu0 %v142
    %v219 = vpop.f32.mrf.mxu0
    %v220 = vadd.f32 %v110, %v219
    %v221 = vpop.f32.mrf.mxu0
    %v222 = vadd.f32 %v110, %v221
    %223 = vmatmul.bf16.gmra.mxu0 %v145
    %v224 = vpop.f32.mrf.mxu0
    %v225 = vadd.f32 %v110, %v224
    %v226 = vpop.f32.mrf.mxu0
    %v227 = vadd.f32 %v110, %v226
    %228 = vmatmul.bf16.gmra.mxu0 %v148
    %v229 = vpop.f32.mrf.mxu0
    %v230 = vadd.f32 %v110, %v229
    %v231 = vpop.f32.mrf.mxu0
    %v232 = vadd.f32 %v110, %v231
    %233 = vmatmul.bf16.gmra.mxu0 %v151
    %v234 = vpop.f32.mrf.mxu0
    %v235 = vadd.f32 %v110, %v234
    %v236 = vpop.f32.mrf.mxu0
    %v237 = vadd.f32 %v110, %v236
    %238 = vmatmul.bf16.gmra.mxu0 %v154
    %v239 = vpop.f32.mrf.mxu0
    %v240 = vadd.f32 %v110, %v239
    %v241 = vpop.f32.mrf.mxu0
    %v242 = vadd.f32 %v110, %v241
    %243 = vmatmul.bf16.gmra.mxu0 %v157
    %v244 = vpop.f32.mrf.mxu0
    %v245 = vadd.f32 %v110, %v244
    %v246 = vpop.f32.mrf.mxu0
    %v247 = vadd.f32 %v110, %v246
    %248 = vmatmul.bf16.gmra.mxu0 %v160
    %v249 = vpop.f32.mrf.mxu0
    %v250 = vadd.f32 %v110, %v249
    %v251 = vpop.f32.mrf.mxu0
    %v252 = vadd.f32 %v110, %v251
    %253 = vmatmul.bf16.gmra.mxu0 %v163
    %v254 = vpop.f32.mrf.mxu0
    %v255 = vadd.f32 %v110, %v254
    %v256 = vpop.f32.mrf.mxu0
    %v257 = vadd.f32 %v110, %v256
    %258 = vmatmul.bf16.gmra.mxu0 %v166
    %v259 = vpop.f32.mrf.mxu0
    %v260 = vadd.f32 %v110, %v259
    %v261 = vpop.f32.mrf.mxu0
    %v262 = vadd.f32 %v110, %v261
    %263 = vmatmul.bf16.gmra.mxu0 %v169
    %v264 = vpop.f32.mrf.mxu0
    %v265 = vadd.f32 %v110, %v264
    %v266 = vpop.f32.mrf.mxu0
    %v267 = vadd.f32 %v110, %v266
    %268 = vmatmul.bf16.gmra.mxu0 %v172
    %v269 = vpop.f32.mrf.mxu0
    %v270 = vadd.f32 %v110, %v269
    %v271 = vpop.f32.mrf.mxu0
    %v272 = vadd.f32 %v110, %v271
    %273 = vmatmul.bf16.gmra.mxu0 %v175
    %v274 = vpop.f32.mrf.mxu0
    %v275 = vadd.f32 %v110, %v274
    %v276 = vpop.f32.mrf.mxu0
    %v277 = vadd.f32 %v110, %v276
    %278 = vdwg.mxu0
    %279 = vmatpush.bf16.msra.mxu0 0
    %280 = vmatpush.bf16.msra.mxu0 0
    %281 = vmatpush.bf16.msra.mxu0 0
    %282 = vmatpush.bf16.msra.mxu0 0
    %283 = vmatpush.bf16.msra.mxu0 0
    %284 = vmatpush.bf16.msra.mxu0 0
    %285 = vmatpush.bf16.msra.mxu0 0
    %286 = vmatpush.bf16.msra.mxu0 %v182
    %287 = vmatmul.bf16.gmra.mxu0 %v130
    %v288 = vpop.f32.mrf.mxu0
    %v289 = vadd.f32 %v111, %v288
    %v290 = vpop.f32.mrf.mxu0
    %v291 = vadd.f32 %v111, %v290
    %292 = vmatmul.bf16.gmra.mxu0 %v133
    %v293 = vpop.f32.mrf.mxu0
    %v294 = vadd.f32 %v111, %v293
    %v295 = vpop.f32.mrf.mxu0
    %v296 = vadd.f32 %v111, %v295
    %297 = vmatmul.bf16.gmra.mxu0 %v136
    %v298 = vpop.f32.mrf.mxu0
    %v299 = vadd.f32 %v111, %v298
    %v300 = vpop.f32.mrf.mxu0
    %v301 = vadd.f32 %v111, %v300
    %302 = vmatmul.bf16.gmra.mxu0 %v139
    %v303 = vpop.f32.mrf.mxu0
    %v304 = vadd.f32 %v111, %v303
    %v305 = vpop.f32.mrf.mxu0
    %v306 = vadd.f32 %v111, %v305
    %307 = vmatmul.bf16.gmra.mxu0 %v142
    %v308 = vpop.f32.mrf.mxu0
    %v309 = vadd.f32 %v111, %v308
    %v310 = vpop.f32.mrf.mxu0
    %v311 = vadd.f32 %v111, %v310
    %312 = vmatmul.bf16.gmra.mxu0 %v145
    %v313 = vpop.f32.mrf.mxu0
    %v314 = vadd.f32 %v111, %v313
    %v315 = vpop.f32.mrf.mxu0
    %v316 = vadd.f32 %v111, %v315
    %317 = vmatmul.bf16.gmra.mxu0 %v148
    %v318 = vpop.f32.mrf.mxu0
    %v319 = vadd.f32 %v111, %v318
    %v320 = vpop.f32.mrf.mxu0
    %v321 = vadd.f32 %v111, %v320
    %322 = vmatmul.bf16.gmra.mxu0 %v151
    %v323 = vpop.f32.mrf.mxu0
    %v324 = vadd.f32 %v111, %v323
    %v325 = vpop.f32.mrf.mxu0
    %v326 = vadd.f32 %v111, %v325
    %327 = vmatmul.bf16.gmra.mxu0 %v154
    %v328 = vpop.f32.mrf.mxu0
    %v329 = vadd.f32 %v111, %v328
    %v330 = vpop.f32.mrf.mxu0
    %v331 = vadd.f32 %v111, %v330
    %332 = vmatmul.bf16.gmra.mxu0 %v157
    %v333 = vpop.f32.mrf.mxu0
    %v334 = vadd.f32 %v111, %v333
    %v335 = vpop.f32.mrf.mxu0
    %v336 = vadd.f32 %v111, %v335
    %337 = vmatmul.bf16.gmra.mxu0 %v160
    %v338 = vpop.f32.mrf.mxu0
    %v339 = vadd.f32 %v111, %v338
    %v340 = vpop.f32.mrf.mxu0
    %v341 = vadd.f32 %v111, %v340
    %342 = vmatmul.bf16.gmra.mxu0 %v163
    %v343 = vpop.f32.mrf.mxu0
    %v344 = vadd.f32 %v111, %v343
    %v345 = vpop.f32.mrf.mxu0
    %v346 = vadd.f32 %v111, %v345
    %347 = vmatmul.bf16.gmra.mxu0 %v166
    %v348 = vpop.f32.mrf.mxu0
    %v349 = vadd.f32 %v111, %v348
    %v350 = vpop.f32.mrf.mxu0
    %v351 = vadd.f32 %v111, %v350
    %352 = vmatmul.bf16.gmra.mxu0 %v169
    %v353 = vpop.f32.mrf.mxu0
    %v354 = vadd.f32 %v111, %v353
    %v355 = vpop.f32.mrf.mxu0
    %v356 = vadd.f32 %v111, %v355
    %357 = vmatmul.bf16.gmra.mxu0 %v172
    %v358 = vpop.f32.mrf.mxu0
    %v359 = vadd.f32 %v111, %v358
    %v360 = vpop.f32.mrf.mxu0
    %v361 = vadd.f32 %v111, %v360
    %362 = vmatmul.bf16.gmra.mxu0 %v175
    %v363 = vpop.f32.mrf.mxu0
    %v364 = vadd.f32 %v111, %v363
    %v365 = vpop.f32.mrf.mxu0
    %v366 = vadd.f32 %v111, %v365
    %367 = vdwg.mxu0
    %368 = vmatpush.bf16.msra.mxu0 0
    %369 = vmatpush.bf16.msra.mxu0 0
    %370 = vmatpush.bf16.msra.mxu0 0
    %371 = vmatpush.bf16.msra.mxu0 0
    %372 = vmatpush.bf16.msra.mxu0 0
    %373 = vmatpush.bf16.msra.mxu0 0
    %374 = vmatpush.bf16.msra.mxu0 0
    %375 = vmatpush.bf16.msra.mxu0 %v185
    %376 = vmatmul.bf16.gmra.mxu0 %v130
    %v377 = vpop.f32.mrf.mxu0
    %v378 = vadd.f32 %v112, %v377
    %v379 = vpop.f32.mrf.mxu0
    %v380 = vadd.f32 %v112, %v379
    %381 = vmatmul.bf16.gmra.mxu0 %v133
    %v382 = vpop.f32.mrf.mxu0
    %v383 = vadd.f32 %v112, %v382
    %v384 = vpop.f32.mrf.mxu0
    %v385 = vadd.f32 %v112, %v384
    %386 = vmatmul.bf16.gmra.mxu0 %v136
    %v387 = vpop.f32.mrf.mxu0
    %v388 = vadd.f32 %v112, %v387
    %v389 = vpop.f32.mrf.mxu0
    %v390 = vadd.f32 %v112, %v389
    %391 = vmatmul.bf16.gmra.mxu0 %v139
    %v392 = vpop.f32.mrf.mxu0
    %v393 = vadd.f32 %v112, %v392
    %v394 = vpop.f32.mrf.mxu0
    %v395 = vadd.f32 %v112, %v394
    %396 = vmatmul.bf16.gmra.mxu0 %v142
    %v397 = vpop.f32.mrf.mxu0
    %v398 = vadd.f32 %v112, %v397
    %v399 = vpop.f32.mrf.mxu0
    %v400 = vadd.f32 %v112, %v399
    %401 = vmatmul.bf16.gmra.mxu0 %v145
    %v402 = vpop.f32.mrf.mxu0
    %v403 = vadd.f32 %v112, %v402
    %v404 = vpop.f32.mrf.mxu0
    %v405 = vadd.f32 %v112, %v404
    %406 = vmatmul.bf16.gmra.mxu0 %v148
    %v407 = vpop.f32.mrf.mxu0
    %v408 = vadd.f32 %v112, %v407
    %v409 = vpop.f32.mrf.mxu0
    %v410 = vadd.f32 %v112, %v409
    %411 = vmatmul.bf16.gmra.mxu0 %v151
    %v412 = vpop.f32.mrf.mxu0
    %v413 = vadd.f32 %v112, %v412
    %v414 = vpop.f32.mrf.mxu0
    %v415 = vadd.f32 %v112, %v414
    %416 = vmatmul.bf16.gmra.mxu0 %v154
    %v417 = vpop.f32.mrf.mxu0
    %v418 = vadd.f32 %v112, %v417
    %v419 = vpop.f32.mrf.mxu0
    %v420 = vadd.f32 %v112, %v419
    %421 = vmatmul.bf16.gmra.mxu0 %v157
    %v422 = vpop.f32.mrf.mxu0
    %v423 = vadd.f32 %v112, %v422
    %v424 = vpop.f32.mrf.mxu0
    %v425 = vadd.f32 %v112, %v424
    %426 = vmatmul.bf16.gmra.mxu0 %v160
    %v427 = vpop.f32.mrf.mxu0
    %v428 = vadd.f32 %v112, %v427
    %v429 = vpop.f32.mrf.mxu0
    %v430 = vadd.f32 %v112, %v429
    %431 = vmatmul.bf16.gmra.mxu0 %v163
    %v432 = vpop.f32.mrf.mxu0
    %v433 = vadd.f32 %v112, %v432
    %v434 = vpop.f32.mrf.mxu0
    %v435 = vadd.f32 %v112, %v434
    %436 = vmatmul.bf16.gmra.mxu0 %v166
    %v437 = vpop.f32.mrf.mxu0
    %v438 = vadd.f32 %v112, %v437
    %v439 = vpop.f32.mrf.mxu0
    %v440 = vadd.f32 %v112, %v439
    %441 = vmatmul.bf16.gmra.mxu0 %v169
    %v442 = vpop.f32.mrf.mxu0
    %v443 = vadd.f32 %v112, %v442
    %v444 = vpop.f32.mrf.mxu0
    %v445 = vadd.f32 %v112, %v444
    %446 = vmatmul.bf16.gmra.mxu0 %v172
    %v447 = vpop.f32.mrf.mxu0
    %v448 = vadd.f32 %v112, %v447
    %v449 = vpop.f32.mrf.mxu0
    %v450 = vadd.f32 %v112, %v449
    %451 = vmatmul.bf16.gmra.mxu0 %v175
    %v452 = vpop.f32.mrf.mxu0
    %v453 = vadd.f32 %v112, %v452
    %v454 = vpop.f32.mrf.mxu0
    %v455 = vadd.f32 %v112, %v454
    %456 = vdwg.mxu0
    %457 = vmatpush.bf16.msra.mxu0 0
    %458 = vmatpush.bf16.msra.mxu0 0
    %459 = vmatpush.bf16.msra.mxu0 0
    %460 = vmatpush.bf16.msra.mxu0 0
    %461 = vmatpush.bf16.msra.mxu0 0
    %462 = vmatpush.bf16.msra.mxu0 0
    %463 = vmatpush.bf16.msra.mxu0 0
    %464 = vmatpush.bf16.msra.mxu0 %v188
    %465 = vmatmul.bf16.gmra.mxu0 %v130
    %v466 = vpop.f32.mrf.mxu0
    %v467 = vadd.f32 %v113, %v466
    %v468 = vpop.f32.mrf.mxu0
    %v469 = vadd.f32 %v113, %v468
    %470 = vmatmul.bf16.gmra.mxu0 %v133
    %v471 = vpop.f32.mrf.mxu0
    %v472 = vadd.f32 %v113, %v471
    %v473 = vpop.f32.mrf.mxu0
    %v474 = vadd.f32 %v113, %v473
    %475 = vmatmul.bf16.gmra.mxu0 %v136
    %v476 = vpop.f32.mrf.mxu0
    %v477 = vadd.f32 %v113, %v476
    %v478 = vpop.f32.mrf.mxu0
    %v479 = vadd.f32 %v113, %v478
    %480 = vmatmul.bf16.gmra.mxu0 %v139
    %v481 = vpop.f32.mrf.mxu0
    %v482 = vadd.f32 %v113, %v481
    %v483 = vpop.f32.mrf.mxu0
    %v484 = vadd.f32 %v113, %v483
    %485 = vmatmul.bf16.gmra.mxu0 %v142
    %v486 = vpop.f32.mrf.mxu0
    %v487 = vadd.f32 %v113, %v486
    %v488 = vpop.f32.mrf.mxu0
    %v489 = vadd.f32 %v113, %v488
    %490 = vmatmul.bf16.gmra.mxu0 %v145
    %v491 = vpop.f32.mrf.mxu0
    %v492 = vadd.f32 %v113, %v491
    %v493 = vpop.f32.mrf.mxu0
    %v494 = vadd.f32 %v113, %v493
    %495 = vmatmul.bf16.gmra.mxu0 %v148
    %v496 = vpop.f32.mrf.mxu0
    %v497 = vadd.f32 %v113, %v496
    %v498 = vpop.f32.mrf.mxu0
    %v499 = vadd.f32 %v113, %v498
    %500 = vmatmul.bf16.gmra.mxu0 %v151
    %v501 = vpop.f32.mrf.mxu0
    %v502 = vadd.f32 %v113, %v501
    %v503 = vpop.f32.mrf.mxu0
    %v504 = vadd.f32 %v113, %v503
    %505 = vmatmul.bf16.gmra.mxu0 %v154
    %v506 = vpop.f32.mrf.mxu0
    %v507 = vadd.f32 %v113, %v506
    %v508 = vpop.f32.mrf.mxu0
    %v509 = vadd.f32 %v113, %v508
    %510 = vmatmul.bf16.gmra.mxu0 %v157
    %v511 = vpop.f32.mrf.mxu0
    %v512 = vadd.f32 %v113, %v511
    %v513 = vpop.f32.mrf.mxu0
    %v514 = vadd.f32 %v113, %v513
    %515 = vmatmul.bf16.gmra.mxu0 %v160
    %v516 = vpop.f32.mrf.mxu0
    %v517 = vadd.f32 %v113, %v516
    %v518 = vpop.f32.mrf.mxu0
    %v519 = vadd.f32 %v113, %v518
    %520 = vmatmul.bf16.gmra.mxu0 %v163
    %v521 = vpop.f32.mrf.mxu0
    %v522 = vadd.f32 %v113, %v521
    %v523 = vpop.f32.mrf.mxu0
    %v524 = vadd.f32 %v113, %v523
    %525 = vmatmul.bf16.gmra.mxu0 %v166
    %v526 = vpop.f32.mrf.mxu0
    %v527 = vadd.f32 %v113, %v526
    %v528 = vpop.f32.mrf.mxu0
    %v529 = vadd.f32 %v113, %v528
    %530 = vmatmul.bf16.gmra.mxu0 %v169
    %v531 = vpop.f32.mrf.mxu0
    %v532 = vadd.f32 %v113, %v531
    %v533 = vpop.f32.mrf.mxu0
    %v534 = vadd.f32 %v113, %v533
    %535 = vmatmul.bf16.gmra.mxu0 %v172
    %v536 = vpop.f32.mrf.mxu0
    %v537 = vadd.f32 %v113, %v536
    %v538 = vpop.f32.mrf.mxu0
    %v539 = vadd.f32 %v113, %v538
    %540 = vmatmul.bf16.gmra.mxu0 %v175
    %v541 = vpop.f32.mrf.mxu0
    %v542 = vadd.f32 %v113, %v541
    %v543 = vpop.f32.mrf.mxu0
    %v544 = vadd.f32 %v113, %v543
    %545 = vdwg.mxu0
    %v546 = vmax.f32 %v200, 0.0
    %v547 = vmax.f32 %v289, 0.0
    %v548 = vmax.f32 %v378, 0.0
    %v549 = vmax.f32 %v467, 0.0
    %v550 = vmax.f32 %v202, 0.0
    %v551 = vmax.f32 %v291, 0.0
    %v552 = vmax.f32 %v380, 0.0
    %v553 = vmax.f32 %v469, 0.0
    %v554 = vmax.f32 %v205, 0.0
    %v555 = vmax.f32 %v294, 0.0
    %v556 = vmax.f32 %v383, 0.0
    %v557 = vmax.f32 %v472, 0.0
    %v558 = vmax.f32 %v207, 0.0
    %v559 = vmax.f32 %v296, 0.0
    %v560 = vmax.f32 %v385, 0.0
    %v561 = vmax.f32 %v474, 0.0
    %v562 = vmax.f32 %v210, 0.0
    %v563 = vmax.f32 %v299, 0.0
    %v564 = vmax.f32 %v388, 0.0
    %v565 = vmax.f32 %v477, 0.0
    %v566 = vmax.f32 %v212, 0.0
    %v567 = vmax.f32 %v301, 0.0
    %v568 = vmax.f32 %v390, 0.0
    %v569 = vmax.f32 %v479, 0.0
    %v570 = vmax.f32 %v215, 0.0
    %v571 = vmax.f32 %v304, 0.0
    %v572 = vmax.f32 %v393, 0.0
    %v573 = vmax.f32 %v482, 0.0
    %v574 = vmax.f32 %v217, 0.0
    %v575 = vmax.f32 %v306, 0.0
    %v576 = vmax.f32 %v395, 0.0
    %v577 = vmax.f32 %v484, 0.0
    %v578 = vmax.f32 %v220, 0.0
    %v579 = vmax.f32 %v309, 0.0
    %v580 = vmax.f32 %v398, 0.0
    %v581 = vmax.f32 %v487, 0.0
    %v582 = vmax.f32 %v222, 0.0
    %v583 = vmax.f32 %v311, 0.0
    %v584 = vmax.f32 %v400, 0.0
    %v585 = vmax.f32 %v489, 0.0
    %v586 = vmax.f32 %v225, 0.0
    %v587 = vmax.f32 %v314, 0.0
    %v588 = vmax.f32 %v403, 0.0
    %v589 = vmax.f32 %v492, 0.0
    %v590 = vmax.f32 %v227, 0.0
    %v591 = vmax.f32 %v316, 0.0
    %v592 = vmax.f32 %v405, 0.0
    %v593 = vmax.f32 %v494, 0.0
    %v594 = vmax.f32 %v230, 0.0
    %v595 = vmax.f32 %v319, 0.0
    %v596 = vmax.f32 %v408, 0.0
    %v597 = vmax.f32 %v497, 0.0
    %v598 = vmax.f32 %v232, 0.0
    %v599 = vmax.f32 %v321, 0.0
    %v600 = vmax.f32 %v410, 0.0
    %v601 = vmax.f32 %v499, 0.0
    %v602 = vmax.f32 %v235, 0.0
    %v603 = vmax.f32 %v324, 0.0
    %v604 = vmax.f32 %v413, 0.0
    %v605 = vmax.f32 %v502, 0.0
    %v606 = vmax.f32 %v237, 0.0
    %v607 = vmax.f32 %v326, 0.0
    %v608 = vmax.f32 %v415, 0.0
    %v609 = vmax.f32 %v504, 0.0
    %v610 = vmax.f32 %v240, 0.0
    %v611 = vmax.f32 %v329, 0.0
    %v612 = vmax.f32 %v418, 0.0
    %v613 = vmax.f32 %v507, 0.0
    %v614 = vmax.f32 %v242, 0.0
    %v615 = vmax.f32 %v331, 0.0
    %v616 = vmax.f32 %v420, 0.0
    %v617 = vmax.f32 %v509, 0.0
    %v618 = vmax.f32 %v245, 0.0
    %v619 = vmax.f32 %v334, 0.0
    %v620 = vmax.f32 %v423, 0.0
    %v621 = vmax.f32 %v512, 0.0
    %v622 = vmax.f32 %v247, 0.0
    %v623 = vmax.f32 %v336, 0.0
    %v624 = vmax.f32 %v425, 0.0
    %v625 = vmax.f32 %v514, 0.0
    %v626 = vmax.f32 %v250, 0.0
    %v627 = vmax.f32 %v339, 0.0
    %v628 = vmax.f32 %v428, 0.0
    %v629 = vmax.f32 %v517, 0.0
    %v630 = vmax.f32 %v252, 0.0
    %v631 = vmax.f32 %v341, 0.0
    %v632 = vmax.f32 %v430, 0.0
    %v633 = vmax.f32 %v519, 0.0
    %v634 = vmax.f32 %v255, 0.0
    %v635 = vmax.f32 %v344, 0.0
    %v636 = vmax.f32 %v433, 0.0
    %v637 = vmax.f32 %v522, 0.0
    %v638 = vmax.f32 %v257, 0.0
    %v639 = vmax.f32 %v346, 0.0
    %v640 = vmax.f32 %v435, 0.0
    %v641 = vmax.f32 %v524, 0.0
    %v642 = vmax.f32 %v260, 0.0
    %v643 = vmax.f32 %v349, 0.0
    %v644 = vmax.f32 %v438, 0.0
    %v645 = vmax.f32 %v527, 0.0
    %v646 = vmax.f32 %v262, 0.0
    %v647 = vmax.f32 %v351, 0.0
    %v648 = vmax.f32 %v440, 0.0
    %v649 = vmax.f32 %v529, 0.0
    %v650 = vmax.f32 %v265, 0.0
    %v651 = vmax.f32 %v354, 0.0
    %v652 = vmax.f32 %v443, 0.0
    %v653 = vmax.f32 %v532, 0.0
    %v654 = vmax.f32 %v267, 0.0
    %v655 = vmax.f32 %v356, 0.0
    %v656 = vmax.f32 %v445, 0.0
    %v657 = vmax.f32 %v534, 0.0
    %v658 = vmax.f32 %v270, 0.0
    %v659 = vmax.f32 %v359, 0.0
    %v660 = vmax.f32 %v448, 0.0
    %v661 = vmax.f32 %v537, 0.0
    %v662 = vmax.f32 %v272, 0.0
    %v663 = vmax.f32 %v361, 0.0
    %v664 = vmax.f32 %v450, 0.0
    %v665 = vmax.f32 %v539, 0.0
    %v666 = vmax.f32 %v275, 0.0
    %v667 = vmax.f32 %v364, 0.0
    %v668 = vmax.f32 %v453, 0.0
    %v669 = vmax.f32 %v542, 0.0
    %v670 = vmax.f32 %v277, 0.0
    %v671 = vmax.f32 %v366, 0.0
    %v672 = vmax.f32 %v455, 0.0
    %v673 = vmax.f32 %v544, 0.0
    %v674 = vpack.c.bf16 %v550, %v546
    %v675 = vpack.c.bf16 %v551, %v547
    %v676 = vpack.c.bf16 %v552, %v548
    %v677 = vpack.c.bf16 %v553, %v549
    %v678 = vpack.c.bf16 %v558, %v554
    %v679 = vpack.c.bf16 %v559, %v555
    %v680 = vpack.c.bf16 %v560, %v556
    %v681 = vpack.c.bf16 %v561, %v557
    %v682 = vpack.c.bf16 %v566, %v562
    %v683 = vpack.c.bf16 %v567, %v563
    %v684 = vpack.c.bf16 %v568, %v564
    %v685 = vpack.c.bf16 %v569, %v565
    %v686 = vpack.c.bf16 %v574, %v570
    %v687 = vpack.c.bf16 %v575, %v571
    %v688 = vpack.c.bf16 %v576, %v572
    %v689 = vpack.c.bf16 %v577, %v573
    %v690 = vpack.c.bf16 %v582, %v578
    %v691 = vpack.c.bf16 %v583, %v579
    %v692 = vpack.c.bf16 %v584, %v580
    %v693 = vpack.c.bf16 %v585, %v581
    %v694 = vpack.c.bf16 %v590, %v586
    %v695 = vpack.c.bf16 %v591, %v587
    %v696 = vpack.c.bf16 %v592, %v588
    %v697 = vpack.c.bf16 %v593, %v589
    %v698 = vpack.c.bf16 %v598, %v594
    %v699 = vpack.c.bf16 %v599, %v595
    %v700 = vpack.c.bf16 %v600, %v596
    %v701 = vpack.c.bf16 %v601, %v597
    %v702 = vpack.c.bf16 %v606, %v602
    %v703 = vpack.c.bf16 %v607, %v603
    %v704 = vpack.c.bf16 %v608, %v604
    %v705 = vpack.c.bf16 %v609, %v605
    %v706 = vpack.c.bf16 %v614, %v610
    %v707 = vpack.c.bf16 %v615, %v611
    %v708 = vpack.c.bf16 %v616, %v612
    %v709 = vpack.c.bf16 %v617, %v613
    %v710 = vpack.c.bf16 %v622, %v618
    %v711 = vpack.c.bf16 %v623, %v619
    %v712 = vpack.c.bf16 %v624, %v620
    %v713 = vpack.c.bf16 %v625, %v621
    %v714 = vpack.c.bf16 %v630, %v626
    %v715 = vpack.c.bf16 %v631, %v627
    %v716 = vpack.c.bf16 %v632, %v628
    %v717 = vpack.c.bf16 %v633, %v629
    %v718 = vpack.c.bf16 %v638, %v634
    %v719 = vpack.c.bf16 %v639, %v635
    %v720 = vpack.c.bf16 %v640, %v636
    %v721 = vpack.c.bf16 %v641, %v637
    %v722 = vpack.c.bf16 %v646, %v642
    %v723 = vpack.c.bf16 %v647, %v643
    %v724 = vpack.c.bf16 %v648, %v644
    %v725 = vpack.c.bf16 %v649, %v645
    %v726 = vpack.c.bf16 %v654, %v650
    %v727 = vpack.c.bf16 %v655, %v651
    %v728 = vpack.c.bf16 %v656, %v652
    %v729 = vpack.c.bf16 %v657, %v653
    %v730 = vpack.c.bf16 %v662, %v658
    %v731 = vpack.c.bf16 %v663, %v659
    %v732 = vpack.c.bf16 %v664, %v660
    %v733 = vpack.c.bf16 %v665, %v661
    %v734 = vpack.c.bf16 %v670, %v666
    %v735 = vpack.c.bf16 %v671, %v667
    %v736 = vpack.c.bf16 %v672, %v668
    %v737 = vpack.c.bf16 %v673, %v669
    %v738 = vld [vmem:[#allocation2] sm:$0xff]
    %v739 = vld [vmem:[#allocation2 + $0x8] sm:$0xff]
    %v740 = vld [vmem:[#allocation2 + $0x10] sm:$0xff]
    %v741 = vld [vmem:[#allocation2 + $0x18] sm:$0xff]
    %v742 = vld [vmem:[#allocation2 + $0x20] sm:$0xff]
    %v743 = vld [vmem:[#allocation2 + $0x28] sm:$0xff]
    %v744 = vld [vmem:[#allocation2 + $0x30] sm:$0xff]
    %v745 = vld [vmem:[#allocation2 + $0x38] sm:$0xff]
    %v746 = vld [vmem:[#allocation2 + $0x40] sm:$0xff]
    %v747 = vld [vmem:[#allocation2 + $0x48] sm:$0xff]
    %v748 = vld [vmem:[#allocation2 + $0x50] sm:$0xff]
    %v749 = vld [vmem:[#allocation2 + $0x58] sm:$0xff]
    %v750 = vld [vmem:[#allocation2 + $0x60] sm:$0xff]
    %v751 = vld [vmem:[#allocation2 + $0x68] sm:$0xff]
    %v752 = vld [vmem:[#allocation2 + $0x70] sm:$0xff]
    %v753 = vld [vmem:[#allocation2 + $0x78] sm:$0xff]
    %v754 = vld [vmem:[#allocation2 + $0x80] sm:$0xff]
    %v755 = vld [vmem:[#allocation2 + $0x88] sm:$0xff]
    %v756 = vld [vmem:[#allocation2 + $0x90] sm:$0xff]
    %v757 = vld [vmem:[#allocation2 + $0x98] sm:$0xff]
    %v758 = vld [vmem:[#allocation2 + $0xa0] sm:$0xff]
    %v759 = vld [vmem:[#allocation2 + $0xa8] sm:$0xff]
    %v760 = vld [vmem:[#allocation2 + $0xb0] sm:$0xff]
    %v761 = vld [vmem:[#allocation2 + $0xb8] sm:$0xff]
    %v762 = vld [vmem:[#allocation2 + $0xc0] sm:$0xff]
    %v763 = vld [vmem:[#allocation2 + $0xc8] sm:$0xff]
    %v764 = vld [vmem:[#allocation2 + $0xd0] sm:$0xff]
    %v765 = vld [vmem:[#allocation2 + $0xd8] sm:$0xff]
    %v766 = vld [vmem:[#allocation2 + $0xe0] sm:$0xff]
    %v767 = vld [vmem:[#allocation2 + $0xe8] sm:$0xff]
    %v768 = vld [vmem:[#allocation2 + $0xf0] sm:$0xff]
    %v769 = vld [vmem:[#allocation2 + $0xf8] sm:$0xff]
    %v770 = vld [vmem:[#allocation2 + $0x100] sm:$0xff]
    %v771 = vld [vmem:[#allocation2 + $0x108] sm:$0xff]
    %v772 = vld [vmem:[#allocation2 + $0x110] sm:$0xff]
    %v773 = vld [vmem:[#allocation2 + $0x118] sm:$0xff]
    %v774 = vld [vmem:[#allocation2 + $0x120] sm:$0xff]
    %v775 = vld [vmem:[#allocation2 + $0x128] sm:$0xff]
    %v776 = vld [vmem:[#allocation2 + $0x130] sm:$0xff]
    %v777 = vld [vmem:[#allocation2 + $0x138] sm:$0xff]
    %v778 = vld [vmem:[#allocation2 + $0x140] sm:$0xff]
    %v779 = vld [vmem:[#allocation2 + $0x148] sm:$0xff]
    %v780 = vld [vmem:[#allocation2 + $0x150] sm:$0xff]
    %v781 = vld [vmem:[#allocation2 + $0x158] sm:$0xff]
    %v782 = vld [vmem:[#allocation2 + $0x160] sm:$0xff]
    %v783 = vld [vmem:[#allocation2 + $0x168] sm:$0xff]
    %v784 = vld [vmem:[#allocation2 + $0x170] sm:$0xff]
    %v785 = vld [vmem:[#allocation2 + $0x178] sm:$0xff]
    %v786 = vld [vmem:[#allocation2 + $0x180] sm:$0xff]
    %v787 = vld [vmem:[#allocation2 + $0x188] sm:$0xff]
    %v788 = vld [vmem:[#allocation2 + $0x190] sm:$0xff]
    %v789 = vld [vmem:[#allocation2 + $0x198] sm:$0xff]
    %v790 = vld [vmem:[#allocation2 + $0x1a0] sm:$0xff]
    %v791 = vld [vmem:[#allocation2 + $0x1a8] sm:$0xff]
    %v792 = vld [vmem:[#allocation2 + $0x1b0] sm:$0xff]
    %v793 = vld [vmem:[#allocation2 + $0x1b8] sm:$0xff]
    %v794 = vld [vmem:[#allocation2 + $0x1c0] sm:$0xff]
    %v795 = vld [vmem:[#allocation2 + $0x1c8] sm:$0xff]
    %v796 = vld [vmem:[#allocation2 + $0x1d0] sm:$0xff]
    %v797 = vld [vmem:[#allocation2 + $0x1d8] sm:$0xff]
    %v798 = vld [vmem:[#allocation2 + $0x1e0] sm:$0xff]
    %v799 = vld [vmem:[#allocation2 + $0x1e8] sm:$0xff]
    %v800 = vld [vmem:[#allocation2 + $0x1f0] sm:$0xff]
    %v801 = vld [vmem:[#allocation2 + $0x1f8] sm:$0xff]
    %v802 = vld [vmem:[#allocation2 + $0x200] sm:$0xff]
    %v803 = vld [vmem:[#allocation2 + $0x208] sm:$0xff]
    %v804 = vld [vmem:[#allocation2 + $0x210] sm:$0xff]
    %v805 = vld [vmem:[#allocation2 + $0x218] sm:$0xff]
    %v806 = vld [vmem:[#allocation2 + $0x220] sm:$0xff]
    %v807 = vld [vmem:[#allocation2 + $0x228] sm:$0xff]
    %v808 = vld [vmem:[#allocation2 + $0x230] sm:$0xff]
    %v809 = vld [vmem:[#allocation2 + $0x238] sm:$0xff]
    %v810 = vld [vmem:[#allocation2 + $0x240] sm:$0xff]
    %v811 = vld [vmem:[#allocation2 + $0x248] sm:$0xff]
    %v812 = vld [vmem:[#allocation2 + $0x250] sm:$0xff]
    %v813 = vld [vmem:[#allocation2 + $0x258] sm:$0xff]
    %v814 = vld [vmem:[#allocation2 + $0x260] sm:$0xff]
    %v815 = vld [vmem:[#allocation2 + $0x268] sm:$0xff]
    %v816 = vld [vmem:[#allocation2 + $0x270] sm:$0xff]
    %v817 = vld [vmem:[#allocation2 + $0x278] sm:$0xff]
    %v818 = vld [vmem:[#allocation2 + $0x280] sm:$0xff]
    %v819 = vld [vmem:[#allocation2 + $0x288] sm:$0xff]
    %v820 = vld [vmem:[#allocation2 + $0x290] sm:$0xff]
    %v821 = vld [vmem:[#allocation2 + $0x298] sm:$0xff]
    %v822 = vld [vmem:[#allocation2 + $0x2a0] sm:$0xff]
    %v823 = vld [vmem:[#allocation2 + $0x2a8] sm:$0xff]
    %v824 = vld [vmem:[#allocation2 + $0x2b0] sm:$0xff]
    %v825 = vld [vmem:[#allocation2 + $0x2b8] sm:$0xff]
    %v826 = vld [vmem:[#allocation2 + $0x2c0] sm:$0xff]
    %v827 = vld [vmem:[#allocation2 + $0x2c8] sm:$0xff]
    %v828 = vld [vmem:[#allocation2 + $0x2d0] sm:$0xff]
    %v829 = vld [vmem:[#allocation2 + $0x2d8] sm:$0xff]
    %v830 = vld [vmem:[#allocation2 + $0x2e0] sm:$0xff]
    %v831 = vld [vmem:[#allocation2 + $0x2e8] sm:$0xff]
    %v832 = vld [vmem:[#allocation2 + $0x2f0] sm:$0xff]
    %v833 = vld [vmem:[#allocation2 + $0x2f8] sm:$0xff]
    %v834 = vld [vmem:[#allocation2 + $0x300] sm:$0xff]
    %v835 = vld [vmem:[#allocation2 + $0x308] sm:$0xff]
    %v836 = vld [vmem:[#allocation2 + $0x310] sm:$0xff]
    %v837 = vld [vmem:[#allocation2 + $0x318] sm:$0xff]
    %v838 = vld [vmem:[#allocation2 + $0x320] sm:$0xff]
    %v839 = vld [vmem:[#allocation2 + $0x328] sm:$0xff]
    %v840 = vld [vmem:[#allocation2 + $0x330] sm:$0xff]
    %v841 = vld [vmem:[#allocation2 + $0x338] sm:$0xff]
    %v842 = vld [vmem:[#allocation2 + $0x340] sm:$0xff]
    %v843 = vld [vmem:[#allocation2 + $0x348] sm:$0xff]
    %v844 = vld [vmem:[#allocation2 + $0x350] sm:$0xff]
    %v845 = vld [vmem:[#allocation2 + $0x358] sm:$0xff]
    %v846 = vld [vmem:[#allocation2 + $0x360] sm:$0xff]
    %v847 = vld [vmem:[#allocation2 + $0x368] sm:$0xff]
    %v848 = vld [vmem:[#allocation2 + $0x370] sm:$0xff]
    %v849 = vld [vmem:[#allocation2 + $0x378] sm:$0xff]
    %v850 = vld [vmem:[#allocation2 + $0x380] sm:$0xff]
    %v851 = vld [vmem:[#allocation2 + $0x388] sm:$0xff]
    %v852 = vld [vmem:[#allocation2 + $0x390] sm:$0xff]
    %v853 = vld [vmem:[#allocation2 + $0x398] sm:$0xff]
    %v854 = vld [vmem:[#allocation2 + $0x3a0] sm:$0xff]
    %v855 = vld [vmem:[#allocation2 + $0x3a8] sm:$0xff]
    %v856 = vld [vmem:[#allocation2 + $0x3b0] sm:$0xff]
    %v857 = vld [vmem:[#allocation2 + $0x3b8] sm:$0xff]
    %v858 = vld [vmem:[#allocation2 + $0x3c0] sm:$0xff]
    %v859 = vld [vmem:[#allocation2 + $0x3c8] sm:$0xff]
    %v860 = vld [vmem:[#allocation2 + $0x3d0] sm:$0xff]
    %v861 = vld [vmem:[#allocation2 + $0x3d8] sm:$0xff]
    %v862 = vld [vmem:[#allocation2 + $0x3e0] sm:$0xff]
    %v863 = vld [vmem:[#allocation2 + $0x3e8] sm:$0xff]
    %v864 = vld [vmem:[#allocation2 + $0x3f0] sm:$0xff]
    %v865 = vld [vmem:[#allocation2 + $0x3f8] sm:$0xff]
    %v866 = vld [vmem:[#allocation5] sm:$0xf]
    %v868 = vperm.slane %v866, 0
    %v869 = vperm.slane %v866, 1
    %v870 = vperm.slane %v866, 2
    %v871 = vperm.slane %v866, 3
    %v1004 = vunpack.c.l.b16 %v738
    %v1005 = vunpack.c.h.b16 %v738
    %v1006 = vunpack.c.l.b16 %v739
    %v1007 = vunpack.c.h.b16 %v739
    %v1008 = vunpack.c.l.b16 %v740
    %v1009 = vunpack.c.h.b16 %v740
    %v1010 = vunpack.c.l.b16 %v741
    %v1011 = vunpack.c.h.b16 %v741
    %v1012 = vunpack.c.l.b16 %v742
    %v1013 = vunpack.c.h.b16 %v742
    %v1014 = vunpack.c.l.b16 %v743
    %v1015 = vunpack.c.h.b16 %v743
    %v1016 = vunpack.c.l.b16 %v744
    %v1017 = vunpack.c.h.b16 %v744
    %v1018 = vunpack.c.l.b16 %v745
    %v1019 = vunpack.c.h.b16 %v745
    %v1020 = vunpack.c.l.b16 %v746
    %v1021 = vunpack.c.h.b16 %v746
    %v1022 = vunpack.c.l.b16 %v747
    %v1023 = vunpack.c.h.b16 %v747
    %v1024 = vunpack.c.l.b16 %v748
    %v1025 = vunpack.c.h.b16 %v748
    %v1026 = vunpack.c.l.b16 %v749
    %v1027 = vunpack.c.h.b16 %v749
    %v1028 = vunpack.c.l.b16 %v750
    %v1029 = vunpack.c.h.b16 %v750
    %v1030 = vunpack.c.l.b16 %v751
    %v1031 = vunpack.c.h.b16 %v751
    %v1032 = vunpack.c.l.b16 %v752
    %v1033 = vunpack.c.h.b16 %v752
    %v1034 = vunpack.c.l.b16 %v753
    %v1035 = vunpack.c.h.b16 %v753
    %v1036 = vunpack.c.l.b16 %v754
    %v1037 = vunpack.c.h.b16 %v754
    %v1038 = vunpack.c.l.b16 %v755
    %v1039 = vunpack.c.h.b16 %v755
    %v1040 = vunpack.c.l.b16 %v756
    %v1041 = vunpack.c.h.b16 %v756
    %v1042 = vunpack.c.l.b16 %v757
    %v1043 = vunpack.c.h.b16 %v757
    %v1044 = vunpack.c.l.b16 %v758
    %v1045 = vunpack.c.h.b16 %v758
    %v1046 = vunpack.c.l.b16 %v759
    %v1047 = vunpack.c.h.b16 %v759
    %v1048 = vunpack.c.l.b16 %v760
    %v1049 = vunpack.c.h.b16 %v760
    %v1050 = vunpack.c.l.b16 %v761
    %v1051 = vunpack.c.h.b16 %v761
    %v1052 = vunpack.c.l.b16 %v762
    %v1053 = vunpack.c.h.b16 %v762
    %v1054 = vunpack.c.l.b16 %v763
    %v1055 = vunpack.c.h.b16 %v763
    %v1056 = vunpack.c.l.b16 %v764
    %v1057 = vunpack.c.h.b16 %v764
    %v1058 = vunpack.c.l.b16 %v765
    %v1059 = vunpack.c.h.b16 %v765
    %v1060 = vunpack.c.l.b16 %v766
    %v1061 = vunpack.c.h.b16 %v766
    %v1062 = vunpack.c.l.b16 %v767
    %v1063 = vunpack.c.h.b16 %v767
    %v1064 = vunpack.c.l.b16 %v768
    %v1065 = vunpack.c.h.b16 %v768
    %v1066 = vunpack.c.l.b16 %v769
    %v1067 = vunpack.c.h.b16 %v769
    %v1068 = vunpack.c.l.b16 %v770
    %v1069 = vunpack.c.h.b16 %v770
    %v1070 = vunpack.c.l.b16 %v771
    %v1071 = vunpack.c.h.b16 %v771
    %v1072 = vunpack.c.l.b16 %v772
    %v1073 = vunpack.c.h.b16 %v772
    %v1074 = vunpack.c.l.b16 %v773
    %v1075 = vunpack.c.h.b16 %v773
    %v1076 = vunpack.c.l.b16 %v774
    %v1077 = vunpack.c.h.b16 %v774
    %v1078 = vunpack.c.l.b16 %v775
    %v1079 = vunpack.c.h.b16 %v775
    %v1080 = vunpack.c.l.b16 %v776
    %v1081 = vunpack.c.h.b16 %v776
    %v1082 = vunpack.c.l.b16 %v777
    %v1083 = vunpack.c.h.b16 %v777
    %v1084 = vunpack.c.l.b16 %v778
    %v1085 = vunpack.c.h.b16 %v778
    %v1086 = vunpack.c.l.b16 %v779
    %v1087 = vunpack.c.h.b16 %v779
    %v1088 = vunpack.c.l.b16 %v780
    %v1089 = vunpack.c.h.b16 %v780
    %v1090 = vunpack.c.l.b16 %v781
    %v1091 = vunpack.c.h.b16 %v781
    %v1092 = vunpack.c.l.b16 %v782
    %v1093 = vunpack.c.h.b16 %v782
    %v1094 = vunpack.c.l.b16 %v783
    %v1095 = vunpack.c.h.b16 %v783
    %v1096 = vunpack.c.l.b16 %v784
    %v1097 = vunpack.c.h.b16 %v784
    %v1098 = vunpack.c.l.b16 %v785
    %v1099 = vunpack.c.h.b16 %v785
    %v1100 = vunpack.c.l.b16 %v786
    %v1101 = vunpack.c.h.b16 %v786
    %v1102 = vunpack.c.l.b16 %v787
    %v1103 = vunpack.c.h.b16 %v787
    %v1104 = vunpack.c.l.b16 %v788
    %v1105 = vunpack.c.h.b16 %v788
    %v1106 = vunpack.c.l.b16 %v789
    %v1107 = vunpack.c.h.b16 %v789
    %v1108 = vunpack.c.l.b16 %v790
    %v1109 = vunpack.c.h.b16 %v790
    %v1110 = vunpack.c.l.b16 %v791
    %v1111 = vunpack.c.h.b16 %v791
    %v1112 = vunpack.c.l.b16 %v792
    %v1113 = vunpack.c.h.b16 %v792
    %v1114 = vunpack.c.l.b16 %v793
    %v1115 = vunpack.c.h.b16 %v793
    %v1116 = vunpack.c.l.b16 %v794
    %v1117 = vunpack.c.h.b16 %v794
    %v1118 = vunpack.c.l.b16 %v795
    %v1119 = vunpack.c.h.b16 %v795
    %v1120 = vunpack.c.l.b16 %v796
    %v1121 = vunpack.c.h.b16 %v796
    %v1122 = vunpack.c.l.b16 %v797
    %v1123 = vunpack.c.h.b16 %v797
    %v1124 = vunpack.c.l.b16 %v798
    %v1125 = vunpack.c.h.b16 %v798
    %v1126 = vunpack.c.l.b16 %v799
    %v1127 = vunpack.c.h.b16 %v799
    %v1128 = vunpack.c.l.b16 %v800
    %v1129 = vunpack.c.h.b16 %v800
    %v1130 = vunpack.c.l.b16 %v801
    %v1131 = vunpack.c.h.b16 %v801
    %v1132 = vunpack.c.l.b16 %v802
    %v1133 = vunpack.c.h.b16 %v802
    %v1134 = vunpack.c.l.b16 %v803
    %v1135 = vunpack.c.h.b16 %v803
    %v1136 = vunpack.c.l.b16 %v804
    %v1137 = vunpack.c.h.b16 %v804
    %v1138 = vunpack.c.l.b16 %v805
    %v1139 = vunpack.c.h.b16 %v805
    %v1140 = vunpack.c.l.b16 %v806
    %v1141 = vunpack.c.h.b16 %v806
    %v1142 = vunpack.c.l.b16 %v807
    %v1143 = vunpack.c.h.b16 %v807
    %v1144 = vunpack.c.l.b16 %v808
    %v1145 = vunpack.c.h.b16 %v808
    %v1146 = vunpack.c.l.b16 %v809
    %v1147 = vunpack.c.h.b16 %v809
    %v1148 = vunpack.c.l.b16 %v810
    %v1149 = vunpack.c.h.b16 %v810
    %v1150 = vunpack.c.l.b16 %v811
    %v1151 = vunpack.c.h.b16 %v811
    %v1152 = vunpack.c.l.b16 %v812
    %v1153 = vunpack.c.h.b16 %v812
    %v1154 = vunpack.c.l.b16 %v813
    %v1155 = vunpack.c.h.b16 %v813
    %v1156 = vunpack.c.l.b16 %v814
    %v1157 = vunpack.c.h.b16 %v814
    %v1158 = vunpack.c.l.b16 %v815
    %v1159 = vunpack.c.h.b16 %v815
    %v1160 = vunpack.c.l.b16 %v816
    %v1161 = vunpack.c.h.b16 %v816
    %v1162 = vunpack.c.l.b16 %v817
    %v1163 = vunpack.c.h.b16 %v817
    %v1164 = vunpack.c.l.b16 %v818
    %v1165 = vunpack.c.h.b16 %v818
    %v1166 = vunpack.c.l.b16 %v819
    %v1167 = vunpack.c.h.b16 %v819
    %v1168 = vunpack.c.l.b16 %v820
    %v1169 = vunpack.c.h.b16 %v820
    %v1170 = vunpack.c.l.b16 %v821
    %v1171 = vunpack.c.h.b16 %v821
    %v1172 = vunpack.c.l.b16 %v822
    %v1173 = vunpack.c.h.b16 %v822
    %v1174 = vunpack.c.l.b16 %v823
    %v1175 = vunpack.c.h.b16 %v823
    %v1176 = vunpack.c.l.b16 %v824
    %v1177 = vunpack.c.h.b16 %v824
    %v1178 = vunpack.c.l.b16 %v825
    %v1179 = vunpack.c.h.b16 %v825
    %v1180 = vunpack.c.l.b16 %v826
    %v1181 = vunpack.c.h.b16 %v826
    %v1182 = vunpack.c.l.b16 %v827
    %v1183 = vunpack.c.h.b16 %v827
    %v1184 = vunpack.c.l.b16 %v828
    %v1185 = vunpack.c.h.b16 %v828
    %v1186 = vunpack.c.l.b16 %v829
    %v1187 = vunpack.c.h.b16 %v829
    %v1188 = vunpack.c.l.b16 %v830
    %v1189 = vunpack.c.h.b16 %v830
    %v1190 = vunpack.c.l.b16 %v831
    %v1191 = vunpack.c.h.b16 %v831
    %v1192 = vunpack.c.l.b16 %v832
    %v1193 = vunpack.c.h.b16 %v832
    %v1194 = vunpack.c.l.b16 %v833
    %v1195 = vunpack.c.h.b16 %v833
    %v1196 = vunpack.c.l.b16 %v834
    %v1197 = vunpack.c.h.b16 %v834
    %v1198 = vunpack.c.l.b16 %v835
    %v1199 = vunpack.c.h.b16 %v835
    %v1200 = vunpack.c.l.b16 %v836
    %v1201 = vunpack.c.h.b16 %v836
    %v1202 = vunpack.c.l.b16 %v837
    %v1203 = vunpack.c.h.b16 %v837
    %v1204 = vunpack.c.l.b16 %v838
    %v1205 = vunpack.c.h.b16 %v838
    %v1206 = vunpack.c.l.b16 %v839
    %v1207 = vunpack.c.h.b16 %v839
    %v1208 = vunpack.c.l.b16 %v840
    %v1209 = vunpack.c.h.b16 %v840
    %v1210 = vunpack.c.l.b16 %v841
    %v1211 = vunpack.c.h.b16 %v841
    %v1212 = vunpack.c.l.b16 %v842
    %v1213 = vunpack.c.h.b16 %v842
    %v1214 = vunpack.c.l.b16 %v843
    %v1215 = vunpack.c.h.b16 %v843
    %v1216 = vunpack.c.l.b16 %v844
    %v1217 = vunpack.c.h.b16 %v844
    %v1218 = vunpack.c.l.b16 %v845
    %v1219 = vunpack.c.h.b16 %v845
    %v1220 = vunpack.c.l.b16 %v846
    %v1221 = vunpack.c.h.b16 %v846
    %v1222 = vunpack.c.l.b16 %v847
    %v1223 = vunpack.c.h.b16 %v847
    %v1224 = vunpack.c.l.b16 %v848
    %v1225 = vunpack.c.h.b16 %v848
    %v1226 = vunpack.c.l.b16 %v849
    %v1227 = vunpack.c.h.b16 %v849
    %v1228 = vunpack.c.l.b16 %v850
    %v1229 = vunpack.c.h.b16 %v850
    %v1230 = vunpack.c.l.b16 %v851
    %v1231 = vunpack.c.h.b16 %v851
    %v1232 = vunpack.c.l.b16 %v852
    %v1233 = vunpack.c.h.b16 %v852
    %v1234 = vunpack.c.l.b16 %v853
    %v1235 = vunpack.c.h.b16 %v853
    %v1236 = vunpack.c.l.b16 %v854
    %v1237 = vunpack.c.h.b16 %v854
    %v1238 = vunpack.c.l.b16 %v855
    %v1239 = vunpack.c.h.b16 %v855
    %v1240 = vunpack.c.l.b16 %v856
    %v1241 = vunpack.c.h.b16 %v856
    %v1242 = vunpack.c.l.b16 %v857
    %v1243 = vunpack.c.h.b16 %v857
    %v1244 = vunpack.c.l.b16 %v858
    %v1245 = vunpack.c.h.b16 %v858
    %v1246 = vunpack.c.l.b16 %v859
    %v1247 = vunpack.c.h.b16 %v859
    %v1248 = vunpack.c.l.b16 %v860
    %v1249 = vunpack.c.h.b16 %v860
    %v1250 = vunpack.c.l.b16 %v861
    %v1251 = vunpack.c.h.b16 %v861
    %v1252 = vunpack.c.l.b16 %v862
    %v1253 = vunpack.c.h.b16 %v862
    %v1254 = vunpack.c.l.b16 %v863
    %v1255 = vunpack.c.h.b16 %v863
    %v1256 = vunpack.c.l.b16 %v864
    %v1257 = vunpack.c.h.b16 %v864
    %v1258 = vunpack.c.l.b16 %v865
    %v1259 = vunpack.c.h.b16 %v865
    %v1260 = vpack.c.b16 %v1008, %v1004
    %v1261 = vpack.c.b16 %v1009, %v1005
    %v1262 = vpack.c.b16 %v1010, %v1006
    %v1263 = vpack.c.b16 %v1011, %v1007
    %v1264 = vpack.c.b16 %v1016, %v1012
    %v1265 = vpack.c.b16 %v1017, %v1013
    %v1266 = vpack.c.b16 %v1018, %v1014
    %v1267 = vpack.c.b16 %v1019, %v1015
    %v1268 = vpack.c.b16 %v1024, %v1020
    %v1269 = vpack.c.b16 %v1025, %v1021
    %v1270 = vpack.c.b16 %v1026, %v1022
    %v1271 = vpack.c.b16 %v1027, %v1023
    %v1272 = vpack.c.b16 %v1032, %v1028
    %v1273 = vpack.c.b16 %v1033, %v1029
    %v1274 = vpack.c.b16 %v1034, %v1030
    %v1275 = vpack.c.b16 %v1035, %v1031
    %v1276 = vpack.c.b16 %v1040, %v1036
    %v1277 = vpack.c.b16 %v1041, %v1037
    %v1278 = vpack.c.b16 %v1042, %v1038
    %v1279 = vpack.c.b16 %v1043, %v1039
    %v1280 = vpack.c.b16 %v1048, %v1044
    %v1281 = vpack.c.b16 %v1049, %v1045
    %v1282 = vpack.c.b16 %v1050, %v1046
    %v1283 = vpack.c.b16 %v1051, %v1047
    %v1284 = vpack.c.b16 %v1056, %v1052
    %v1285 = vpack.c.b16 %v1057, %v1053
    %v1286 = vpack.c.b16 %v1058, %v1054
    %v1287 = vpack.c.b16 %v1059, %v1055
    %v1288 = vpack.c.b16 %v1064, %v1060
    %v1289 = vpack.c.b16 %v1065, %v1061
    %v1290 = vpack.c.b16 %v1066, %v1062
    %v1291 = vpack.c.b16 %v1067, %v1063
    %v1292 = vpack.c.b16 %v1072, %v1068
    %v1293 = vpack.c.b16 %v1073, %v1069
    %v1294 = vpack.c.b16 %v1074, %v1070
    %v1295 = vpack.c.b16 %v1075, %v1071
    %v1296 = vpack.c.b16 %v1080, %v1076
    %v1297 = vpack.c.b16 %v1081, %v1077
    %v1298 = vpack.c.b16 %v1082, %v1078
    %v1299 = vpack.c.b16 %v1083, %v1079
    %v1300 = vpack.c.b16 %v1088, %v1084
    %v1301 = vpack.c.b16 %v1089, %v1085
    %v1302 = vpack.c.b16 %v1090, %v1086
    %v1303 = vpack.c.b16 %v1091, %v1087
    %v1304 = vpack.c.b16 %v1096, %v1092
    %v1305 = vpack.c.b16 %v1097, %v1093
    %v1306 = vpack.c.b16 %v1098, %v1094
    %v1307 = vpack.c.b16 %v1099, %v1095
    %v1308 = vpack.c.b16 %v1104, %v1100
    %v1309 = vpack.c.b16 %v1105, %v1101
    %v1310 = vpack.c.b16 %v1106, %v1102
    %v1311 = vpack.c.b16 %v1107, %v1103
    %v1312 = vpack.c.b16 %v1112, %v1108
    %v1313 = vpack.c.b16 %v1113, %v1109
    %v1314 = vpack.c.b16 %v1114, %v1110
    %v1315 = vpack.c.b16 %v1115, %v1111
    %v1316 = vpack.c.b16 %v1120, %v1116
    %v1317 = vpack.c.b16 %v1121, %v1117
    %v1318 = vpack.c.b16 %v1122, %v1118
    %v1319 = vpack.c.b16 %v1123, %v1119
    %v1320 = vpack.c.b16 %v1128, %v1124
    %v1321 = vpack.c.b16 %v1129, %v1125
    %v1322 = vpack.c.b16 %v1130, %v1126
    %v1323 = vpack.c.b16 %v1131, %v1127
    %v1324 = vpack.c.b16 %v1136, %v1132
    %v1325 = vpack.c.b16 %v1137, %v1133
    %v1326 = vpack.c.b16 %v1138, %v1134
    %v1327 = vpack.c.b16 %v1139, %v1135
    %v1328 = vpack.c.b16 %v1144, %v1140
    %v1329 = vpack.c.b16 %v1145, %v1141
    %v1330 = vpack.c.b16 %v1146, %v1142
    %v1331 = vpack.c.b16 %v1147, %v1143
    %v1332 = vpack.c.b16 %v1152, %v1148
    %v1333 = vpack.c.b16 %v1153, %v1149
    %v1334 = vpack.c.b16 %v1154, %v1150
    %v1335 = vpack.c.b16 %v1155, %v1151
    %v1336 = vpack.c.b16 %v1160, %v1156
    %v1337 = vpack.c.b16 %v1161, %v1157
    %v1338 = vpack.c.b16 %v1162, %v1158
    %v1339 = vpack.c.b16 %v1163, %v1159
    %v1340 = vpack.c.b16 %v1168, %v1164
    %v1341 = vpack.c.b16 %v1169, %v1165
    %v1342 = vpack.c.b16 %v1170, %v1166
    %v1343 = vpack.c.b16 %v1171, %v1167
    %v1344 = vpack.c.b16 %v1176, %v1172
    %v1345 = vpack.c.b16 %v1177, %v1173
    %v1346 = vpack.c.b16 %v1178, %v1174
    %v1347 = vpack.c.b16 %v1179, %v1175
    %v1348 = vpack.c.b16 %v1184, %v1180
    %v1349 = vpack.c.b16 %v1185, %v1181
    %v1350 = vpack.c.b16 %v1186, %v1182
    %v1351 = vpack.c.b16 %v1187, %v1183
    %v1352 = vpack.c.b16 %v1192, %v1188
    %v1353 = vpack.c.b16 %v1193, %v1189
    %v1354 = vpack.c.b16 %v1194, %v1190
    %v1355 = vpack.c.b16 %v1195, %v1191
    %v1356 = vpack.c.b16 %v1200, %v1196
    %v1357 = vpack.c.b16 %v1201, %v1197
    %v1358 = vpack.c.b16 %v1202, %v1198
    %v1359 = vpack.c.b16 %v1203, %v1199
    %v1360 = vpack.c.b16 %v1208, %v1204
    %v1361 = vpack.c.b16 %v1209, %v1205
    %v1362 = vpack.c.b16 %v1210, %v1206
    %v1363 = vpack.c.b16 %v1211, %v1207
    %v1364 = vpack.c.b16 %v1216, %v1212
    %v1365 = vpack.c.b16 %v1217, %v1213
    %v1366 = vpack.c.b16 %v1218, %v1214
    %v1367 = vpack.c.b16 %v1219, %v1215
    %v1368 = vpack.c.b16 %v1224, %v1220
    %v1369 = vpack.c.b16 %v1225, %v1221
    %v1370 = vpack.c.b16 %v1226, %v1222
    %v1371 = vpack.c.b16 %v1227, %v1223
    %v1372 = vpack.c.b16 %v1232, %v1228
    %v1373 = vpack.c.b16 %v1233, %v1229
    %v1374 = vpack.c.b16 %v1234, %v1230
    %v1375 = vpack.c.b16 %v1235, %v1231
    %v1376 = vpack.c.b16 %v1240, %v1236
    %v1377 = vpack.c.b16 %v1241, %v1237
    %v1378 = vpack.c.b16 %v1242, %v1238
    %v1379 = vpack.c.b16 %v1243, %v1239
    %v1380 = vpack.c.b16 %v1248, %v1244
    %v1381 = vpack.c.b16 %v1249, %v1245
    %v1382 = vpack.c.b16 %v1250, %v1246
    %v1383 = vpack.c.b16 %v1251, %v1247
    %v1384 = vpack.c.b16 %v1256, %v1252
    %v1385 = vpack.c.b16 %v1257, %v1253
    %v1386 = vpack.c.b16 %v1258, %v1254
    %v1387 = vpack.c.b16 %v1259, %v1255
    %1516 = vmatpush.bf16.msra.mxu0 %v1288
    %1517 = vmatpush.bf16.msra.mxu0 %v1284
    %1518 = vmatpush.bf16.msra.mxu0 %v1280
    %1519 = vmatpush.bf16.msra.mxu0 %v1276
    %1520 = vmatpush.bf16.msra.mxu0 %v1272
    %1521 = vmatpush.bf16.msra.mxu0 %v1268
    %1522 = vmatpush.bf16.msra.mxu0 %v1264
    %1523 = vmatpush.bf16.msra.mxu0 %v1260
    %1524 = vmatmul.bf16.gmra.mxu0 %v674
    %v1525 = vpop.f32.mrf.mxu0
    %v1526 = vadd.f32 %v868, %v1525
    %v1527 = vpop.f32.mrf.mxu0
    %v1528 = vadd.f32 %v868, %v1527
    %1529 = vmatmul.bf16.gmra.mxu0 %v678
    %v1530 = vpop.f32.mrf.mxu0
    %v1531 = vadd.f32 %v868, %v1530
    %v1532 = vpop.f32.mrf.mxu0
    %v1533 = vadd.f32 %v868, %v1532
    %1534 = vmatmul.bf16.gmra.mxu0 %v682
    %v1535 = vpop.f32.mrf.mxu0
    %v1536 = vadd.f32 %v868, %v1535
    %v1537 = vpop.f32.mrf.mxu0
    %v1538 = vadd.f32 %v868, %v1537
    %1539 = vmatmul.bf16.gmra.mxu0 %v686
    %v1540 = vpop.f32.mrf.mxu0
    %v1541 = vadd.f32 %v868, %v1540
    %v1542 = vpop.f32.mrf.mxu0
    %v1543 = vadd.f32 %v868, %v1542
    %1544 = vmatmul.bf16.gmra.mxu0 %v690
    %v1545 = vpop.f32.mrf.mxu0
    %v1546 = vadd.f32 %v868, %v1545
    %v1547 = vpop.f32.mrf.mxu0
    %v1548 = vadd.f32 %v868, %v1547
    %1549 = vmatmul.bf16.gmra.mxu0 %v694
    %v1550 = vpop.f32.mrf.mxu0
    %v1551 = vadd.f32 %v868, %v1550
    %v1552 = vpop.f32.mrf.mxu0
    %v1553 = vadd.f32 %v868, %v1552
    %1554 = vmatmul.bf16.gmra.mxu0 %v698
    %v1555 = vpop.f32.mrf.mxu0
    %v1556 = vadd.f32 %v868, %v1555
    %v1557 = vpop.f32.mrf.mxu0
    %v1558 = vadd.f32 %v868, %v1557
    %1559 = vmatmul.bf16.gmra.mxu0 %v702
    %v1560 = vpop.f32.mrf.mxu0
    %v1561 = vadd.f32 %v868, %v1560
    %v1562 = vpop.f32.mrf.mxu0
    %v1563 = vadd.f32 %v868, %v1562
    %1564 = vmatmul.bf16.gmra.mxu0 %v706
    %v1565 = vpop.f32.mrf.mxu0
    %v1566 = vadd.f32 %v868, %v1565
    %v1567 = vpop.f32.mrf.mxu0
    %v1568 = vadd.f32 %v868, %v1567
    %1569 = vmatmul.bf16.gmra.mxu0 %v710
    %v1570 = vpop.f32.mrf.mxu0
    %v1571 = vadd.f32 %v868, %v1570
    %v1572 = vpop.f32.mrf.mxu0
    %v1573 = vadd.f32 %v868, %v1572
    %1574 = vmatmul.bf16.gmra.mxu0 %v714
    %v1575 = vpop.f32.mrf.mxu0
    %v1576 = vadd.f32 %v868, %v1575
    %v1577 = vpop.f32.mrf.mxu0
    %v1578 = vadd.f32 %v868, %v1577
    %1579 = vmatmul.bf16.gmra.mxu0 %v718
    %v1580 = vpop.f32.mrf.mxu0
    %v1581 = vadd.f32 %v868, %v1580
    %v1582 = vpop.f32.mrf.mxu0
    %v1583 = vadd.f32 %v868, %v1582
    %1584 = vmatmul.bf16.gmra.mxu0 %v722
    %v1585 = vpop.f32.mrf.mxu0
    %v1586 = vadd.f32 %v868, %v1585
    %v1587 = vpop.f32.mrf.mxu0
    %v1588 = vadd.f32 %v868, %v1587
    %1589 = vmatmul.bf16.gmra.mxu0 %v726
    %v1590 = vpop.f32.mrf.mxu0
    %v1591 = vadd.f32 %v868, %v1590
    %v1592 = vpop.f32.mrf.mxu0
    %v1593 = vadd.f32 %v868, %v1592
    %1594 = vmatmul.bf16.gmra.mxu0 %v730
    %v1595 = vpop.f32.mrf.mxu0
    %v1596 = vadd.f32 %v868, %v1595
    %v1597 = vpop.f32.mrf.mxu0
    %v1598 = vadd.f32 %v868, %v1597
    %1599 = vmatmul.bf16.gmra.mxu0 %v734
    %v1600 = vpop.f32.mrf.mxu0
    %v1601 = vadd.f32 %v868, %v1600
    %v1602 = vpop.f32.mrf.mxu0
    %v1603 = vadd.f32 %v868, %v1602
    %1604 = vdwg.mxu0
    %1605 = vmatpush.bf16.msra.mxu0 %v1320
    %1606 = vmatpush.bf16.msra.mxu0 %v1316
    %1607 = vmatpush.bf16.msra.mxu0 %v1312
    %1608 = vmatpush.bf16.msra.mxu0 %v1308
    %1609 = vmatpush.bf16.msra.mxu0 %v1304
    %1610 = vmatpush.bf16.msra.mxu0 %v1300
    %1611 = vmatpush.bf16.msra.mxu0 %v1296
    %1612 = vmatpush.bf16.msra.mxu0 %v1292
    %1613 = vmatmul.bf16.gmra.mxu0 %v675
    %v1614 = vpop.f32.mrf.mxu0
    %v1615 = vadd.f32 %v1526, %v1614
    %v1616 = vpop.f32.mrf.mxu0
    %v1617 = vadd.f32 %v1528, %v1616
    %1618 = vmatmul.bf16.gmra.mxu0 %v679
    %v1619 = vpop.f32.mrf.mxu0
    %v1620 = vadd.f32 %v1531, %v1619
    %v1621 = vpop.f32.mrf.mxu0
    %v1622 = vadd.f32 %v1533, %v1621
    %1623 = vmatmul.bf16.gmra.mxu0 %v683
    %v1624 = vpop.f32.mrf.mxu0
    %v1625 = vadd.f32 %v1536, %v1624
    %v1626 = vpop.f32.mrf.mxu0
    %v1627 = vadd.f32 %v1538, %v1626
    %1628 = vmatmul.bf16.gmra.mxu0 %v687
    %v1629 = vpop.f32.mrf.mxu0
    %v1630 = vadd.f32 %v1541, %v1629
    %v1631 = vpop.f32.mrf.mxu0
    %v1632 = vadd.f32 %v1543, %v1631
    %1633 = vmatmul.bf16.gmra.mxu0 %v691
    %v1634 = vpop.f32.mrf.mxu0
    %v1635 = vadd.f32 %v1546, %v1634
    %v1636 = vpop.f32.mrf.mxu0
    %v1637 = vadd.f32 %v1548, %v1636
    %1638 = vmatmul.bf16.gmra.mxu0 %v695
    %v1639 = vpop.f32.mrf.mxu0
    %v1640 = vadd.f32 %v1551, %v1639
    %v1641 = vpop.f32.mrf.mxu0
    %v1642 = vadd.f32 %v1553, %v1641
    %1643 = vmatmul.bf16.gmra.mxu0 %v699
    %v1644 = vpop.f32.mrf.mxu0
    %v1645 = vadd.f32 %v1556, %v1644
    %v1646 = vpop.f32.mrf.mxu0
    %v1647 = vadd.f32 %v1558, %v1646
    %1648 = vmatmul.bf16.gmra.mxu0 %v703
    %v1649 = vpop.f32.mrf.mxu0
    %v1650 = vadd.f32 %v1561, %v1649
    %v1651 = vpop.f32.mrf.mxu0
    %v1652 = vadd.f32 %v1563, %v1651
    %1653 = vmatmul.bf16.gmra.mxu0 %v707
    %v1654 = vpop.f32.mrf.mxu0
    %v1655 = vadd.f32 %v1566, %v1654
    %v1656 = vpop.f32.mrf.mxu0
    %v1657 = vadd.f32 %v1568, %v1656
    %1658 = vmatmul.bf16.gmra.mxu0 %v711
    %v1659 = vpop.f32.mrf.mxu0
    %v1660 = vadd.f32 %v1571, %v1659
    %v1661 = vpop.f32.mrf.mxu0
    %v1662 = vadd.f32 %v1573, %v1661
    %1663 = vmatmul.bf16.gmra.mxu0 %v715
    %v1664 = vpop.f32.mrf.mxu0
    %v1665 = vadd.f32 %v1576, %v1664
    %v1666 = vpop.f32.mrf.mxu0
    %v1667 = vadd.f32 %v1578, %v1666
    %1668 = vmatmul.bf16.gmra.mxu0 %v719
    %v1669 = vpop.f32.mrf.mxu0
    %v1670 = vadd.f32 %v1581, %v1669
    %v1671 = vpop.f32.mrf.mxu0
    %v1672 = vadd.f32 %v1583, %v1671
    %1673 = vmatmul.bf16.gmra.mxu0 %v723
    %v1674 = vpop.f32.mrf.mxu0
    %v1675 = vadd.f32 %v1586, %v1674
    %v1676 = vpop.f32.mrf.mxu0
    %v1677 = vadd.f32 %v1588, %v1676
    %1678 = vmatmul.bf16.gmra.mxu0 %v727
    %v1679 = vpop.f32.mrf.mxu0
    %v1680 = vadd.f32 %v1591, %v1679
    %v1681 = vpop.f32.mrf.mxu0
    %v1682 = vadd.f32 %v1593, %v1681
    %1683 = vmatmul.bf16.gmra.mxu0 %v731
    %v1684 = vpop.f32.mrf.mxu0
    %v1685 = vadd.f32 %v1596, %v1684
    %v1686 = vpop.f32.mrf.mxu0
    %v1687 = vadd.f32 %v1598, %v1686
    %1688 = vmatmul.bf16.gmra.mxu0 %v735
    %v1689 = vpop.f32.mrf.mxu0
    %v1690 = vadd.f32 %v1601, %v1689
    %v1691 = vpop.f32.mrf.mxu0
    %v1692 = vadd.f32 %v1603, %v1691
    %1693 = vdwg.mxu0
    %1694 = vmatpush.bf16.msra.mxu0 %v1352
    %1695 = vmatpush.bf16.msra.mxu0 %v1348
    %1696 = vmatpush.bf16.msra.mxu0 %v1344
    %1697 = vmatpush.bf16.msra.mxu0 %v1340
    %1698 = vmatpush.bf16.msra.mxu0 %v1336
    %1699 = vmatpush.bf16.msra.mxu0 %v1332
    %1700 = vmatpush.bf16.msra.mxu0 %v1328
    %1701 = vmatpush.bf16.msra.mxu0 %v1324
    %1702 = vmatmul.bf16.gmra.mxu0 %v676
    %v1703 = vpop.f32.mrf.mxu0
    %v1704 = vadd.f32 %v1615, %v1703
    %v1705 = vpop.f32.mrf.mxu0
    %v1706 = vadd.f32 %v1617, %v1705
    %1707 = vmatmul.bf16.gmra.mxu0 %v680
    %v1708 = vpop.f32.mrf.mxu0
    %v1709 = vadd.f32 %v1620, %v1708
    %v1710 = vpop.f32.mrf.mxu0
    %v1711 = vadd.f32 %v1622, %v1710
    %1712 = vmatmul.bf16.gmra.mxu0 %v684
    %v1713 = vpop.f32.mrf.mxu0
    %v1714 = vadd.f32 %v1625, %v1713
    %v1715 = vpop.f32.mrf.mxu0
    %v1716 = vadd.f32 %v1627, %v1715
    %1717 = vmatmul.bf16.gmra.mxu0 %v688
    %v1718 = vpop.f32.mrf.mxu0
    %v1719 = vadd.f32 %v1630, %v1718
    %v1720 = vpop.f32.mrf.mxu0
    %v1721 = vadd.f32 %v1632, %v1720
    %1722 = vmatmul.bf16.gmra.mxu0 %v692
    %v1723 = vpop.f32.mrf.mxu0
    %v1724 = vadd.f32 %v1635, %v1723
    %v1725 = vpop.f32.mrf.mxu0
    %v1726 = vadd.f32 %v1637, %v1725
    %1727 = vmatmul.bf16.gmra.mxu0 %v696
    %v1728 = vpop.f32.mrf.mxu0
    %v1729 = vadd.f32 %v1640, %v1728
    %v1730 = vpop.f32.mrf.mxu0
    %v1731 = vadd.f32 %v1642, %v1730
    %1732 = vmatmul.bf16.gmra.mxu0 %v700
    %v1733 = vpop.f32.mrf.mxu0
    %v1734 = vadd.f32 %v1645, %v1733
    %v1735 = vpop.f32.mrf.mxu0
    %v1736 = vadd.f32 %v1647, %v1735
    %1737 = vmatmul.bf16.gmra.mxu0 %v704
    %v1738 = vpop.f32.mrf.mxu0
    %v1739 = vadd.f32 %v1650, %v1738
    %v1740 = vpop.f32.mrf.mxu0
    %v1741 = vadd.f32 %v1652, %v1740
    %1742 = vmatmul.bf16.gmra.mxu0 %v708
    %v1743 = vpop.f32.mrf.mxu0
    %v1744 = vadd.f32 %v1655, %v1743
    %v1745 = vpop.f32.mrf.mxu0
    %v1746 = vadd.f32 %v1657, %v1745
    %1747 = vmatmul.bf16.gmra.mxu0 %v712
    %v1748 = vpop.f32.mrf.mxu0
    %v1749 = vadd.f32 %v1660, %v1748
    %v1750 = vpop.f32.mrf.mxu0
    %v1751 = vadd.f32 %v1662, %v1750
    %1752 = vmatmul.bf16.gmra.mxu0 %v716
    %v1753 = vpop.f32.mrf.mxu0
    %v1754 = vadd.f32 %v1665, %v1753
    %v1755 = vpop.f32.mrf.mxu0
    %v1756 = vadd.f32 %v1667, %v1755
    %1757 = vmatmul.bf16.gmra.mxu0 %v720
    %v1758 = vpop.f32.mrf.mxu0
    %v1759 = vadd.f32 %v1670, %v1758
    %v1760 = vpop.f32.mrf.mxu0
    %v1761 = vadd.f32 %v1672, %v1760
    %1762 = vmatmul.bf16.gmra.mxu0 %v724
    %v1763 = vpop.f32.mrf.mxu0
    %v1764 = vadd.f32 %v1675, %v1763
    %v1765 = vpop.f32.mrf.mxu0
    %v1766 = vadd.f32 %v1677, %v1765
    %1767 = vmatmul.bf16.gmra.mxu0 %v728
    %v1768 = vpop.f32.mrf.mxu0
    %v1769 = vadd.f32 %v1680, %v1768
    %v1770 = vpop.f32.mrf.mxu0
    %v1771 = vadd.f32 %v1682, %v1770
    %1772 = vmatmul.bf16.gmra.mxu0 %v732
    %v1773 = vpop.f32.mrf.mxu0
    %v1774 = vadd.f32 %v1685, %v1773
    %v1775 = vpop.f32.mrf.mxu0
    %v1776 = vadd.f32 %v1687, %v1775
    %1777 = vmatmul.bf16.gmra.mxu0 %v736
    %v1778 = vpop.f32.mrf.mxu0
    %v1779 = vadd.f32 %v1690, %v1778
    %v1780 = vpop.f32.mrf.mxu0
    %v1781 = vadd.f32 %v1692, %v1780
    %1782 = vdwg.mxu0
    %1783 = vmatpush.bf16.msra.mxu0 %v1384
    %1784 = vmatpush.bf16.msra.mxu0 %v1380
    %1785 = vmatpush.bf16.msra.mxu0 %v1376
    %1786 = vmatpush.bf16.msra.mxu0 %v1372
    %1787 = vmatpush.bf16.msra.mxu0 %v1368
    %1788 = vmatpush.bf16.msra.mxu0 %v1364
    %1789 = vmatpush.bf16.msra.mxu0 %v1360
    %1790 = vmatpush.bf16.msra.mxu0 %v1356
    %1791 = vmatmul.bf16.gmra.mxu0 %v677
    %v1792 = vpop.f32.mrf.mxu0
    %v1793 = vadd.f32 %v1704, %v1792
    %v1794 = vpop.f32.mrf.mxu0
    %v1795 = vadd.f32 %v1706, %v1794
    %1796 = vmatmul.bf16.gmra.mxu0 %v681
    %v1797 = vpop.f32.mrf.mxu0
    %v1798 = vadd.f32 %v1709, %v1797
    %v1799 = vpop.f32.mrf.mxu0
    %v1800 = vadd.f32 %v1711, %v1799
    %1801 = vmatmul.bf16.gmra.mxu0 %v685
    %v1802 = vpop.f32.mrf.mxu0
    %v1803 = vadd.f32 %v1714, %v1802
    %v1804 = vpop.f32.mrf.mxu0
    %v1805 = vadd.f32 %v1716, %v1804
    %1806 = vmatmul.bf16.gmra.mxu0 %v689
    %v1807 = vpop.f32.mrf.mxu0
    %v1808 = vadd.f32 %v1719, %v1807
    %v1809 = vpop.f32.mrf.mxu0
    %v1810 = vadd.f32 %v1721, %v1809
    %1811 = vmatmul.bf16.gmra.mxu0 %v693
    %v1812 = vpop.f32.mrf.mxu0
    %v1813 = vadd.f32 %v1724, %v1812
    %v1814 = vpop.f32.mrf.mxu0
    %v1815 = vadd.f32 %v1726, %v1814
    %1816 = vmatmul.bf16.gmra.mxu0 %v697
    %v1817 = vpop.f32.mrf.mxu0
    %v1818 = vadd.f32 %v1729, %v1817
    %v1819 = vpop.f32.mrf.mxu0
    %v1820 = vadd.f32 %v1731, %v1819
    %1821 = vmatmul.bf16.gmra.mxu0 %v701
    %v1822 = vpop.f32.mrf.mxu0
    %v1823 = vadd.f32 %v1734, %v1822
    %v1824 = vpop.f32.mrf.mxu0
    %v1825 = vadd.f32 %v1736, %v1824
    %1826 = vmatmul.bf16.gmra.mxu0 %v705
    %v1827 = vpop.f32.mrf.mxu0
    %v1828 = vadd.f32 %v1739, %v1827
    %v1829 = vpop.f32.mrf.mxu0
    %v1830 = vadd.f32 %v1741, %v1829
    %1831 = vmatmul.bf16.gmra.mxu0 %v709
    %v1832 = vpop.f32.mrf.mxu0
    %v1833 = vadd.f32 %v1744, %v1832
    %v1834 = vpop.f32.mrf.mxu0
    %v1835 = vadd.f32 %v1746, %v1834
    %1836 = vmatmul.bf16.gmra.mxu0 %v713
    %v1837 = vpop.f32.mrf.mxu0
    %v1838 = vadd.f32 %v1749, %v1837
    %v1839 = vpop.f32.mrf.mxu0
    %v1840 = vadd.f32 %v1751, %v1839
    %1841 = vmatmul.bf16.gmra.mxu0 %v717
    %v1842 = vpop.f32.mrf.mxu0
    %v1843 = vadd.f32 %v1754, %v1842
    %v1844 = vpop.f32.mrf.mxu0
    %v1845 = vadd.f32 %v1756, %v1844
    %1846 = vmatmul.bf16.gmra.mxu0 %v721
    %v1847 = vpop.f32.mrf.mxu0
    %v1848 = vadd.f32 %v1759, %v1847
    %v1849 = vpop.f32.mrf.mxu0
    %v1850 = vadd.f32 %v1761, %v1849
    %1851 = vmatmul.bf16.gmra.mxu0 %v725
    %v1852 = vpop.f32.mrf.mxu0
    %v1853 = vadd.f32 %v1764, %v1852
    %v1854 = vpop.f32.mrf.mxu0
    %v1855 = vadd.f32 %v1766, %v1854
    %1856 = vmatmul.bf16.gmra.mxu0 %v729
    %v1857 = vpop.f32.mrf.mxu0
    %v1858 = vadd.f32 %v1769, %v1857
    %v1859 = vpop.f32.mrf.mxu0
    %v1860 = vadd.f32 %v1771, %v1859
    %1861 = vmatmul.bf16.gmra.mxu0 %v733
    %v1862 = vpop.f32.mrf.mxu0
    %v1863 = vadd.f32 %v1774, %v1862
    %v1864 = vpop.f32.mrf.mxu0
    %v1865 = vadd.f32 %v1776, %v1864
    %1866 = vmatmul.bf16.gmra.mxu0 %v737
    %v1867 = vpop.f32.mrf.mxu0
    %v1868 = vadd.f32 %v1779, %v1867
    %v1869 = vpop.f32.mrf.mxu0
    %v1870 = vadd.f32 %v1781, %v1869
    %1871 = vdwg.mxu0
    %1872 = vmatpush.bf16.msra.mxu0 %v1289
    %1873 = vmatpush.bf16.msra.mxu0 %v1285
    %1874 = vmatpush.bf16.msra.mxu0 %v1281
    %1875 = vmatpush.bf16.msra.mxu0 %v1277
    %1876 = vmatpush.bf16.msra.mxu0 %v1273
    %1877 = vmatpush.bf16.msra.mxu0 %v1269
    %1878 = vmatpush.bf16.msra.mxu0 %v1265
    %1879 = vmatpush.bf16.msra.mxu0 %v1261
    %1880 = vmatmul.bf16.gmra.mxu0 %v674
    %v1881 = vpop.f32.mrf.mxu0
    %v1882 = vadd.f32 %v869, %v1881
    %v1883 = vpop.f32.mrf.mxu0
    %v1884 = vadd.f32 %v869, %v1883
    %1885 = vmatmul.bf16.gmra.mxu0 %v678
    %v1886 = vpop.f32.mrf.mxu0
    %v1887 = vadd.f32 %v869, %v1886
    %v1888 = vpop.f32.mrf.mxu0
    %v1889 = vadd.f32 %v869, %v1888
    %1890 = vmatmul.bf16.gmra.mxu0 %v682
    %v1891 = vpop.f32.mrf.mxu0
    %v1892 = vadd.f32 %v869, %v1891
    %v1893 = vpop.f32.mrf.mxu0
    %v1894 = vadd.f32 %v869, %v1893
    %1895 = vmatmul.bf16.gmra.mxu0 %v686
    %v1896 = vpop.f32.mrf.mxu0
    %v1897 = vadd.f32 %v869, %v1896
    %v1898 = vpop.f32.mrf.mxu0
    %v1899 = vadd.f32 %v869, %v1898
    %1900 = vmatmul.bf16.gmra.mxu0 %v690
    %v1901 = vpop.f32.mrf.mxu0
    %v1902 = vadd.f32 %v869, %v1901
    %v1903 = vpop.f32.mrf.mxu0
    %v1904 = vadd.f32 %v869, %v1903
    %1905 = vmatmul.bf16.gmra.mxu0 %v694
    %v1906 = vpop.f32.mrf.mxu0
    %v1907 = vadd.f32 %v869, %v1906
    %v1908 = vpop.f32.mrf.mxu0
    %v1909 = vadd.f32 %v869, %v1908
    %1910 = vmatmul.bf16.gmra.mxu0 %v698
    %v1911 = vpop.f32.mrf.mxu0
    %v1912 = vadd.f32 %v869, %v1911
    %v1913 = vpop.f32.mrf.mxu0
    %v1914 = vadd.f32 %v869, %v1913
    %1915 = vmatmul.bf16.gmra.mxu0 %v702
    %v1916 = vpop.f32.mrf.mxu0
    %v1917 = vadd.f32 %v869, %v1916
    %v1918 = vpop.f32.mrf.mxu0
    %v1919 = vadd.f32 %v869, %v1918
    %1920 = vmatmul.bf16.gmra.mxu0 %v706
    %v1921 = vpop.f32.mrf.mxu0
    %v1922 = vadd.f32 %v869, %v1921
    %v1923 = vpop.f32.mrf.mxu0
    %v1924 = vadd.f32 %v869, %v1923
    %1925 = vmatmul.bf16.gmra.mxu0 %v710
    %v1926 = vpop.f32.mrf.mxu0
    %v1927 = vadd.f32 %v869, %v1926
    %v1928 = vpop.f32.mrf.mxu0
    %v1929 = vadd.f32 %v869, %v1928
    %1930 = vmatmul.bf16.gmra.mxu0 %v714
    %v1931 = vpop.f32.mrf.mxu0
    %v1932 = vadd.f32 %v869, %v1931
    %v1933 = vpop.f32.mrf.mxu0
    %v1934 = vadd.f32 %v869, %v1933
    %1935 = vmatmul.bf16.gmra.mxu0 %v718
    %v1936 = vpop.f32.mrf.mxu0
    %v1937 = vadd.f32 %v869, %v1936
    %v1938 = vpop.f32.mrf.mxu0
    %v1939 = vadd.f32 %v869, %v1938
    %1940 = vmatmul.bf16.gmra.mxu0 %v722
    %v1941 = vpop.f32.mrf.mxu0
    %v1942 = vadd.f32 %v869, %v1941
    %v1943 = vpop.f32.mrf.mxu0
    %v1944 = vadd.f32 %v869, %v1943
    %1945 = vmatmul.bf16.gmra.mxu0 %v726
    %v1946 = vpop.f32.mrf.mxu0
    %v1947 = vadd.f32 %v869, %v1946
    %v1948 = vpop.f32.mrf.mxu0
    %v1949 = vadd.f32 %v869, %v1948
    %1950 = vmatmul.bf16.gmra.mxu0 %v730
    %v1951 = vpop.f32.mrf.mxu0
    %v1952 = vadd.f32 %v869, %v1951
    %v1953 = vpop.f32.mrf.mxu0
    %v1954 = vadd.f32 %v869, %v1953
    %1955 = vmatmul.bf16.gmra.mxu0 %v734
    %v1956 = vpop.f32.mrf.mxu0
    %v1957 = vadd.f32 %v869, %v1956
    %v1958 = vpop.f32.mrf.mxu0
    %v1959 = vadd.f32 %v869, %v1958
    %1960 = vdwg.mxu0
    %1961 = vmatpush.bf16.msra.mxu0 %v1321
    %1962 = vmatpush.bf16.msra.mxu0 %v1317
    %1963 = vmatpush.bf16.msra.mxu0 %v1313
    %1964 = vmatpush.bf16.msra.mxu0 %v1309
    %1965 = vmatpush.bf16.msra.mxu0 %v1305
    %1966 = vmatpush.bf16.msra.mxu0 %v1301
    %1967 = vmatpush.bf16.msra.mxu0 %v1297
    %1968 = vmatpush.bf16.msra.mxu0 %v1293
    %1969 = vmatmul.bf16.gmra.mxu0 %v675
    %v1970 = vpop.f32.mrf.mxu0
    %v1971 = vadd.f32 %v1882, %v1970
    %v1972 = vpop.f32.mrf.mxu0
    %v1973 = vadd.f32 %v1884, %v1972
    %1974 = vmatmul.bf16.gmra.mxu0 %v679
    %v1975 = vpop.f32.mrf.mxu0
    %v1976 = vadd.f32 %v1887, %v1975
    %v1977 = vpop.f32.mrf.mxu0
    %v1978 = vadd.f32 %v1889, %v1977
    %1979 = vmatmul.bf16.gmra.mxu0 %v683
    %v1980 = vpop.f32.mrf.mxu0
    %v1981 = vadd.f32 %v1892, %v1980
    %v1982 = vpop.f32.mrf.mxu0
    %v1983 = vadd.f32 %v1894, %v1982
    %1984 = vmatmul.bf16.gmra.mxu0 %v687
    %v1985 = vpop.f32.mrf.mxu0
    %v1986 = vadd.f32 %v1897, %v1985
    %v1987 = vpop.f32.mrf.mxu0
    %v1988 = vadd.f32 %v1899, %v1987
    %1989 = vmatmul.bf16.gmra.mxu0 %v691
    %v1990 = vpop.f32.mrf.mxu0
    %v1991 = vadd.f32 %v1902, %v1990
    %v1992 = vpop.f32.mrf.mxu0
    %v1993 = vadd.f32 %v1904, %v1992
    %1994 = vmatmul.bf16.gmra.mxu0 %v695
    %v1995 = vpop.f32.mrf.mxu0
    %v1996 = vadd.f32 %v1907, %v1995
    %v1997 = vpop.f32.mrf.mxu0
    %v1998 = vadd.f32 %v1909, %v1997
    %1999 = vmatmul.bf16.gmra.mxu0 %v699
    %v2000 = vpop.f32.mrf.mxu0
    %v2001 = vadd.f32 %v1912, %v2000
    %v2002 = vpop.f32.mrf.mxu0
    %v2003 = vadd.f32 %v1914, %v2002
    %2004 = vmatmul.bf16.gmra.mxu0 %v703
    %v2005 = vpop.f32.mrf.mxu0
    %v2006 = vadd.f32 %v1917, %v2005
    %v2007 = vpop.f32.mrf.mxu0
    %v2008 = vadd.f32 %v1919, %v2007
    %2009 = vmatmul.bf16.gmra.mxu0 %v707
    %v2010 = vpop.f32.mrf.mxu0
    %v2011 = vadd.f32 %v1922, %v2010
    %v2012 = vpop.f32.mrf.mxu0
    %v2013 = vadd.f32 %v1924, %v2012
    %2014 = vmatmul.bf16.gmra.mxu0 %v711
    %v2015 = vpop.f32.mrf.mxu0
    %v2016 = vadd.f32 %v1927, %v2015
    %v2017 = vpop.f32.mrf.mxu0
    %v2018 = vadd.f32 %v1929, %v2017
    %2019 = vmatmul.bf16.gmra.mxu0 %v715
    %v2020 = vpop.f32.mrf.mxu0
    %v2021 = vadd.f32 %v1932, %v2020
    %v2022 = vpop.f32.mrf.mxu0
    %v2023 = vadd.f32 %v1934, %v2022
    %2024 = vmatmul.bf16.gmra.mxu0 %v719
    %v2025 = vpop.f32.mrf.mxu0
    %v2026 = vadd.f32 %v1937, %v2025
    %v2027 = vpop.f32.mrf.mxu0
    %v2028 = vadd.f32 %v1939, %v2027
    %2029 = vmatmul.bf16.gmra.mxu0 %v723
    %v2030 = vpop.f32.mrf.mxu0
    %v2031 = vadd.f32 %v1942, %v2030
    %v2032 = vpop.f32.mrf.mxu0
    %v2033 = vadd.f32 %v1944, %v2032
    %2034 = vmatmul.bf16.gmra.mxu0 %v727
    %v2035 = vpop.f32.mrf.mxu0
    %v2036 = vadd.f32 %v1947, %v2035
    %v2037 = vpop.f32.mrf.mxu0
    %v2038 = vadd.f32 %v1949, %v2037
    %2039 = vmatmul.bf16.gmra.mxu0 %v731
    %v2040 = vpop.f32.mrf.mxu0
    %v2041 = vadd.f32 %v1952, %v2040
    %v2042 = vpop.f32.mrf.mxu0
    %v2043 = vadd.f32 %v1954, %v2042
    %2044 = vmatmul.bf16.gmra.mxu0 %v735
    %v2045 = vpop.f32.mrf.mxu0
    %v2046 = vadd.f32 %v1957, %v2045
    %v2047 = vpop.f32.mrf.mxu0
    %v2048 = vadd.f32 %v1959, %v2047
    %2049 = vdwg.mxu0
    %2050 = vmatpush.bf16.msra.mxu0 %v1353
    %2051 = vmatpush.bf16.msra.mxu0 %v1349
    %2052 = vmatpush.bf16.msra.mxu0 %v1345
    %2053 = vmatpush.bf16.msra.mxu0 %v1341
    %2054 = vmatpush.bf16.msra.mxu0 %v1337
    %2055 = vmatpush.bf16.msra.mxu0 %v1333
    %2056 = vmatpush.bf16.msra.mxu0 %v1329
    %2057 = vmatpush.bf16.msra.mxu0 %v1325
    %2058 = vmatmul.bf16.gmra.mxu0 %v676
    %v2059 = vpop.f32.mrf.mxu0
    %v2060 = vadd.f32 %v1971, %v2059
    %v2061 = vpop.f32.mrf.mxu0
    %v2062 = vadd.f32 %v1973, %v2061
    %2063 = vmatmul.bf16.gmra.mxu0 %v680
    %v2064 = vpop.f32.mrf.mxu0
    %v2065 = vadd.f32 %v1976, %v2064
    %v2066 = vpop.f32.mrf.mxu0
    %v2067 = vadd.f32 %v1978, %v2066
    %2068 = vmatmul.bf16.gmra.mxu0 %v684
    %v2069 = vpop.f32.mrf.mxu0
    %v2070 = vadd.f32 %v1981, %v2069
    %v2071 = vpop.f32.mrf.mxu0
    %v2072 = vadd.f32 %v1983, %v2071
    %2073 = vmatmul.bf16.gmra.mxu0 %v688
    %v2074 = vpop.f32.mrf.mxu0
    %v2075 = vadd.f32 %v1986, %v2074
    %v2076 = vpop.f32.mrf.mxu0
    %v2077 = vadd.f32 %v1988, %v2076
    %2078 = vmatmul.bf16.gmra.mxu0 %v692
    %v2079 = vpop.f32.mrf.mxu0
    %v2080 = vadd.f32 %v1991, %v2079
    %v2081 = vpop.f32.mrf.mxu0
    %v2082 = vadd.f32 %v1993, %v2081
    %2083 = vmatmul.bf16.gmra.mxu0 %v696
    %v2084 = vpop.f32.mrf.mxu0
    %v2085 = vadd.f32 %v1996, %v2084
    %v2086 = vpop.f32.mrf.mxu0
    %v2087 = vadd.f32 %v1998, %v2086
    %2088 = vmatmul.bf16.gmra.mxu0 %v700
    %v2089 = vpop.f32.mrf.mxu0
    %v2090 = vadd.f32 %v2001, %v2089
    %v2091 = vpop.f32.mrf.mxu0
    %v2092 = vadd.f32 %v2003, %v2091
    %2093 = vmatmul.bf16.gmra.mxu0 %v704
    %v2094 = vpop.f32.mrf.mxu0
    %v2095 = vadd.f32 %v2006, %v2094
    %v2096 = vpop.f32.mrf.mxu0
    %v2097 = vadd.f32 %v2008, %v2096
    %2098 = vmatmul.bf16.gmra.mxu0 %v708
    %v2099 = vpop.f32.mrf.mxu0
    %v2100 = vadd.f32 %v2011, %v2099
    %v2101 = vpop.f32.mrf.mxu0
    %v2102 = vadd.f32 %v2013, %v2101
    %2103 = vmatmul.bf16.gmra.mxu0 %v712
    %v2104 = vpop.f32.mrf.mxu0
    %v2105 = vadd.f32 %v2016, %v2104
    %v2106 = vpop.f32.mrf.mxu0
    %v2107 = vadd.f32 %v2018, %v2106
    %2108 = vmatmul.bf16.gmra.mxu0 %v716
    %v2109 = vpop.f32.mrf.mxu0
    %v2110 = vadd.f32 %v2021, %v2109
    %v2111 = vpop.f32.mrf.mxu0
    %v2112 = vadd.f32 %v2023, %v2111
    %2113 = vmatmul.bf16.gmra.mxu0 %v720
    %v2114 = vpop.f32.mrf.mxu0
    %v2115 = vadd.f32 %v2026, %v2114
    %v2116 = vpop.f32.mrf.mxu0
    %v2117 = vadd.f32 %v2028, %v2116
    %2118 = vmatmul.bf16.gmra.mxu0 %v724
    %v2119 = vpop.f32.mrf.mxu0
    %v2120 = vadd.f32 %v2031, %v2119
    %v2121 = vpop.f32.mrf.mxu0
    %v2122 = vadd.f32 %v2033, %v2121
    %2123 = vmatmul.bf16.gmra.mxu0 %v728
    %v2124 = vpop.f32.mrf.mxu0
    %v2125 = vadd.f32 %v2036, %v2124
    %v2126 = vpop.f32.mrf.mxu0
    %v2127 = vadd.f32 %v2038, %v2126
    %2128 = vmatmul.bf16.gmra.mxu0 %v732
    %v2129 = vpop.f32.mrf.mxu0
    %v2130 = vadd.f32 %v2041, %v2129
    %v2131 = vpop.f32.mrf.mxu0
    %v2132 = vadd.f32 %v2043, %v2131
    %2133 = vmatmul.bf16.gmra.mxu0 %v736
    %v2134 = vpop.f32.mrf.mxu0
    %v2135 = vadd.f32 %v2046, %v2134
    %v2136 = vpop.f32.mrf.mxu0
    %v2137 = vadd.f32 %v2048, %v2136
    %2138 = vdwg.mxu0
    %2139 = vmatpush.bf16.msra.mxu0 %v1385
    %2140 = vmatpush.bf16.msra.mxu0 %v1381
    %2141 = vmatpush.bf16.msra.mxu0 %v1377
    %2142 = vmatpush.bf16.msra.mxu0 %v1373
    %2143 = vmatpush.bf16.msra.mxu0 %v1369
    %2144 = vmatpush.bf16.msra.mxu0 %v1365
    %2145 = vmatpush.bf16.msra.mxu0 %v1361
    %2146 = vmatpush.bf16.msra.mxu0 %v1357
    %2147 = vmatmul.bf16.gmra.mxu0 %v677
    %v2148 = vpop.f32.mrf.mxu0
    %v2149 = vadd.f32 %v2060, %v2148
    %v2150 = vpop.f32.mrf.mxu0
    %v2151 = vadd.f32 %v2062, %v2150
    %2152 = vmatmul.bf16.gmra.mxu0 %v681
    %v2153 = vpop.f32.mrf.mxu0
    %v2154 = vadd.f32 %v2065, %v2153
    %v2155 = vpop.f32.mrf.mxu0
    %v2156 = vadd.f32 %v2067, %v2155
    %2157 = vmatmul.bf16.gmra.mxu0 %v685
    %v2158 = vpop.f32.mrf.mxu0
    %v2159 = vadd.f32 %v2070, %v2158
    %v2160 = vpop.f32.mrf.mxu0
    %v2161 = vadd.f32 %v2072, %v2160
    %2162 = vmatmul.bf16.gmra.mxu0 %v689
    %v2163 = vpop.f32.mrf.mxu0
    %v2164 = vadd.f32 %v2075, %v2163
    %v2165 = vpop.f32.mrf.mxu0
    %v2166 = vadd.f32 %v2077, %v2165
    %2167 = vmatmul.bf16.gmra.mxu0 %v693
    %v2168 = vpop.f32.mrf.mxu0
    %v2169 = vadd.f32 %v2080, %v2168
    %v2170 = vpop.f32.mrf.mxu0
    %v2171 = vadd.f32 %v2082, %v2170
    %2172 = vmatmul.bf16.gmra.mxu0 %v697
    %v2173 = vpop.f32.mrf.mxu0
    %v2174 = vadd.f32 %v2085, %v2173
    %v2175 = vpop.f32.mrf.mxu0
    %v2176 = vadd.f32 %v2087, %v2175
    %2177 = vmatmul.bf16.gmra.mxu0 %v701
    %v2178 = vpop.f32.mrf.mxu0
    %v2179 = vadd.f32 %v2090, %v2178
    %v2180 = vpop.f32.mrf.mxu0
    %v2181 = vadd.f32 %v2092, %v2180
    %2182 = vmatmul.bf16.gmra.mxu0 %v705
    %v2183 = vpop.f32.mrf.mxu0
    %v2184 = vadd.f32 %v2095, %v2183
    %v2185 = vpop.f32.mrf.mxu0
    %v2186 = vadd.f32 %v2097, %v2185
    %2187 = vmatmul.bf16.gmra.mxu0 %v709
    %v2188 = vpop.f32.mrf.mxu0
    %v2189 = vadd.f32 %v2100, %v2188
    %v2190 = vpop.f32.mrf.mxu0
    %v2191 = vadd.f32 %v2102, %v2190
    %2192 = vmatmul.bf16.gmra.mxu0 %v713
    %v2193 = vpop.f32.mrf.mxu0
    %v2194 = vadd.f32 %v2105, %v2193
    %v2195 = vpop.f32.mrf.mxu0
    %v2196 = vadd.f32 %v2107, %v2195
    %2197 = vmatmul.bf16.gmra.mxu0 %v717
    %v2198 = vpop.f32.mrf.mxu0
    %v2199 = vadd.f32 %v2110, %v2198
    %v2200 = vpop.f32.mrf.mxu0
    %v2201 = vadd.f32 %v2112, %v2200
    %2202 = vmatmul.bf16.gmra.mxu0 %v721
    %v2203 = vpop.f32.mrf.mxu0
    %v2204 = vadd.f32 %v2115, %v2203
    %v2205 = vpop.f32.mrf.mxu0
    %v2206 = vadd.f32 %v2117, %v2205
    %2207 = vmatmul.bf16.gmra.mxu0 %v725
    %v2208 = vpop.f32.mrf.mxu0
    %v2209 = vadd.f32 %v2120, %v2208
    %v2210 = vpop.f32.mrf.mxu0
    %v2211 = vadd.f32 %v2122, %v2210
    %2212 = vmatmul.bf16.gmra.mxu0 %v729
    %v2213 = vpop.f32.mrf.mxu0
    %v2214 = vadd.f32 %v2125, %v2213
    %v2215 = vpop.f32.mrf.mxu0
    %v2216 = vadd.f32 %v2127, %v2215
    %2217 = vmatmul.bf16.gmra.mxu0 %v733
    %v2218 = vpop.f32.mrf.mxu0
    %v2219 = vadd.f32 %v2130, %v2218
    %v2220 = vpop.f32.mrf.mxu0
    %v2221 = vadd.f32 %v2132, %v2220
    %2222 = vmatmul.bf16.gmra.mxu0 %v737
    %v2223 = vpop.f32.mrf.mxu0
    %v2224 = vadd.f32 %v2135, %v2223
    %v2225 = vpop.f32.mrf.mxu0
    %v2226 = vadd.f32 %v2137, %v2225
    %2227 = vdwg.mxu0
    %2228 = vmatpush.bf16.msra.mxu0 %v1290
    %2229 = vmatpush.bf16.msra.mxu0 %v1286
    %2230 = vmatpush.bf16.msra.mxu0 %v1282
    %2231 = vmatpush.bf16.msra.mxu0 %v1278
    %2232 = vmatpush.bf16.msra.mxu0 %v1274
    %2233 = vmatpush.bf16.msra.mxu0 %v1270
    %2234 = vmatpush.bf16.msra.mxu0 %v1266
    %2235 = vmatpush.bf16.msra.mxu0 %v1262
    %2236 = vmatmul.bf16.gmra.mxu0 %v674
    %v2237 = vpop.f32.mrf.mxu0
    %v2238 = vadd.f32 %v870, %v2237
    %v2239 = vpop.f32.mrf.mxu0
    %v2240 = vadd.f32 %v870, %v2239
    %2241 = vmatmul.bf16.gmra.mxu0 %v678
    %v2242 = vpop.f32.mrf.mxu0
    %v2243 = vadd.f32 %v870, %v2242
    %v2244 = vpop.f32.mrf.mxu0
    %v2245 = vadd.f32 %v870, %v2244
    %2246 = vmatmul.bf16.gmra.mxu0 %v682
    %v2247 = vpop.f32.mrf.mxu0
    %v2248 = vadd.f32 %v870, %v2247
    %v2249 = vpop.f32.mrf.mxu0
    %v2250 = vadd.f32 %v870, %v2249
    %2251 = vmatmul.bf16.gmra.mxu0 %v686
    %v2252 = vpop.f32.mrf.mxu0
    %v2253 = vadd.f32 %v870, %v2252
    %v2254 = vpop.f32.mrf.mxu0
    %v2255 = vadd.f32 %v870, %v2254
    %2256 = vmatmul.bf16.gmra.mxu0 %v690
    %v2257 = vpop.f32.mrf.mxu0
    %v2258 = vadd.f32 %v870, %v2257
    %v2259 = vpop.f32.mrf.mxu0
    %v2260 = vadd.f32 %v870, %v2259
    %2261 = vmatmul.bf16.gmra.mxu0 %v694
    %v2262 = vpop.f32.mrf.mxu0
    %v2263 = vadd.f32 %v870, %v2262
    %v2264 = vpop.f32.mrf.mxu0
    %v2265 = vadd.f32 %v870, %v2264
    %2266 = vmatmul.bf16.gmra.mxu0 %v698
    %v2267 = vpop.f32.mrf.mxu0
    %v2268 = vadd.f32 %v870, %v2267
    %v2269 = vpop.f32.mrf.mxu0
    %v2270 = vadd.f32 %v870, %v2269
    %2271 = vmatmul.bf16.gmra.mxu0 %v702
    %v2272 = vpop.f32.mrf.mxu0
    %v2273 = vadd.f32 %v870, %v2272
    %v2274 = vpop.f32.mrf.mxu0
    %v2275 = vadd.f32 %v870, %v2274
    %2276 = vmatmul.bf16.gmra.mxu0 %v706
    %v2277 = vpop.f32.mrf.mxu0
    %v2278 = vadd.f32 %v870, %v2277
    %v2279 = vpop.f32.mrf.mxu0
    %v2280 = vadd.f32 %v870, %v2279
    %2281 = vmatmul.bf16.gmra.mxu0 %v710
    %v2282 = vpop.f32.mrf.mxu0
    %v2283 = vadd.f32 %v870, %v2282
    %v2284 = vpop.f32.mrf.mxu0
    %v2285 = vadd.f32 %v870, %v2284
    %2286 = vmatmul.bf16.gmra.mxu0 %v714
    %v2287 = vpop.f32.mrf.mxu0
    %v2288 = vadd.f32 %v870, %v2287
    %v2289 = vpop.f32.mrf.mxu0
    %v2290 = vadd.f32 %v870, %v2289
    %2291 = vmatmul.bf16.gmra.mxu0 %v718
    %v2292 = vpop.f32.mrf.mxu0
    %v2293 = vadd.f32 %v870, %v2292
    %v2294 = vpop.f32.mrf.mxu0
    %v2295 = vadd.f32 %v870, %v2294
    %2296 = vmatmul.bf16.gmra.mxu0 %v722
    %v2297 = vpop.f32.mrf.mxu0
    %v2298 = vadd.f32 %v870, %v2297
    %v2299 = vpop.f32.mrf.mxu0
    %v2300 = vadd.f32 %v870, %v2299
    %2301 = vmatmul.bf16.gmra.mxu0 %v726
    %v2302 = vpop.f32.mrf.mxu0
    %v2303 = vadd.f32 %v870, %v2302
    %v2304 = vpop.f32.mrf.mxu0
    %v2305 = vadd.f32 %v870, %v2304
    %2306 = vmatmul.bf16.gmra.mxu0 %v730
    %v2307 = vpop.f32.mrf.mxu0
    %v2308 = vadd.f32 %v870, %v2307
    %v2309 = vpop.f32.mrf.mxu0
    %v2310 = vadd.f32 %v870, %v2309
    %2311 = vmatmul.bf16.gmra.mxu0 %v734
    %v2312 = vpop.f32.mrf.mxu0
    %v2313 = vadd.f32 %v870, %v2312
    %v2314 = vpop.f32.mrf.mxu0
    %v2315 = vadd.f32 %v870, %v2314
    %2316 = vdwg.mxu0
    %2317 = vmatpush.bf16.msra.mxu0 %v1322
    %2318 = vmatpush.bf16.msra.mxu0 %v1318
    %2319 = vmatpush.bf16.msra.mxu0 %v1314
    %2320 = vmatpush.bf16.msra.mxu0 %v1310
    %2321 = vmatpush.bf16.msra.mxu0 %v1306
    %2322 = vmatpush.bf16.msra.mxu0 %v1302
    %2323 = vmatpush.bf16.msra.mxu0 %v1298
    %2324 = vmatpush.bf16.msra.mxu0 %v1294
    %2325 = vmatmul.bf16.gmra.mxu0 %v675
    %v2326 = vpop.f32.mrf.mxu0
    %v2327 = vadd.f32 %v2238, %v2326
    %v2328 = vpop.f32.mrf.mxu0
    %v2329 = vadd.f32 %v2240, %v2328
    %2330 = vmatmul.bf16.gmra.mxu0 %v679
    %v2331 = vpop.f32.mrf.mxu0
    %v2332 = vadd.f32 %v2243, %v2331
    %v2333 = vpop.f32.mrf.mxu0
    %v2334 = vadd.f32 %v2245, %v2333
    %2335 = vmatmul.bf16.gmra.mxu0 %v683
    %v2336 = vpop.f32.mrf.mxu0
    %v2337 = vadd.f32 %v2248, %v2336
    %v2338 = vpop.f32.mrf.mxu0
    %v2339 = vadd.f32 %v2250, %v2338
    %2340 = vmatmul.bf16.gmra.mxu0 %v687
    %v2341 = vpop.f32.mrf.mxu0
    %v2342 = vadd.f32 %v2253, %v2341
    %v2343 = vpop.f32.mrf.mxu0
    %v2344 = vadd.f32 %v2255, %v2343
    %2345 = vmatmul.bf16.gmra.mxu0 %v691
    %v2346 = vpop.f32.mrf.mxu0
    %v2347 = vadd.f32 %v2258, %v2346
    %v2348 = vpop.f32.mrf.mxu0
    %v2349 = vadd.f32 %v2260, %v2348
    %2350 = vmatmul.bf16.gmra.mxu0 %v695
    %v2351 = vpop.f32.mrf.mxu0
    %v2352 = vadd.f32 %v2263, %v2351
    %v2353 = vpop.f32.mrf.mxu0
    %v2354 = vadd.f32 %v2265, %v2353
    %2355 = vmatmul.bf16.gmra.mxu0 %v699
    %v2356 = vpop.f32.mrf.mxu0
    %v2357 = vadd.f32 %v2268, %v2356
    %v2358 = vpop.f32.mrf.mxu0
    %v2359 = vadd.f32 %v2270, %v2358
    %2360 = vmatmul.bf16.gmra.mxu0 %v703
    %v2361 = vpop.f32.mrf.mxu0
    %v2362 = vadd.f32 %v2273, %v2361
    %v2363 = vpop.f32.mrf.mxu0
    %v2364 = vadd.f32 %v2275, %v2363
    %2365 = vmatmul.bf16.gmra.mxu0 %v707
    %v2366 = vpop.f32.mrf.mxu0
    %v2367 = vadd.f32 %v2278, %v2366
    %v2368 = vpop.f32.mrf.mxu0
    %v2369 = vadd.f32 %v2280, %v2368
    %2370 = vmatmul.bf16.gmra.mxu0 %v711
    %v2371 = vpop.f32.mrf.mxu0
    %v2372 = vadd.f32 %v2283, %v2371
    %v2373 = vpop.f32.mrf.mxu0
    %v2374 = vadd.f32 %v2285, %v2373
    %2375 = vmatmul.bf16.gmra.mxu0 %v715
    %v2376 = vpop.f32.mrf.mxu0
    %v2377 = vadd.f32 %v2288, %v2376
    %v2378 = vpop.f32.mrf.mxu0
    %v2379 = vadd.f32 %v2290, %v2378
    %2380 = vmatmul.bf16.gmra.mxu0 %v719
    %v2381 = vpop.f32.mrf.mxu0
    %v2382 = vadd.f32 %v2293, %v2381
    %v2383 = vpop.f32.mrf.mxu0
    %v2384 = vadd.f32 %v2295, %v2383
    %2385 = vmatmul.bf16.gmra.mxu0 %v723
    %v2386 = vpop.f32.mrf.mxu0
    %v2387 = vadd.f32 %v2298, %v2386
    %v2388 = vpop.f32.mrf.mxu0
    %v2389 = vadd.f32 %v2300, %v2388
    %2390 = vmatmul.bf16.gmra.mxu0 %v727
    %v2391 = vpop.f32.mrf.mxu0
    %v2392 = vadd.f32 %v2303, %v2391
    %v2393 = vpop.f32.mrf.mxu0
    %v2394 = vadd.f32 %v2305, %v2393
    %2395 = vmatmul.bf16.gmra.mxu0 %v731
    %v2396 = vpop.f32.mrf.mxu0
    %v2397 = vadd.f32 %v2308, %v2396
    %v2398 = vpop.f32.mrf.mxu0
    %v2399 = vadd.f32 %v2310, %v2398
    %2400 = vmatmul.bf16.gmra.mxu0 %v735
    %v2401 = vpop.f32.mrf.mxu0
    %v2402 = vadd.f32 %v2313, %v2401
    %v2403 = vpop.f32.mrf.mxu0
    %v2404 = vadd.f32 %v2315, %v2403
    %2405 = vdwg.mxu0
    %2406 = vmatpush.bf16.msra.mxu0 %v1354
    %2407 = vmatpush.bf16.msra.mxu0 %v1350
    %2408 = vmatpush.bf16.msra.mxu0 %v1346
    %2409 = vmatpush.bf16.msra.mxu0 %v1342
    %2410 = vmatpush.bf16.msra.mxu0 %v1338
    %2411 = vmatpush.bf16.msra.mxu0 %v1334
    %2412 = vmatpush.bf16.msra.mxu0 %v1330
    %2413 = vmatpush.bf16.msra.mxu0 %v1326
    %2414 = vmatmul.bf16.gmra.mxu0 %v676
    %v2415 = vpop.f32.mrf.mxu0
    %v2416 = vadd.f32 %v2327, %v2415
    %v2417 = vpop.f32.mrf.mxu0
    %v2418 = vadd.f32 %v2329, %v2417
    %2419 = vmatmul.bf16.gmra.mxu0 %v680
    %v2420 = vpop.f32.mrf.mxu0
    %v2421 = vadd.f32 %v2332, %v2420
    %v2422 = vpop.f32.mrf.mxu0
    %v2423 = vadd.f32 %v2334, %v2422
    %2424 = vmatmul.bf16.gmra.mxu0 %v684
    %v2425 = vpop.f32.mrf.mxu0
    %v2426 = vadd.f32 %v2337, %v2425
    %v2427 = vpop.f32.mrf.mxu0
    %v2428 = vadd.f32 %v2339, %v2427
    %2429 = vmatmul.bf16.gmra.mxu0 %v688
    %v2430 = vpop.f32.mrf.mxu0
    %v2431 = vadd.f32 %v2342, %v2430
    %v2432 = vpop.f32.mrf.mxu0
    %v2433 = vadd.f32 %v2344, %v2432
    %2434 = vmatmul.bf16.gmra.mxu0 %v692
    %v2435 = vpop.f32.mrf.mxu0
    %v2436 = vadd.f32 %v2347, %v2435
    %v2437 = vpop.f32.mrf.mxu0
    %v2438 = vadd.f32 %v2349, %v2437
    %2439 = vmatmul.bf16.gmra.mxu0 %v696
    %v2440 = vpop.f32.mrf.mxu0
    %v2441 = vadd.f32 %v2352, %v2440
    %v2442 = vpop.f32.mrf.mxu0
    %v2443 = vadd.f32 %v2354, %v2442
    %2444 = vmatmul.bf16.gmra.mxu0 %v700
    %v2445 = vpop.f32.mrf.mxu0
    %v2446 = vadd.f32 %v2357, %v2445
    %v2447 = vpop.f32.mrf.mxu0
    %v2448 = vadd.f32 %v2359, %v2447
    %2449 = vmatmul.bf16.gmra.mxu0 %v704
    %v2450 = vpop.f32.mrf.mxu0
    %v2451 = vadd.f32 %v2362, %v2450
    %v2452 = vpop.f32.mrf.mxu0
    %v2453 = vadd.f32 %v2364, %v2452
    %2454 = vmatmul.bf16.gmra.mxu0 %v708
    %v2455 = vpop.f32.mrf.mxu0
    %v2456 = vadd.f32 %v2367, %v2455
    %v2457 = vpop.f32.mrf.mxu0
    %v2458 = vadd.f32 %v2369, %v2457
    %2459 = vmatmul.bf16.gmra.mxu0 %v712
    %v2460 = vpop.f32.mrf.mxu0
    %v2461 = vadd.f32 %v2372, %v2460
    %v2462 = vpop.f32.mrf.mxu0
    %v2463 = vadd.f32 %v2374, %v2462
    %2464 = vmatmul.bf16.gmra.mxu0 %v716
    %v2465 = vpop.f32.mrf.mxu0
    %v2466 = vadd.f32 %v2377, %v2465
    %v2467 = vpop.f32.mrf.mxu0
    %v2468 = vadd.f32 %v2379, %v2467
    %2469 = vmatmul.bf16.gmra.mxu0 %v720
    %v2470 = vpop.f32.mrf.mxu0
    %v2471 = vadd.f32 %v2382, %v2470
    %v2472 = vpop.f32.mrf.mxu0
    %v2473 = vadd.f32 %v2384, %v2472
    %2474 = vmatmul.bf16.gmra.mxu0 %v724
    %v2475 = vpop.f32.mrf.mxu0
    %v2476 = vadd.f32 %v2387, %v2475
    %v2477 = vpop.f32.mrf.mxu0
    %v2478 = vadd.f32 %v2389, %v2477
    %2479 = vmatmul.bf16.gmra.mxu0 %v728
    %v2480 = vpop.f32.mrf.mxu0
    %v2481 = vadd.f32 %v2392, %v2480
    %v2482 = vpop.f32.mrf.mxu0
    %v2483 = vadd.f32 %v2394, %v2482
    %2484 = vmatmul.bf16.gmra.mxu0 %v732
    %v2485 = vpop.f32.mrf.mxu0
    %v2486 = vadd.f32 %v2397, %v2485
    %v2487 = vpop.f32.mrf.mxu0
    %v2488 = vadd.f32 %v2399, %v2487
    %2489 = vmatmul.bf16.gmra.mxu0 %v736
    %v2490 = vpop.f32.mrf.mxu0
    %v2491 = vadd.f32 %v2402, %v2490
    %v2492 = vpop.f32.mrf.mxu0
    %v2493 = vadd.f32 %v2404, %v2492
    %2494 = vdwg.mxu0
    %2495 = vmatpush.bf16.msra.mxu0 %v1386
    %2496 = vmatpush.bf16.msra.mxu0 %v1382
    %2497 = vmatpush.bf16.msra.mxu0 %v1378
    %2498 = vmatpush.bf16.msra.mxu0 %v1374
    %2499 = vmatpush.bf16.msra.mxu0 %v1370
    %2500 = vmatpush.bf16.msra.mxu0 %v1366
    %2501 = vmatpush.bf16.msra.mxu0 %v1362
    %2502 = vmatpush.bf16.msra.mxu0 %v1358
    %2503 = vmatmul.bf16.gmra.mxu0 %v677
    %v2504 = vpop.f32.mrf.mxu0
    %v2505 = vadd.f32 %v2416, %v2504
    %v2506 = vpop.f32.mrf.mxu0
    %v2507 = vadd.f32 %v2418, %v2506
    %2508 = vmatmul.bf16.gmra.mxu0 %v681
    %v2509 = vpop.f32.mrf.mxu0
    %v2510 = vadd.f32 %v2421, %v2509
    %v2511 = vpop.f32.mrf.mxu0
    %v2512 = vadd.f32 %v2423, %v2511
    %2513 = vmatmul.bf16.gmra.mxu0 %v685
    %v2514 = vpop.f32.mrf.mxu0
    %v2515 = vadd.f32 %v2426, %v2514
    %v2516 = vpop.f32.mrf.mxu0
    %v2517 = vadd.f32 %v2428, %v2516
    %2518 = vmatmul.bf16.gmra.mxu0 %v689
    %v2519 = vpop.f32.mrf.mxu0
    %v2520 = vadd.f32 %v2431, %v2519
    %v2521 = vpop.f32.mrf.mxu0
    %v2522 = vadd.f32 %v2433, %v2521
    %2523 = vmatmul.bf16.gmra.mxu0 %v693
    %v2524 = vpop.f32.mrf.mxu0
    %v2525 = vadd.f32 %v2436, %v2524
    %v2526 = vpop.f32.mrf.mxu0
    %v2527 = vadd.f32 %v2438, %v2526
    %2528 = vmatmul.bf16.gmra.mxu0 %v697
    %v2529 = vpop.f32.mrf.mxu0
    %v2530 = vadd.f32 %v2441, %v2529
    %v2531 = vpop.f32.mrf.mxu0
    %v2532 = vadd.f32 %v2443, %v2531
    %2533 = vmatmul.bf16.gmra.mxu0 %v701
    %v2534 = vpop.f32.mrf.mxu0
    %v2535 = vadd.f32 %v2446, %v2534
    %v2536 = vpop.f32.mrf.mxu0
    %v2537 = vadd.f32 %v2448, %v2536
    %2538 = vmatmul.bf16.gmra.mxu0 %v705
    %v2539 = vpop.f32.mrf.mxu0
    %v2540 = vadd.f32 %v2451, %v2539
    %v2541 = vpop.f32.mrf.mxu0
    %v2542 = vadd.f32 %v2453, %v2541
    %2543 = vmatmul.bf16.gmra.mxu0 %v709
    %v2544 = vpop.f32.mrf.mxu0
    %v2545 = vadd.f32 %v2456, %v2544
    %v2546 = vpop.f32.mrf.mxu0
    %v2547 = vadd.f32 %v2458, %v2546
    %2548 = vmatmul.bf16.gmra.mxu0 %v713
    %v2549 = vpop.f32.mrf.mxu0
    %v2550 = vadd.f32 %v2461, %v2549
    %v2551 = vpop.f32.mrf.mxu0
    %v2552 = vadd.f32 %v2463, %v2551
    %2553 = vmatmul.bf16.gmra.mxu0 %v717
    %v2554 = vpop.f32.mrf.mxu0
    %v2555 = vadd.f32 %v2466, %v2554
    %v2556 = vpop.f32.mrf.mxu0
    %v2557 = vadd.f32 %v2468, %v2556
    %2558 = vmatmul.bf16.gmra.mxu0 %v721
    %v2559 = vpop.f32.mrf.mxu0
    %v2560 = vadd.f32 %v2471, %v2559
    %v2561 = vpop.f32.mrf.mxu0
    %v2562 = vadd.f32 %v2473, %v2561
    %2563 = vmatmul.bf16.gmra.mxu0 %v725
    %v2564 = vpop.f32.mrf.mxu0
    %v2565 = vadd.f32 %v2476, %v2564
    %v2566 = vpop.f32.mrf.mxu0
    %v2567 = vadd.f32 %v2478, %v2566
    %2568 = vmatmul.bf16.gmra.mxu0 %v729
    %v2569 = vpop.f32.mrf.mxu0
    %v2570 = vadd.f32 %v2481, %v2569
    %v2571 = vpop.f32.mrf.mxu0
    %v2572 = vadd.f32 %v2483, %v2571
    %2573 = vmatmul.bf16.gmra.mxu0 %v733
    %v2574 = vpop.f32.mrf.mxu0
    %v2575 = vadd.f32 %v2486, %v2574
    %v2576 = vpop.f32.mrf.mxu0
    %v2577 = vadd.f32 %v2488, %v2576
    %2578 = vmatmul.bf16.gmra.mxu0 %v737
    %v2579 = vpop.f32.mrf.mxu0
    %v2580 = vadd.f32 %v2491, %v2579
    %v2581 = vpop.f32.mrf.mxu0
    %v2582 = vadd.f32 %v2493, %v2581
    %2583 = vdwg.mxu0
    %2584 = vmatpush.bf16.msra.mxu0 %v1291
    %2585 = vmatpush.bf16.msra.mxu0 %v1287
    %2586 = vmatpush.bf16.msra.mxu0 %v1283
    %2587 = vmatpush.bf16.msra.mxu0 %v1279
    %2588 = vmatpush.bf16.msra.mxu0 %v1275
    %2589 = vmatpush.bf16.msra.mxu0 %v1271
    %2590 = vmatpush.bf16.msra.mxu0 %v1267
    %2591 = vmatpush.bf16.msra.mxu0 %v1263
    %2592 = vmatmul.bf16.gmra.mxu0 %v674
    %v2593 = vpop.f32.mrf.mxu0
    %v2594 = vadd.f32 %v871, %v2593
    %v2595 = vpop.f32.mrf.mxu0
    %v2596 = vadd.f32 %v871, %v2595
    %2597 = vmatmul.bf16.gmra.mxu0 %v678
    %v2598 = vpop.f32.mrf.mxu0
    %v2599 = vadd.f32 %v871, %v2598
    %v2600 = vpop.f32.mrf.mxu0
    %v2601 = vadd.f32 %v871, %v2600
    %2602 = vmatmul.bf16.gmra.mxu0 %v682
    %v2603 = vpop.f32.mrf.mxu0
    %v2604 = vadd.f32 %v871, %v2603
    %v2605 = vpop.f32.mrf.mxu0
    %v2606 = vadd.f32 %v871, %v2605
    %2607 = vmatmul.bf16.gmra.mxu0 %v686
    %v2608 = vpop.f32.mrf.mxu0
    %v2609 = vadd.f32 %v871, %v2608
    %v2610 = vpop.f32.mrf.mxu0
    %v2611 = vadd.f32 %v871, %v2610
    %2612 = vmatmul.bf16.gmra.mxu0 %v690
    %v2613 = vpop.f32.mrf.mxu0
    %v2614 = vadd.f32 %v871, %v2613
    %v2615 = vpop.f32.mrf.mxu0
    %v2616 = vadd.f32 %v871, %v2615
    %2617 = vmatmul.bf16.gmra.mxu0 %v694
    %v2618 = vpop.f32.mrf.mxu0
    %v2619 = vadd.f32 %v871, %v2618
    %v2620 = vpop.f32.mrf.mxu0
    %v2621 = vadd.f32 %v871, %v2620
    %2622 = vmatmul.bf16.gmra.mxu0 %v698
    %v2623 = vpop.f32.mrf.mxu0
    %v2624 = vadd.f32 %v871, %v2623
    %v2625 = vpop.f32.mrf.mxu0
    %v2626 = vadd.f32 %v871, %v2625
    %2627 = vmatmul.bf16.gmra.mxu0 %v702
    %v2628 = vpop.f32.mrf.mxu0
    %v2629 = vadd.f32 %v871, %v2628
    %v2630 = vpop.f32.mrf.mxu0
    %v2631 = vadd.f32 %v871, %v2630
    %2632 = vmatmul.bf16.gmra.mxu0 %v706
    %v2633 = vpop.f32.mrf.mxu0
    %v2634 = vadd.f32 %v871, %v2633
    %v2635 = vpop.f32.mrf.mxu0
    %v2636 = vadd.f32 %v871, %v2635
    %2637 = vmatmul.bf16.gmra.mxu0 %v710
    %v2638 = vpop.f32.mrf.mxu0
    %v2639 = vadd.f32 %v871, %v2638
    %v2640 = vpop.f32.mrf.mxu0
    %v2641 = vadd.f32 %v871, %v2640
    %2642 = vmatmul.bf16.gmra.mxu0 %v714
    %v2643 = vpop.f32.mrf.mxu0
    %v2644 = vadd.f32 %v871, %v2643
    %v2645 = vpop.f32.mrf.mxu0
    %v2646 = vadd.f32 %v871, %v2645
    %2647 = vmatmul.bf16.gmra.mxu0 %v718
    %v2648 = vpop.f32.mrf.mxu0
    %v2649 = vadd.f32 %v871, %v2648
    %v2650 = vpop.f32.mrf.mxu0
    %v2651 = vadd.f32 %v871, %v2650
    %2652 = vmatmul.bf16.gmra.mxu0 %v722
    %v2653 = vpop.f32.mrf.mxu0
    %v2654 = vadd.f32 %v871, %v2653
    %v2655 = vpop.f32.mrf.mxu0
    %v2656 = vadd.f32 %v871, %v2655
    %2657 = vmatmul.bf16.gmra.mxu0 %v726
    %v2658 = vpop.f32.mrf.mxu0
    %v2659 = vadd.f32 %v871, %v2658
    %v2660 = vpop.f32.mrf.mxu0
    %v2661 = vadd.f32 %v871, %v2660
    %2662 = vmatmul.bf16.gmra.mxu0 %v730
    %v2663 = vpop.f32.mrf.mxu0
    %v2664 = vadd.f32 %v871, %v2663
    %v2665 = vpop.f32.mrf.mxu0
    %v2666 = vadd.f32 %v871, %v2665
    %2667 = vmatmul.bf16.gmra.mxu0 %v734
    %v2668 = vpop.f32.mrf.mxu0
    %v2669 = vadd.f32 %v871, %v2668
    %v2670 = vpop.f32.mrf.mxu0
    %v2671 = vadd.f32 %v871, %v2670
    %2672 = vdwg.mxu0
    %2673 = vmatpush.bf16.msra.mxu0 %v1323
    %2674 = vmatpush.bf16.msra.mxu0 %v1319
    %2675 = vmatpush.bf16.msra.mxu0 %v1315
    %2676 = vmatpush.bf16.msra.mxu0 %v1311
    %2677 = vmatpush.bf16.msra.mxu0 %v1307
    %2678 = vmatpush.bf16.msra.mxu0 %v1303
    %2679 = vmatpush.bf16.msra.mxu0 %v1299
    %2680 = vmatpush.bf16.msra.mxu0 %v1295
    %2681 = vmatmul.bf16.gmra.mxu0 %v675
    %v2682 = vpop.f32.mrf.mxu0
    %v2683 = vadd.f32 %v2594, %v2682
    %v2684 = vpop.f32.mrf.mxu0
    %v2685 = vadd.f32 %v2596, %v2684
    %2686 = vmatmul.bf16.gmra.mxu0 %v679
    %v2687 = vpop.f32.mrf.mxu0
    %v2688 = vadd.f32 %v2599, %v2687
    %v2689 = vpop.f32.mrf.mxu0
    %v2690 = vadd.f32 %v2601, %v2689
    %2691 = vmatmul.bf16.gmra.mxu0 %v683
    %v2692 = vpop.f32.mrf.mxu0
    %v2693 = vadd.f32 %v2604, %v2692
    %v2694 = vpop.f32.mrf.mxu0
    %v2695 = vadd.f32 %v2606, %v2694
    %2696 = vmatmul.bf16.gmra.mxu0 %v687
    %v2697 = vpop.f32.mrf.mxu0
    %v2698 = vadd.f32 %v2609, %v2697
    %v2699 = vpop.f32.mrf.mxu0
    %v2700 = vadd.f32 %v2611, %v2699
    %2701 = vmatmul.bf16.gmra.mxu0 %v691
    %v2702 = vpop.f32.mrf.mxu0
    %v2703 = vadd.f32 %v2614, %v2702
    %v2704 = vpop.f32.mrf.mxu0
    %v2705 = vadd.f32 %v2616, %v2704
    %2706 = vmatmul.bf16.gmra.mxu0 %v695
    %v2707 = vpop.f32.mrf.mxu0
    %v2708 = vadd.f32 %v2619, %v2707
    %v2709 = vpop.f32.mrf.mxu0
    %v2710 = vadd.f32 %v2621, %v2709
    %2711 = vmatmul.bf16.gmra.mxu0 %v699
    %v2712 = vpop.f32.mrf.mxu0
    %v2713 = vadd.f32 %v2624, %v2712
    %v2714 = vpop.f32.mrf.mxu0
    %v2715 = vadd.f32 %v2626, %v2714
    %2716 = vmatmul.bf16.gmra.mxu0 %v703
    %v2717 = vpop.f32.mrf.mxu0
    %v2718 = vadd.f32 %v2629, %v2717
    %v2719 = vpop.f32.mrf.mxu0
    %v2720 = vadd.f32 %v2631, %v2719
    %2721 = vmatmul.bf16.gmra.mxu0 %v707
    %v2722 = vpop.f32.mrf.mxu0
    %v2723 = vadd.f32 %v2634, %v2722
    %v2724 = vpop.f32.mrf.mxu0
    %v2725 = vadd.f32 %v2636, %v2724
    %2726 = vmatmul.bf16.gmra.mxu0 %v711
    %v2727 = vpop.f32.mrf.mxu0
    %v2728 = vadd.f32 %v2639, %v2727
    %v2729 = vpop.f32.mrf.mxu0
    %v2730 = vadd.f32 %v2641, %v2729
    %2731 = vmatmul.bf16.gmra.mxu0 %v715
    %v2732 = vpop.f32.mrf.mxu0
    %v2733 = vadd.f32 %v2644, %v2732
    %v2734 = vpop.f32.mrf.mxu0
    %v2735 = vadd.f32 %v2646, %v2734
    %2736 = vmatmul.bf16.gmra.mxu0 %v719
    %v2737 = vpop.f32.mrf.mxu0
    %v2738 = vadd.f32 %v2649, %v2737
    %v2739 = vpop.f32.mrf.mxu0
    %v2740 = vadd.f32 %v2651, %v2739
    %2741 = vmatmul.bf16.gmra.mxu0 %v723
    %v2742 = vpop.f32.mrf.mxu0
    %v2743 = vadd.f32 %v2654, %v2742
    %v2744 = vpop.f32.mrf.mxu0
    %v2745 = vadd.f32 %v2656, %v2744
    %2746 = vmatmul.bf16.gmra.mxu0 %v727
    %v2747 = vpop.f32.mrf.mxu0
    %v2748 = vadd.f32 %v2659, %v2747
    %v2749 = vpop.f32.mrf.mxu0
    %v2750 = vadd.f32 %v2661, %v2749
    %2751 = vmatmul.bf16.gmra.mxu0 %v731
    %v2752 = vpop.f32.mrf.mxu0
    %v2753 = vadd.f32 %v2664, %v2752
    %v2754 = vpop.f32.mrf.mxu0
    %v2755 = vadd.f32 %v2666, %v2754
    %2756 = vmatmul.bf16.gmra.mxu0 %v735
    %v2757 = vpop.f32.mrf.mxu0
    %v2758 = vadd.f32 %v2669, %v2757
    %v2759 = vpop.f32.mrf.mxu0
    %v2760 = vadd.f32 %v2671, %v2759
    %2761 = vdwg.mxu0
    %2762 = vmatpush.bf16.msra.mxu0 %v1355
    %2763 = vmatpush.bf16.msra.mxu0 %v1351
    %2764 = vmatpush.bf16.msra.mxu0 %v1347
    %2765 = vmatpush.bf16.msra.mxu0 %v1343
    %2766 = vmatpush.bf16.msra.mxu0 %v1339
    %2767 = vmatpush.bf16.msra.mxu0 %v1335
    %2768 = vmatpush.bf16.msra.mxu0 %v1331
    %2769 = vmatpush.bf16.msra.mxu0 %v1327
    %2770 = vmatmul.bf16.gmra.mxu0 %v676
    %v2771 = vpop.f32.mrf.mxu0
    %v2772 = vadd.f32 %v2683, %v2771
    %v2773 = vpop.f32.mrf.mxu0
    %v2774 = vadd.f32 %v2685, %v2773
    %2775 = vmatmul.bf16.gmra.mxu0 %v680
    %v2776 = vpop.f32.mrf.mxu0
    %v2777 = vadd.f32 %v2688, %v2776
    %v2778 = vpop.f32.mrf.mxu0
    %v2779 = vadd.f32 %v2690, %v2778
    %2780 = vmatmul.bf16.gmra.mxu0 %v684
    %v2781 = vpop.f32.mrf.mxu0
    %v2782 = vadd.f32 %v2693, %v2781
    %v2783 = vpop.f32.mrf.mxu0
    %v2784 = vadd.f32 %v2695, %v2783
    %2785 = vmatmul.bf16.gmra.mxu0 %v688
    %v2786 = vpop.f32.mrf.mxu0
    %v2787 = vadd.f32 %v2698, %v2786
    %v2788 = vpop.f32.mrf.mxu0
    %v2789 = vadd.f32 %v2700, %v2788
    %2790 = vmatmul.bf16.gmra.mxu0 %v692
    %v2791 = vpop.f32.mrf.mxu0
    %v2792 = vadd.f32 %v2703, %v2791
    %v2793 = vpop.f32.mrf.mxu0
    %v2794 = vadd.f32 %v2705, %v2793
    %2795 = vmatmul.bf16.gmra.mxu0 %v696
    %v2796 = vpop.f32.mrf.mxu0
    %v2797 = vadd.f32 %v2708, %v2796
    %v2798 = vpop.f32.mrf.mxu0
    %v2799 = vadd.f32 %v2710, %v2798
    %2800 = vmatmul.bf16.gmra.mxu0 %v700
    %v2801 = vpop.f32.mrf.mxu0
    %v2802 = vadd.f32 %v2713, %v2801
    %v2803 = vpop.f32.mrf.mxu0
    %v2804 = vadd.f32 %v2715, %v2803
    %2805 = vmatmul.bf16.gmra.mxu0 %v704
    %v2806 = vpop.f32.mrf.mxu0
    %v2807 = vadd.f32 %v2718, %v2806
    %v2808 = vpop.f32.mrf.mxu0
    %v2809 = vadd.f32 %v2720, %v2808
    %2810 = vmatmul.bf16.gmra.mxu0 %v708
    %v2811 = vpop.f32.mrf.mxu0
    %v2812 = vadd.f32 %v2723, %v2811
    %v2813 = vpop.f32.mrf.mxu0
    %v2814 = vadd.f32 %v2725, %v2813
    %2815 = vmatmul.bf16.gmra.mxu0 %v712
    %v2816 = vpop.f32.mrf.mxu0
    %v2817 = vadd.f32 %v2728, %v2816
    %v2818 = vpop.f32.mrf.mxu0
    %v2819 = vadd.f32 %v2730, %v2818
    %2820 = vmatmul.bf16.gmra.mxu0 %v716
    %v2821 = vpop.f32.mrf.mxu0
    %v2822 = vadd.f32 %v2733, %v2821
    %v2823 = vpop.f32.mrf.mxu0
    %v2824 = vadd.f32 %v2735, %v2823
    %2825 = vmatmul.bf16.gmra.mxu0 %v720
    %v2826 = vpop.f32.mrf.mxu0
    %v2827 = vadd.f32 %v2738, %v2826
    %v2828 = vpop.f32.mrf.mxu0
    %v2829 = vadd.f32 %v2740, %v2828
    %2830 = vmatmul.bf16.gmra.mxu0 %v724
    %v2831 = vpop.f32.mrf.mxu0
    %v2832 = vadd.f32 %v2743, %v2831
    %v2833 = vpop.f32.mrf.mxu0
    %v2834 = vadd.f32 %v2745, %v2833
    %2835 = vmatmul.bf16.gmra.mxu0 %v728
    %v2836 = vpop.f32.mrf.mxu0
    %v2837 = vadd.f32 %v2748, %v2836
    %v2838 = vpop.f32.mrf.mxu0
    %v2839 = vadd.f32 %v2750, %v2838
    %2840 = vmatmul.bf16.gmra.mxu0 %v732
    %v2841 = vpop.f32.mrf.mxu0
    %v2842 = vadd.f32 %v2753, %v2841
    %v2843 = vpop.f32.mrf.mxu0
    %v2844 = vadd.f32 %v2755, %v2843
    %2845 = vmatmul.bf16.gmra.mxu0 %v736
    %v2846 = vpop.f32.mrf.mxu0
    %v2847 = vadd.f32 %v2758, %v2846
    %v2848 = vpop.f32.mrf.mxu0
    %v2849 = vadd.f32 %v2760, %v2848
    %2850 = vdwg.mxu0
    %2851 = vmatpush.bf16.msra.mxu0 %v1387
    %2852 = vmatpush.bf16.msra.mxu0 %v1383
    %2853 = vmatpush.bf16.msra.mxu0 %v1379
    %2854 = vmatpush.bf16.msra.mxu0 %v1375
    %2855 = vmatpush.bf16.msra.mxu0 %v1371
    %2856 = vmatpush.bf16.msra.mxu0 %v1367
    %2857 = vmatpush.bf16.msra.mxu0 %v1363
    %2858 = vmatpush.bf16.msra.mxu0 %v1359
    %2859 = vmatmul.bf16.gmra.mxu0 %v677
    %v2860 = vpop.f32.mrf.mxu0
    %v2861 = vadd.f32 %v2772, %v2860
    %v2862 = vpop.f32.mrf.mxu0
    %v2863 = vadd.f32 %v2774, %v2862
    %2864 = vmatmul.bf16.gmra.mxu0 %v681
    %v2865 = vpop.f32.mrf.mxu0
    %v2866 = vadd.f32 %v2777, %v2865
    %v2867 = vpop.f32.mrf.mxu0
    %v2868 = vadd.f32 %v2779, %v2867
    %2869 = vmatmul.bf16.gmra.mxu0 %v685
    %v2870 = vpop.f32.mrf.mxu0
    %v2871 = vadd.f32 %v2782, %v2870
    %v2872 = vpop.f32.mrf.mxu0
    %v2873 = vadd.f32 %v2784, %v2872
    %2874 = vmatmul.bf16.gmra.mxu0 %v689
    %v2875 = vpop.f32.mrf.mxu0
    %v2876 = vadd.f32 %v2787, %v2875
    %v2877 = vpop.f32.mrf.mxu0
    %v2878 = vadd.f32 %v2789, %v2877
    %2879 = vmatmul.bf16.gmra.mxu0 %v693
    %v2880 = vpop.f32.mrf.mxu0
    %v2881 = vadd.f32 %v2792, %v2880
    %v2882 = vpop.f32.mrf.mxu0
    %v2883 = vadd.f32 %v2794, %v2882
    %2884 = vmatmul.bf16.gmra.mxu0 %v697
    %v2885 = vpop.f32.mrf.mxu0
    %v2886 = vadd.f32 %v2797, %v2885
    %v2887 = vpop.f32.mrf.mxu0
    %v2888 = vadd.f32 %v2799, %v2887
    %2889 = vmatmul.bf16.gmra.mxu0 %v701
    %v2890 = vpop.f32.mrf.mxu0
    %v2891 = vadd.f32 %v2802, %v2890
    %v2892 = vpop.f32.mrf.mxu0
    %v2893 = vadd.f32 %v2804, %v2892
    %2894 = vmatmul.bf16.gmra.mxu0 %v705
    %v2895 = vpop.f32.mrf.mxu0
    %v2896 = vadd.f32 %v2807, %v2895
    %v2897 = vpop.f32.mrf.mxu0
    %v2898 = vadd.f32 %v2809, %v2897
    %2899 = vmatmul.bf16.gmra.mxu0 %v709
    %v2900 = vpop.f32.mrf.mxu0
    %v2901 = vadd.f32 %v2812, %v2900
    %v2902 = vpop.f32.mrf.mxu0
    %v2903 = vadd.f32 %v2814, %v2902
    %2904 = vmatmul.bf16.gmra.mxu0 %v713
    %v2905 = vpop.f32.mrf.mxu0
    %v2906 = vadd.f32 %v2817, %v2905
    %v2907 = vpop.f32.mrf.mxu0
    %v2908 = vadd.f32 %v2819, %v2907
    %2909 = vmatmul.bf16.gmra.mxu0 %v717
    %v2910 = vpop.f32.mrf.mxu0
    %v2911 = vadd.f32 %v2822, %v2910
    %v2912 = vpop.f32.mrf.mxu0
    %v2913 = vadd.f32 %v2824, %v2912
    %2914 = vmatmul.bf16.gmra.mxu0 %v721
    %v2915 = vpop.f32.mrf.mxu0
    %v2916 = vadd.f32 %v2827, %v2915
    %v2917 = vpop.f32.mrf.mxu0
    %v2918 = vadd.f32 %v2829, %v2917
    %2919 = vmatmul.bf16.gmra.mxu0 %v725
    %v2920 = vpop.f32.mrf.mxu0
    %v2921 = vadd.f32 %v2832, %v2920
    %v2922 = vpop.f32.mrf.mxu0
    %v2923 = vadd.f32 %v2834, %v2922
    %2924 = vmatmul.bf16.gmra.mxu0 %v729
    %v2925 = vpop.f32.mrf.mxu0
    %v2926 = vadd.f32 %v2837, %v2925
    %v2927 = vpop.f32.mrf.mxu0
    %v2928 = vadd.f32 %v2839, %v2927
    %2929 = vmatmul.bf16.gmra.mxu0 %v733
    %v2930 = vpop.f32.mrf.mxu0
    %v2931 = vadd.f32 %v2842, %v2930
    %v2932 = vpop.f32.mrf.mxu0
    %v2933 = vadd.f32 %v2844, %v2932
    %2934 = vmatmul.bf16.gmra.mxu0 %v737
    %v2935 = vpop.f32.mrf.mxu0
    %v2936 = vadd.f32 %v2847, %v2935
    %v2937 = vpop.f32.mrf.mxu0
    %v2938 = vadd.f32 %v2849, %v2937
    %2939 = vdwg.mxu0
    %v2940 = vmax.f32 %v1793, 0.0
    %v2941 = vmax.f32 %v2149, 0.0
    %v2942 = vmax.f32 %v2505, 0.0
    %v2943 = vmax.f32 %v2861, 0.0
    %v2944 = vmax.f32 %v1795, 0.0
    %v2945 = vmax.f32 %v2151, 0.0
    %v2946 = vmax.f32 %v2507, 0.0
    %v2947 = vmax.f32 %v2863, 0.0
    %v2948 = vmax.f32 %v1798, 0.0
    %v2949 = vmax.f32 %v2154, 0.0
    %v2950 = vmax.f32 %v2510, 0.0
    %v2951 = vmax.f32 %v2866, 0.0
    %v2952 = vmax.f32 %v1800, 0.0
    %v2953 = vmax.f32 %v2156, 0.0
    %v2954 = vmax.f32 %v2512, 0.0
    %v2955 = vmax.f32 %v2868, 0.0
    %v2956 = vmax.f32 %v1803, 0.0
    %v2957 = vmax.f32 %v2159, 0.0
    %v2958 = vmax.f32 %v2515, 0.0
    %v2959 = vmax.f32 %v2871, 0.0
    %v2960 = vmax.f32 %v1805, 0.0
    %v2961 = vmax.f32 %v2161, 0.0
    %v2962 = vmax.f32 %v2517, 0.0
    %v2963 = vmax.f32 %v2873, 0.0
    %v2964 = vmax.f32 %v1808, 0.0
    %v2965 = vmax.f32 %v2164, 0.0
    %v2966 = vmax.f32 %v2520, 0.0
    %v2967 = vmax.f32 %v2876, 0.0
    %v2968 = vmax.f32 %v1810, 0.0
    %v2969 = vmax.f32 %v2166, 0.0
    %v2970 = vmax.f32 %v2522, 0.0
    %v2971 = vmax.f32 %v2878, 0.0
    %v2972 = vmax.f32 %v1813, 0.0
    %v2973 = vmax.f32 %v2169, 0.0
    %v2974 = vmax.f32 %v2525, 0.0
    %v2975 = vmax.f32 %v2881, 0.0
    %v2976 = vmax.f32 %v1815, 0.0
    %v2977 = vmax.f32 %v2171, 0.0
    %v2978 = vmax.f32 %v2527, 0.0
    %v2979 = vmax.f32 %v2883, 0.0
    %v2980 = vmax.f32 %v1818, 0.0
    %v2981 = vmax.f32 %v2174, 0.0
    %v2982 = vmax.f32 %v2530, 0.0
    %v2983 = vmax.f32 %v2886, 0.0
    %v2984 = vmax.f32 %v1820, 0.0
    %v2985 = vmax.f32 %v2176, 0.0
    %v2986 = vmax.f32 %v2532, 0.0
    %v2987 = vmax.f32 %v2888, 0.0
    %v2988 = vmax.f32 %v1823, 0.0
    %v2989 = vmax.f32 %v2179, 0.0
    %v2990 = vmax.f32 %v2535, 0.0
    %v2991 = vmax.f32 %v2891, 0.0
    %v2992 = vmax.f32 %v1825, 0.0
    %v2993 = vmax.f32 %v2181, 0.0
    %v2994 = vmax.f32 %v2537, 0.0
    %v2995 = vmax.f32 %v2893, 0.0
    %v2996 = vmax.f32 %v1828, 0.0
    %v2997 = vmax.f32 %v2184, 0.0
    %v2998 = vmax.f32 %v2540, 0.0
    %v2999 = vmax.f32 %v2896, 0.0
    %v3000 = vmax.f32 %v1830, 0.0
    %v3001 = vmax.f32 %v2186, 0.0
    %v3002 = vmax.f32 %v2542, 0.0
    %v3003 = vmax.f32 %v2898, 0.0
    %v3004 = vmax.f32 %v1833, 0.0
    %v3005 = vmax.f32 %v2189, 0.0
    %v3006 = vmax.f32 %v2545, 0.0
    %v3007 = vmax.f32 %v2901, 0.0
    %v3008 = vmax.f32 %v1835, 0.0
    %v3009 = vmax.f32 %v2191, 0.0
    %v3010 = vmax.f32 %v2547, 0.0
    %v3011 = vmax.f32 %v2903, 0.0
    %v3012 = vmax.f32 %v1838, 0.0
    %v3013 = vmax.f32 %v2194, 0.0
    %v3014 = vmax.f32 %v2550, 0.0
    %v3015 = vmax.f32 %v2906, 0.0
    %v3016 = vmax.f32 %v1840, 0.0
    %v3017 = vmax.f32 %v2196, 0.0
    %v3018 = vmax.f32 %v2552, 0.0
    %v3019 = vmax.f32 %v2908, 0.0
    %v3020 = vmax.f32 %v1843, 0.0
    %v3021 = vmax.f32 %v2199, 0.0
    %v3022 = vmax.f32 %v2555, 0.0
    %v3023 = vmax.f32 %v2911, 0.0
    %v3024 = vmax.f32 %v1845, 0.0
    %v3025 = vmax.f32 %v2201, 0.0
    %v3026 = vmax.f32 %v2557, 0.0
    %v3027 = vmax.f32 %v2913, 0.0
    %v3028 = vmax.f32 %v1848, 0.0
    %v3029 = vmax.f32 %v2204, 0.0
    %v3030 = vmax.f32 %v2560, 0.0
    %v3031 = vmax.f32 %v2916, 0.0
    %v3032 = vmax.f32 %v1850, 0.0
    %v3033 = vmax.f32 %v2206, 0.0
    %v3034 = vmax.f32 %v2562, 0.0
    %v3035 = vmax.f32 %v2918, 0.0
    %v3036 = vmax.f32 %v1853, 0.0
    %v3037 = vmax.f32 %v2209, 0.0
    %v3038 = vmax.f32 %v2565, 0.0
    %v3039 = vmax.f32 %v2921, 0.0
    %v3040 = vmax.f32 %v1855, 0.0
    %v3041 = vmax.f32 %v2211, 0.0
    %v3042 = vmax.f32 %v2567, 0.0
    %v3043 = vmax.f32 %v2923, 0.0
    %v3044 = vmax.f32 %v1858, 0.0
    %v3045 = vmax.f32 %v2214, 0.0
    %v3046 = vmax.f32 %v2570, 0.0
    %v3047 = vmax.f32 %v2926, 0.0
    %v3048 = vmax.f32 %v1860, 0.0
    %v3049 = vmax.f32 %v2216, 0.0
    %v3050 = vmax.f32 %v2572, 0.0
    %v3051 = vmax.f32 %v2928, 0.0
    %v3052 = vmax.f32 %v1863, 0.0
    %v3053 = vmax.f32 %v2219, 0.0
    %v3054 = vmax.f32 %v2575, 0.0
    %v3055 = vmax.f32 %v2931, 0.0
    %v3056 = vmax.f32 %v1865, 0.0
    %v3057 = vmax.f32 %v2221, 0.0
    %v3058 = vmax.f32 %v2577, 0.0
    %v3059 = vmax.f32 %v2933, 0.0
    %v3060 = vmax.f32 %v1868, 0.0
    %v3061 = vmax.f32 %v2224, 0.0
    %v3062 = vmax.f32 %v2580, 0.0
    %v3063 = vmax.f32 %v2936, 0.0
    %v3064 = vmax.f32 %v1870, 0.0
    %v3065 = vmax.f32 %v2226, 0.0
    %v3066 = vmax.f32 %v2582, 0.0
    %v3067 = vmax.f32 %v2938, 0.0
    %v3068 = vpack.c.bf16 %v2944, %v2940
    %v3069 = vpack.c.bf16 %v2945, %v2941
    %v3070 = vpack.c.bf16 %v2946, %v2942
    %v3071 = vpack.c.bf16 %v2947, %v2943
    %v3072 = vpack.c.bf16 %v2952, %v2948
    %v3073 = vpack.c.bf16 %v2953, %v2949
    %v3074 = vpack.c.bf16 %v2954, %v2950
    %v3075 = vpack.c.bf16 %v2955, %v2951
    %v3076 = vpack.c.bf16 %v2960, %v2956
    %v3077 = vpack.c.bf16 %v2961, %v2957
    %v3078 = vpack.c.bf16 %v2962, %v2958
    %v3079 = vpack.c.bf16 %v2963, %v2959
    %v3080 = vpack.c.bf16 %v2968, %v2964
    %v3081 = vpack.c.bf16 %v2969, %v2965
    %v3082 = vpack.c.bf16 %v2970, %v2966
    %v3083 = vpack.c.bf16 %v2971, %v2967
    %v3084 = vpack.c.bf16 %v2976, %v2972
    %v3085 = vpack.c.bf16 %v2977, %v2973
    %v3086 = vpack.c.bf16 %v2978, %v2974
    %v3087 = vpack.c.bf16 %v2979, %v2975
    %v3088 = vpack.c.bf16 %v2984, %v2980
    %v3089 = vpack.c.bf16 %v2985, %v2981
    %v3090 = vpack.c.bf16 %v2986, %v2982
    %v3091 = vpack.c.bf16 %v2987, %v2983
    %v3092 = vpack.c.bf16 %v2992, %v2988
    %v3093 = vpack.c.bf16 %v2993, %v2989
    %v3094 = vpack.c.bf16 %v2994, %v2990
    %v3095 = vpack.c.bf16 %v2995, %v2991
    %v3096 = vpack.c.bf16 %v3000, %v2996
    %v3097 = vpack.c.bf16 %v3001, %v2997
    %v3098 = vpack.c.bf16 %v3002, %v2998
    %v3099 = vpack.c.bf16 %v3003, %v2999
    %v3100 = vpack.c.bf16 %v3008, %v3004
    %v3101 = vpack.c.bf16 %v3009, %v3005
    %v3102 = vpack.c.bf16 %v3010, %v3006
    %v3103 = vpack.c.bf16 %v3011, %v3007
    %v3104 = vpack.c.bf16 %v3016, %v3012
    %v3105 = vpack.c.bf16 %v3017, %v3013
    %v3106 = vpack.c.bf16 %v3018, %v3014
    %v3107 = vpack.c.bf16 %v3019, %v3015
    %v3108 = vpack.c.bf16 %v3024, %v3020
    %v3109 = vpack.c.bf16 %v3025, %v3021
    %v3110 = vpack.c.bf16 %v3026, %v3022
    %v3111 = vpack.c.bf16 %v3027, %v3023
    %v3112 = vpack.c.bf16 %v3032, %v3028
    %v3113 = vpack.c.bf16 %v3033, %v3029
    %v3114 = vpack.c.bf16 %v3034, %v3030
    %v3115 = vpack.c.bf16 %v3035, %v3031
    %v3116 = vpack.c.bf16 %v3040, %v3036
    %v3117 = vpack.c.bf16 %v3041, %v3037
    %v3118 = vpack.c.bf16 %v3042, %v3038
    %v3119 = vpack.c.bf16 %v3043, %v3039
    %v3120 = vpack.c.bf16 %v3048, %v3044
    %v3121 = vpack.c.bf16 %v3049, %v3045
    %v3122 = vpack.c.bf16 %v3050, %v3046
    %v3123 = vpack.c.bf16 %v3051, %v3047
    %v3124 = vpack.c.bf16 %v3056, %v3052
    %v3125 = vpack.c.bf16 %v3057, %v3053
    %v3126 = vpack.c.bf16 %v3058, %v3054
    %v3127 = vpack.c.bf16 %v3059, %v3055
    %v3128 = vpack.c.bf16 %v3064, %v3060
    %v3129 = vpack.c.bf16 %v3065, %v3061
    %v3130 = vpack.c.bf16 %v3066, %v3062
    %v3131 = vpack.c.bf16 %v3067, %v3063
    %v3132 = vld [vmem:[%s5] sm:$0xf]
    %v3133 = vld [vmem:[%s5 + $0x4] sm:$0xf]
    %v3134 = vld [vmem:[%s5 + $0x8] sm:$0xf]
    %v3135 = vld [vmem:[%s5 + $0xc] sm:$0xf]
    %v3136 = vld [vmem:[%s5 + $0x10] sm:$0xf]
    %v3137 = vld [vmem:[%s5 + $0x14] sm:$0xf]
    %v3138 = vld [vmem:[%s5 + $0x18] sm:$0xf]
    %v3139 = vld [vmem:[%s5 + $0x1c] sm:$0xf]
    %v3140 = vld [vmem:[%s5 + $0x20] sm:$0xf]
    %v3141 = vld [vmem:[%s5 + $0x24] sm:$0xf]
    %v3142 = vld [vmem:[%s5 + $0x28] sm:$0xf]
    %v3143 = vld [vmem:[%s5 + $0x2c] sm:$0xf]
    %v3144 = vld [vmem:[%s5 + $0x30] sm:$0xf]
    %v3145 = vld [vmem:[%s5 + $0x34] sm:$0xf]
    %v3146 = vld [vmem:[%s5 + $0x38] sm:$0xf]
    %v3147 = vld [vmem:[%s5 + $0x3c] sm:$0xf]
    %v3148 = vld [vmem:[%s5 + $0x40] sm:$0xf]
    %v3149 = vld [vmem:[%s5 + $0x44] sm:$0xf]
    %v3150 = vld [vmem:[%s5 + $0x48] sm:$0xf]
    %v3151 = vld [vmem:[%s5 + $0x4c] sm:$0xf]
    %v3152 = vld [vmem:[%s5 + $0x50] sm:$0xf]
    %v3153 = vld [vmem:[%s5 + $0x54] sm:$0xf]
    %v3154 = vld [vmem:[%s5 + $0x58] sm:$0xf]
    %v3155 = vld [vmem:[%s5 + $0x5c] sm:$0xf]
    %v3156 = vld [vmem:[%s5 + $0x60] sm:$0xf]
    %v3157 = vld [vmem:[%s5 + $0x64] sm:$0xf]
    %v3158 = vld [vmem:[%s5 + $0x68] sm:$0xf]
    %v3159 = vld [vmem:[%s5 + $0x6c] sm:$0xf]
    %v3160 = vld [vmem:[%s5 + $0x70] sm:$0xf]
    %v3161 = vld [vmem:[%s5 + $0x74] sm:$0xf]
    %v3162 = vld [vmem:[%s5 + $0x78] sm:$0xf]
    %v3163 = vld [vmem:[%s5 + $0x7c] sm:$0xf]
    %v3164 = vld [vmem:[%s5 + $0x80] sm:$0xf]
    %v3165 = vld [vmem:[%s5 + $0x84] sm:$0xf]
    %v3166 = vld [vmem:[%s5 + $0x88] sm:$0xf]
    %v3167 = vld [vmem:[%s5 + $0x8c] sm:$0xf]
    %v3168 = vld [vmem:[%s5 + $0x90] sm:$0xf]
    %v3169 = vld [vmem:[%s5 + $0x94] sm:$0xf]
    %v3170 = vld [vmem:[%s5 + $0x98] sm:$0xf]
    %v3171 = vld [vmem:[%s5 + $0x9c] sm:$0xf]
    %v3172 = vld [vmem:[%s5 + $0xa0] sm:$0xf]
    %v3173 = vld [vmem:[%s5 + $0xa4] sm:$0xf]
    %v3174 = vld [vmem:[%s5 + $0xa8] sm:$0xf]
    %v3175 = vld [vmem:[%s5 + $0xac] sm:$0xf]
    %v3176 = vld [vmem:[%s5 + $0xb0] sm:$0xf]
    %v3177 = vld [vmem:[%s5 + $0xb4] sm:$0xf]
    %v3178 = vld [vmem:[%s5 + $0xb8] sm:$0xf]
    %v3179 = vld [vmem:[%s5 + $0xbc] sm:$0xf]
    %v3180 = vld [vmem:[%s5 + $0xc0] sm:$0xf]
    %v3181 = vld [vmem:[%s5 + $0xc4] sm:$0xf]
    %v3182 = vld [vmem:[%s5 + $0xc8] sm:$0xf]
    %v3183 = vld [vmem:[%s5 + $0xcc] sm:$0xf]
    %v3184 = vld [vmem:[%s5 + $0xd0] sm:$0xf]
    %v3185 = vld [vmem:[%s5 + $0xd4] sm:$0xf]
    %v3186 = vld [vmem:[%s5 + $0xd8] sm:$0xf]
    %v3187 = vld [vmem:[%s5 + $0xdc] sm:$0xf]
    %v3188 = vld [vmem:[%s5 + $0xe0] sm:$0xf]
    %v3189 = vld [vmem:[%s5 + $0xe4] sm:$0xf]
    %v3190 = vld [vmem:[%s5 + $0xe8] sm:$0xf]
    %v3191 = vld [vmem:[%s5 + $0xec] sm:$0xf]
    %v3192 = vld [vmem:[%s5 + $0xf0] sm:$0xf]
    %v3193 = vld [vmem:[%s5 + $0xf4] sm:$0xf]
    %v3194 = vld [vmem:[%s5 + $0xf8] sm:$0xf]
    %v3195 = vld [vmem:[%s5 + $0xfc] sm:$0xf]
    %v3196 = vld [vmem:[%s6] sm:$0x1]
    %v3198 = vperm.slane %v3196, 0
    %v3264 = vunpack.c.l.b16 %v3132
    %v3265 = vunpack.c.l.b16 %v3133
    %v3266 = vunpack.c.l.b16 %v3134
    %v3267 = vunpack.c.l.b16 %v3135
    %v3268 = vunpack.c.l.b16 %v3136
    %v3269 = vunpack.c.l.b16 %v3137
    %v3270 = vunpack.c.l.b16 %v3138
    %v3271 = vunpack.c.l.b16 %v3139
    %v3272 = vunpack.c.l.b16 %v3140
    %v3273 = vunpack.c.l.b16 %v3141
    %v3274 = vunpack.c.l.b16 %v3142
    %v3275 = vunpack.c.l.b16 %v3143
    %v3276 = vunpack.c.l.b16 %v3144
    %v3277 = vunpack.c.l.b16 %v3145
    %v3278 = vunpack.c.l.b16 %v3146
    %v3279 = vunpack.c.l.b16 %v3147
    %v3280 = vunpack.c.l.b16 %v3148
    %v3281 = vunpack.c.l.b16 %v3149
    %v3282 = vunpack.c.l.b16 %v3150
    %v3283 = vunpack.c.l.b16 %v3151
    %v3284 = vunpack.c.l.b16 %v3152
    %v3285 = vunpack.c.l.b16 %v3153
    %v3286 = vunpack.c.l.b16 %v3154
    %v3287 = vunpack.c.l.b16 %v3155
    %v3288 = vunpack.c.l.b16 %v3156
    %v3289 = vunpack.c.l.b16 %v3157
    %v3290 = vunpack.c.l.b16 %v3158
    %v3291 = vunpack.c.l.b16 %v3159
    %v3292 = vunpack.c.l.b16 %v3160
    %v3293 = vunpack.c.l.b16 %v3161
    %v3294 = vunpack.c.l.b16 %v3162
    %v3295 = vunpack.c.l.b16 %v3163
    %v3296 = vunpack.c.l.b16 %v3164
    %v3297 = vunpack.c.l.b16 %v3165
    %v3298 = vunpack.c.l.b16 %v3166
    %v3299 = vunpack.c.l.b16 %v3167
    %v3300 = vunpack.c.l.b16 %v3168
    %v3301 = vunpack.c.l.b16 %v3169
    %v3302 = vunpack.c.l.b16 %v3170
    %v3303 = vunpack.c.l.b16 %v3171
    %v3304 = vunpack.c.l.b16 %v3172
    %v3305 = vunpack.c.l.b16 %v3173
    %v3306 = vunpack.c.l.b16 %v3174
    %v3307 = vunpack.c.l.b16 %v3175
    %v3308 = vunpack.c.l.b16 %v3176
    %v3309 = vunpack.c.l.b16 %v3177
    %v3310 = vunpack.c.l.b16 %v3178
    %v3311 = vunpack.c.l.b16 %v3179
    %v3312 = vunpack.c.l.b16 %v3180
    %v3313 = vunpack.c.l.b16 %v3181
    %v3314 = vunpack.c.l.b16 %v3182
    %v3315 = vunpack.c.l.b16 %v3183
    %v3316 = vunpack.c.l.b16 %v3184
    %v3317 = vunpack.c.l.b16 %v3185
    %v3318 = vunpack.c.l.b16 %v3186
    %v3319 = vunpack.c.l.b16 %v3187
    %v3320 = vunpack.c.l.b16 %v3188
    %v3321 = vunpack.c.l.b16 %v3189
    %v3322 = vunpack.c.l.b16 %v3190
    %v3323 = vunpack.c.l.b16 %v3191
    %v3324 = vunpack.c.l.b16 %v3192
    %v3325 = vunpack.c.l.b16 %v3193
    %v3326 = vunpack.c.l.b16 %v3194
    %v3327 = vunpack.c.l.b16 %v3195
    %v3328 = vpack.c.b16 %v3265, %v3264
    %v3329 = vpack.c.b16 %v3267, %v3266
    %v3330 = vpack.c.b16 %v3269, %v3268
    %v3331 = vpack.c.b16 %v3271, %v3270
    %v3332 = vpack.c.b16 %v3273, %v3272
    %v3333 = vpack.c.b16 %v3275, %v3274
    %v3334 = vpack.c.b16 %v3277, %v3276
    %v3335 = vpack.c.b16 %v3279, %v3278
    %v3336 = vpack.c.b16 %v3281, %v3280
    %v3337 = vpack.c.b16 %v3283, %v3282
    %v3338 = vpack.c.b16 %v3285, %v3284
    %v3339 = vpack.c.b16 %v3287, %v3286
    %v3340 = vpack.c.b16 %v3289, %v3288
    %v3341 = vpack.c.b16 %v3291, %v3290
    %v3342 = vpack.c.b16 %v3293, %v3292
    %v3343 = vpack.c.b16 %v3295, %v3294
    %v3344 = vpack.c.b16 %v3297, %v3296
    %v3345 = vpack.c.b16 %v3299, %v3298
    %v3346 = vpack.c.b16 %v3301, %v3300
    %v3347 = vpack.c.b16 %v3303, %v3302
    %v3348 = vpack.c.b16 %v3305, %v3304
    %v3349 = vpack.c.b16 %v3307, %v3306
    %v3350 = vpack.c.b16 %v3309, %v3308
    %v3351 = vpack.c.b16 %v3311, %v3310
    %v3352 = vpack.c.b16 %v3313, %v3312
    %v3353 = vpack.c.b16 %v3315, %v3314
    %v3354 = vpack.c.b16 %v3317, %v3316
    %v3355 = vpack.c.b16 %v3319, %v3318
    %v3356 = vpack.c.b16 %v3321, %v3320
    %v3357 = vpack.c.b16 %v3323, %v3322
    %v3358 = vpack.c.b16 %v3325, %v3324
    %v3359 = vpack.c.b16 %v3327, %v3326
    %3392 = vmatpush.bf16.msra.mxu0 %v3335
    %3393 = vmatpush.bf16.msra.mxu0 %v3334
    %3394 = vmatpush.bf16.msra.mxu0 %v3333
    %3395 = vmatpush.bf16.msra.mxu0 %v3332
    %3396 = vmatpush.bf16.msra.mxu0 %v3331
    %3397 = vmatpush.bf16.msra.mxu0 %v3330
    %3398 = vmatpush.bf16.msra.mxu0 %v3329
    %3399 = vmatpush.bf16.msra.mxu0 %v3328
    %3400 = vmatmul.bf16.gmra.mxu0 %v3068
    %v3401 = vpop.f32.mrf.mxu0
    %v3402 = vadd.f32 %v3198, %v3401
    %v3403 = vpop.f32.mrf.mxu0
    %v3404 = vadd.f32 %v3198, %v3403
    %3405 = vmatmul.bf16.gmra.mxu0 %v3072
    %v3406 = vpop.f32.mrf.mxu0
    %v3407 = vadd.f32 %v3198, %v3406
    %v3408 = vpop.f32.mrf.mxu0
    %v3409 = vadd.f32 %v3198, %v3408
    %3410 = vmatmul.bf16.gmra.mxu0 %v3076
    %v3411 = vpop.f32.mrf.mxu0
    %v3412 = vadd.f32 %v3198, %v3411
    %v3413 = vpop.f32.mrf.mxu0
    %v3414 = vadd.f32 %v3198, %v3413
    %3415 = vmatmul.bf16.gmra.mxu0 %v3080
    %v3416 = vpop.f32.mrf.mxu0
    %v3417 = vadd.f32 %v3198, %v3416
    %v3418 = vpop.f32.mrf.mxu0
    %v3419 = vadd.f32 %v3198, %v3418
    %3420 = vmatmul.bf16.gmra.mxu0 %v3084
    %v3421 = vpop.f32.mrf.mxu0
    %v3422 = vadd.f32 %v3198, %v3421
    %v3423 = vpop.f32.mrf.mxu0
    %v3424 = vadd.f32 %v3198, %v3423
    %3425 = vmatmul.bf16.gmra.mxu0 %v3088
    %v3426 = vpop.f32.mrf.mxu0
    %v3427 = vadd.f32 %v3198, %v3426
    %v3428 = vpop.f32.mrf.mxu0
    %v3429 = vadd.f32 %v3198, %v3428
    %3430 = vmatmul.bf16.gmra.mxu0 %v3092
    %v3431 = vpop.f32.mrf.mxu0
    %v3432 = vadd.f32 %v3198, %v3431
    %v3433 = vpop.f32.mrf.mxu0
    %v3434 = vadd.f32 %v3198, %v3433
    %3435 = vmatmul.bf16.gmra.mxu0 %v3096
    %v3436 = vpop.f32.mrf.mxu0
    %v3437 = vadd.f32 %v3198, %v3436
    %v3438 = vpop.f32.mrf.mxu0
    %v3439 = vadd.f32 %v3198, %v3438
    %3440 = vmatmul.bf16.gmra.mxu0 %v3100
    %v3441 = vpop.f32.mrf.mxu0
    %v3442 = vadd.f32 %v3198, %v3441
    %v3443 = vpop.f32.mrf.mxu0
    %v3444 = vadd.f32 %v3198, %v3443
    %3445 = vmatmul.bf16.gmra.mxu0 %v3104
    %v3446 = vpop.f32.mrf.mxu0
    %v3447 = vadd.f32 %v3198, %v3446
    %v3448 = vpop.f32.mrf.mxu0
    %v3449 = vadd.f32 %v3198, %v3448
    %3450 = vmatmul.bf16.gmra.mxu0 %v3108
    %v3451 = vpop.f32.mrf.mxu0
    %v3452 = vadd.f32 %v3198, %v3451
    %v3453 = vpop.f32.mrf.mxu0
    %v3454 = vadd.f32 %v3198, %v3453
    %3455 = vmatmul.bf16.gmra.mxu0 %v3112
    %v3456 = vpop.f32.mrf.mxu0
    %v3457 = vadd.f32 %v3198, %v3456
    %v3458 = vpop.f32.mrf.mxu0
    %v3459 = vadd.f32 %v3198, %v3458
    %3460 = vmatmul.bf16.gmra.mxu0 %v3116
    %v3461 = vpop.f32.mrf.mxu0
    %v3462 = vadd.f32 %v3198, %v3461
    %v3463 = vpop.f32.mrf.mxu0
    %v3464 = vadd.f32 %v3198, %v3463
    %3465 = vmatmul.bf16.gmra.mxu0 %v3120
    %v3466 = vpop.f32.mrf.mxu0
    %v3467 = vadd.f32 %v3198, %v3466
    %v3468 = vpop.f32.mrf.mxu0
    %v3469 = vadd.f32 %v3198, %v3468
    %3470 = vmatmul.bf16.gmra.mxu0 %v3124
    %v3471 = vpop.f32.mrf.mxu0
    %v3472 = vadd.f32 %v3198, %v3471
    %v3473 = vpop.f32.mrf.mxu0
    %v3474 = vadd.f32 %v3198, %v3473
    %3475 = vmatmul.bf16.gmra.mxu0 %v3128
    %v3476 = vpop.f32.mrf.mxu0
    %v3477 = vadd.f32 %v3198, %v3476
    %v3478 = vpop.f32.mrf.mxu0
    %v3479 = vadd.f32 %v3198, %v3478
    %3480 = vdwg.mxu0
    %3481 = vmatpush.bf16.msra.mxu0 %v3343
    %3482 = vmatpush.bf16.msra.mxu0 %v3342
    %3483 = vmatpush.bf16.msra.mxu0 %v3341
    %3484 = vmatpush.bf16.msra.mxu0 %v3340
    %3485 = vmatpush.bf16.msra.mxu0 %v3339
    %3486 = vmatpush.bf16.msra.mxu0 %v3338
    %3487 = vmatpush.bf16.msra.mxu0 %v3337
    %3488 = vmatpush.bf16.msra.mxu0 %v3336
    %3489 = vmatmul.bf16.gmra.mxu0 %v3069
    %v3490 = vpop.f32.mrf.mxu0
    %v3491 = vadd.f32 %v3402, %v3490
    %v3492 = vpop.f32.mrf.mxu0
    %v3493 = vadd.f32 %v3404, %v3492
    %3494 = vmatmul.bf16.gmra.mxu0 %v3073
    %v3495 = vpop.f32.mrf.mxu0
    %v3496 = vadd.f32 %v3407, %v3495
    %v3497 = vpop.f32.mrf.mxu0
    %v3498 = vadd.f32 %v3409, %v3497
    %3499 = vmatmul.bf16.gmra.mxu0 %v3077
    %v3500 = vpop.f32.mrf.mxu0
    %v3501 = vadd.f32 %v3412, %v3500
    %v3502 = vpop.f32.mrf.mxu0
    %v3503 = vadd.f32 %v3414, %v3502
    %3504 = vmatmul.bf16.gmra.mxu0 %v3081
    %v3505 = vpop.f32.mrf.mxu0
    %v3506 = vadd.f32 %v3417, %v3505
    %v3507 = vpop.f32.mrf.mxu0
    %v3508 = vadd.f32 %v3419, %v3507
    %3509 = vmatmul.bf16.gmra.mxu0 %v3085
    %v3510 = vpop.f32.mrf.mxu0
    %v3511 = vadd.f32 %v3422, %v3510
    %v3512 = vpop.f32.mrf.mxu0
    %v3513 = vadd.f32 %v3424, %v3512
    %3514 = vmatmul.bf16.gmra.mxu0 %v3089
    %v3515 = vpop.f32.mrf.mxu0
    %v3516 = vadd.f32 %v3427, %v3515
    %v3517 = vpop.f32.mrf.mxu0
    %v3518 = vadd.f32 %v3429, %v3517
    %3519 = vmatmul.bf16.gmra.mxu0 %v3093
    %v3520 = vpop.f32.mrf.mxu0
    %v3521 = vadd.f32 %v3432, %v3520
    %v3522 = vpop.f32.mrf.mxu0
    %v3523 = vadd.f32 %v3434, %v3522
    %3524 = vmatmul.bf16.gmra.mxu0 %v3097
    %v3525 = vpop.f32.mrf.mxu0
    %v3526 = vadd.f32 %v3437, %v3525
    %v3527 = vpop.f32.mrf.mxu0
    %v3528 = vadd.f32 %v3439, %v3527
    %3529 = vmatmul.bf16.gmra.mxu0 %v3101
    %v3530 = vpop.f32.mrf.mxu0
    %v3531 = vadd.f32 %v3442, %v3530
    %v3532 = vpop.f32.mrf.mxu0
    %v3533 = vadd.f32 %v3444, %v3532
    %3534 = vmatmul.bf16.gmra.mxu0 %v3105
    %v3535 = vpop.f32.mrf.mxu0
    %v3536 = vadd.f32 %v3447, %v3535
    %v3537 = vpop.f32.mrf.mxu0
    %v3538 = vadd.f32 %v3449, %v3537
    %3539 = vmatmul.bf16.gmra.mxu0 %v3109
    %v3540 = vpop.f32.mrf.mxu0
    %v3541 = vadd.f32 %v3452, %v3540
    %v3542 = vpop.f32.mrf.mxu0
    %v3543 = vadd.f32 %v3454, %v3542
    %3544 = vmatmul.bf16.gmra.mxu0 %v3113
    %v3545 = vpop.f32.mrf.mxu0
    %v3546 = vadd.f32 %v3457, %v3545
    %v3547 = vpop.f32.mrf.mxu0
    %v3548 = vadd.f32 %v3459, %v3547
    %3549 = vmatmul.bf16.gmra.mxu0 %v3117
    %v3550 = vpop.f32.mrf.mxu0
    %v3551 = vadd.f32 %v3462, %v3550
    %v3552 = vpop.f32.mrf.mxu0
    %v3553 = vadd.f32 %v3464, %v3552
    %3554 = vmatmul.bf16.gmra.mxu0 %v3121
    %v3555 = vpop.f32.mrf.mxu0
    %v3556 = vadd.f32 %v3467, %v3555
    %v3557 = vpop.f32.mrf.mxu0
    %v3558 = vadd.f32 %v3469, %v3557
    %3559 = vmatmul.bf16.gmra.mxu0 %v3125
    %v3560 = vpop.f32.mrf.mxu0
    %v3561 = vadd.f32 %v3472, %v3560
    %v3562 = vpop.f32.mrf.mxu0
    %v3563 = vadd.f32 %v3474, %v3562
    %3564 = vmatmul.bf16.gmra.mxu0 %v3129
    %v3565 = vpop.f32.mrf.mxu0
    %v3566 = vadd.f32 %v3477, %v3565
    %v3567 = vpop.f32.mrf.mxu0
    %v3568 = vadd.f32 %v3479, %v3567
    %3569 = vdwg.mxu0
    %3570 = vmatpush.bf16.msra.mxu0 %v3351
    %3571 = vmatpush.bf16.msra.mxu0 %v3350
    %3572 = vmatpush.bf16.msra.mxu0 %v3349
    %3573 = vmatpush.bf16.msra.mxu0 %v3348
    %3574 = vmatpush.bf16.msra.mxu0 %v3347
    %3575 = vmatpush.bf16.msra.mxu0 %v3346
    %3576 = vmatpush.bf16.msra.mxu0 %v3345
    %3577 = vmatpush.bf16.msra.mxu0 %v3344
    %3578 = vmatmul.bf16.gmra.mxu0 %v3070
    %v3579 = vpop.f32.mrf.mxu0
    %v3580 = vadd.f32 %v3491, %v3579
    %v3581 = vpop.f32.mrf.mxu0
    %v3582 = vadd.f32 %v3493, %v3581
    %3583 = vmatmul.bf16.gmra.mxu0 %v3074
    %v3584 = vpop.f32.mrf.mxu0
    %v3585 = vadd.f32 %v3496, %v3584
    %v3586 = vpop.f32.mrf.mxu0
    %v3587 = vadd.f32 %v3498, %v3586
    %3588 = vmatmul.bf16.gmra.mxu0 %v3078
    %v3589 = vpop.f32.mrf.mxu0
    %v3590 = vadd.f32 %v3501, %v3589
    %v3591 = vpop.f32.mrf.mxu0
    %v3592 = vadd.f32 %v3503, %v3591
    %3593 = vmatmul.bf16.gmra.mxu0 %v3082
    %v3594 = vpop.f32.mrf.mxu0
    %v3595 = vadd.f32 %v3506, %v3594
    %v3596 = vpop.f32.mrf.mxu0
    %v3597 = vadd.f32 %v3508, %v3596
    %3598 = vmatmul.bf16.gmra.mxu0 %v3086
    %v3599 = vpop.f32.mrf.mxu0
    %v3600 = vadd.f32 %v3511, %v3599
    %v3601 = vpop.f32.mrf.mxu0
    %v3602 = vadd.f32 %v3513, %v3601
    %3603 = vmatmul.bf16.gmra.mxu0 %v3090
    %v3604 = vpop.f32.mrf.mxu0
    %v3605 = vadd.f32 %v3516, %v3604
    %v3606 = vpop.f32.mrf.mxu0
    %v3607 = vadd.f32 %v3518, %v3606
    %3608 = vmatmul.bf16.gmra.mxu0 %v3094
    %v3609 = vpop.f32.mrf.mxu0
    %v3610 = vadd.f32 %v3521, %v3609
    %v3611 = vpop.f32.mrf.mxu0
    %v3612 = vadd.f32 %v3523, %v3611
    %3613 = vmatmul.bf16.gmra.mxu0 %v3098
    %v3614 = vpop.f32.mrf.mxu0
    %v3615 = vadd.f32 %v3526, %v3614
    %v3616 = vpop.f32.mrf.mxu0
    %v3617 = vadd.f32 %v3528, %v3616
    %3618 = vmatmul.bf16.gmra.mxu0 %v3102
    %v3619 = vpop.f32.mrf.mxu0
    %v3620 = vadd.f32 %v3531, %v3619
    %v3621 = vpop.f32.mrf.mxu0
    %v3622 = vadd.f32 %v3533, %v3621
    %3623 = vmatmul.bf16.gmra.mxu0 %v3106
    %v3624 = vpop.f32.mrf.mxu0
    %v3625 = vadd.f32 %v3536, %v3624
    %v3626 = vpop.f32.mrf.mxu0
    %v3627 = vadd.f32 %v3538, %v3626
    %3628 = vmatmul.bf16.gmra.mxu0 %v3110
    %v3629 = vpop.f32.mrf.mxu0
    %v3630 = vadd.f32 %v3541, %v3629
    %v3631 = vpop.f32.mrf.mxu0
    %v3632 = vadd.f32 %v3543, %v3631
    %3633 = vmatmul.bf16.gmra.mxu0 %v3114
    %v3634 = vpop.f32.mrf.mxu0
    %v3635 = vadd.f32 %v3546, %v3634
    %v3636 = vpop.f32.mrf.mxu0
    %v3637 = vadd.f32 %v3548, %v3636
    %3638 = vmatmul.bf16.gmra.mxu0 %v3118
    %v3639 = vpop.f32.mrf.mxu0
    %v3640 = vadd.f32 %v3551, %v3639
    %v3641 = vpop.f32.mrf.mxu0
    %v3642 = vadd.f32 %v3553, %v3641
    %3643 = vmatmul.bf16.gmra.mxu0 %v3122
    %v3644 = vpop.f32.mrf.mxu0
    %v3645 = vadd.f32 %v3556, %v3644
    %v3646 = vpop.f32.mrf.mxu0
    %v3647 = vadd.f32 %v3558, %v3646
    %3648 = vmatmul.bf16.gmra.mxu0 %v3126
    %v3649 = vpop.f32.mrf.mxu0
    %v3650 = vadd.f32 %v3561, %v3649
    %v3651 = vpop.f32.mrf.mxu0
    %v3652 = vadd.f32 %v3563, %v3651
    %3653 = vmatmul.bf16.gmra.mxu0 %v3130
    %v3654 = vpop.f32.mrf.mxu0
    %v3655 = vadd.f32 %v3566, %v3654
    %v3656 = vpop.f32.mrf.mxu0
    %v3657 = vadd.f32 %v3568, %v3656
    %3658 = vdwg.mxu0
    %3659 = vmatpush.bf16.msra.mxu0 %v3359
    %3660 = vmatpush.bf16.msra.mxu0 %v3358
    %3661 = vmatpush.bf16.msra.mxu0 %v3357
    %3662 = vmatpush.bf16.msra.mxu0 %v3356
    %3663 = vmatpush.bf16.msra.mxu0 %v3355
    %3664 = vmatpush.bf16.msra.mxu0 %v3354
    %3665 = vmatpush.bf16.msra.mxu0 %v3353
    %3666 = vmatpush.bf16.msra.mxu0 %v3352
    %3667 = vmatmul.bf16.gmra.mxu0 %v3071
    %v3668 = vpop.f32.mrf.mxu0
    %v3669 = vadd.f32 %v3580, %v3668
    %v3670 = vpop.f32.mrf.mxu0
    %v3671 = vadd.f32 %v3582, %v3670
    %3672 = vmatmul.bf16.gmra.mxu0 %v3075
    %v3673 = vpop.f32.mrf.mxu0
    %v3674 = vadd.f32 %v3585, %v3673
    %v3675 = vpop.f32.mrf.mxu0
    %v3676 = vadd.f32 %v3587, %v3675
    %3677 = vmatmul.bf16.gmra.mxu0 %v3079
    %v3678 = vpop.f32.mrf.mxu0
    %v3679 = vadd.f32 %v3590, %v3678
    %v3680 = vpop.f32.mrf.mxu0
    %v3681 = vadd.f32 %v3592, %v3680
    %3682 = vmatmul.bf16.gmra.mxu0 %v3083
    %v3683 = vpop.f32.mrf.mxu0
    %v3684 = vadd.f32 %v3595, %v3683
    %v3685 = vpop.f32.mrf.mxu0
    %v3686 = vadd.f32 %v3597, %v3685
    %3687 = vmatmul.bf16.gmra.mxu0 %v3087
    %v3688 = vpop.f32.mrf.mxu0
    %v3689 = vadd.f32 %v3600, %v3688
    %v3690 = vpop.f32.mrf.mxu0
    %v3691 = vadd.f32 %v3602, %v3690
    %3692 = vmatmul.bf16.gmra.mxu0 %v3091
    %v3693 = vpop.f32.mrf.mxu0
    %v3694 = vadd.f32 %v3605, %v3693
    %v3695 = vpop.f32.mrf.mxu0
    %v3696 = vadd.f32 %v3607, %v3695
    %3697 = vmatmul.bf16.gmra.mxu0 %v3095
    %v3698 = vpop.f32.mrf.mxu0
    %v3699 = vadd.f32 %v3610, %v3698
    %v3700 = vpop.f32.mrf.mxu0
    %v3701 = vadd.f32 %v3612, %v3700
    %3702 = vmatmul.bf16.gmra.mxu0 %v3099
    %v3703 = vpop.f32.mrf.mxu0
    %v3704 = vadd.f32 %v3615, %v3703
    %v3705 = vpop.f32.mrf.mxu0
    %v3706 = vadd.f32 %v3617, %v3705
    %3707 = vmatmul.bf16.gmra.mxu0 %v3103
    %v3708 = vpop.f32.mrf.mxu0
    %v3709 = vadd.f32 %v3620, %v3708
    %v3710 = vpop.f32.mrf.mxu0
    %v3711 = vadd.f32 %v3622, %v3710
    %3712 = vmatmul.bf16.gmra.mxu0 %v3107
    %v3713 = vpop.f32.mrf.mxu0
    %v3714 = vadd.f32 %v3625, %v3713
    %v3715 = vpop.f32.mrf.mxu0
    %v3716 = vadd.f32 %v3627, %v3715
    %3717 = vmatmul.bf16.gmra.mxu0 %v3111
    %v3718 = vpop.f32.mrf.mxu0
    %v3719 = vadd.f32 %v3630, %v3718
    %v3720 = vpop.f32.mrf.mxu0
    %v3721 = vadd.f32 %v3632, %v3720
    %3722 = vmatmul.bf16.gmra.mxu0 %v3115
    %v3723 = vpop.f32.mrf.mxu0
    %v3724 = vadd.f32 %v3635, %v3723
    %v3725 = vpop.f32.mrf.mxu0
    %v3726 = vadd.f32 %v3637, %v3725
    %3727 = vmatmul.bf16.gmra.mxu0 %v3119
    %v3728 = vpop.f32.mrf.mxu0
    %v3729 = vadd.f32 %v3640, %v3728
    %v3730 = vpop.f32.mrf.mxu0
    %v3731 = vadd.f32 %v3642, %v3730
    %3732 = vmatmul.bf16.gmra.mxu0 %v3123
    %v3733 = vpop.f32.mrf.mxu0
    %v3734 = vadd.f32 %v3645, %v3733
    %v3735 = vpop.f32.mrf.mxu0
    %v3736 = vadd.f32 %v3647, %v3735
    %3737 = vmatmul.bf16.gmra.mxu0 %v3127
    %v3738 = vpop.f32.mrf.mxu0
    %v3739 = vadd.f32 %v3650, %v3738
    %v3740 = vpop.f32.mrf.mxu0
    %v3741 = vadd.f32 %v3652, %v3740
    %3742 = vmatmul.bf16.gmra.mxu0 %v3131
    %v3743 = vpop.f32.mrf.mxu0
    %v3744 = vadd.f32 %v3655, %v3743
    %v3745 = vpop.f32.mrf.mxu0
    %v3746 = vadd.f32 %v3657, %v3745
    %3747 = vdwg.mxu0
    %v3748 = vpack.c.bf16 %v3669, %v3669
    %v3749 = vpack.c.bf16 %v3671, %v3671
    %v3750 = vpack.c.bf16 %v3674, %v3674
    %v3751 = vpack.c.bf16 %v3676, %v3676
    %v3752 = vpack.c.bf16 %v3679, %v3679
    %v3753 = vpack.c.bf16 %v3681, %v3681
    %v3754 = vpack.c.bf16 %v3684, %v3684
    %v3755 = vpack.c.bf16 %v3686, %v3686
    %v3756 = vpack.c.bf16 %v3689, %v3689
    %v3757 = vpack.c.bf16 %v3691, %v3691
    %v3758 = vpack.c.bf16 %v3694, %v3694
    %v3759 = vpack.c.bf16 %v3696, %v3696
    %v3760 = vpack.c.bf16 %v3699, %v3699
    %v3761 = vpack.c.bf16 %v3701, %v3701
    %v3762 = vpack.c.bf16 %v3704, %v3704
    %v3763 = vpack.c.bf16 %v3706, %v3706
    %v3764 = vpack.c.bf16 %v3709, %v3709
    %v3765 = vpack.c.bf16 %v3711, %v3711
    %v3766 = vpack.c.bf16 %v3714, %v3714
    %v3767 = vpack.c.bf16 %v3716, %v3716
    %v3768 = vpack.c.bf16 %v3719, %v3719
    %v3769 = vpack.c.bf16 %v3721, %v3721
    %v3770 = vpack.c.bf16 %v3724, %v3724
    %v3771 = vpack.c.bf16 %v3726, %v3726
    %v3772 = vpack.c.bf16 %v3729, %v3729
    %v3773 = vpack.c.bf16 %v3731, %v3731
    %v3774 = vpack.c.bf16 %v3734, %v3734
    %v3775 = vpack.c.bf16 %v3736, %v3736
    %v3776 = vpack.c.bf16 %v3739, %v3739
    %v3777 = vpack.c.bf16 %v3741, %v3741
    %v3778 = vpack.c.bf16 %v3744, %v3744
    %v3779 = vpack.c.bf16 %v3746, %v3746
    %3780 = vst [vmem:[#allocation7] sm:$0xf] %v3748
    %3781 = vst [vmem:[#allocation7 + $0x4] sm:$0xf] %v3749
    %3782 = vst [vmem:[#allocation7 + $0x8] sm:$0xf] %v3750
    %3783 = vst [vmem:[#allocation7 + $0xc] sm:$0xf] %v3751
    %3784 = vst [vmem:[#allocation7 + $0x10] sm:$0xf] %v3752
    %3785 = vst [vmem:[#allocation7 + $0x14] sm:$0xf] %v3753
    %3786 = vst [vmem:[#allocation7 + $0x18] sm:$0xf] %v3754
    %3787 = vst [vmem:[#allocation7 + $0x1c] sm:$0xf] %v3755
    %3788 = vst [vmem:[#allocation7 + $0x20] sm:$0xf] %v3756
    %3789 = vst [vmem:[#allocation7 + $0x24] sm:$0xf] %v3757
    %3790 = vst [vmem:[#allocation7 + $0x28] sm:$0xf] %v3758
    %3791 = vst [vmem:[#allocation7 + $0x2c] sm:$0xf] %v3759
    %3792 = vst [vmem:[#allocation7 + $0x30] sm:$0xf] %v3760
    %3793 = vst [vmem:[#allocation7 + $0x34] sm:$0xf] %v3761
    %3794 = vst [vmem:[#allocation7 + $0x38] sm:$0xf] %v3762
    %3795 = vst [vmem:[#allocation7 + $0x3c] sm:$0xf] %v3763
    %3796 = vst [vmem:[#allocation7 + $0x40] sm:$0xf] %v3764
    %3797 = vst [vmem:[#allocation7 + $0x44] sm:$0xf] %v3765
    %3798 = vst [vmem:[#allocation7 + $0x48] sm:$0xf] %v3766
    %3799 = vst [vmem:[#allocation7 + $0x4c] sm:$0xf] %v3767
    %3800 = vst [vmem:[#allocation7 + $0x50] sm:$0xf] %v3768
    %3801 = vst [vmem:[#allocation7 + $0x54] sm:$0xf] %v3769
    %3802 = vst [vmem:[#allocation7 + $0x58] sm:$0xf] %v3770
    %3803 = vst [vmem:[#allocation7 + $0x5c] sm:$0xf] %v3771
    %3804 = vst [vmem:[#allocation7 + $0x60] sm:$0xf] %v3772
    %3805 = vst [vmem:[#allocation7 + $0x64] sm:$0xf] %v3773
    %3806 = vst [vmem:[#allocation7 + $0x68] sm:$0xf] %v3774
    %3807 = vst [vmem:[#allocation7 + $0x6c] sm:$0xf] %v3775
    %3808 = vst [vmem:[#allocation7 + $0x70] sm:$0xf] %v3776
    %3809 = vst [vmem:[#allocation7 + $0x74] sm:$0xf] %v3777
    %3810 = vst [vmem:[#allocation7 + $0x78] sm:$0xf] %v3778
    %3811 = vst [vmem:[#allocation7 + $0x7c] sm:$0xf] %v3779
    // Predicated region
    $region38: #{tpu_custom_call.1} parent=1 // pred_check
      _
    $region39: #{tpu_custom_call.1} parent=1 // pred_check_branch
      %3813 = sbr.rel (0) target = $region41
    $region40: #{tpu_custom_call.1} parent=1 // pred_region
      %3815 = vsyncadd [#allocation4], 0
      %s3816 = sshll.u32 [#allocation7], 4
      %s3817 = int_to_ptr.vmem [resolvable:$true] %s3816
      %s3818 = sshll.u32 %s7, 4
      %s3819 = int_to_ptr.hbm [resolvable:$true] %s3818
      %3824 = dma.vmem_to_hbm [thread:$0]  %s3817, 2048, %s3819, [#allocation4], 64, 64, 4
    $region41: #{tpu_custom_call.1} parent=1 // pred_fallthru
      _
    // Predicated region
    $region42: #{tpu_custom_call.1} parent=1 // pred_check
      _
    $region43: #{tpu_custom_call.1} parent=1 // pred_check_branch
      %3826 = sbr.rel (0) target = $region45
    $region44: #{tpu_custom_call.1} parent=1 // pred_region
      %3828 = dma.done [#allocation4], 2048
    $region45: #{tpu_custom_call.1} parent=1 // pred_fallthru
      _
    %3829 = vsyncpa [#allocation3], 1
    %3830 = vsyncpa [#allocation6], 1
    %3831 = vsyncpa [#allocation4], 1

// kernel: tpu_custom_call.1
$region0: #{tpu_custom_call.1}
  #allocation0 [shape = 'u32[]', space=smem, size = 0x4, offset = 0x4, fixed_abs, tag = 'smem constant byte address 0x4 - core index']
  #allocation1 [shape = 'u32[72,128]{1,0:T(1,128)}', space=vmem, size = 0x9000, scoped, tag = 'internal scratch']
  %s0 = inlined_call_operand.vmem [shape: f32[256,8], index: 0, kind: input, shape index: {}]
  %s1 = inlined_call_operand.vmem [shape: bf16[8,512], index: 1, kind: input, shape index: {}]
  %s2 = inlined_call_operand.vmem [shape: f32[1,512], index: 2, kind: input, shape index: {}]
  %s3 = inlined_call_operand.hbm [shape: bf16[512,512], index: 3, kind: input, shape index: {}]
  %s4 = inlined_call_operand.hbm [shape: f32[1,512], index: 4, kind: input, shape index: {}]
  %s5 = inlined_call_operand.vmem [shape: bf16[512,128], index: 5, kind: input, shape index: {}]
  %s6 = inlined_call_operand.vmem [shape: f32[1,128], index: 6, kind: input, shape index: {}]
  %s7 = inlined_call_operand.hbm [shape: bf16[256,128], index: 7, kind: output, shape index: {}]
  %s8 = sld [smem:[#allocation0]]
  $region46: #{tpu_custom_call.1} parent=0
    _
  %s10 = ssub.s32 1, %s8
  %s11 = scalar_select 0, %s10, %s8
  $region1: #{tpu_custom_call.1} parent=0
    #allocation2 [shape = 'u8[524288]{0}', space=vmem, size = 0x80000, scoped, tag = 'input window, operand 3, single buffered']
    #allocation3 [shape = 's32[1]{0}', space=sflag, size = 0x4, scoped, tag = 'scoped memory for tpu_custom_call.1']
    #allocation4 [shape = 's32[1]{0}', space=sflag, size = 0x4, scoped, tag = 'scoped memory for tpu_custom_call.1']
    #allocation5 [shape = 'u8[2048]{0}', space=vmem, size = 0x800, scoped, tag = 'input window, operand 4, single buffered']
    #allocation6 [shape = 's32[1]{0}', space=sflag, size = 0x4, scoped, tag = 'scoped memory for tpu_custom_call.1']
    #allocation7 [shape = 'u8[65536]{0}', space=vmem, size = 0x10000, scoped, tag = 'output window, operand 0, single buffered']
    %12 = vsyncpa [#allocation3], 0
    %13 = vsyncpa [#allocation6], 0
    %14 = vsyncpa [#allocation4], 0
    // Predicated region
    $region2: #{tpu_custom_call.1} parent=1 // pred_check
      _
    $region3: #{tpu_custom_call.1} parent=1 // pred_check_branch
      %16 = sbr.rel (0) target = $region5
    $region4: #{tpu_custom_call.1} parent=1 // pred_region
      _
    $region5: #{tpu_custom_call.1} parent=1 // pred_fallthru
      _
    // Predicated region
    $region6: #{tpu_custom_call.1} parent=1 // pred_check
      _
    $region7: #{tpu_custom_call.1} parent=1 // pred_check_branch
      %18 = sbr.rel (0) target = $region9
    $region8: #{tpu_custom_call.1} parent=1 // pred_region
      _
    $region9: #{tpu_custom_call.1} parent=1 // pred_fallthru
      _
    // Predicated region
    $region10: #{tpu_custom_call.1} parent=1 // pred_check
      _
    $region11: #{tpu_custom_call.1} parent=1 // pred_check_branch
      %20 = sbr.rel (0) target = $region13
    $region12: #{tpu_custom_call.1} parent=1 // pred_region
      _
    $region13: #{tpu_custom_call.1} parent=1 // pred_fallthru
      _
    // Predicated region
    $region14: #{tpu_custom_call.1} parent=1 // pred_check
      _
    $region15: #{tpu_custom_call.1} parent=1 // pred_check_branch
      %22 = sbr.rel (0) target = $region17
    $region16: #{tpu_custom_call.1} parent=1 // pred_region
      %24 = vsyncadd [#allocation3], 0
      %s25 = sshll.u32 %s3, 4
      %s26 = int_to_ptr.hbm [resolvable:$true] %s25
      %s27 = sshll.u32 [#allocation2], 4
      %s28 = int_to_ptr.vmem [resolvable:$true] %s27
      %33 = dma.hbm_to_vmem [thread:$0]  %s26, 16384, %s28, [#allocation3], 256, 256, 16
    $region17: #{tpu_custom_call.1} parent=1 // pred_fallthru
      _
    // Predicated region
    $region18: #{tpu_custom_call.1} parent=1 // pred_check
      _
    $region19: #{tpu_custom_call.1} parent=1 // pred_check_branch
      %35 = sbr.rel (0) target = $region21
    $region20: #{tpu_custom_call.1} parent=1 // pred_region
      %37 = vsyncadd [#allocation6], 0
      %s39 = sshll.u32 %s4, 4
      %s40 = int_to_ptr.hbm [resolvable:$true] %s39
      %s41 = sshll.u32 [#allocation5], 4
      %s42 = int_to_ptr.vmem [resolvable:$true] %s41
      %44 = dma.hbm_to_vmem [thread:$0]  %s40, 64, %s42, [#allocation6]
    $region21: #{tpu_custom_call.1} parent=1 // pred_fallthru
      _
    // Predicated region
    $region22: #{tpu_custom_call.1} parent=1 // pred_check
      _
    $region23: #{tpu_custom_call.1} parent=1 // pred_check_branch
      %46 = sbr.rel (0) target = $region25
    $region24: #{tpu_custom_call.1} parent=1 // pred_region
      _
    $region25: #{tpu_custom_call.1} parent=1 // pred_fallthru
      _
    // Predicated region
    $region26: #{tpu_custom_call.1} parent=1 // pred_check
      _
    $region27: #{tpu_custom_call.1} parent=1 // pred_check_branch
      %48 = sbr.rel (0) target = $region29
    $region28: #{tpu_custom_call.1} parent=1 // pred_region
      _
    $region29: #{tpu_custom_call.1} parent=1 // pred_fallthru
      _
    // Predicated region
    $region30: #{tpu_custom_call.1} parent=1 // pred_check
      _
    $region31: #{tpu_custom_call.1} parent=1 // pred_check_branch
      %50 = sbr.rel (0) target = $region33
    $region32: #{tpu_custom_call.1} parent=1 // pred_region
      %52 = dma.done [#allocation3], 16384
    $region33: #{tpu_custom_call.1} parent=1 // pred_fallthru
      _
    // Predicated region
    $region34: #{tpu_custom_call.1} parent=1 // pred_check
      _
    $region35: #{tpu_custom_call.1} parent=1 // pred_check_branch
      %54 = sbr.rel (0) target = $region37
    $region36: #{tpu_custom_call.1} parent=1 // pred_region
      %56 = dma.done [#allocation6], 64
    $region37: #{tpu_custom_call.1} parent=1 // pred_fallthru
      _
    %v58 = vld [vmem:[%s0] sm:$0xff]
    %v59 = vld [vmem:[%s0 + $0x8] sm:$0xff]
    %v60 = vld [vmem:[%s0 + $0x10] sm:$0xff]
    %v61 = vld [vmem:[%s0 + $0x18] sm:$0xff]
    %v62 = vld [vmem:[%s0 + $0x20] sm:$0xff]
    %v63 = vld [vmem:[%s0 + $0x28] sm:$0xff]
    %v64 = vld [vmem:[%s0 + $0x30] sm:$0xff]
    %v65 = vld [vmem:[%s0 + $0x38] sm:$0xff]
    %v66 = vld [vmem:[%s0 + $0x40] sm:$0xff]
    %v67 = vld [vmem:[%s0 + $0x48] sm:$0xff]
    %v68 = vld [vmem:[%s0 + $0x50] sm:$0xff]
    %v69 = vld [vmem:[%s0 + $0x58] sm:$0xff]
    %v70 = vld [vmem:[%s0 + $0x60] sm:$0xff]
    %v71 = vld [vmem:[%s0 + $0x68] sm:$0xff]
    %v72 = vld [vmem:[%s0 + $0x70] sm:$0xff]
    %v73 = vld [vmem:[%s0 + $0x78] sm:$0xff]
    %v74 = vld [vmem:[%s0 + $0x80] sm:$0xff]
    %v75 = vld [vmem:[%s0 + $0x88] sm:$0xff]
    %v76 = vld [vmem:[%s0 + $0x90] sm:$0xff]
    %v77 = vld [vmem:[%s0 + $0x98] sm:$0xff]
    %v78 = vld [vmem:[%s0 + $0xa0] sm:$0xff]
    %v79 = vld [vmem:[%s0 + $0xa8] sm:$0xff]
    %v80 = vld [vmem:[%s0 + $0xb0] sm:$0xff]
    %v81 = vld [vmem:[%s0 + $0xb8] sm:$0xff]
    %v82 = vld [vmem:[%s0 + $0xc0] sm:$0xff]
    %v83 = vld [vmem:[%s0 + $0xc8] sm:$0xff]
    %v84 = vld [vmem:[%s0 + $0xd0] sm:$0xff]
    %v85 = vld [vmem:[%s0 + $0xd8] sm:$0xff]
    %v86 = vld [vmem:[%s0 + $0xe0] sm:$0xff]
    %v87 = vld [vmem:[%s0 + $0xe8] sm:$0xff]
    %v88 = vld [vmem:[%s0 + $0xf0] sm:$0xff]
    %v89 = vld [vmem:[%s0 + $0xf8] sm:$0xff]
    %v90 = vpack.c.bf16 %v59, %v58
    %v91 = vpack.c.bf16 %v61, %v60
    %v92 = vpack.c.bf16 %v63, %v62
    %v93 = vpack.c.bf16 %v65, %v64
    %v94 = vpack.c.bf16 %v67, %v66
    %v95 = vpack.c.bf16 %v69, %v68
    %v96 = vpack.c.bf16 %v71, %v70
    %v97 = vpack.c.bf16 %v73, %v72
    %v98 = vpack.c.bf16 %v75, %v74
    %v99 = vpack.c.bf16 %v77, %v76
    %v100 = vpack.c.bf16 %v79, %v78
    %v101 = vpack.c.bf16 %v81, %v80
    %v102 = vpack.c.bf16 %v83, %v82
    %v103 = vpack.c.bf16 %v85, %v84
    %v104 = vpack.c.bf16 %v87, %v86
    %v105 = vpack.c.bf16 %v89, %v88
    %v106 = vld [vmem:[%s1] sm:$0xff]
    %v107 = vld [vmem:[%s1 + $0x8] sm:$0xff]
    %v108 = vld [vmem:[%s2] sm:$0xf]
    %v110 = vperm.slane %v108, 0
    %v111 = vperm.slane %v108, 1
    %v112 = vperm.slane %v108, 2
    %v113 = vperm.slane %v108, 3
    %v120 = vunpack.c.l.b16 %v106
    %v121 = vunpack.c.h.b16 %v106
    %v122 = vunpack.c.l.b16 %v107
    %v123 = vunpack.c.h.b16 %v107
    %v124 = vpack.c.b16 %v120, %v120
    %v125 = vpack.c.b16 %v121, %v121
    %v126 = vpack.c.b16 %v122, %v122
    %v127 = vpack.c.b16 %v123, %v123
    %vm128 = vcmask 64512
    %v130 = vsel %vm128, %v90, 0
    %v133 = vsel %vm128, %v91, 0
    %v136 = vsel %vm128, %v92, 0
    %v139 = vsel %vm128, %v93, 0
    %v142 = vsel %vm128, %v94, 0
    %v145 = vsel %vm128, %v95, 0
    %v148 = vsel %vm128, %v96, 0
    %v151 = vsel %vm128, %v97, 0
    %v154 = vsel %vm128, %v98, 0
    %v157 = vsel %vm128, %v99, 0
    %v160 = vsel %vm128, %v100, 0
    %v163 = vsel %vm128, %v101, 0
    %v166 = vsel %vm128, %v102, 0
    %v169 = vsel %vm128, %v103, 0
    %v172 = vsel %vm128, %v104, 0
    %v175 = vsel %vm128, %v105, 0
    %vm177 = vcmask 1043456
    %v179 = vsel %vm177, %v124, 0
    %v182 = vsel %vm177, %v125, 0
    %v185 = vsel %vm177, %v126, 0
    %v188 = vsel %vm177, %v127, 0
    %190 = vmatpush.bf16.msra.mxu0 0
    %191 = vmatpush.bf16.msra.mxu0 0
    %192 = vmatpush.bf16.msra.mxu0 0
    %193 = vmatpush.bf16.msra.mxu0 0
    %194 = vmatpush.bf16.msra.mxu0 0
    %195 = vmatpush.bf16.msra.mxu0 0
    %196 = vmatpush.bf16.msra.mxu0 0
    %197 = vmatpush.bf16.msra.mxu0 %v179
    %198 = vmatmul.bf16.gmra.mxu0 %v130
    %v199 = vpop.f32.mrf.mxu0
    %v200 = vadd.f32 %v110, %v199
    %v201 = vpop.f32.mrf.mxu0
    %v202 = vadd.f32 %v110, %v201
    %203 = vmatmul.bf16.gmra.mxu0 %v133
    %v204 = vpop.f32.mrf.mxu0
    %v205 = vadd.f32 %v110, %v204
    %v206 = vpop.f32.mrf.mxu0
    %v207 = vadd.f32 %v110, %v206
    %208 = vmatmul.bf16.gmra.mxu0 %v136
    %v209 = vpop.f32.mrf.mxu0
    %v210 = vadd.f32 %v110, %v209
    %v211 = vpop.f32.mrf.mxu0
    %v212 = vadd.f32 %v110, %v211
    %213 = vmatmul.bf16.gmra.mxu0 %v139
    %v214 = vpop.f32.mrf.mxu0
    %v215 = vadd.f32 %v110, %v214
    %v216 = vpop.f32.mrf.mxu0
    %v217 = vadd.f32 %v110, %v216
    %218 = vmatmul.bf16.gmra.mxu0 %v142
    %v219 = vpop.f32.mrf.mxu0
    %v220 = vadd.f32 %v110, %v219
    %v221 = vpop.f32.mrf.mxu0
    %v222 = vadd.f32 %v110, %v221
    %223 = vmatmul.bf16.gmra.mxu0 %v145
    %v224 = vpop.f32.mrf.mxu0
    %v225 = vadd.f32 %v110, %v224
    %v226 = vpop.f32.mrf.mxu0
    %v227 = vadd.f32 %v110, %v226
    %228 = vmatmul.bf16.gmra.mxu0 %v148
    %v229 = vpop.f32.mrf.mxu0
    %v230 = vadd.f32 %v110, %v229
    %v231 = vpop.f32.mrf.mxu0
    %v232 = vadd.f32 %v110, %v231
    %233 = vmatmul.bf16.gmra.mxu0 %v151
    %v234 = vpop.f32.mrf.mxu0
    %v235 = vadd.f32 %v110, %v234
    %v236 = vpop.f32.mrf.mxu0
    %v237 = vadd.f32 %v110, %v236
    %238 = vmatmul.bf16.gmra.mxu0 %v154
    %v239 = vpop.f32.mrf.mxu0
    %v240 = vadd.f32 %v110, %v239
    %v241 = vpop.f32.mrf.mxu0
    %v242 = vadd.f32 %v110, %v241
    %243 = vmatmul.bf16.gmra.mxu0 %v157
    %v244 = vpop.f32.mrf.mxu0
    %v245 = vadd.f32 %v110, %v244
    %v246 = vpop.f32.mrf.mxu0
    %v247 = vadd.f32 %v110, %v246
    %248 = vmatmul.bf16.gmra.mxu0 %v160
    %v249 = vpop.f32.mrf.mxu0
    %v250 = vadd.f32 %v110, %v249
    %v251 = vpop.f32.mrf.mxu0
    %v252 = vadd.f32 %v110, %v251
    %253 = vmatmul.bf16.gmra.mxu0 %v163
    %v254 = vpop.f32.mrf.mxu0
    %v255 = vadd.f32 %v110, %v254
    %v256 = vpop.f32.mrf.mxu0
    %v257 = vadd.f32 %v110, %v256
    %258 = vmatmul.bf16.gmra.mxu0 %v166
    %v259 = vpop.f32.mrf.mxu0
    %v260 = vadd.f32 %v110, %v259
    %v261 = vpop.f32.mrf.mxu0
    %v262 = vadd.f32 %v110, %v261
    %263 = vmatmul.bf16.gmra.mxu0 %v169
    %v264 = vpop.f32.mrf.mxu0
    %v265 = vadd.f32 %v110, %v264
    %v266 = vpop.f32.mrf.mxu0
    %v267 = vadd.f32 %v110, %v266
    %268 = vmatmul.bf16.gmra.mxu0 %v172
    %v269 = vpop.f32.mrf.mxu0
    %v270 = vadd.f32 %v110, %v269
    %v271 = vpop.f32.mrf.mxu0
    %v272 = vadd.f32 %v110, %v271
    %273 = vmatmul.bf16.gmra.mxu0 %v175
    %v274 = vpop.f32.mrf.mxu0
    %v275 = vadd.f32 %v110, %v274
    %v276 = vpop.f32.mrf.mxu0
    %v277 = vadd.f32 %v110, %v276
    %278 = vdwg.mxu0
    %279 = vmatpush.bf16.msra.mxu0 0
    %280 = vmatpush.bf16.msra.mxu0 0
    %281 = vmatpush.bf16.msra.mxu0 0
    %282 = vmatpush.bf16.msra.mxu0 0
    %283 = vmatpush.bf16.msra.mxu0 0
    %284 = vmatpush.bf16.msra.mxu0 0
    %285 = vmatpush.bf16.msra.mxu0 0
    %286 = vmatpush.bf16.msra.mxu0 %v182
    %287 = vmatmul.bf16.gmra.mxu0 %v130
    %v288 = vpop.f32.mrf.mxu0
    %v289 = vadd.f32 %v111, %v288
    %v290 = vpop.f32.mrf.mxu0
    %v291 = vadd.f32 %v111, %v290
    %292 = vmatmul.bf16.gmra.mxu0 %v133
    %v293 = vpop.f32.mrf.mxu0
    %v294 = vadd.f32 %v111, %v293
    %v295 = vpop.f32.mrf.mxu0
    %v296 = vadd.f32 %v111, %v295
    %297 = vmatmul.bf16.gmra.mxu0 %v136
    %v298 = vpop.f32.mrf.mxu0
    %v299 = vadd.f32 %v111, %v298
    %v300 = vpop.f32.mrf.mxu0
    %v301 = vadd.f32 %v111, %v300
    %302 = vmatmul.bf16.gmra.mxu0 %v139
    %v303 = vpop.f32.mrf.mxu0
    %v304 = vadd.f32 %v111, %v303
    %v305 = vpop.f32.mrf.mxu0
    %v306 = vadd.f32 %v111, %v305
    %307 = vmatmul.bf16.gmra.mxu0 %v142
    %v308 = vpop.f32.mrf.mxu0
    %v309 = vadd.f32 %v111, %v308
    %v310 = vpop.f32.mrf.mxu0
    %v311 = vadd.f32 %v111, %v310
    %312 = vmatmul.bf16.gmra.mxu0 %v145
    %v313 = vpop.f32.mrf.mxu0
    %v314 = vadd.f32 %v111, %v313
    %v315 = vpop.f32.mrf.mxu0
    %v316 = vadd.f32 %v111, %v315
    %317 = vmatmul.bf16.gmra.mxu0 %v148
    %v318 = vpop.f32.mrf.mxu0
    %v319 = vadd.f32 %v111, %v318
    %v320 = vpop.f32.mrf.mxu0
    %v321 = vadd.f32 %v111, %v320
    %322 = vmatmul.bf16.gmra.mxu0 %v151
    %v323 = vpop.f32.mrf.mxu0
    %v324 = vadd.f32 %v111, %v323
    %v325 = vpop.f32.mrf.mxu0
    %v326 = vadd.f32 %v111, %v325
    %327 = vmatmul.bf16.gmra.mxu0 %v154
    %v328 = vpop.f32.mrf.mxu0
    %v329 = vadd.f32 %v111, %v328
    %v330 = vpop.f32.mrf.mxu0
    %v331 = vadd.f32 %v111, %v330
    %332 = vmatmul.bf16.gmra.mxu0 %v157
    %v333 = vpop.f32.mrf.mxu0
    %v334 = vadd.f32 %v111, %v333
    %v335 = vpop.f32.mrf.mxu0
    %v336 = vadd.f32 %v111, %v335
    %337 = vmatmul.bf16.gmra.mxu0 %v160
    %v338 = vpop.f32.mrf.mxu0
    %v339 = vadd.f32 %v111, %v338
    %v340 = vpop.f32.mrf.mxu0
    %v341 = vadd.f32 %v111, %v340
    %342 = vmatmul.bf16.gmra.mxu0 %v163
    %v343 = vpop.f32.mrf.mxu0
    %v344 = vadd.f32 %v111, %v343
    %v345 = vpop.f32.mrf.mxu0
    %v346 = vadd.f32 %v111, %v345
    %347 = vmatmul.bf16.gmra.mxu0 %v166
    %v348 = vpop.f32.mrf.mxu0
    %v349 = vadd.f32 %v111, %v348
    %v350 = vpop.f32.mrf.mxu0
    %v351 = vadd.f32 %v111, %v350
    %352 = vmatmul.bf16.gmra.mxu0 %v169
    %v353 = vpop.f32.mrf.mxu0
    %v354 = vadd.f32 %v111, %v353
    %v355 = vpop.f32.mrf.mxu0
    %v356 = vadd.f32 %v111, %v355
    %357 = vmatmul.bf16.gmra.mxu0 %v172
    %v358 = vpop.f32.mrf.mxu0
    %v359 = vadd.f32 %v111, %v358
    %v360 = vpop.f32.mrf.mxu0
    %v361 = vadd.f32 %v111, %v360
    %362 = vmatmul.bf16.gmra.mxu0 %v175
    %v363 = vpop.f32.mrf.mxu0
    %v364 = vadd.f32 %v111, %v363
    %v365 = vpop.f32.mrf.mxu0
    %v366 = vadd.f32 %v111, %v365
    %367 = vdwg.mxu0
    %368 = vmatpush.bf16.msra.mxu0 0
    %369 = vmatpush.bf16.msra.mxu0 0
    %370 = vmatpush.bf16.msra.mxu0 0
    %371 = vmatpush.bf16.msra.mxu0 0
    %372 = vmatpush.bf16.msra.mxu0 0
    %373 = vmatpush.bf16.msra.mxu0 0
    %374 = vmatpush.bf16.msra.mxu0 0
    %375 = vmatpush.bf16.msra.mxu0 %v185
    %376 = vmatmul.bf16.gmra.mxu0 %v130
    %v377 = vpop.f32.mrf.mxu0
    %v378 = vadd.f32 %v112, %v377
    %v379 = vpop.f32.mrf.mxu0
    %v380 = vadd.f32 %v112, %v379
    %381 = vmatmul.bf16.gmra.mxu0 %v133
    %v382 = vpop.f32.mrf.mxu0
    %v383 = vadd.f32 %v112, %v382
    %v384 = vpop.f32.mrf.mxu0
    %v385 = vadd.f32 %v112, %v384
    %386 = vmatmul.bf16.gmra.mxu0 %v136
    %v387 = vpop.f32.mrf.mxu0
    %v388 = vadd.f32 %v112, %v387
    %v389 = vpop.f32.mrf.mxu0
    %v390 = vadd.f32 %v112, %v389
    %391 = vmatmul.bf16.gmra.mxu0 %v139
    %v392 = vpop.f32.mrf.mxu0
    %v393 = vadd.f32 %v112, %v392
    %v394 = vpop.f32.mrf.mxu0
    %v395 = vadd.f32 %v112, %v394
    %396 = vmatmul.bf16.gmra.mxu0 %v142
    %v397 = vpop.f32.mrf.mxu0
    %v398 = vadd.f32 %v112, %v397
    %v399 = vpop.f32.mrf.mxu0
    %v400 = vadd.f32 %v112, %v399
    %401 = vmatmul.bf16.gmra.mxu0 %v145
    %v402 = vpop.f32.mrf.mxu0
    %v403 = vadd.f32 %v112, %v402
    %v404 = vpop.f32.mrf.mxu0
    %v405 = vadd.f32 %v112, %v404
    %406 = vmatmul.bf16.gmra.mxu0 %v148
    %v407 = vpop.f32.mrf.mxu0
    %v408 = vadd.f32 %v112, %v407
    %v409 = vpop.f32.mrf.mxu0
    %v410 = vadd.f32 %v112, %v409
    %411 = vmatmul.bf16.gmra.mxu0 %v151
    %v412 = vpop.f32.mrf.mxu0
    %v413 = vadd.f32 %v112, %v412
    %v414 = vpop.f32.mrf.mxu0
    %v415 = vadd.f32 %v112, %v414
    %416 = vmatmul.bf16.gmra.mxu0 %v154
    %v417 = vpop.f32.mrf.mxu0
    %v418 = vadd.f32 %v112, %v417
    %v419 = vpop.f32.mrf.mxu0
    %v420 = vadd.f32 %v112, %v419
    %421 = vmatmul.bf16.gmra.mxu0 %v157
    %v422 = vpop.f32.mrf.mxu0
    %v423 = vadd.f32 %v112, %v422
    %v424 = vpop.f32.mrf.mxu0
    %v425 = vadd.f32 %v112, %v424
    %426 = vmatmul.bf16.gmra.mxu0 %v160
    %v427 = vpop.f32.mrf.mxu0
    %v428 = vadd.f32 %v112, %v427
    %v429 = vpop.f32.mrf.mxu0
    %v430 = vadd.f32 %v112, %v429
    %431 = vmatmul.bf16.gmra.mxu0 %v163
    %v432 = vpop.f32.mrf.mxu0
    %v433 = vadd.f32 %v112, %v432
    %v434 = vpop.f32.mrf.mxu0
    %v435 = vadd.f32 %v112, %v434
    %436 = vmatmul.bf16.gmra.mxu0 %v166
    %v437 = vpop.f32.mrf.mxu0
    %v438 = vadd.f32 %v112, %v437
    %v439 = vpop.f32.mrf.mxu0
    %v440 = vadd.f32 %v112, %v439
    %441 = vmatmul.bf16.gmra.mxu0 %v169
    %v442 = vpop.f32.mrf.mxu0
    %v443 = vadd.f32 %v112, %v442
    %v444 = vpop.f32.mrf.mxu0
    %v445 = vadd.f32 %v112, %v444
    %446 = vmatmul.bf16.gmra.mxu0 %v172
    %v447 = vpop.f32.mrf.mxu0
    %v448 = vadd.f32 %v112, %v447
    %v449 = vpop.f32.mrf.mxu0
    %v450 = vadd.f32 %v112, %v449
    %451 = vmatmul.bf16.gmra.mxu0 %v175
    %v452 = vpop.f32.mrf.mxu0
    %v453 = vadd.f32 %v112, %v452
    %v454 = vpop.f32.mrf.mxu0
    %v455 = vadd.f32 %v112, %v454
    %456 = vdwg.mxu0
    %457 = vmatpush.bf16.msra.mxu0 0
    %458 = vmatpush.bf16.msra.mxu0 0
    %459 = vmatpush.bf16.msra.mxu0 0
    %460 = vmatpush.bf16.msra.mxu0 0
    %461 = vmatpush.bf16.msra.mxu0 0
    %462 = vmatpush.bf16.msra.mxu0 0
    %463 = vmatpush.bf16.msra.mxu0 0
    %464 = vmatpush.bf16.msra.mxu0 %v188
    %465 = vmatmul.bf16.gmra.mxu0 %v130
    %v466 = vpop.f32.mrf.mxu0
    %v467 = vadd.f32 %v113, %v466
    %v468 = vpop.f32.mrf.mxu0
    %v469 = vadd.f32 %v113, %v468
    %470 = vmatmul.bf16.gmra.mxu0 %v133
    %v471 = vpop.f32.mrf.mxu0
    %v472 = vadd.f32 %v113, %v471
    %v473 = vpop.f32.mrf.mxu0
    %v474 = vadd.f32 %v113, %v473
    %475 = vmatmul.bf16.gmra.mxu0 %v136
    %v476 = vpop.f32.mrf.mxu0
    %v477 = vadd.f32 %v113, %v476
    %v478 = vpop.f32.mrf.mxu0
    %v479 = vadd.f32 %v113, %v478
    %480 = vmatmul.bf16.gmra.mxu0 %v139
    %v481 = vpop.f32.mrf.mxu0
    %v482 = vadd.f32 %v113, %v481
    %v483 = vpop.f32.mrf.mxu0
    %v484 = vadd.f32 %v113, %v483
    %485 = vmatmul.bf16.gmra.mxu0 %v142
    %v486 = vpop.f32.mrf.mxu0
    %v487 = vadd.f32 %v113, %v486
    %v488 = vpop.f32.mrf.mxu0
    %v489 = vadd.f32 %v113, %v488
    %490 = vmatmul.bf16.gmra.mxu0 %v145
    %v491 = vpop.f32.mrf.mxu0
    %v492 = vadd.f32 %v113, %v491
    %v493 = vpop.f32.mrf.mxu0
    %v494 = vadd.f32 %v113, %v493
    %495 = vmatmul.bf16.gmra.mxu0 %v148
    %v496 = vpop.f32.mrf.mxu0
    %v497 = vadd.f32 %v113, %v496
    %v498 = vpop.f32.mrf.mxu0
    %v499 = vadd.f32 %v113, %v498
    %500 = vmatmul.bf16.gmra.mxu0 %v151
    %v501 = vpop.f32.mrf.mxu0
    %v502 = vadd.f32 %v113, %v501
    %v503 = vpop.f32.mrf.mxu0
    %v504 = vadd.f32 %v113, %v503
    %505 = vmatmul.bf16.gmra.mxu0 %v154
    %v506 = vpop.f32.mrf.mxu0
    %v507 = vadd.f32 %v113, %v506
    %v508 = vpop.f32.mrf.mxu0
    %v509 = vadd.f32 %v113, %v508
    %510 = vmatmul.bf16.gmra.mxu0 %v157
    %v511 = vpop.f32.mrf.mxu0
    %v512 = vadd.f32 %v113, %v511
    %v513 = vpop.f32.mrf.mxu0
    %v514 = vadd.f32 %v113, %v513
    %515 = vmatmul.bf16.gmra.mxu0 %v160
    %v516 = vpop.f32.mrf.mxu0
    %v517 = vadd.f32 %v113, %v516
    %v518 = vpop.f32.mrf.mxu0
    %v519 = vadd.f32 %v113, %v518
    %520 = vmatmul.bf16.gmra.mxu0 %v163
    %v521 = vpop.f32.mrf.mxu0
    %v522 = vadd.f32 %v113, %v521
    %v523 = vpop.f32.mrf.mxu0
    %v524 = vadd.f32 %v113, %v523
    %525 = vmatmul.bf16.gmra.mxu0 %v166
    %v526 = vpop.f32.mrf.mxu0
    %v527 = vadd.f32 %v113, %v526
    %v528 = vpop.f32.mrf.mxu0
    %v529 = vadd.f32 %v113, %v528
    %530 = vmatmul.bf16.gmra.mxu0 %v169
    %v531 = vpop.f32.mrf.mxu0
    %v532 = vadd.f32 %v113, %v531
    %v533 = vpop.f32.mrf.mxu0
    %v534 = vadd.f32 %v113, %v533
    %535 = vmatmul.bf16.gmra.mxu0 %v172
    %v536 = vpop.f32.mrf.mxu0
    %v537 = vadd.f32 %v113, %v536
    %v538 = vpop.f32.mrf.mxu0
    %v539 = vadd.f32 %v113, %v538
    %540 = vmatmul.bf16.gmra.mxu0 %v175
    %v541 = vpop.f32.mrf.mxu0
    %v542 = vadd.f32 %v113, %v541
    %v543 = vpop.f32.mrf.mxu0
    %v544 = vadd.f32 %v113, %v543
    %545 = vdwg.mxu0
    %v546 = vmax.f32 %v200, 0.0
    %v547 = vmax.f32 %v289, 0.0
    %v548 = vmax.f32 %v378, 0.0
    %v549 = vmax.f32 %v467, 0.0
    %v550 = vmax.f32 %v202, 0.0
    %v551 = vmax.f32 %v291, 0.0
    %v552 = vmax.f32 %v380, 0.0
    %v553 = vmax.f32 %v469, 0.0
    %v554 = vmax.f32 %v205, 0.0
    %v555 = vmax.f32 %v294, 0.0
    %v556 = vmax.f32 %v383, 0.0
    %v557 = vmax.f32 %v472, 0.0
    %v558 = vmax.f32 %v207, 0.0
    %v559 = vmax.f32 %v296, 0.0
    %v560 = vmax.f32 %v385, 0.0
    %v561 = vmax.f32 %v474, 0.0
    %v562 = vmax.f32 %v210, 0.0
    %v563 = vmax.f32 %v299, 0.0
    %v564 = vmax.f32 %v388, 0.0
    %v565 = vmax.f32 %v477, 0.0
    %v566 = vmax.f32 %v212, 0.0
    %v567 = vmax.f32 %v301, 0.0
    %v568 = vmax.f32 %v390, 0.0
    %v569 = vmax.f32 %v479, 0.0
    %v570 = vmax.f32 %v215, 0.0
    %v571 = vmax.f32 %v304, 0.0
    %v572 = vmax.f32 %v393, 0.0
    %v573 = vmax.f32 %v482, 0.0
    %v574 = vmax.f32 %v217, 0.0
    %v575 = vmax.f32 %v306, 0.0
    %v576 = vmax.f32 %v395, 0.0
    %v577 = vmax.f32 %v484, 0.0
    %v578 = vmax.f32 %v220, 0.0
    %v579 = vmax.f32 %v309, 0.0
    %v580 = vmax.f32 %v398, 0.0
    %v581 = vmax.f32 %v487, 0.0
    %v582 = vmax.f32 %v222, 0.0
    %v583 = vmax.f32 %v311, 0.0
    %v584 = vmax.f32 %v400, 0.0
    %v585 = vmax.f32 %v489, 0.0
    %v586 = vmax.f32 %v225, 0.0
    %v587 = vmax.f32 %v314, 0.0
    %v588 = vmax.f32 %v403, 0.0
    %v589 = vmax.f32 %v492, 0.0
    %v590 = vmax.f32 %v227, 0.0
    %v591 = vmax.f32 %v316, 0.0
    %v592 = vmax.f32 %v405, 0.0
    %v593 = vmax.f32 %v494, 0.0
    %v594 = vmax.f32 %v230, 0.0
    %v595 = vmax.f32 %v319, 0.0
    %v596 = vmax.f32 %v408, 0.0
    %v597 = vmax.f32 %v497, 0.0
    %v598 = vmax.f32 %v232, 0.0
    %v599 = vmax.f32 %v321, 0.0
    %v600 = vmax.f32 %v410, 0.0
    %v601 = vmax.f32 %v499, 0.0
    %v602 = vmax.f32 %v235, 0.0
    %v603 = vmax.f32 %v324, 0.0
    %v604 = vmax.f32 %v413, 0.0
    %v605 = vmax.f32 %v502, 0.0
    %v606 = vmax.f32 %v237, 0.0
    %v607 = vmax.f32 %v326, 0.0
    %v608 = vmax.f32 %v415, 0.0
    %v609 = vmax.f32 %v504, 0.0
    %v610 = vmax.f32 %v240, 0.0
    %v611 = vmax.f32 %v329, 0.0
    %v612 = vmax.f32 %v418, 0.0
    %v613 = vmax.f32 %v507, 0.0
    %v614 = vmax.f32 %v242, 0.0
    %v615 = vmax.f32 %v331, 0.0
    %v616 = vmax.f32 %v420, 0.0
    %v617 = vmax.f32 %v509, 0.0
    %v618 = vmax.f32 %v245, 0.0
    %v619 = vmax.f32 %v334, 0.0
    %v620 = vmax.f32 %v423, 0.0
    %v621 = vmax.f32 %v512, 0.0
    %v622 = vmax.f32 %v247, 0.0
    %v623 = vmax.f32 %v336, 0.0
    %v624 = vmax.f32 %v425, 0.0
    %v625 = vmax.f32 %v514, 0.0
    %v626 = vmax.f32 %v250, 0.0
    %v627 = vmax.f32 %v339, 0.0
    %v628 = vmax.f32 %v428, 0.0
    %v629 = vmax.f32 %v517, 0.0
    %v630 = vmax.f32 %v252, 0.0
    %v631 = vmax.f32 %v341, 0.0
    %v632 = vmax.f32 %v430, 0.0
    %v633 = vmax.f32 %v519, 0.0
    %v634 = vmax.f32 %v255, 0.0
    %v635 = vmax.f32 %v344, 0.0
    %v636 = vmax.f32 %v433, 0.0
    %v637 = vmax.f32 %v522, 0.0
    %v638 = vmax.f32 %v257, 0.0
    %v639 = vmax.f32 %v346, 0.0
    %v640 = vmax.f32 %v435, 0.0
    %v641 = vmax.f32 %v524, 0.0
    %v642 = vmax.f32 %v260, 0.0
    %v643 = vmax.f32 %v349, 0.0
    %v644 = vmax.f32 %v438, 0.0
    %v645 = vmax.f32 %v527, 0.0
    %v646 = vmax.f32 %v262, 0.0
    %v647 = vmax.f32 %v351, 0.0
    %v648 = vmax.f32 %v440, 0.0
    %v649 = vmax.f32 %v529, 0.0
    %v650 = vmax.f32 %v265, 0.0
    %v651 = vmax.f32 %v354, 0.0
    %v652 = vmax.f32 %v443, 0.0
    %v653 = vmax.f32 %v532, 0.0
    %v654 = vmax.f32 %v267, 0.0
    %v655 = vmax.f32 %v356, 0.0
    %v656 = vmax.f32 %v445, 0.0
    %v657 = vmax.f32 %v534, 0.0
    %v658 = vmax.f32 %v270, 0.0
    %v659 = vmax.f32 %v359, 0.0
    %v660 = vmax.f32 %v448, 0.0
    %v661 = vmax.f32 %v537, 0.0
    %v662 = vmax.f32 %v272, 0.0
    %v663 = vmax.f32 %v361, 0.0
    %v664 = vmax.f32 %v450, 0.0
    %v665 = vmax.f32 %v539, 0.0
    %v666 = vmax.f32 %v275, 0.0
    %v667 = vmax.f32 %v364, 0.0
    %v668 = vmax.f32 %v453, 0.0
    %v669 = vmax.f32 %v542, 0.0
    %v670 = vmax.f32 %v277, 0.0
    %v671 = vmax.f32 %v366, 0.0
    %v672 = vmax.f32 %v455, 0.0
    %v673 = vmax.f32 %v544, 0.0
    %v674 = vpack.c.bf16 %v550, %v546
    %v675 = vpack.c.bf16 %v551, %v547
    %v676 = vpack.c.bf16 %v552, %v548
    %v677 = vpack.c.bf16 %v553, %v549
    %v678 = vpack.c.bf16 %v558, %v554
    %v679 = vpack.c.bf16 %v559, %v555
    %v680 = vpack.c.bf16 %v560, %v556
    %v681 = vpack.c.bf16 %v561, %v557
    %v682 = vpack.c.bf16 %v566, %v562
    %v683 = vpack.c.bf16 %v567, %v563
    %v684 = vpack.c.bf16 %v568, %v564
    %v685 = vpack.c.bf16 %v569, %v565
    %v686 = vpack.c.bf16 %v574, %v570
    %v687 = vpack.c.bf16 %v575, %v571
    %v688 = vpack.c.bf16 %v576, %v572
    %v689 = vpack.c.bf16 %v577, %v573
    %v690 = vpack.c.bf16 %v582, %v578
    %v691 = vpack.c.bf16 %v583, %v579
    %v692 = vpack.c.bf16 %v584, %v580
    %v693 = vpack.c.bf16 %v585, %v581
    %v694 = vpack.c.bf16 %v590, %v586
    %v695 = vpack.c.bf16 %v591, %v587
    %v696 = vpack.c.bf16 %v592, %v588
    %v697 = vpack.c.bf16 %v593, %v589
    %v698 = vpack.c.bf16 %v598, %v594
    %v699 = vpack.c.bf16 %v599, %v595
    %v700 = vpack.c.bf16 %v600, %v596
    %v701 = vpack.c.bf16 %v601, %v597
    %v702 = vpack.c.bf16 %v606, %v602
    %v703 = vpack.c.bf16 %v607, %v603
    %v704 = vpack.c.bf16 %v608, %v604
    %v705 = vpack.c.bf16 %v609, %v605
    %v706 = vpack.c.bf16 %v614, %v610
    %v707 = vpack.c.bf16 %v615, %v611
    %v708 = vpack.c.bf16 %v616, %v612
    %v709 = vpack.c.bf16 %v617, %v613
    %v710 = vpack.c.bf16 %v622, %v618
    %v711 = vpack.c.bf16 %v623, %v619
    %v712 = vpack.c.bf16 %v624, %v620
    %v713 = vpack.c.bf16 %v625, %v621
    %v714 = vpack.c.bf16 %v630, %v626
    %v715 = vpack.c.bf16 %v631, %v627
    %v716 = vpack.c.bf16 %v632, %v628
    %v717 = vpack.c.bf16 %v633, %v629
    %v718 = vpack.c.bf16 %v638, %v634
    %v719 = vpack.c.bf16 %v639, %v635
    %v720 = vpack.c.bf16 %v640, %v636
    %v721 = vpack.c.bf16 %v641, %v637
    %v722 = vpack.c.bf16 %v646, %v642
    %v723 = vpack.c.bf16 %v647, %v643
    %v724 = vpack.c.bf16 %v648, %v644
    %v725 = vpack.c.bf16 %v649, %v645
    %v726 = vpack.c.bf16 %v654, %v650
    %v727 = vpack.c.bf16 %v655, %v651
    %v728 = vpack.c.bf16 %v656, %v652
    %v729 = vpack.c.bf16 %v657, %v653
    %v730 = vpack.c.bf16 %v662, %v658
    %v731 = vpack.c.bf16 %v663, %v659
    %v732 = vpack.c.bf16 %v664, %v660
    %v733 = vpack.c.bf16 %v665, %v661
    %v734 = vpack.c.bf16 %v670, %v666
    %v735 = vpack.c.bf16 %v671, %v667
    %v736 = vpack.c.bf16 %v672, %v668
    %v737 = vpack.c.bf16 %v673, %v669
    %v738 = vld [vmem:[#allocation2] sm:$0xff]
    %v739 = vld [vmem:[#allocation2 + $0x8] sm:$0xff]
    %v740 = vld [vmem:[#allocation2 + $0x10] sm:$0xff]
    %v741 = vld [vmem:[#allocation2 + $0x18] sm:$0xff]
    %v742 = vld [vmem:[#allocation2 + $0x20] sm:$0xff]
    %v743 = vld [vmem:[#allocation2 + $0x28] sm:$0xff]
    %v744 = vld [vmem:[#allocation2 + $0x30] sm:$0xff]
    %v745 = vld [vmem:[#allocation2 + $0x38] sm:$0xff]
    %v746 = vld [vmem:[#allocation2 + $0x40] sm:$0xff]
    %v747 = vld [vmem:[#allocation2 + $0x48] sm:$0xff]
    %v748 = vld [vmem:[#allocation2 + $0x50] sm:$0xff]
    %v749 = vld [vmem:[#allocation2 + $0x58] sm:$0xff]
    %v750 = vld [vmem:[#allocation2 + $0x60] sm:$0xff]
    %v751 = vld [vmem:[#allocation2 + $0x68] sm:$0xff]
    %v752 = vld [vmem:[#allocation2 + $0x70] sm:$0xff]
    %v753 = vld [vmem:[#allocation2 + $0x78] sm:$0xff]
    %v754 = vld [vmem:[#allocation2 + $0x80] sm:$0xff]
    %v755 = vld [vmem:[#allocation2 + $0x88] sm:$0xff]
    %v756 = vld [vmem:[#allocation2 + $0x90] sm:$0xff]
    %v757 = vld [vmem:[#allocation2 + $0x98] sm:$0xff]
    %v758 = vld [vmem:[#allocation2 + $0xa0] sm:$0xff]
    %v759 = vld [vmem:[#allocation2 + $0xa8] sm:$0xff]
    %v760 = vld [vmem:[#allocation2 + $0xb0] sm:$0xff]
    %v761 = vld [vmem:[#allocation2 + $0xb8] sm:$0xff]
    %v762 = vld [vmem:[#allocation2 + $0xc0] sm:$0xff]
    %v763 = vld [vmem:[#allocation2 + $0xc8] sm:$0xff]
    %v764 = vld [vmem:[#allocation2 + $0xd0] sm:$0xff]
    %v765 = vld [vmem:[#allocation2 + $0xd8] sm:$0xff]
    %v766 = vld [vmem:[#allocation2 + $0xe0] sm:$0xff]
    %v767 = vld [vmem:[#allocation2 + $0xe8] sm:$0xff]
    %v768 = vld [vmem:[#allocation2 + $0xf0] sm:$0xff]
    %v769 = vld [vmem:[#allocation2 + $0xf8] sm:$0xff]
    %v770 = vld [vmem:[#allocation2 + $0x100] sm:$0xff]
    %v771 = vld [vmem:[#allocation2 + $0x108] sm:$0xff]
    %v772 = vld [vmem:[#allocation2 + $0x110] sm:$0xff]
    %v773 = vld [vmem:[#allocation2 + $0x118] sm:$0xff]
    %v774 = vld [vmem:[#allocation2 + $0x120] sm:$0xff]
    %v775 = vld [vmem:[#allocation2 + $0x128] sm:$0xff]
    %v776 = vld [vmem:[#allocation2 + $0x130] sm:$0xff]
    %v777 = vld [vmem:[#allocation2 + $0x138] sm:$0xff]
    %v778 = vld [vmem:[#allocation2 + $0x140] sm:$0xff]
    %v779 = vld [vmem:[#allocation2 + $0x148] sm:$0xff]
    %v780 = vld [vmem:[#allocation2 + $0x150] sm:$0xff]
    %v781 = vld [vmem:[#allocation2 + $0x158] sm:$0xff]
    %v782 = vld [vmem:[#allocation2 + $0x160] sm:$0xff]
    %v783 = vld [vmem:[#allocation2 + $0x168] sm:$0xff]
    %v784 = vld [vmem:[#allocation2 + $0x170] sm:$0xff]
    %v785 = vld [vmem:[#allocation2 + $0x178] sm:$0xff]
    %v786 = vld [vmem:[#allocation2 + $0x180] sm:$0xff]
    %v787 = vld [vmem:[#allocation2 + $0x188] sm:$0xff]
    %v788 = vld [vmem:[#allocation2 + $0x190] sm:$0xff]
    %v789 = vld [vmem:[#allocation2 + $0x198] sm:$0xff]
    %v790 = vld [vmem:[#allocation2 + $0x1a0] sm:$0xff]
    %v791 = vld [vmem:[#allocation2 + $0x1a8] sm:$0xff]
    %v792 = vld [vmem:[#allocation2 + $0x1b0] sm:$0xff]
    %v793 = vld [vmem:[#allocation2 + $0x1b8] sm:$0xff]
    %v794 = vld [vmem:[#allocation2 + $0x1c0] sm:$0xff]
    %v795 = vld [vmem:[#allocation2 + $0x1c8] sm:$0xff]
    %v796 = vld [vmem:[#allocation2 + $0x1d0] sm:$0xff]
    %v797 = vld [vmem:[#allocation2 + $0x1d8] sm:$0xff]
    %v798 = vld [vmem:[#allocation2 + $0x1e0] sm:$0xff]
    %v799 = vld [vmem:[#allocation2 + $0x1e8] sm:$0xff]
    %v800 = vld [vmem:[#allocation2 + $0x1f0] sm:$0xff]
    %v801 = vld [vmem:[#allocation2 + $0x1f8] sm:$0xff]
    %v802 = vld [vmem:[#allocation2 + $0x200] sm:$0xff]
    %v803 = vld [vmem:[#allocation2 + $0x208] sm:$0xff]
    %v804 = vld [vmem:[#allocation2 + $0x210] sm:$0xff]
    %v805 = vld [vmem:[#allocation2 + $0x218] sm:$0xff]
    %v806 = vld [vmem:[#allocation2 + $0x220] sm:$0xff]
    %v807 = vld [vmem:[#allocation2 + $0x228] sm:$0xff]
    %v808 = vld [vmem:[#allocation2 + $0x230] sm:$0xff]
    %v809 = vld [vmem:[#allocation2 + $0x238] sm:$0xff]
    %v810 = vld [vmem:[#allocation2 + $0x240] sm:$0xff]
    %v811 = vld [vmem:[#allocation2 + $0x248] sm:$0xff]
    %v812 = vld [vmem:[#allocation2 + $0x250] sm:$0xff]
    %v813 = vld [vmem:[#allocation2 + $0x258] sm:$0xff]
    %v814 = vld [vmem:[#allocation2 + $0x260] sm:$0xff]
    %v815 = vld [vmem:[#allocation2 + $0x268] sm:$0xff]
    %v816 = vld [vmem:[#allocation2 + $0x270] sm:$0xff]
    %v817 = vld [vmem:[#allocation2 + $0x278] sm:$0xff]
    %v818 = vld [vmem:[#allocation2 + $0x280] sm:$0xff]
    %v819 = vld [vmem:[#allocation2 + $0x288] sm:$0xff]
    %v820 = vld [vmem:[#allocation2 + $0x290] sm:$0xff]
    %v821 = vld [vmem:[#allocation2 + $0x298] sm:$0xff]
    %v822 = vld [vmem:[#allocation2 + $0x2a0] sm:$0xff]
    %v823 = vld [vmem:[#allocation2 + $0x2a8] sm:$0xff]
    %v824 = vld [vmem:[#allocation2 + $0x2b0] sm:$0xff]
    %v825 = vld [vmem:[#allocation2 + $0x2b8] sm:$0xff]
    %v826 = vld [vmem:[#allocation2 + $0x2c0] sm:$0xff]
    %v827 = vld [vmem:[#allocation2 + $0x2c8] sm:$0xff]
    %v828 = vld [vmem:[#allocation2 + $0x2d0] sm:$0xff]
    %v829 = vld [vmem:[#allocation2 + $0x2d8] sm:$0xff]
    %v830 = vld [vmem:[#allocation2 + $0x2e0] sm:$0xff]
    %v831 = vld [vmem:[#allocation2 + $0x2e8] sm:$0xff]
    %v832 = vld [vmem:[#allocation2 + $0x2f0] sm:$0xff]
    %v833 = vld [vmem:[#allocation2 + $0x2f8] sm:$0xff]
    %v834 = vld [vmem:[#allocation2 + $0x300] sm:$0xff]
    %v835 = vld [vmem:[#allocation2 + $0x308] sm:$0xff]
    %v836 = vld [vmem:[#allocation2 + $0x310] sm:$0xff]
    %v837 = vld [vmem:[#allocation2 + $0x318] sm:$0xff]
    %v838 = vld [vmem:[#allocation2 + $0x320] sm:$0xff]
    %v839 = vld [vmem:[#allocation2 + $0x328] sm:$0xff]
    %v840 = vld [vmem:[#allocation2 + $0x330] sm:$0xff]
    %v841 = vld [vmem:[#allocation2 + $0x338] sm:$0xff]
    %v842 = vld [vmem:[#allocation2 + $0x340] sm:$0xff]
    %v843 = vld [vmem:[#allocation2 + $0x348] sm:$0xff]
    %v844 = vld [vmem:[#allocation2 + $0x350] sm:$0xff]
    %v845 = vld [vmem:[#allocation2 + $0x358] sm:$0xff]
    %v846 = vld [vmem:[#allocation2 + $0x360] sm:$0xff]
    %v847 = vld [vmem:[#allocation2 + $0x368] sm:$0xff]
    %v848 = vld [vmem:[#allocation2 + $0x370] sm:$0xff]
    %v849 = vld [vmem:[#allocation2 + $0x378] sm:$0xff]
    %v850 = vld [vmem:[#allocation2 + $0x380] sm:$0xff]
    %v851 = vld [vmem:[#allocation2 + $0x388] sm:$0xff]
    %v852 = vld [vmem:[#allocation2 + $0x390] sm:$0xff]
    %v853 = vld [vmem:[#allocation2 + $0x398] sm:$0xff]
    %v854 = vld [vmem:[#allocation2 + $0x3a0] sm:$0xff]
    %v855 = vld [vmem:[#allocation2 + $0x3a8] sm:$0xff]
    %v856 = vld [vmem:[#allocation2 + $0x3b0] sm:$0xff]
    %v857 = vld [vmem:[#allocation2 + $0x3b8] sm:$0xff]
    %v858 = vld [vmem:[#allocation2 + $0x3c0] sm:$0xff]
    %v859 = vld [vmem:[#allocation2 + $0x3c8] sm:$0xff]
    %v860 = vld [vmem:[#allocation2 + $0x3d0] sm:$0xff]
    %v861 = vld [vmem:[#allocation2 + $0x3d8] sm:$0xff]
    %v862 = vld [vmem:[#allocation2 + $0x3e0] sm:$0xff]
    %v863 = vld [vmem:[#allocation2 + $0x3e8] sm:$0xff]
    %v864 = vld [vmem:[#allocation2 + $0x3f0] sm:$0xff]
    %v865 = vld [vmem:[#allocation2 + $0x3f8] sm:$0xff]
    %v866 = vld [vmem:[#allocation5] sm:$0xf]
    %v868 = vperm.slane %v866, 0
    %v869 = vperm.slane %v866, 1
    %v870 = vperm.slane %v866, 2
    %v871 = vperm.slane %v866, 3
    %v1004 = vunpack.c.l.b16 %v738
    %v1005 = vunpack.c.h.b16 %v738
    %v1006 = vunpack.c.l.b16 %v739
    %v1007 = vunpack.c.h.b16 %v739
    %v1008 = vunpack.c.l.b16 %v740
    %v1009 = vunpack.c.h.b16 %v740
    %v1010 = vunpack.c.l.b16 %v741
    %v1011 = vunpack.c.h.b16 %v741
    %v1012 = vunpack.c.l.b16 %v742
    %v1013 = vunpack.c.h.b16 %v742
    %v1014 = vunpack.c.l.b16 %v743
    %v1015 = vunpack.c.h.b16 %v743
    %v1016 = vunpack.c.l.b16 %v744
    %v1017 = vunpack.c.h.b16 %v744
    %v1018 = vunpack.c.l.b16 %v745
    %v1019 = vunpack.c.h.b16 %v745
    %v1020 = vunpack.c.l.b16 %v746
    %v1021 = vunpack.c.h.b16 %v746
    %v1022 = vunpack.c.l.b16 %v747
    %v1023 = vunpack.c.h.b16 %v747
    %v1024 = vunpack.c.l.b16 %v748
    %v1025 = vunpack.c.h.b16 %v748
    %v1026 = vunpack.c.l.b16 %v749
    %v1027 = vunpack.c.h.b16 %v749
    %v1028 = vunpack.c.l.b16 %v750
    %v1029 = vunpack.c.h.b16 %v750
    %v1030 = vunpack.c.l.b16 %v751
    %v1031 = vunpack.c.h.b16 %v751
    %v1032 = vunpack.c.l.b16 %v752
    %v1033 = vunpack.c.h.b16 %v752
    %v1034 = vunpack.c.l.b16 %v753
    %v1035 = vunpack.c.h.b16 %v753
    %v1036 = vunpack.c.l.b16 %v754
    %v1037 = vunpack.c.h.b16 %v754
    %v1038 = vunpack.c.l.b16 %v755
    %v1039 = vunpack.c.h.b16 %v755
    %v1040 = vunpack.c.l.b16 %v756
    %v1041 = vunpack.c.h.b16 %v756
    %v1042 = vunpack.c.l.b16 %v757
    %v1043 = vunpack.c.h.b16 %v757
    %v1044 = vunpack.c.l.b16 %v758
    %v1045 = vunpack.c.h.b16 %v758
    %v1046 = vunpack.c.l.b16 %v759
    %v1047 = vunpack.c.h.b16 %v759
    %v1048 = vunpack.c.l.b16 %v760
    %v1049 = vunpack.c.h.b16 %v760
    %v1050 = vunpack.c.l.b16 %v761
    %v1051 = vunpack.c.h.b16 %v761
    %v1052 = vunpack.c.l.b16 %v762
    %v1053 = vunpack.c.h.b16 %v762
    %v1054 = vunpack.c.l.b16 %v763
    %v1055 = vunpack.c.h.b16 %v763
    %v1056 = vunpack.c.l.b16 %v764
    %v1057 = vunpack.c.h.b16 %v764
    %v1058 = vunpack.c.l.b16 %v765
    %v1059 = vunpack.c.h.b16 %v765
    %v1060 = vunpack.c.l.b16 %v766
    %v1061 = vunpack.c.h.b16 %v766
    %v1062 = vunpack.c.l.b16 %v767
    %v1063 = vunpack.c.h.b16 %v767
    %v1064 = vunpack.c.l.b16 %v768
    %v1065 = vunpack.c.h.b16 %v768
    %v1066 = vunpack.c.l.b16 %v769
    %v1067 = vunpack.c.h.b16 %v769
    %v1068 = vunpack.c.l.b16 %v770
    %v1069 = vunpack.c.h.b16 %v770
    %v1070 = vunpack.c.l.b16 %v771
    %v1071 = vunpack.c.h.b16 %v771
    %v1072 = vunpack.c.l.b16 %v772
    %v1073 = vunpack.c.h.b16 %v772
    %v1074 = vunpack.c.l.b16 %v773
    %v1075 = vunpack.c.h.b16 %v773
    %v1076 = vunpack.c.l.b16 %v774
    %v1077 = vunpack.c.h.b16 %v774
    %v1078 = vunpack.c.l.b16 %v775
    %v1079 = vunpack.c.h.b16 %v775
    %v1080 = vunpack.c.l.b16 %v776
    %v1081 = vunpack.c.h.b16 %v776
    %v1082 = vunpack.c.l.b16 %v777
    %v1083 = vunpack.c.h.b16 %v777
    %v1084 = vunpack.c.l.b16 %v778
    %v1085 = vunpack.c.h.b16 %v778
    %v1086 = vunpack.c.l.b16 %v779
    %v1087 = vunpack.c.h.b16 %v779
    %v1088 = vunpack.c.l.b16 %v780
    %v1089 = vunpack.c.h.b16 %v780
    %v1090 = vunpack.c.l.b16 %v781
    %v1091 = vunpack.c.h.b16 %v781
    %v1092 = vunpack.c.l.b16 %v782
    %v1093 = vunpack.c.h.b16 %v782
    %v1094 = vunpack.c.l.b16 %v783
    %v1095 = vunpack.c.h.b16 %v783
    %v1096 = vunpack.c.l.b16 %v784
    %v1097 = vunpack.c.h.b16 %v784
    %v1098 = vunpack.c.l.b16 %v785
    %v1099 = vunpack.c.h.b16 %v785
    %v1100 = vunpack.c.l.b16 %v786
    %v1101 = vunpack.c.h.b16 %v786
    %v1102 = vunpack.c.l.b16 %v787
    %v1103 = vunpack.c.h.b16 %v787
    %v1104 = vunpack.c.l.b16 %v788
    %v1105 = vunpack.c.h.b16 %v788
    %v1106 = vunpack.c.l.b16 %v789
    %v1107 = vunpack.c.h.b16 %v789
    %v1108 = vunpack.c.l.b16 %v790
    %v1109 = vunpack.c.h.b16 %v790
    %v1110 = vunpack.c.l.b16 %v791
    %v1111 = vunpack.c.h.b16 %v791
    %v1112 = vunpack.c.l.b16 %v792
    %v1113 = vunpack.c.h.b16 %v792
    %v1114 = vunpack.c.l.b16 %v793
    %v1115 = vunpack.c.h.b16 %v793
    %v1116 = vunpack.c.l.b16 %v794
    %v1117 = vunpack.c.h.b16 %v794
    %v1118 = vunpack.c.l.b16 %v795
    %v1119 = vunpack.c.h.b16 %v795
    %v1120 = vunpack.c.l.b16 %v796
    %v1121 = vunpack.c.h.b16 %v796
    %v1122 = vunpack.c.l.b16 %v797
    %v1123 = vunpack.c.h.b16 %v797
    %v1124 = vunpack.c.l.b16 %v798
    %v1125 = vunpack.c.h.b16 %v798
    %v1126 = vunpack.c.l.b16 %v799
    %v1127 = vunpack.c.h.b16 %v799
    %v1128 = vunpack.c.l.b16 %v800
    %v1129 = vunpack.c.h.b16 %v800
    %v1130 = vunpack.c.l.b16 %v801
    %v1131 = vunpack.c.h.b16 %v801
    %v1132 = vunpack.c.l.b16 %v802
    %v1133 = vunpack.c.h.b16 %v802
    %v1134 = vunpack.c.l.b16 %v803
    %v1135 = vunpack.c.h.b16 %v803
    %v1136 = vunpack.c.l.b16 %v804
    %v1137 = vunpack.c.h.b16 %v804
    %v1138 = vunpack.c.l.b16 %v805
    %v1139 = vunpack.c.h.b16 %v805
    %v1140 = vunpack.c.l.b16 %v806
    %v1141 = vunpack.c.h.b16 %v806
    %v1142 = vunpack.c.l.b16 %v807
    %v1143 = vunpack.c.h.b16 %v807
    %v1144 = vunpack.c.l.b16 %v808
    %v1145 = vunpack.c.h.b16 %v808
    %v1146 = vunpack.c.l.b16 %v809
    %v1147 = vunpack.c.h.b16 %v809
    %v1148 = vunpack.c.l.b16 %v810
    %v1149 = vunpack.c.h.b16 %v810
    %v1150 = vunpack.c.l.b16 %v811
    %v1151 = vunpack.c.h.b16 %v811
    %v1152 = vunpack.c.l.b16 %v812
    %v1153 = vunpack.c.h.b16 %v812
    %v1154 = vunpack.c.l.b16 %v813
    %v1155 = vunpack.c.h.b16 %v813
    %v1156 = vunpack.c.l.b16 %v814
    %v1157 = vunpack.c.h.b16 %v814
    %v1158 = vunpack.c.l.b16 %v815
    %v1159 = vunpack.c.h.b16 %v815
    %v1160 = vunpack.c.l.b16 %v816
    %v1161 = vunpack.c.h.b16 %v816
    %v1162 = vunpack.c.l.b16 %v817
    %v1163 = vunpack.c.h.b16 %v817
    %v1164 = vunpack.c.l.b16 %v818
    %v1165 = vunpack.c.h.b16 %v818
    %v1166 = vunpack.c.l.b16 %v819
    %v1167 = vunpack.c.h.b16 %v819
    %v1168 = vunpack.c.l.b16 %v820
    %v1169 = vunpack.c.h.b16 %v820
    %v1170 = vunpack.c.l.b16 %v821
    %v1171 = vunpack.c.h.b16 %v821
    %v1172 = vunpack.c.l.b16 %v822
    %v1173 = vunpack.c.h.b16 %v822
    %v1174 = vunpack.c.l.b16 %v823
    %v1175 = vunpack.c.h.b16 %v823
    %v1176 = vunpack.c.l.b16 %v824
    %v1177 = vunpack.c.h.b16 %v824
    %v1178 = vunpack.c.l.b16 %v825
    %v1179 = vunpack.c.h.b16 %v825
    %v1180 = vunpack.c.l.b16 %v826
    %v1181 = vunpack.c.h.b16 %v826
    %v1182 = vunpack.c.l.b16 %v827
    %v1183 = vunpack.c.h.b16 %v827
    %v1184 = vunpack.c.l.b16 %v828
    %v1185 = vunpack.c.h.b16 %v828
    %v1186 = vunpack.c.l.b16 %v829
    %v1187 = vunpack.c.h.b16 %v829
    %v1188 = vunpack.c.l.b16 %v830
    %v1189 = vunpack.c.h.b16 %v830
    %v1190 = vunpack.c.l.b16 %v831
    %v1191 = vunpack.c.h.b16 %v831
    %v1192 = vunpack.c.l.b16 %v832
    %v1193 = vunpack.c.h.b16 %v832
    %v1194 = vunpack.c.l.b16 %v833
    %v1195 = vunpack.c.h.b16 %v833
    %v1196 = vunpack.c.l.b16 %v834
    %v1197 = vunpack.c.h.b16 %v834
    %v1198 = vunpack.c.l.b16 %v835
    %v1199 = vunpack.c.h.b16 %v835
    %v1200 = vunpack.c.l.b16 %v836
    %v1201 = vunpack.c.h.b16 %v836
    %v1202 = vunpack.c.l.b16 %v837
    %v1203 = vunpack.c.h.b16 %v837
    %v1204 = vunpack.c.l.b16 %v838
    %v1205 = vunpack.c.h.b16 %v838
    %v1206 = vunpack.c.l.b16 %v839
    %v1207 = vunpack.c.h.b16 %v839
    %v1208 = vunpack.c.l.b16 %v840
    %v1209 = vunpack.c.h.b16 %v840
    %v1210 = vunpack.c.l.b16 %v841
    %v1211 = vunpack.c.h.b16 %v841
    %v1212 = vunpack.c.l.b16 %v842
    %v1213 = vunpack.c.h.b16 %v842
    %v1214 = vunpack.c.l.b16 %v843
    %v1215 = vunpack.c.h.b16 %v843
    %v1216 = vunpack.c.l.b16 %v844
    %v1217 = vunpack.c.h.b16 %v844
    %v1218 = vunpack.c.l.b16 %v845
    %v1219 = vunpack.c.h.b16 %v845
    %v1220 = vunpack.c.l.b16 %v846
    %v1221 = vunpack.c.h.b16 %v846
    %v1222 = vunpack.c.l.b16 %v847
    %v1223 = vunpack.c.h.b16 %v847
    %v1224 = vunpack.c.l.b16 %v848
    %v1225 = vunpack.c.h.b16 %v848
    %v1226 = vunpack.c.l.b16 %v849
    %v1227 = vunpack.c.h.b16 %v849
    %v1228 = vunpack.c.l.b16 %v850
    %v1229 = vunpack.c.h.b16 %v850
    %v1230 = vunpack.c.l.b16 %v851
    %v1231 = vunpack.c.h.b16 %v851
    %v1232 = vunpack.c.l.b16 %v852
    %v1233 = vunpack.c.h.b16 %v852
    %v1234 = vunpack.c.l.b16 %v853
    %v1235 = vunpack.c.h.b16 %v853
    %v1236 = vunpack.c.l.b16 %v854
    %v1237 = vunpack.c.h.b16 %v854
    %v1238 = vunpack.c.l.b16 %v855
    %v1239 = vunpack.c.h.b16 %v855
    %v1240 = vunpack.c.l.b16 %v856
    %v1241 = vunpack.c.h.b16 %v856
    %v1242 = vunpack.c.l.b16 %v857
    %v1243 = vunpack.c.h.b16 %v857
    %v1244 = vunpack.c.l.b16 %v858
    %v1245 = vunpack.c.h.b16 %v858
    %v1246 = vunpack.c.l.b16 %v859
    %v1247 = vunpack.c.h.b16 %v859
    %v1248 = vunpack.c.l.b16 %v860
    %v1249 = vunpack.c.h.b16 %v860
    %v1250 = vunpack.c.l.b16 %v861
    %v1251 = vunpack.c.h.b16 %v861
    %v1252 = vunpack.c.l.b16 %v862
    %v1253 = vunpack.c.h.b16 %v862
    %v1254 = vunpack.c.l.b16 %v863
    %v1255 = vunpack.c.h.b16 %v863
    %v1256 = vunpack.c.l.b16 %v864
    %v1257 = vunpack.c.h.b16 %v864
    %v1258 = vunpack.c.l.b16 %v865
    %v1259 = vunpack.c.h.b16 %v865
    %v1260 = vpack.c.b16 %v1008, %v1004
    %v1261 = vpack.c.b16 %v1009, %v1005
    %v1262 = vpack.c.b16 %v1010, %v1006
    %v1263 = vpack.c.b16 %v1011, %v1007
    %v1264 = vpack.c.b16 %v1016, %v1012
    %v1265 = vpack.c.b16 %v1017, %v1013
    %v1266 = vpack.c.b16 %v1018, %v1014
    %v1267 = vpack.c.b16 %v1019, %v1015
    %v1268 = vpack.c.b16 %v1024, %v1020
    %v1269 = vpack.c.b16 %v1025, %v1021
    %v1270 = vpack.c.b16 %v1026, %v1022
    %v1271 = vpack.c.b16 %v1027, %v1023
    %v1272 = vpack.c.b16 %v1032, %v1028
    %v1273 = vpack.c.b16 %v1033, %v1029
    %v1274 = vpack.c.b16 %v1034, %v1030
    %v1275 = vpack.c.b16 %v1035, %v1031
    %v1276 = vpack.c.b16 %v1040, %v1036
    %v1277 = vpack.c.b16 %v1041, %v1037
    %v1278 = vpack.c.b16 %v1042, %v1038
    %v1279 = vpack.c.b16 %v1043, %v1039
    %v1280 = vpack.c.b16 %v1048, %v1044
    %v1281 = vpack.c.b16 %v1049, %v1045
    %v1282 = vpack.c.b16 %v1050, %v1046
    %v1283 = vpack.c.b16 %v1051, %v1047
    %v1284 = vpack.c.b16 %v1056, %v1052
    %v1285 = vpack.c.b16 %v1057, %v1053
    %v1286 = vpack.c.b16 %v1058, %v1054
    %v1287 = vpack.c.b16 %v1059, %v1055
    %v1288 = vpack.c.b16 %v1064, %v1060
    %v1289 = vpack.c.b16 %v1065, %v1061
    %v1290 = vpack.c.b16 %v1066, %v1062
    %v1291 = vpack.c.b16 %v1067, %v1063
    %v1292 = vpack.c.b16 %v1072, %v1068
    %v1293 = vpack.c.b16 %v1073, %v1069
    %v1294 = vpack.c.b16 %v1074, %v1070
    %v1295 = vpack.c.b16 %v1075, %v1071
    %v1296 = vpack.c.b16 %v1080, %v1076
    %v1297 = vpack.c.b16 %v1081, %v1077
    %v1298 = vpack.c.b16 %v1082, %v1078
    %v1299 = vpack.c.b16 %v1083, %v1079
    %v1300 = vpack.c.b16 %v1088, %v1084
    %v1301 = vpack.c.b16 %v1089, %v1085
    %v1302 = vpack.c.b16 %v1090, %v1086
    %v1303 = vpack.c.b16 %v1091, %v1087
    %v1304 = vpack.c.b16 %v1096, %v1092
    %v1305 = vpack.c.b16 %v1097, %v1093
    %v1306 = vpack.c.b16 %v1098, %v1094
    %v1307 = vpack.c.b16 %v1099, %v1095
    %v1308 = vpack.c.b16 %v1104, %v1100
    %v1309 = vpack.c.b16 %v1105, %v1101
    %v1310 = vpack.c.b16 %v1106, %v1102
    %v1311 = vpack.c.b16 %v1107, %v1103
    %v1312 = vpack.c.b16 %v1112, %v1108
    %v1313 = vpack.c.b16 %v1113, %v1109
    %v1314 = vpack.c.b16 %v1114, %v1110
    %v1315 = vpack.c.b16 %v1115, %v1111
    %v1316 = vpack.c.b16 %v1120, %v1116
    %v1317 = vpack.c.b16 %v1121, %v1117
    %v1318 = vpack.c.b16 %v1122, %v1118
    %v1319 = vpack.c.b16 %v1123, %v1119
    %v1320 = vpack.c.b16 %v1128, %v1124
    %v1321 = vpack.c.b16 %v1129, %v1125
    %v1322 = vpack.c.b16 %v1130, %v1126
    %v1323 = vpack.c.b16 %v1131, %v1127
    %v1324 = vpack.c.b16 %v1136, %v1132
    %v1325 = vpack.c.b16 %v1137, %v1133
    %v1326 = vpack.c.b16 %v1138, %v1134
    %v1327 = vpack.c.b16 %v1139, %v1135
    %v1328 = vpack.c.b16 %v1144, %v1140
    %v1329 = vpack.c.b16 %v1145, %v1141
    %v1330 = vpack.c.b16 %v1146, %v1142
    %v1331 = vpack.c.b16 %v1147, %v1143
    %v1332 = vpack.c.b16 %v1152, %v1148
    %v1333 = vpack.c.b16 %v1153, %v1149
    %v1334 = vpack.c.b16 %v1154, %v1150
    %v1335 = vpack.c.b16 %v1155, %v1151
    %v1336 = vpack.c.b16 %v1160, %v1156
    %v1337 = vpack.c.b16 %v1161, %v1157
    %v1338 = vpack.c.b16 %v1162, %v1158
    %v1339 = vpack.c.b16 %v1163, %v1159
    %v1340 = vpack.c.b16 %v1168, %v1164
    %v1341 = vpack.c.b16 %v1169, %v1165
    %v1342 = vpack.c.b16 %v1170, %v1166
    %v1343 = vpack.c.b16 %v1171, %v1167
    %v1344 = vpack.c.b16 %v1176, %v1172
    %v1345 = vpack.c.b16 %v1177, %v1173
    %v1346 = vpack.c.b16 %v1178, %v1174
    %v1347 = vpack.c.b16 %v1179, %v1175
    %v1348 = vpack.c.b16 %v1184, %v1180
    %v1349 = vpack.c.b16 %v1185, %v1181
    %v1350 = vpack.c.b16 %v1186, %v1182
    %v1351 = vpack.c.b16 %v1187, %v1183
    %v1352 = vpack.c.b16 %v1192, %v1188
    %v1353 = vpack.c.b16 %v1193, %v1189
    %v1354 = vpack.c.b16 %v1194, %v1190
    %v1355 = vpack.c.b16 %v1195, %v1191
    %v1356 = vpack.c.b16 %v1200, %v1196
    %v1357 = vpack.c.b16 %v1201, %v1197
    %v1358 = vpack.c.b16 %v1202, %v1198
    %v1359 = vpack.c.b16 %v1203, %v1199
    %v1360 = vpack.c.b16 %v1208, %v1204
    %v1361 = vpack.c.b16 %v1209, %v1205
    %v1362 = vpack.c.b16 %v1210, %v1206
    %v1363 = vpack.c.b16 %v1211, %v1207
    %v1364 = vpack.c.b16 %v1216, %v1212
    %v1365 = vpack.c.b16 %v1217, %v1213
    %v1366 = vpack.c.b16 %v1218, %v1214
    %v1367 = vpack.c.b16 %v1219, %v1215
    %v1368 = vpack.c.b16 %v1224, %v1220
    %v1369 = vpack.c.b16 %v1225, %v1221
    %v1370 = vpack.c.b16 %v1226, %v1222
    %v1371 = vpack.c.b16 %v1227, %v1223
    %v1372 = vpack.c.b16 %v1232, %v1228
    %v1373 = vpack.c.b16 %v1233, %v1229
    %v1374 = vpack.c.b16 %v1234, %v1230
    %v1375 = vpack.c.b16 %v1235, %v1231
    %v1376 = vpack.c.b16 %v1240, %v1236
    %v1377 = vpack.c.b16 %v1241, %v1237
    %v1378 = vpack.c.b16 %v1242, %v1238
    %v1379 = vpack.c.b16 %v1243, %v1239
    %v1380 = vpack.c.b16 %v1248, %v1244
    %v1381 = vpack.c.b16 %v1249, %v1245
    %v1382 = vpack.c.b16 %v1250, %v1246
    %v1383 = vpack.c.b16 %v1251, %v1247
    %v1384 = vpack.c.b16 %v1256, %v1252
    %v1385 = vpack.c.b16 %v1257, %v1253
    %v1386 = vpack.c.b16 %v1258, %v1254
    %v1387 = vpack.c.b16 %v1259, %v1255
    %1516 = vmatpush.bf16.msra.mxu0 %v1288
    %1517 = vmatpush.bf16.msra.mxu0 %v1284
    %1518 = vmatpush.bf16.msra.mxu0 %v1280
    %1519 = vmatpush.bf16.msra.mxu0 %v1276
    %1520 = vmatpush.bf16.msra.mxu0 %v1272
    %1521 = vmatpush.bf16.msra.mxu0 %v1268
    %1522 = vmatpush.bf16.msra.mxu0 %v1264
    %1523 = vmatpush.bf16.msra.mxu0 %v1260
    %1524 = vmatmul.bf16.gmra.mxu0 %v674
    %v1525 = vpop.f32.mrf.mxu0
    %v1526 = vadd.f32 %v868, %v1525
    %v1527 = vpop.f32.mrf.mxu0
    %v1528 = vadd.f32 %v868, %v1527
    %1529 = vmatmul.bf16.gmra.mxu0 %v678
    %v1530 = vpop.f32.mrf.mxu0
    %v1531 = vadd.f32 %v868, %v1530
    %v1532 = vpop.f32.mrf.mxu0
    %v1533 = vadd.f32 %v868, %v1532
    %1534 = vmatmul.bf16.gmra.mxu0 %v682
    %v1535 = vpop.f32.mrf.mxu0
    %v1536 = vadd.f32 %v868, %v1535
    %v1537 = vpop.f32.mrf.mxu0
    %v1538 = vadd.f32 %v868, %v1537
    %1539 = vmatmul.bf16.gmra.mxu0 %v686
    %v1540 = vpop.f32.mrf.mxu0
    %v1541 = vadd.f32 %v868, %v1540
    %v1542 = vpop.f32.mrf.mxu0
    %v1543 = vadd.f32 %v868, %v1542
    %1544 = vmatmul.bf16.gmra.mxu0 %v690
    %v1545 = vpop.f32.mrf.mxu0
    %v1546 = vadd.f32 %v868, %v1545
    %v1547 = vpop.f32.mrf.mxu0
    %v1548 = vadd.f32 %v868, %v1547
    %1549 = vmatmul.bf16.gmra.mxu0 %v694
    %v1550 = vpop.f32.mrf.mxu0
    %v1551 = vadd.f32 %v868, %v1550
    %v1552 = vpop.f32.mrf.mxu0
    %v1553 = vadd.f32 %v868, %v1552
    %1554 = vmatmul.bf16.gmra.mxu0 %v698
    %v1555 = vpop.f32.mrf.mxu0
    %v1556 = vadd.f32 %v868, %v1555
    %v1557 = vpop.f32.mrf.mxu0
    %v1558 = vadd.f32 %v868, %v1557
    %1559 = vmatmul.bf16.gmra.mxu0 %v702
    %v1560 = vpop.f32.mrf.mxu0
    %v1561 = vadd.f32 %v868, %v1560
    %v1562 = vpop.f32.mrf.mxu0
    %v1563 = vadd.f32 %v868, %v1562
    %1564 = vmatmul.bf16.gmra.mxu0 %v706
    %v1565 = vpop.f32.mrf.mxu0
    %v1566 = vadd.f32 %v868, %v1565
    %v1567 = vpop.f32.mrf.mxu0
    %v1568 = vadd.f32 %v868, %v1567
    %1569 = vmatmul.bf16.gmra.mxu0 %v710
    %v1570 = vpop.f32.mrf.mxu0
    %v1571 = vadd.f32 %v868, %v1570
    %v1572 = vpop.f32.mrf.mxu0
    %v1573 = vadd.f32 %v868, %v1572
    %1574 = vmatmul.bf16.gmra.mxu0 %v714
    %v1575 = vpop.f32.mrf.mxu0
    %v1576 = vadd.f32 %v868, %v1575
    %v1577 = vpop.f32.mrf.mxu0
    %v1578 = vadd.f32 %v868, %v1577
    %1579 = vmatmul.bf16.gmra.mxu0 %v718
    %v1580 = vpop.f32.mrf.mxu0
    %v1581 = vadd.f32 %v868, %v1580
    %v1582 = vpop.f32.mrf.mxu0
    %v1583 = vadd.f32 %v868, %v1582
    %1584 = vmatmul.bf16.gmra.mxu0 %v722
    %v1585 = vpop.f32.mrf.mxu0
    %v1586 = vadd.f32 %v868, %v1585
    %v1587 = vpop.f32.mrf.mxu0
    %v1588 = vadd.f32 %v868, %v1587
    %1589 = vmatmul.bf16.gmra.mxu0 %v726
    %v1590 = vpop.f32.mrf.mxu0
    %v1591 = vadd.f32 %v868, %v1590
    %v1592 = vpop.f32.mrf.mxu0
    %v1593 = vadd.f32 %v868, %v1592
    %1594 = vmatmul.bf16.gmra.mxu0 %v730
    %v1595 = vpop.f32.mrf.mxu0
    %v1596 = vadd.f32 %v868, %v1595
    %v1597 = vpop.f32.mrf.mxu0
    %v1598 = vadd.f32 %v868, %v1597
    %1599 = vmatmul.bf16.gmra.mxu0 %v734
    %v1600 = vpop.f32.mrf.mxu0
    %v1601 = vadd.f32 %v868, %v1600
    %v1602 = vpop.f32.mrf.mxu0
    %v1603 = vadd.f32 %v868, %v1602
    %1604 = vdwg.mxu0
    %1605 = vmatpush.bf16.msra.mxu0 %v1320
    %1606 = vmatpush.bf16.msra.mxu0 %v1316
    %1607 = vmatpush.bf16.msra.mxu0 %v1312
    %1608 = vmatpush.bf16.msra.mxu0 %v1308
    %1609 = vmatpush.bf16.msra.mxu0 %v1304
    %1610 = vmatpush.bf16.msra.mxu0 %v1300
    %1611 = vmatpush.bf16.msra.mxu0 %v1296
    %1612 = vmatpush.bf16.msra.mxu0 %v1292
    %1613 = vmatmul.bf16.gmra.mxu0 %v675
    %v1614 = vpop.f32.mrf.mxu0
    %v1615 = vadd.f32 %v1526, %v1614
    %v1616 = vpop.f32.mrf.mxu0
    %v1617 = vadd.f32 %v1528, %v1616
    %1618 = vmatmul.bf16.gmra.mxu0 %v679
    %v1619 = vpop.f32.mrf.mxu0
    %v1620 = vadd.f32 %v1531, %v1619
    %v1621 = vpop.f32.mrf.mxu0
    %v1622 = vadd.f32 %v1533, %v1621
    %1623 = vmatmul.bf16.gmra.mxu0 %v683
    %v1624 = vpop.f32.mrf.mxu0
    %v1625 = vadd.f32 %v1536, %v1624
    %v1626 = vpop.f32.mrf.mxu0
    %v1627 = vadd.f32 %v1538, %v1626
    %1628 = vmatmul.bf16.gmra.mxu0 %v687
    %v1629 = vpop.f32.mrf.mxu0
    %v1630 = vadd.f32 %v1541, %v1629
    %v1631 = vpop.f32.mrf.mxu0
    %v1632 = vadd.f32 %v1543, %v1631
    %1633 = vmatmul.bf16.gmra.mxu0 %v691
    %v1634 = vpop.f32.mrf.mxu0
    %v1635 = vadd.f32 %v1546, %v1634
    %v1636 = vpop.f32.mrf.mxu0
    %v1637 = vadd.f32 %v1548, %v1636
    %1638 = vmatmul.bf16.gmra.mxu0 %v695
    %v1639 = vpop.f32.mrf.mxu0
    %v1640 = vadd.f32 %v1551, %v1639
    %v1641 = vpop.f32.mrf.mxu0
    %v1642 = vadd.f32 %v1553, %v1641
    %1643 = vmatmul.bf16.gmra.mxu0 %v699
    %v1644 = vpop.f32.mrf.mxu0
    %v1645 = vadd.f32 %v1556, %v1644
    %v1646 = vpop.f32.mrf.mxu0
    %v1647 = vadd.f32 %v1558, %v1646
    %1648 = vmatmul.bf16.gmra.mxu0 %v703
    %v1649 = vpop.f32.mrf.mxu0
    %v1650 = vadd.f32 %v1561, %v1649
    %v1651 = vpop.f32.mrf.mxu0
    %v1652 = vadd.f32 %v1563, %v1651
    %1653 = vmatmul.bf16.gmra.mxu0 %v707
    %v1654 = vpop.f32.mrf.mxu0
    %v1655 = vadd.f32 %v1566, %v1654
    %v1656 = vpop.f32.mrf.mxu0
    %v1657 = vadd.f32 %v1568, %v1656
    %1658 = vmatmul.bf16.gmra.mxu0 %v711
    %v1659 = vpop.f32.mrf.mxu0
    %v1660 = vadd.f32 %v1571, %v1659
    %v1661 = vpop.f32.mrf.mxu0
    %v1662 = vadd.f32 %v1573, %v1661
    %1663 = vmatmul.bf16.gmra.mxu0 %v715
    %v1664 = vpop.f32.mrf.mxu0
    %v1665 = vadd.f32 %v1576, %v1664
    %v1666 = vpop.f32.mrf.mxu0
    %v1667 = vadd.f32 %v1578, %v1666
    %1668 = vmatmul.bf16.gmra.mxu0 %v719
    %v1669 = vpop.f32.mrf.mxu0
    %v1670 = vadd.f32 %v1581, %v1669
    %v1671 = vpop.f32.mrf.mxu0
    %v1672 = vadd.f32 %v1583, %v1671
    %1673 = vmatmul.bf16.gmra.mxu0 %v723
    %v1674 = vpop.f32.mrf.mxu0
    %v1675 = vadd.f32 %v1586, %v1674
    %v1676 = vpop.f32.mrf.mxu0
    %v1677 = vadd.f32 %v1588, %v1676
    %1678 = vmatmul.bf16.gmra.mxu0 %v727
    %v1679 = vpop.f32.mrf.mxu0
    %v1680 = vadd.f32 %v1591, %v1679
    %v1681 = vpop.f32.mrf.mxu0
    %v1682 = vadd.f32 %v1593, %v1681
    %1683 = vmatmul.bf16.gmra.mxu0 %v731
    %v1684 = vpop.f32.mrf.mxu0
    %v1685 = vadd.f32 %v1596, %v1684
    %v1686 = vpop.f32.mrf.mxu0
    %v1687 = vadd.f32 %v1598, %v1686
    %1688 = vmatmul.bf16.gmra.mxu0 %v735
    %v1689 = vpop.f32.mrf.mxu0
    %v1690 = vadd.f32 %v1601, %v1689
    %v1691 = vpop.f32.mrf.mxu0
    %v1692 = vadd.f32 %v1603, %v1691
    %1693 = vdwg.mxu0
    %1694 = vmatpush.bf16.msra.mxu0 %v1352
    %1695 = vmatpush.bf16.msra.mxu0 %v1348
    %1696 = vmatpush.bf16.msra.mxu0 %v1344
    %1697 = vmatpush.bf16.msra.mxu0 %v1340
    %1698 = vmatpush.bf16.msra.mxu0 %v1336
    %1699 = vmatpush.bf16.msra.mxu0 %v1332
    %1700 = vmatpush.bf16.msra.mxu0 %v1328
    %1701 = vmatpush.bf16.msra.mxu0 %v1324
    %1702 = vmatmul.bf16.gmra.mxu0 %v676
    %v1703 = vpop.f32.mrf.mxu0
    %v1704 = vadd.f32 %v1615, %v1703
    %v1705 = vpop.f32.mrf.mxu0
    %v1706 = vadd.f32 %v1617, %v1705
    %1707 = vmatmul.bf16.gmra.mxu0 %v680
    %v1708 = vpop.f32.mrf.mxu0
    %v1709 = vadd.f32 %v1620, %v1708
    %v1710 = vpop.f32.mrf.mxu0
    %v1711 = vadd.f32 %v1622, %v1710
    %1712 = vmatmul.bf16.gmra.mxu0 %v684
    %v1713 = vpop.f32.mrf.mxu0
    %v1714 = vadd.f32 %v1625, %v1713
    %v1715 = vpop.f32.mrf.mxu0
    %v1716 = vadd.f32 %v1627, %v1715
    %1717 = vmatmul.bf16.gmra.mxu0 %v688
    %v1718 = vpop.f32.mrf.mxu0
    %v1719 = vadd.f32 %v1630, %v1718
    %v1720 = vpop.f32.mrf.mxu0
    %v1721 = vadd.f32 %v1632, %v1720
    %1722 = vmatmul.bf16.gmra.mxu0 %v692
    %v1723 = vpop.f32.mrf.mxu0
    %v1724 = vadd.f32 %v1635, %v1723
    %v1725 = vpop.f32.mrf.mxu0
    %v1726 = vadd.f32 %v1637, %v1725
    %1727 = vmatmul.bf16.gmra.mxu0 %v696
    %v1728 = vpop.f32.mrf.mxu0
    %v1729 = vadd.f32 %v1640, %v1728
    %v1730 = vpop.f32.mrf.mxu0
    %v1731 = vadd.f32 %v1642, %v1730
    %1732 = vmatmul.bf16.gmra.mxu0 %v700
    %v1733 = vpop.f32.mrf.mxu0
    %v1734 = vadd.f32 %v1645, %v1733
    %v1735 = vpop.f32.mrf.mxu0
    %v1736 = vadd.f32 %v1647, %v1735
    %1737 = vmatmul.bf16.gmra.mxu0 %v704
    %v1738 = vpop.f32.mrf.mxu0
    %v1739 = vadd.f32 %v1650, %v1738
    %v1740 = vpop.f32.mrf.mxu0
    %v1741 = vadd.f32 %v1652, %v1740
    %1742 = vmatmul.bf16.gmra.mxu0 %v708
    %v1743 = vpop.f32.mrf.mxu0
    %v1744 = vadd.f32 %v1655, %v1743
    %v1745 = vpop.f32.mrf.mxu0
    %v1746 = vadd.f32 %v1657, %v1745
    %1747 = vmatmul.bf16.gmra.mxu0 %v712
    %v1748 = vpop.f32.mrf.mxu0
    %v1749 = vadd.f32 %v1660, %v1748
    %v1750 = vpop.f32.mrf.mxu0
    %v1751 = vadd.f32 %v1662, %v1750
    %1752 = vmatmul.bf16.gmra.mxu0 %v716
    %v1753 = vpop.f32.mrf.mxu0
    %v1754 = vadd.f32 %v1665, %v1753
    %v1755 = vpop.f32.mrf.mxu0
    %v1756 = vadd.f32 %v1667, %v1755
    %1757 = vmatmul.bf16.gmra.mxu0 %v720
    %v1758 = vpop.f32.mrf.mxu0
    %v1759 = vadd.f32 %v1670, %v1758
    %v1760 = vpop.f32.mrf.mxu0
    %v1761 = vadd.f32 %v1672, %v1760
    %1762 = vmatmul.bf16.gmra.mxu0 %v724
    %v1763 = vpop.f32.mrf.mxu0
    %v1764 = vadd.f32 %v1675, %v1763
    %v1765 = vpop.f32.mrf.mxu0
    %v1766 = vadd.f32 %v1677, %v1765
    %1767 = vmatmul.bf16.gmra.mxu0 %v728
    %v1768 = vpop.f32.mrf.mxu0
    %v1769 = vadd.f32 %v1680, %v1768
    %v1770 = vpop.f32.mrf.mxu0
    %v1771 = vadd.f32 %v1682, %v1770
    %1772 = vmatmul.bf16.gmra.mxu0 %v732
    %v1773 = vpop.f32.mrf.mxu0
    %v1774 = vadd.f32 %v1685, %v1773
    %v1775 = vpop.f32.mrf.mxu0
    %v1776 = vadd.f32 %v1687, %v1775
    %1777 = vmatmul.bf16.gmra.mxu0 %v736
    %v1778 = vpop.f32.mrf.mxu0
    %v1779 = vadd.f32 %v1690, %v1778
    %v1780 = vpop.f32.mrf.mxu0
    %v1781 = vadd.f32 %v1692, %v1780
    %1782 = vdwg.mxu0
    %1783 = vmatpush.bf16.msra.mxu0 %v1384
    %1784 = vmatpush.bf16.msra.mxu0 %v1380
    %1785 = vmatpush.bf16.msra.mxu0 %v1376
    %1786 = vmatpush.bf16.msra.mxu0 %v1372
    %1787 = vmatpush.bf16.msra.mxu0 %v1368
    %1788 = vmatpush.bf16.msra.mxu0 %v1364
    %1789 = vmatpush.bf16.msra.mxu0 %v1360
    %1790 = vmatpush.bf16.msra.mxu0 %v1356
    %1791 = vmatmul.bf16.gmra.mxu0 %v677
    %v1792 = vpop.f32.mrf.mxu0
    %v1793 = vadd.f32 %v1704, %v1792
    %v1794 = vpop.f32.mrf.mxu0
    %v1795 = vadd.f32 %v1706, %v1794
    %1796 = vmatmul.bf16.gmra.mxu0 %v681
    %v1797 = vpop.f32.mrf.mxu0
    %v1798 = vadd.f32 %v1709, %v1797
    %v1799 = vpop.f32.mrf.mxu0
    %v1800 = vadd.f32 %v1711, %v1799
    %1801 = vmatmul.bf16.gmra.mxu0 %v685
    %v1802 = vpop.f32.mrf.mxu0
    %v1803 = vadd.f32 %v1714, %v1802
    %v1804 = vpop.f32.mrf.mxu0
    %v1805 = vadd.f32 %v1716, %v1804
    %1806 = vmatmul.bf16.gmra.mxu0 %v689
    %v1807 = vpop.f32.mrf.mxu0
    %v1808 = vadd.f32 %v1719, %v1807
    %v1809 = vpop.f32.mrf.mxu0
    %v1810 = vadd.f32 %v1721, %v1809
    %1811 = vmatmul.bf16.gmra.mxu0 %v693
    %v1812 = vpop.f32.mrf.mxu0
    %v1813 = vadd.f32 %v1724, %v1812
    %v1814 = vpop.f32.mrf.mxu0
    %v1815 = vadd.f32 %v1726, %v1814
    %1816 = vmatmul.bf16.gmra.mxu0 %v697
    %v1817 = vpop.f32.mrf.mxu0
    %v1818 = vadd.f32 %v1729, %v1817
    %v1819 = vpop.f32.mrf.mxu0
    %v1820 = vadd.f32 %v1731, %v1819
    %1821 = vmatmul.bf16.gmra.mxu0 %v701
    %v1822 = vpop.f32.mrf.mxu0
    %v1823 = vadd.f32 %v1734, %v1822
    %v1824 = vpop.f32.mrf.mxu0
    %v1825 = vadd.f32 %v1736, %v1824
    %1826 = vmatmul.bf16.gmra.mxu0 %v705
    %v1827 = vpop.f32.mrf.mxu0
    %v1828 = vadd.f32 %v1739, %v1827
    %v1829 = vpop.f32.mrf.mxu0
    %v1830 = vadd.f32 %v1741, %v1829
    %1831 = vmatmul.bf16.gmra.mxu0 %v709
    %v1832 = vpop.f32.mrf.mxu0
    %v1833 = vadd.f32 %v1744, %v1832
    %v1834 = vpop.f32.mrf.mxu0
    %v1835 = vadd.f32 %v1746, %v1834
    %1836 = vmatmul.bf16.gmra.mxu0 %v713
    %v1837 = vpop.f32.mrf.mxu0
    %v1838 = vadd.f32 %v1749, %v1837
    %v1839 = vpop.f32.mrf.mxu0
    %v1840 = vadd.f32 %v1751, %v1839
    %1841 = vmatmul.bf16.gmra.mxu0 %v717
    %v1842 = vpop.f32.mrf.mxu0
    %v1843 = vadd.f32 %v1754, %v1842
    %v1844 = vpop.f32.mrf.mxu0
    %v1845 = vadd.f32 %v1756, %v1844
    %1846 = vmatmul.bf16.gmra.mxu0 %v721
    %v1847 = vpop.f32.mrf.mxu0
    %v1848 = vadd.f32 %v1759, %v1847
    %v1849 = vpop.f32.mrf.mxu0
    %v1850 = vadd.f32 %v1761, %v1849
    %1851 = vmatmul.bf16.gmra.mxu0 %v725
    %v1852 = vpop.f32.mrf.mxu0
    %v1853 = vadd.f32 %v1764, %v1852
    %v1854 = vpop.f32.mrf.mxu0
    %v1855 = vadd.f32 %v1766, %v1854
    %1856 = vmatmul.bf16.gmra.mxu0 %v729
    %v1857 = vpop.f32.mrf.mxu0
    %v1858 = vadd.f32 %v1769, %v1857
    %v1859 = vpop.f32.mrf.mxu0
    %v1860 = vadd.f32 %v1771, %v1859
    %1861 = vmatmul.bf16.gmra.mxu0 %v733
    %v1862 = vpop.f32.mrf.mxu0
    %v1863 = vadd.f32 %v1774, %v1862
    %v1864 = vpop.f32.mrf.mxu0
    %v1865 = vadd.f32 %v1776, %v1864
    %1866 = vmatmul.bf16.gmra.mxu0 %v737
    %v1867 = vpop.f32.mrf.mxu0
    %v1868 = vadd.f32 %v1779, %v1867
    %v1869 = vpop.f32.mrf.mxu0
    %v1870 = vadd.f32 %v1781, %v1869
    %1871 = vdwg.mxu0
    %1872 = vmatpush.bf16.msra.mxu0 %v1289
    %1873 = vmatpush.bf16.msra.mxu0 %v1285
    %1874 = vmatpush.bf16.msra.mxu0 %v1281
    %1875 = vmatpush.bf16.msra.mxu0 %v1277
    %1876 = vmatpush.bf16.msra.mxu0 %v1273
    %1877 = vmatpush.bf16.msra.mxu0 %v1269
    %1878 = vmatpush.bf16.msra.mxu0 %v1265
    %1879 = vmatpush.bf16.msra.mxu0 %v1261
    %1880 = vmatmul.bf16.gmra.mxu0 %v674
    %v1881 = vpop.f32.mrf.mxu0
    %v1882 = vadd.f32 %v869, %v1881
    %v1883 = vpop.f32.mrf.mxu0
    %v1884 = vadd.f32 %v869, %v1883
    %1885 = vmatmul.bf16.gmra.mxu0 %v678
    %v1886 = vpop.f32.mrf.mxu0
    %v1887 = vadd.f32 %v869, %v1886
    %v1888 = vpop.f32.mrf.mxu0
    %v1889 = vadd.f32 %v869, %v1888
    %1890 = vmatmul.bf16.gmra.mxu0 %v682
    %v1891 = vpop.f32.mrf.mxu0
    %v1892 = vadd.f32 %v869, %v1891
    %v1893 = vpop.f32.mrf.mxu0
    %v1894 = vadd.f32 %v869, %v1893
    %1895 = vmatmul.bf16.gmra.mxu0 %v686
    %v1896 = vpop.f32.mrf.mxu0
    %v1897 = vadd.f32 %v869, %v1896
    %v1898 = vpop.f32.mrf.mxu0
    %v1899 = vadd.f32 %v869, %v1898
    %1900 = vmatmul.bf16.gmra.mxu0 %v690
    %v1901 = vpop.f32.mrf.mxu0
    %v1902 = vadd.f32 %v869, %v1901
    %v1903 = vpop.f32.mrf.mxu0
    %v1904 = vadd.f32 %v869, %v1903
    %1905 = vmatmul.bf16.gmra.mxu0 %v694
    %v1906 = vpop.f32.mrf.mxu0
    %v1907 = vadd.f32 %v869, %v1906
    %v1908 = vpop.f32.mrf.mxu0
    %v1909 = vadd.f32 %v869, %v1908
    %1910 = vmatmul.bf16.gmra.mxu0 %v698
    %v1911 = vpop.f32.mrf.mxu0
    %v1912 = vadd.f32 %v869, %v1911
    %v1913 = vpop.f32.mrf.mxu0
    %v1914 = vadd.f32 %v869, %v1913
    %1915 = vmatmul.bf16.gmra.mxu0 %v702
    %v1916 = vpop.f32.mrf.mxu0
    %v1917 = vadd.f32 %v869, %v1916
    %v1918 = vpop.f32.mrf.mxu0
    %v1919 = vadd.f32 %v869, %v1918
    %1920 = vmatmul.bf16.gmra.mxu0 %v706
    %v1921 = vpop.f32.mrf.mxu0
    %v1922 = vadd.f32 %v869, %v1921
    %v1923 = vpop.f32.mrf.mxu0
    %v1924 = vadd.f32 %v869, %v1923
    %1925 = vmatmul.bf16.gmra.mxu0 %v710
    %v1926 = vpop.f32.mrf.mxu0
    %v1927 = vadd.f32 %v869, %v1926
    %v1928 = vpop.f32.mrf.mxu0
    %v1929 = vadd.f32 %v869, %v1928
    %1930 = vmatmul.bf16.gmra.mxu0 %v714
    %v1931 = vpop.f32.mrf.mxu0
    %v1932 = vadd.f32 %v869, %v1931
    %v1933 = vpop.f32.mrf.mxu0
    %v1934 = vadd.f32 %v869, %v1933
    %1935 = vmatmul.bf16.gmra.mxu0 %v718
    %v1936 = vpop.f32.mrf.mxu0
    %v1937 = vadd.f32 %v869, %v1936
    %v1938 = vpop.f32.mrf.mxu0
    %v1939 = vadd.f32 %v869, %v1938
    %1940 = vmatmul.bf16.gmra.mxu0 %v722
    %v1941 = vpop.f32.mrf.mxu0
    %v1942 = vadd.f32 %v869, %v1941
    %v1943 = vpop.f32.mrf.mxu0
    %v1944 = vadd.f32 %v869, %v1943
    %1945 = vmatmul.bf16.gmra.mxu0 %v726
    %v1946 = vpop.f32.mrf.mxu0
    %v1947 = vadd.f32 %v869, %v1946
    %v1948 = vpop.f32.mrf.mxu0
    %v1949 = vadd.f32 %v869, %v1948
    %1950 = vmatmul.bf16.gmra.mxu0 %v730
    %v1951 = vpop.f32.mrf.mxu0
    %v1952 = vadd.f32 %v869, %v1951
    %v1953 = vpop.f32.mrf.mxu0
    %v1954 = vadd.f32 %v869, %v1953
    %1955 = vmatmul.bf16.gmra.mxu0 %v734
    %v1956 = vpop.f32.mrf.mxu0
    %v1957 = vadd.f32 %v869, %v1956
    %v1958 = vpop.f32.mrf.mxu0
    %v1959 = vadd.f32 %v869, %v1958
    %1960 = vdwg.mxu0
    %1961 = vmatpush.bf16.msra.mxu0 %v1321
    %1962 = vmatpush.bf16.msra.mxu0 %v1317
    %1963 = vmatpush.bf16.msra.mxu0 %v1313
    %1964 = vmatpush.bf16.msra.mxu0 %v1309
    %1965 = vmatpush.bf16.msra.mxu0 %v1305
    %1966 = vmatpush.bf16.msra.mxu0 %v1301
    %1967 = vmatpush.bf16.msra.mxu0 %v1297
    %1968 = vmatpush.bf16.msra.mxu0 %v1293
    %1969 = vmatmul.bf16.gmra.mxu0 %v675
    %v1970 = vpop.f32.mrf.mxu0
    %v1971 = vadd.f32 %v1882, %v1970
    %v1972 = vpop.f32.mrf.mxu0
    %v1973 = vadd.f32 %v1884, %v1972
    %1974 = vmatmul.bf16.gmra.mxu0 %v679
    %v1975 = vpop.f32.mrf.mxu0
    %v1976 = vadd.f32 %v1887, %v1975
    %v1977 = vpop.f32.mrf.mxu0
    %v1978 = vadd.f32 %v1889, %v1977
    %1979 = vmatmul.bf16.gmra.mxu0 %v683
    %v1980 = vpop.f32.mrf.mxu0
    %v1981 = vadd.f32 %v1892, %v1980
    %v1982 = vpop.f32.mrf.mxu0
    %v1983 = vadd.f32 %v1894, %v1982
    %1984 = vmatmul.bf16.gmra.mxu0 %v687
    %v1985 = vpop.f32.mrf.mxu0
    %v1986 = vadd.f32 %v1897, %v1985
    %v1987 = vpop.f32.mrf.mxu0
    %v1988 = vadd.f32 %v1899, %v1987
    %1989 = vmatmul.bf16.gmra.mxu0 %v691
    %v1990 = vpop.f32.mrf.mxu0
    %v1991 = vadd.f32 %v1902, %v1990
    %v1992 = vpop.f32.mrf.mxu0
    %v1993 = vadd.f32 %v1904, %v1992
    %1994 = vmatmul.bf16.gmra.mxu0 %v695
    %v1995 = vpop.f32.mrf.mxu0
    %v1996 = vadd.f32 %v1907, %v1995
    %v1997 = vpop.f32.mrf.mxu0
    %v1998 = vadd.f32 %v1909, %v1997
    %1999 = vmatmul.bf16.gmra.mxu0 %v699
    %v2000 = vpop.f32.mrf.mxu0
    %v2001 = vadd.f32 %v1912, %v2000
    %v2002 = vpop.f32.mrf.mxu0
    %v2003 = vadd.f32 %v1914, %v2002
    %2004 = vmatmul.bf16.gmra.mxu0 %v703
    %v2005 = vpop.f32.mrf.mxu0
    %v2006 = vadd.f32 %v1917, %v2005
    %v2007 = vpop.f32.mrf.mxu0
    %v2008 = vadd.f32 %v1919, %v2007
    %2009 = vmatmul.bf16.gmra.mxu0 %v707
    %v2010 = vpop.f32.mrf.mxu0
    %v2011 = vadd.f32 %v1922, %v2010
    %v2012 = vpop.f32.mrf.mxu0
    %v2013 = vadd.f32 %v1924, %v2012
    %2014 = vmatmul.bf16.gmra.mxu0 %v711
    %v2015 = vpop.f32.mrf.mxu0
    %v2016 = vadd.f32 %v1927, %v2015
    %v2017 = vpop.f32.mrf.mxu0
    %v2018 = vadd.f32 %v1929, %v2017
    %2019 = vmatmul.bf16.gmra.mxu0 %v715
    %v2020 = vpop.f32.mrf.mxu0
    %v2021 = vadd.f32 %v1932, %v2020
    %v2022 = vpop.f32.mrf.mxu0
    %v2023 = vadd.f32 %v1934, %v2022
    %2024 = vmatmul.bf16.gmra.mxu0 %v719
    %v2025 = vpop.f32.mrf.mxu0
    %v2026 = vadd.f32 %v1937, %v2025
    %v2027 = vpop.f32.mrf.mxu0
    %v2028 = vadd.f32 %v1939, %v2027
    %2029 = vmatmul.bf16.gmra.mxu0 %v723
    %v2030 = vpop.f32.mrf.mxu0
    %v2031 = vadd.f32 %v1942, %v2030
    %v2032 = vpop.f32.mrf.mxu0
    %v2033 = vadd.f32 %v1944, %v2032
    %2034 = vmatmul.bf16.gmra.mxu0 %v727
    %v2035 = vpop.f32.mrf.mxu0
    %v2036 = vadd.f32 %v1947, %v2035
    %v2037 = vpop.f32.mrf.mxu0
    %v2038 = vadd.f32 %v1949, %v2037
    %2039 = vmatmul.bf16.gmra.mxu0 %v731
    %v2040 = vpop.f32.mrf.mxu0
    %v2041 = vadd.f32 %v1952, %v2040
    %v2042 = vpop.f32.mrf.mxu0
    %v2043 = vadd.f32 %v1954, %v2042
    %2044 = vmatmul.bf16.gmra.mxu0 %v735
    %v2045 = vpop.f32.mrf.mxu0
    %v2046 = vadd.f32 %v1957, %v2045
    %v2047 = vpop.f32.mrf.mxu0
    %v2048 = vadd.f32 %v1959, %v2047
    %2049 = vdwg.mxu0
    %2050 = vmatpush.bf16.msra.mxu0 %v1353
    %2051 = vmatpush.bf16.msra.mxu0 %v1349
    %2052 = vmatpush.bf16.msra.mxu0 %v1345
    %2053 = vmatpush.bf16.msra.mxu0 %v1341
    %2054 = vmatpush.bf16.msra.mxu0 %v1337
    %2055 = vmatpush.bf16.msra.mxu0 %v1333
    %2056 = vmatpush.bf16.msra.mxu0 %v1329
    %2057 = vmatpush.bf16.msra.mxu0 %v1325
    %2058 = vmatmul.bf16.gmra.mxu0 %v676
    %v2059 = vpop.f32.mrf.mxu0
    %v2060 = vadd.f32 %v1971, %v2059
    %v2061 = vpop.f32.mrf.mxu0
    %v2062 = vadd.f32 %v1973, %v2061
    %2063 = vmatmul.bf16.gmra.mxu0 %v680
    %v2064 = vpop.f32.mrf.mxu0
    %v2065 = vadd.f32 %v1976, %v2064
    %v2066 = vpop.f32.mrf.mxu0
    %v2067 = vadd.f32 %v1978, %v2066
    %2068 = vmatmul.bf16.gmra.mxu0 %v684
    %v2069 = vpop.f32.mrf.mxu0
    %v2070 = vadd.f32 %v1981, %v2069
    %v2071 = vpop.f32.mrf.mxu0
    %v2072 = vadd.f32 %v1983, %v2071
    %2073 = vmatmul.bf16.gmra.mxu0 %v688
    %v2074 = vpop.f32.mrf.mxu0
    %v2075 = vadd.f32 %v1986, %v2074
    %v2076 = vpop.f32.mrf.mxu0
    %v2077 = vadd.f32 %v1988, %v2076
    %2078 = vmatmul.bf16.gmra.mxu0 %v692
    %v2079 = vpop.f32.mrf.mxu0
    %v2080 = vadd.f32 %v1991, %v2079
    %v2081 = vpop.f32.mrf.mxu0
    %v2082 = vadd.f32 %v1993, %v2081
    %2083 = vmatmul.bf16.gmra.mxu0 %v696
    %v2084 = vpop.f32.mrf.mxu0
    %v2085 = vadd.f32 %v1996, %v2084
    %v2086 = vpop.f32.mrf.mxu0
    %v2087 = vadd.f32 %v1998, %v2086
    %2088 = vmatmul.bf16.gmra.mxu0 %v700
    %v2089 = vpop.f32.mrf.mxu0
    %v2090 = vadd.f32 %v2001, %v2089
    %v2091 = vpop.f32.mrf.mxu0
    %v2092 = vadd.f32 %v2003, %v2091
    %2093 = vmatmul.bf16.gmra.mxu0 %v704
    %v2094 = vpop.f32.mrf.mxu0
    %v2095 = vadd.f32 %v2006, %v2094
    %v2096 = vpop.f32.mrf.mxu0
    %v2097 = vadd.f32 %v2008, %v2096
    %2098 = vmatmul.bf16.gmra.mxu0 %v708
    %v2099 = vpop.f32.mrf.mxu0
    %v2100 = vadd.f32 %v2011, %v2099
    %v2101 = vpop.f32.mrf.mxu0
    %v2102 = vadd.f32 %v2013, %v2101
    %2103 = vmatmul.bf16.gmra.mxu0 %v712
    %v2104 = vpop.f32.mrf.mxu0
    %v2105 = vadd.f32 %v2016, %v2104
    %v2106 = vpop.f32.mrf.mxu0
    %v2107 = vadd.f32 %v2018, %v2106
    %2108 = vmatmul.bf16.gmra.mxu0 %v716
    %v2109 = vpop.f32.mrf.mxu0
    %v2110 = vadd.f32 %v2021, %v2109
    %v2111 = vpop.f32.mrf.mxu0
    %v2112 = vadd.f32 %v2023, %v2111
    %2113 = vmatmul.bf16.gmra.mxu0 %v720
    %v2114 = vpop.f32.mrf.mxu0
    %v2115 = vadd.f32 %v2026, %v2114
    %v2116 = vpop.f32.mrf.mxu0
    %v2117 = vadd.f32 %v2028, %v2116
    %2118 = vmatmul.bf16.gmra.mxu0 %v724
    %v2119 = vpop.f32.mrf.mxu0
    %v2120 = vadd.f32 %v2031, %v2119
    %v2121 = vpop.f32.mrf.mxu0
    %v2122 = vadd.f32 %v2033, %v2121
    %2123 = vmatmul.bf16.gmra.mxu0 %v728
    %v2124 = vpop.f32.mrf.mxu0
    %v2125 = vadd.f32 %v2036, %v2124
    %v2126 = vpop.f32.mrf.mxu0
    %v2127 = vadd.f32 %v2038, %v2126
    %2128 = vmatmul.bf16.gmra.mxu0 %v732
    %v2129 = vpop.f32.mrf.mxu0
    %v2130 = vadd.f32 %v2041, %v2129
    %v2131 = vpop.f32.mrf.mxu0
    %v2132 = vadd.f32 %v2043, %v2131
    %2133 = vmatmul.bf16.gmra.mxu0 %v736
    %v2134 = vpop.f32.mrf.mxu0
    %v2135 = vadd.f32 %v2046, %v2134
    %v2136 = vpop.f32.mrf.mxu0
    %v2137 = vadd.f32 %v2048, %v2136
    %2138 = vdwg.mxu0
    %2139 = vmatpush.bf16.msra.mxu0 %v1385
    %2140 = vmatpush.bf16.msra.mxu0 %v1381
    %2141 = vmatpush.bf16.msra.mxu0 %v1377
    %2142 = vmatpush.bf16.msra.mxu0 %v1373
    %2143 = vmatpush.bf16.msra.mxu0 %v1369
    %2144 = vmatpush.bf16.msra.mxu0 %v1365
    %2145 = vmatpush.bf16.msra.mxu0 %v1361
    %2146 = vmatpush.bf16.msra.mxu0 %v1357
    %2147 = vmatmul.bf16.gmra.mxu0 %v677
    %v2148 = vpop.f32.mrf.mxu0
    %v2149 = vadd.f32 %v2060, %v2148
    %v2150 = vpop.f32.mrf.mxu0
    %v2151 = vadd.f32 %v2062, %v2150
    %2152 = vmatmul.bf16.gmra.mxu0 %v681
    %v2153 = vpop.f32.mrf.mxu0
    %v2154 = vadd.f32 %v2065, %v2153
    %v2155 = vpop.f32.mrf.mxu0
    %v2156 = vadd.f32 %v2067, %v2155
    %2157 = vmatmul.bf16.gmra.mxu0 %v685
    %v2158 = vpop.f32.mrf.mxu0
    %v2159 = vadd.f32 %v2070, %v2158
    %v2160 = vpop.f32.mrf.mxu0
    %v2161 = vadd.f32 %v2072, %v2160
    %2162 = vmatmul.bf16.gmra.mxu0 %v689
    %v2163 = vpop.f32.mrf.mxu0
    %v2164 = vadd.f32 %v2075, %v2163
    %v2165 = vpop.f32.mrf.mxu0
    %v2166 = vadd.f32 %v2077, %v2165
    %2167 = vmatmul.bf16.gmra.mxu0 %v693
    %v2168 = vpop.f32.mrf.mxu0
    %v2169 = vadd.f32 %v2080, %v2168
    %v2170 = vpop.f32.mrf.mxu0
    %v2171 = vadd.f32 %v2082, %v2170
    %2172 = vmatmul.bf16.gmra.mxu0 %v697
    %v2173 = vpop.f32.mrf.mxu0
    %v2174 = vadd.f32 %v2085, %v2173
    %v2175 = vpop.f32.mrf.mxu0
    %v2176 = vadd.f32 %v2087, %v2175
    %2177 = vmatmul.bf16.gmra.mxu0 %v701
    %v2178 = vpop.f32.mrf.mxu0
    %v2179 = vadd.f32 %v2090, %v2178
    %v2180 = vpop.f32.mrf.mxu0
    %v2181 = vadd.f32 %v2092, %v2180
    %2182 = vmatmul.bf16.gmra.mxu0 %v705
    %v2183 = vpop.f32.mrf.mxu0
    %v2184 = vadd.f32 %v2095, %v2183
    %v2185 = vpop.f32.mrf.mxu0
    %v2186 = vadd.f32 %v2097, %v2185
    %2187 = vmatmul.bf16.gmra.mxu0 %v709
    %v2188 = vpop.f32.mrf.mxu0
    %v2189 = vadd.f32 %v2100, %v2188
    %v2190 = vpop.f32.mrf.mxu0
    %v2191 = vadd.f32 %v2102, %v2190
    %2192 = vmatmul.bf16.gmra.mxu0 %v713
    %v2193 = vpop.f32.mrf.mxu0
    %v2194 = vadd.f32 %v2105, %v2193
    %v2195 = vpop.f32.mrf.mxu0
    %v2196 = vadd.f32 %v2107, %v2195
    %2197 = vmatmul.bf16.gmra.mxu0 %v717
    %v2198 = vpop.f32.mrf.mxu0
    %v2199 = vadd.f32 %v2110, %v2198
    %v2200 = vpop.f32.mrf.mxu0
    %v2201 = vadd.f32 %v2112, %v2200
    %2202 = vmatmul.bf16.gmra.mxu0 %v721
    %v2203 = vpop.f32.mrf.mxu0
    %v2204 = vadd.f32 %v2115, %v2203
    %v2205 = vpop.f32.mrf.mxu0
    %v2206 = vadd.f32 %v2117, %v2205
    %2207 = vmatmul.bf16.gmra.mxu0 %v725
    %v2208 = vpop.f32.mrf.mxu0
    %v2209 = vadd.f32 %v2120, %v2208
    %v2210 = vpop.f32.mrf.mxu0
    %v2211 = vadd.f32 %v2122, %v2210
    %2212 = vmatmul.bf16.gmra.mxu0 %v729
    %v2213 = vpop.f32.mrf.mxu0
    %v2214 = vadd.f32 %v2125, %v2213
    %v2215 = vpop.f32.mrf.mxu0
    %v2216 = vadd.f32 %v2127, %v2215
    %2217 = vmatmul.bf16.gmra.mxu0 %v733
    %v2218 = vpop.f32.mrf.mxu0
    %v2219 = vadd.f32 %v2130, %v2218
    %v2220 = vpop.f32.mrf.mxu0
    %v2221 = vadd.f32 %v2132, %v2220
    %2222 = vmatmul.bf16.gmra.mxu0 %v737
    %v2223 = vpop.f32.mrf.mxu0
    %v2224 = vadd.f32 %v2135, %v2223
    %v2225 = vpop.f32.mrf.mxu0
    %v2226 = vadd.f32 %v2137, %v2225
    %2227 = vdwg.mxu0
    %2228 = vmatpush.bf16.msra.mxu0 %v1290
    %2229 = vmatpush.bf16.msra.mxu0 %v1286
    %2230 = vmatpush.bf16.msra.mxu0 %v1282
    %2231 = vmatpush.bf16.msra.mxu0 %v1278
    %2232 = vmatpush.bf16.msra.mxu0 %v1274
    %2233 = vmatpush.bf16.msra.mxu0 %v1270
    %2234 = vmatpush.bf16.msra.mxu0 %v1266
    %2235 = vmatpush.bf16.msra.mxu0 %v1262
    %2236 = vmatmul.bf16.gmra.mxu0 %v674
    %v2237 = vpop.f32.mrf.mxu0
    %v2238 = vadd.f32 %v870, %v2237
    %v2239 = vpop.f32.mrf.mxu0
    %v2240 = vadd.f32 %v870, %v2239
    %2241 = vmatmul.bf16.gmra.mxu0 %v678
    %v2242 = vpop.f32.mrf.mxu0
    %v2243 = vadd.f32 %v870, %v2242
    %v2244 = vpop.f32.mrf.mxu0
    %v2245 = vadd.f32 %v870, %v2244
    %2246 = vmatmul.bf16.gmra.mxu0 %v682
    %v2247 = vpop.f32.mrf.mxu0
    %v2248 = vadd.f32 %v870, %v2247
    %v2249 = vpop.f32.mrf.mxu0
    %v2250 = vadd.f32 %v870, %v2249
    %2251 = vmatmul.bf16.gmra.mxu0 %v686
    %v2252 = vpop.f32.mrf.mxu0
    %v2253 = vadd.f32 %v870, %v2252
    %v2254 = vpop.f32.mrf.mxu0
    %v2255 = vadd.f32 %v870, %v2254
    %2256 = vmatmul.bf16.gmra.mxu0 %v690
    %v2257 = vpop.f32.mrf.mxu0
    %v2258 = vadd.f32 %v870, %v2257
    %v2259 = vpop.f32.mrf.mxu0
    %v2260 = vadd.f32 %v870, %v2259
    %2261 = vmatmul.bf16.gmra.mxu0 %v694
    %v2262 = vpop.f32.mrf.mxu0
    %v2263 = vadd.f32 %v870, %v2262
    %v2264 = vpop.f32.mrf.mxu0
    %v2265 = vadd.f32 %v870, %v2264
    %2266 = vmatmul.bf16.gmra.mxu0 %v698
    %v2267 = vpop.f32.mrf.mxu0
    %v2268 = vadd.f32 %v870, %v2267
    %v2269 = vpop.f32.mrf.mxu0
    %v2270 = vadd.f32 %v870, %v2269
    %2271 = vmatmul.bf16.gmra.mxu0 %v702
    %v2272 = vpop.f32.mrf.mxu0
    %v2273 = vadd.f32 %v870, %v2272
    %v2274 = vpop.f32.mrf.mxu0
    %v2275 = vadd.f32 %v870, %v2274
    %2276 = vmatmul.bf16.gmra.mxu0 %v706
    %v2277 = vpop.f32.mrf.mxu0
    %v2278 = vadd.f32 %v870, %v2277
    %v2279 = vpop.f32.mrf.mxu0
    %v2280 = vadd.f32 %v870, %v2279
    %2281 = vmatmul.bf16.gmra.mxu0 %v710
    %v2282 = vpop.f32.mrf.mxu0
    %v2283 = vadd.f32 %v870, %v2282
    %v2284 = vpop.f32.mrf.mxu0
    %v2285 = vadd.f32 %v870, %v2284
    %2286 = vmatmul.bf16.gmra.mxu0 %v714
    %v2287 = vpop.f32.mrf.mxu0
    %v2288 = vadd.f32 %v870, %v2287
    %v2289 = vpop.f32.mrf.mxu0
    %v2290 = vadd.f32 %v870, %v2289
    %2291 = vmatmul.bf16.gmra.mxu0 %v718
    %v2292 = vpop.f32.mrf.mxu0
    %v2293 = vadd.f32 %v870, %v2292
    %v2294 = vpop.f32.mrf.mxu0
    %v2295 = vadd.f32 %v870, %v2294
    %2296 = vmatmul.bf16.gmra.mxu0 %v722
    %v2297 = vpop.f32.mrf.mxu0
    %v2298 = vadd.f32 %v870, %v2297
    %v2299 = vpop.f32.mrf.mxu0
    %v2300 = vadd.f32 %v870, %v2299
    %2301 = vmatmul.bf16.gmra.mxu0 %v726
    %v2302 = vpop.f32.mrf.mxu0
    %v2303 = vadd.f32 %v870, %v2302
    %v2304 = vpop.f32.mrf.mxu0
    %v2305 = vadd.f32 %v870, %v2304
    %2306 = vmatmul.bf16.gmra.mxu0 %v730
    %v2307 = vpop.f32.mrf.mxu0
    %v2308 = vadd.f32 %v870, %v2307
    %v2309 = vpop.f32.mrf.mxu0
    %v2310 = vadd.f32 %v870, %v2309
    %2311 = vmatmul.bf16.gmra.mxu0 %v734
    %v2312 = vpop.f32.mrf.mxu0
    %v2313 = vadd.f32 %v870, %v2312
    %v2314 = vpop.f32.mrf.mxu0
    %v2315 = vadd.f32 %v870, %v2314
    %2316 = vdwg.mxu0
    %2317 = vmatpush.bf16.msra.mxu0 %v1322
    %2318 = vmatpush.bf16.msra.mxu0 %v1318
    %2319 = vmatpush.bf16.msra.mxu0 %v1314
    %2320 = vmatpush.bf16.msra.mxu0 %v1310
    %2321 = vmatpush.bf16.msra.mxu0 %v1306
    %2322 = vmatpush.bf16.msra.mxu0 %v1302
    %2323 = vmatpush.bf16.msra.mxu0 %v1298
    %2324 = vmatpush.bf16.msra.mxu0 %v1294
    %2325 = vmatmul.bf16.gmra.mxu0 %v675
    %v2326 = vpop.f32.mrf.mxu0
    %v2327 = vadd.f32 %v2238, %v2326
    %v2328 = vpop.f32.mrf.mxu0
    %v2329 = vadd.f32 %v2240, %v2328
    %2330 = vmatmul.bf16.gmra.mxu0 %v679
    %v2331 = vpop.f32.mrf.mxu0
    %v2332 = vadd.f32 %v2243, %v2331
    %v2333 = vpop.f32.mrf.mxu0
    %v2334 = vadd.f32 %v2245, %v2333
    %2335 = vmatmul.bf16.gmra.mxu0 %v683
    %v2336 = vpop.f32.mrf.mxu0
    %v2337 = vadd.f32 %v2248, %v2336
    %v2338 = vpop.f32.mrf.mxu0
    %v2339 = vadd.f32 %v2250, %v2338
    %2340 = vmatmul.bf16.gmra.mxu0 %v687
    %v2341 = vpop.f32.mrf.mxu0
    %v2342 = vadd.f32 %v2253, %v2341
    %v2343 = vpop.f32.mrf.mxu0
    %v2344 = vadd.f32 %v2255, %v2343
    %2345 = vmatmul.bf16.gmra.mxu0 %v691
    %v2346 = vpop.f32.mrf.mxu0
    %v2347 = vadd.f32 %v2258, %v2346
    %v2348 = vpop.f32.mrf.mxu0
    %v2349 = vadd.f32 %v2260, %v2348
    %2350 = vmatmul.bf16.gmra.mxu0 %v695
    %v2351 = vpop.f32.mrf.mxu0
    %v2352 = vadd.f32 %v2263, %v2351
    %v2353 = vpop.f32.mrf.mxu0
    %v2354 = vadd.f32 %v2265, %v2353
    %2355 = vmatmul.bf16.gmra.mxu0 %v699
    %v2356 = vpop.f32.mrf.mxu0
    %v2357 = vadd.f32 %v2268, %v2356
    %v2358 = vpop.f32.mrf.mxu0
    %v2359 = vadd.f32 %v2270, %v2358
    %2360 = vmatmul.bf16.gmra.mxu0 %v703
    %v2361 = vpop.f32.mrf.mxu0
    %v2362 = vadd.f32 %v2273, %v2361
    %v2363 = vpop.f32.mrf.mxu0
    %v2364 = vadd.f32 %v2275, %v2363
    %2365 = vmatmul.bf16.gmra.mxu0 %v707
    %v2366 = vpop.f32.mrf.mxu0
    %v2367 = vadd.f32 %v2278, %v2366
    %v2368 = vpop.f32.mrf.mxu0
    %v2369 = vadd.f32 %v2280, %v2368
    %2370 = vmatmul.bf16.gmra.mxu0 %v711
    %v2371 = vpop.f32.mrf.mxu0
    %v2372 = vadd.f32 %v2283, %v2371
    %v2373 = vpop.f32.mrf.mxu0
    %v2374 = vadd.f32 %v2285, %v2373
    %2375 = vmatmul.bf16.gmra.mxu0 %v715
    %v2376 = vpop.f32.mrf.mxu0
    %v2377 = vadd.f32 %v2288, %v2376
    %v2378 = vpop.f32.mrf.mxu0
    %v2379 = vadd.f32 %v2290, %v2378
    %2380 = vmatmul.bf16.gmra.mxu0 %v719
    %v2381 = vpop.f32.mrf.mxu0
    %v2382 = vadd.f32 %v2293, %v2381
    %v2383 = vpop.f32.mrf.mxu0
    %v2384 = vadd.f32 %v2295, %v2383
    %2385 = vmatmul.bf16.gmra.mxu0 %v723
    %v2386 = vpop.f32.mrf.mxu0
    %v2387 = vadd.f32 %v2298, %v2386
    %v2388 = vpop.f32.mrf.mxu0
    %v2389 = vadd.f32 %v2300, %v2388
    %2390 = vmatmul.bf16.gmra.mxu0 %v727
    %v2391 = vpop.f32.mrf.mxu0
    %v2392 = vadd.f32 %v2303, %v2391
    %v2393 = vpop.f32.mrf.mxu0
    %v2394 = vadd.f32 %v2305, %v2393
    %2395 = vmatmul.bf16.gmra.mxu0 %v731
    %v2396 = vpop.f32.mrf.mxu0
    %v2397 = vadd.f32 %v2308, %v2396
    %v2398 = vpop.f32.mrf.mxu0
    %v2399 = vadd.f32 %v2310, %v2398
    %2400 = vmatmul.bf16.gmra.mxu0 %v735
    %v2401 = vpop.f32.mrf.mxu0
    %v2402 = vadd.f32 %v2313, %v2401
    %v2403 = vpop.f32.mrf.mxu0
    %v2404 = vadd.f32 %v2315, %v2403
    %2405 = vdwg.mxu0
    %2406 = vmatpush.bf16.msra.mxu0 %v1354
    %2407 = vmatpush.bf16.msra.mxu0 %v1350
    %2408 = vmatpush.bf16.msra.mxu0 %v1346
    %2409 = vmatpush.bf16.msra.mxu0 %v1342
    %2410 = vmatpush.bf16.msra.mxu0 %v1338
    %2411 = vmatpush.bf16.msra.mxu0 %v1334
    %2412 = vmatpush.bf16.msra.mxu0 %v1330
    %2413 = vmatpush.bf16.msra.mxu0 %v1326
    %2414 = vmatmul.bf16.gmra.mxu0 %v676
    %v2415 = vpop.f32.mrf.mxu0
    %v2416 = vadd.f32 %v2327, %v2415
    %v2417 = vpop.f32.mrf.mxu0
    %v2418 = vadd.f32 %v2329, %v2417
    %2419 = vmatmul.bf16.gmra.mxu0 %v680
    %v2420 = vpop.f32.mrf.mxu0
    %v2421 = vadd.f32 %v2332, %v2420
    %v2422 = vpop.f32.mrf.mxu0
    %v2423 = vadd.f32 %v2334, %v2422
    %2424 = vmatmul.bf16.gmra.mxu0 %v684
    %v2425 = vpop.f32.mrf.mxu0
    %v2426 = vadd.f32 %v2337, %v2425
    %v2427 = vpop.f32.mrf.mxu0
    %v2428 = vadd.f32 %v2339, %v2427
    %2429 = vmatmul.bf16.gmra.mxu0 %v688
    %v2430 = vpop.f32.mrf.mxu0
    %v2431 = vadd.f32 %v2342, %v2430
    %v2432 = vpop.f32.mrf.mxu0
    %v2433 = vadd.f32 %v2344, %v2432
    %2434 = vmatmul.bf16.gmra.mxu0 %v692
    %v2435 = vpop.f32.mrf.mxu0
    %v2436 = vadd.f32 %v2347, %v2435
    %v2437 = vpop.f32.mrf.mxu0
    %v2438 = vadd.f32 %v2349, %v2437
    %2439 = vmatmul.bf16.gmra.mxu0 %v696
    %v2440 = vpop.f32.mrf.mxu0
    %v2441 = vadd.f32 %v2352, %v2440
    %v2442 = vpop.f32.mrf.mxu0
    %v2443 = vadd.f32 %v2354, %v2442
    %2444 = vmatmul.bf16.gmra.mxu0 %v700
    %v2445 = vpop.f32.mrf.mxu0
    %v2446 = vadd.f32 %v2357, %v2445
    %v2447 = vpop.f32.mrf.mxu0
    %v2448 = vadd.f32 %v2359, %v2447
    %2449 = vmatmul.bf16.gmra.mxu0 %v704
    %v2450 = vpop.f32.mrf.mxu0
    %v2451 = vadd.f32 %v2362, %v2450
    %v2452 = vpop.f32.mrf.mxu0
    %v2453 = vadd.f32 %v2364, %v2452
    %2454 = vmatmul.bf16.gmra.mxu0 %v708
    %v2455 = vpop.f32.mrf.mxu0
    %v2456 = vadd.f32 %v2367, %v2455
    %v2457 = vpop.f32.mrf.mxu0
    %v2458 = vadd.f32 %v2369, %v2457
    %2459 = vmatmul.bf16.gmra.mxu0 %v712
    %v2460 = vpop.f32.mrf.mxu0
    %v2461 = vadd.f32 %v2372, %v2460
    %v2462 = vpop.f32.mrf.mxu0
    %v2463 = vadd.f32 %v2374, %v2462
    %2464 = vmatmul.bf16.gmra.mxu0 %v716
    %v2465 = vpop.f32.mrf.mxu0
    %v2466 = vadd.f32 %v2377, %v2465
    %v2467 = vpop.f32.mrf.mxu0
    %v2468 = vadd.f32 %v2379, %v2467
    %2469 = vmatmul.bf16.gmra.mxu0 %v720
    %v2470 = vpop.f32.mrf.mxu0
    %v2471 = vadd.f32 %v2382, %v2470
    %v2472 = vpop.f32.mrf.mxu0
    %v2473 = vadd.f32 %v2384, %v2472
    %2474 = vmatmul.bf16.gmra.mxu0 %v724
    %v2475 = vpop.f32.mrf.mxu0
    %v2476 = vadd.f32 %v2387, %v2475
    %v2477 = vpop.f32.mrf.mxu0
    %v2478 = vadd.f32 %v2389, %v2477
    %2479 = vmatmul.bf16.gmra.mxu0 %v728
    %v2480 = vpop.f32.mrf.mxu0
    %v2481 = vadd.f32 %v2392, %v2480
    %v2482 = vpop.f32.mrf.mxu0
    %v2483 = vadd.f32 %v2394, %v2482
    %2484 = vmatmul.bf16.gmra.mxu0 %v732
    %v2485 = vpop.f32.mrf.mxu0
    %v2486 = vadd.f32 %v2397, %v2485
    %v2487 = vpop.f32.mrf.mxu0
    %v2488 = vadd.f32 %v2399, %v2487
    %2489 = vmatmul.bf16.gmra.mxu0 %v736
    %v2490 = vpop.f32.mrf.mxu0
    %v2491 = vadd.f32 %v2402, %v2490
    %v2492 = vpop.f32.mrf.mxu0
    %v2493 = vadd.f32 %v2404, %v2492
    %2494 = vdwg.mxu0
    %2495 = vmatpush.bf16.msra.mxu0 %v1386
    %2496 = vmatpush.bf16.msra.mxu0 %v1382
    %2497 = vmatpush.bf16.msra.mxu0 %v1378
    %2498 = vmatpush.bf16.msra.mxu0 %v1374
    %2499 = vmatpush.bf16.msra.mxu0 %v1370
    %2500 = vmatpush.bf16.msra.mxu0 %v1366
    %2501 = vmatpush.bf16.msra.mxu0 %v1362
    %2502 = vmatpush.bf16.msra.mxu0 %v1358
    %2503 = vmatmul.bf16.gmra.mxu0 %v677
    %v2504 = vpop.f32.mrf.mxu0
    %v2505 = vadd.f32 %v2416, %v2504
    %v2506 = vpop.f32.mrf.mxu0
    %v2507 = vadd.f32 %v2418, %v2506
    %2508 = vmatmul.bf16.gmra.mxu0 %v681
    %v2509 = vpop.f32.mrf.mxu0
    %v2510 = vadd.f32 %v2421, %v2509
    %v2511 = vpop.f32.mrf.mxu0
    %v2512 = vadd.f32 %v2423, %v2511
    %2513 = vmatmul.bf16.gmra.mxu0 %v685
    %v2514 = vpop.f32.mrf.mxu0
    %v2515 = vadd.f32 %v2426, %v2514
    %v2516 = vpop.f32.mrf.mxu0
    %v2517 = vadd.f32 %v2428, %v2516
    %2518 = vmatmul.bf16.gmra.mxu0 %v689
    %v2519 = vpop.f32.mrf.mxu0
    %v2520 = vadd.f32 %v2431, %v2519
    %v2521 = vpop.f32.mrf.mxu0
    %v2522 = vadd.f32 %v2433, %v2521
    %2523 = vmatmul.bf16.gmra.mxu0 %v693
    %v2524 = vpop.f32.mrf.mxu0
    %v2525 = vadd.f32 %v2436, %v2524
    %v2526 = vpop.f32.mrf.mxu0
    %v2527 = vadd.f32 %v2438, %v2526
    %2528 = vmatmul.bf16.gmra.mxu0 %v697
    %v2529 = vpop.f32.mrf.mxu0
    %v2530 = vadd.f32 %v2441, %v2529
    %v2531 = vpop.f32.mrf.mxu0
    %v2532 = vadd.f32 %v2443, %v2531
    %2533 = vmatmul.bf16.gmra.mxu0 %v701
    %v2534 = vpop.f32.mrf.mxu0
    %v2535 = vadd.f32 %v2446, %v2534
    %v2536 = vpop.f32.mrf.mxu0
    %v2537 = vadd.f32 %v2448, %v2536
    %2538 = vmatmul.bf16.gmra.mxu0 %v705
    %v2539 = vpop.f32.mrf.mxu0
    %v2540 = vadd.f32 %v2451, %v2539
    %v2541 = vpop.f32.mrf.mxu0
    %v2542 = vadd.f32 %v2453, %v2541
    %2543 = vmatmul.bf16.gmra.mxu0 %v709
    %v2544 = vpop.f32.mrf.mxu0
    %v2545 = vadd.f32 %v2456, %v2544
    %v2546 = vpop.f32.mrf.mxu0
    %v2547 = vadd.f32 %v2458, %v2546
    %2548 = vmatmul.bf16.gmra.mxu0 %v713
    %v2549 = vpop.f32.mrf.mxu0
    %v2550 = vadd.f32 %v2461, %v2549
    %v2551 = vpop.f32.mrf.mxu0
    %v2552 = vadd.f32 %v2463, %v2551
    %2553 = vmatmul.bf16.gmra.mxu0 %v717
    %v2554 = vpop.f32.mrf.mxu0
    %v2555 = vadd.f32 %v2466, %v2554
    %v2556 = vpop.f32.mrf.mxu0
    %v2557 = vadd.f32 %v2468, %v2556
    %2558 = vmatmul.bf16.gmra.mxu0 %v721
    %v2559 = vpop.f32.mrf.mxu0
    %v2560 = vadd.f32 %v2471, %v2559
    %v2561 = vpop.f32.mrf.mxu0
    %v2562 = vadd.f32 %v2473, %v2561
    %2563 = vmatmul.bf16.gmra.mxu0 %v725
    %v2564 = vpop.f32.mrf.mxu0
    %v2565 = vadd.f32 %v2476, %v2564
    %v2566 = vpop.f32.mrf.mxu0
    %v2567 = vadd.f32 %v2478, %v2566
    %2568 = vmatmul.bf16.gmra.mxu0 %v729
    %v2569 = vpop.f32.mrf.mxu0
    %v2570 = vadd.f32 %v2481, %v2569
    %v2571 = vpop.f32.mrf.mxu0
    %v2572 = vadd.f32 %v2483, %v2571
    %2573 = vmatmul.bf16.gmra.mxu0 %v733
    %v2574 = vpop.f32.mrf.mxu0
    %v2575 = vadd.f32 %v2486, %v2574
    %v2576 = vpop.f32.mrf.mxu0
    %v2577 = vadd.f32 %v2488, %v2576
    %2578 = vmatmul.bf16.gmra.mxu0 %v737
    %v2579 = vpop.f32.mrf.mxu0
    %v2580 = vadd.f32 %v2491, %v2579
    %v2581 = vpop.f32.mrf.mxu0
    %v2582 = vadd.f32 %v2493, %v2581
    %2583 = vdwg.mxu0
    %2584 = vmatpush.bf16.msra.mxu0 %v1291
    %2585 = vmatpush.bf16.msra.mxu0 %v1287
    %2586 = vmatpush.bf16.msra.mxu0 %v1283
    %2587 = vmatpush.bf16.msra.mxu0 %v1279
    %2588 = vmatpush.bf16.msra.mxu0 %v1275
    %2589 = vmatpush.bf16.msra.mxu0 %v1271
    %2590 = vmatpush.bf16.msra.mxu0 %v1267
    %2591 = vmatpush.bf16.msra.mxu0 %v1263
    %2592 = vmatmul.bf16.gmra.mxu0 %v674
    %v2593 = vpop.f32.mrf.mxu0
    %v2594 = vadd.f32 %v871, %v2593
    %v2595 = vpop.f32.mrf.mxu0
    %v2596 = vadd.f32 %v871, %v2595
    %2597 = vmatmul.bf16.gmra.mxu0 %v678
    %v2598 = vpop.f32.mrf.mxu0
    %v2599 = vadd.f32 %v871, %v2598
    %v2600 = vpop.f32.mrf.mxu0
    %v2601 = vadd.f32 %v871, %v2600
    %2602 = vmatmul.bf16.gmra.mxu0 %v682
    %v2603 = vpop.f32.mrf.mxu0
    %v2604 = vadd.f32 %v871, %v2603
    %v2605 = vpop.f32.mrf.mxu0
    %v2606 = vadd.f32 %v871, %v2605
    %2607 = vmatmul.bf16.gmra.mxu0 %v686
    %v2608 = vpop.f32.mrf.mxu0
    %v2609 = vadd.f32 %v871, %v2608
    %v2610 = vpop.f32.mrf.mxu0
    %v2611 = vadd.f32 %v871, %v2610
    %2612 = vmatmul.bf16.gmra.mxu0 %v690
    %v2613 = vpop.f32.mrf.mxu0
    %v2614 = vadd.f32 %v871, %v2613
    %v2615 = vpop.f32.mrf.mxu0
    %v2616 = vadd.f32 %v871, %v2615
    %2617 = vmatmul.bf16.gmra.mxu0 %v694
    %v2618 = vpop.f32.mrf.mxu0
    %v2619 = vadd.f32 %v871, %v2618
    %v2620 = vpop.f32.mrf.mxu0
    %v2621 = vadd.f32 %v871, %v2620
    %2622 = vmatmul.bf16.gmra.mxu0 %v698
    %v2623 = vpop.f32.mrf.mxu0
    %v2624 = vadd.f32 %v871, %v2623
    %v2625 = vpop.f32.mrf.mxu0
    %v2626 = vadd.f32 %v871, %v2625
    %2627 = vmatmul.bf16.gmra.mxu0 %v702
    %v2628 = vpop.f32.mrf.mxu0
    %v2629 = vadd.f32 %v871, %v2628
    %v2630 = vpop.f32.mrf.mxu0
    %v2631 = vadd.f32 %v871, %v2630
    %2632 = vmatmul.bf16.gmra.mxu0 %v706
    %v2633 = vpop.f32.mrf.mxu0
    %v2634 = vadd.f32 %v871, %v2633
    %v2635 = vpop.f32.mrf.mxu0
    %v2636 = vadd.f32 %v871, %v2635
    %2637 = vmatmul.bf16.gmra.mxu0 %v710
    %v2638 = vpop.f32.mrf.mxu0
    %v2639 = vadd.f32 %v871, %v2638
    %v2640 = vpop.f32.mrf.mxu0
    %v2641 = vadd.f32 %v871, %v2640
    %2642 = vmatmul.bf16.gmra.mxu0 %v714
    %v2643 = vpop.f32.mrf.mxu0
    %v2644 = vadd.f32 %v871, %v2643
    %v2645 = vpop.f32.mrf.mxu0
    %v2646 = vadd.f32 %v871, %v2645
    %2647 = vmatmul.bf16.gmra.mxu0 %v718
    %v2648 = vpop.f32.mrf.mxu0
    %v2649 = vadd.f32 %v871, %v2648
    %v2650 = vpop.f32.mrf.mxu0
    %v2651 = vadd.f32 %v871, %v2650
    %2652 = vmatmul.bf16.gmra.mxu0 %v722
    %v2653 = vpop.f32.mrf.mxu0
    %v2654 = vadd.f32 %v871, %v2653
    %v2655 = vpop.f32.mrf.mxu0
    %v2656 = vadd.f32 %v871, %v2655
    %2657 = vmatmul.bf16.gmra.mxu0 %v726
    %v2658 = vpop.f32.mrf.mxu0
    %v2659 = vadd.f32 %v871, %v2658
    %v2660 = vpop.f32.mrf.mxu0
    %v2661 = vadd.f32 %v871, %v2660
    %2662 = vmatmul.bf16.gmra.mxu0 %v730
    %v2663 = vpop.f32.mrf.mxu0
    %v2664 = vadd.f32 %v871, %v2663
    %v2665 = vpop.f32.mrf.mxu0
    %v2666 = vadd.f32 %v871, %v2665
    %2667 = vmatmul.bf16.gmra.mxu0 %v734
    %v2668 = vpop.f32.mrf.mxu0
    %v2669 = vadd.f32 %v871, %v2668
    %v2670 = vpop.f32.mrf.mxu0
    %v2671 = vadd.f32 %v871, %v2670
    %2672 = vdwg.mxu0
    %2673 = vmatpush.bf16.msra.mxu0 %v1323
    %2674 = vmatpush.bf16.msra.mxu0 %v1319
    %2675 = vmatpush.bf16.msra.mxu0 %v1315
    %2676 = vmatpush.bf16.msra.mxu0 %v1311
    %2677 = vmatpush.bf16.msra.mxu0 %v1307
    %2678 = vmatpush.bf16.msra.mxu0 %v1303
    %2679 = vmatpush.bf16.msra.mxu0 %v1299
    %2680 = vmatpush.bf16.msra.mxu0 %v1295
    %2681 = vmatmul.bf16.gmra.mxu0 %v675
    %v2682 = vpop.f32.mrf.mxu0
    %v2683 = vadd.f32 %v2594, %v2682
    %v2684 = vpop.f32.mrf.mxu0
    %v2685 = vadd.f32 %v2596, %v2684
    %2686 = vmatmul.bf16.gmra.mxu0 %v679
    %v2687 = vpop.f32.mrf.mxu0
    %v2688 = vadd.f32 %v2599, %v2687
    %v2689 = vpop.f32.mrf.mxu0
    %v2690 = vadd.f32 %v2601, %v2689
    %2691 = vmatmul.bf16.gmra.mxu0 %v683
    %v2692 = vpop.f32.mrf.mxu0
    %v2693 = vadd.f32 %v2604, %v2692
    %v2694 = vpop.f32.mrf.mxu0
    %v2695 = vadd.f32 %v2606, %v2694
    %2696 = vmatmul.bf16.gmra.mxu0 %v687
    %v2697 = vpop.f32.mrf.mxu0
    %v2698 = vadd.f32 %v2609, %v2697
    %v2699 = vpop.f32.mrf.mxu0
    %v2700 = vadd.f32 %v2611, %v2699
    %2701 = vmatmul.bf16.gmra.mxu0 %v691
    %v2702 = vpop.f32.mrf.mxu0
    %v2703 = vadd.f32 %v2614, %v2702
    %v2704 = vpop.f32.mrf.mxu0
    %v2705 = vadd.f32 %v2616, %v2704
    %2706 = vmatmul.bf16.gmra.mxu0 %v695
    %v2707 = vpop.f32.mrf.mxu0
    %v2708 = vadd.f32 %v2619, %v2707
    %v2709 = vpop.f32.mrf.mxu0
    %v2710 = vadd.f32 %v2621, %v2709
    %2711 = vmatmul.bf16.gmra.mxu0 %v699
    %v2712 = vpop.f32.mrf.mxu0
    %v2713 = vadd.f32 %v2624, %v2712
    %v2714 = vpop.f32.mrf.mxu0
    %v2715 = vadd.f32 %v2626, %v2714
    %2716 = vmatmul.bf16.gmra.mxu0 %v703
    %v2717 = vpop.f32.mrf.mxu0
    %v2718 = vadd.f32 %v2629, %v2717
    %v2719 = vpop.f32.mrf.mxu0
    %v2720 = vadd.f32 %v2631, %v2719
    %2721 = vmatmul.bf16.gmra.mxu0 %v707
    %v2722 = vpop.f32.mrf.mxu0
    %v2723 = vadd.f32 %v2634, %v2722
    %v2724 = vpop.f32.mrf.mxu0
    %v2725 = vadd.f32 %v2636, %v2724
    %2726 = vmatmul.bf16.gmra.mxu0 %v711
    %v2727 = vpop.f32.mrf.mxu0
    %v2728 = vadd.f32 %v2639, %v2727
    %v2729 = vpop.f32.mrf.mxu0
    %v2730 = vadd.f32 %v2641, %v2729
    %2731 = vmatmul.bf16.gmra.mxu0 %v715
    %v2732 = vpop.f32.mrf.mxu0
    %v2733 = vadd.f32 %v2644, %v2732
    %v2734 = vpop.f32.mrf.mxu0
    %v2735 = vadd.f32 %v2646, %v2734
    %2736 = vmatmul.bf16.gmra.mxu0 %v719
    %v2737 = vpop.f32.mrf.mxu0
    %v2738 = vadd.f32 %v2649, %v2737
    %v2739 = vpop.f32.mrf.mxu0
    %v2740 = vadd.f32 %v2651, %v2739
    %2741 = vmatmul.bf16.gmra.mxu0 %v723
    %v2742 = vpop.f32.mrf.mxu0
    %v2743 = vadd.f32 %v2654, %v2742
    %v2744 = vpop.f32.mrf.mxu0
    %v2745 = vadd.f32 %v2656, %v2744
    %2746 = vmatmul.bf16.gmra.mxu0 %v727
    %v2747 = vpop.f32.mrf.mxu0
    %v2748 = vadd.f32 %v2659, %v2747
    %v2749 = vpop.f32.mrf.mxu0
    %v2750 = vadd.f32 %v2661, %v2749
    %2751 = vmatmul.bf16.gmra.mxu0 %v731
    %v2752 = vpop.f32.mrf.mxu0
    %v2753 = vadd.f32 %v2664, %v2752
    %v2754 = vpop.f32.mrf.mxu0
    %v2755 = vadd.f32 %v2666, %v2754
    %2756 = vmatmul.bf16.gmra.mxu0 %v735
    %v2757 = vpop.f32.mrf.mxu0
    %v2758 = vadd.f32 %v2669, %v2757
    %v2759 = vpop.f32.mrf.mxu0
    %v2760 = vadd.f32 %v2671, %v2759
    %2761 = vdwg.mxu0
    %2762 = vmatpush.bf16.msra.mxu0 %v1355
    %2763 = vmatpush.bf16.msra.mxu0 %v1351
    %2764 = vmatpush.bf16.msra.mxu0 %v1347
    %2765 = vmatpush.bf16.msra.mxu0 %v1343
    %2766 = vmatpush.bf16.msra.mxu0 %v1339
    %2767 = vmatpush.bf16.msra.mxu0 %v1335
    %2768 = vmatpush.bf16.msra.mxu0 %v1331
    %2769 = vmatpush.bf16.msra.mxu0 %v1327
    %2770 = vmatmul.bf16.gmra.mxu0 %v676
    %v2771 = vpop.f32.mrf.mxu0
    %v2772 = vadd.f32 %v2683, %v2771
    %v2773 = vpop.f32.mrf.mxu0
    %v2774 = vadd.f32 %v2685, %v2773
    %2775 = vmatmul.bf16.gmra.mxu0 %v680
    %v2776 = vpop.f32.mrf.mxu0
    %v2777 = vadd.f32 %v2688, %v2776
    %v2778 = vpop.f32.mrf.mxu0
    %v2779 = vadd.f32 %v2690, %v2778
    %2780 = vmatmul.bf16.gmra.mxu0 %v684
    %v2781 = vpop.f32.mrf.mxu0
    %v2782 = vadd.f32 %v2693, %v2781
    %v2783 = vpop.f32.mrf.mxu0
    %v2784 = vadd.f32 %v2695, %v2783
    %2785 = vmatmul.bf16.gmra.mxu0 %v688
    %v2786 = vpop.f32.mrf.mxu0
    %v2787 = vadd.f32 %v2698, %v2786
    %v2788 = vpop.f32.mrf.mxu0
    %v2789 = vadd.f32 %v2700, %v2788
    %2790 = vmatmul.bf16.gmra.mxu0 %v692
    %v2791 = vpop.f32.mrf.mxu0
    %v2792 = vadd.f32 %v2703, %v2791
    %v2793 = vpop.f32.mrf.mxu0
    %v2794 = vadd.f32 %v2705, %v2793
    %2795 = vmatmul.bf16.gmra.mxu0 %v696
    %v2796 = vpop.f32.mrf.mxu0
    %v2797 = vadd.f32 %v2708, %v2796
    %v2798 = vpop.f32.mrf.mxu0
    %v2799 = vadd.f32 %v2710, %v2798
    %2800 = vmatmul.bf16.gmra.mxu0 %v700
    %v2801 = vpop.f32.mrf.mxu0
    %v2802 = vadd.f32 %v2713, %v2801
    %v2803 = vpop.f32.mrf.mxu0
    %v2804 = vadd.f32 %v2715, %v2803
    %2805 = vmatmul.bf16.gmra.mxu0 %v704
    %v2806 = vpop.f32.mrf.mxu0
    %v2807 = vadd.f32 %v2718, %v2806
    %v2808 = vpop.f32.mrf.mxu0
    %v2809 = vadd.f32 %v2720, %v2808
    %2810 = vmatmul.bf16.gmra.mxu0 %v708
    %v2811 = vpop.f32.mrf.mxu0
    %v2812 = vadd.f32 %v2723, %v2811
    %v2813 = vpop.f32.mrf.mxu0
    %v2814 = vadd.f32 %v2725, %v2813
    %2815 = vmatmul.bf16.gmra.mxu0 %v712
    %v2816 = vpop.f32.mrf.mxu0
    %v2817 = vadd.f32 %v2728, %v2816
    %v2818 = vpop.f32.mrf.mxu0
    %v2819 = vadd.f32 %v2730, %v2818
    %2820 = vmatmul.bf16.gmra.mxu0 %v716
    %v2821 = vpop.f32.mrf.mxu0
    %v2822 = vadd.f32 %v2733, %v2821
    %v2823 = vpop.f32.mrf.mxu0
    %v2824 = vadd.f32 %v2735, %v2823
    %2825 = vmatmul.bf16.gmra.mxu0 %v720
    %v2826 = vpop.f32.mrf.mxu0
    %v2827 = vadd.f32 %v2738, %v2826
    %v2828 = vpop.f32.mrf.mxu0
    %v2829 = vadd.f32 %v2740, %v2828
    %2830 = vmatmul.bf16.gmra.mxu0 %v724
    %v2831 = vpop.f32.mrf.mxu0
    %v2832 = vadd.f32 %v2743, %v2831
    %v2833 = vpop.f32.mrf.mxu0
    %v2834 = vadd.f32 %v2745, %v2833
    %2835 = vmatmul.bf16.gmra.mxu0 %v728
    %v2836 = vpop.f32.mrf.mxu0
    %v2837 = vadd.f32 %v2748, %v2836
    %v2838 = vpop.f32.mrf.mxu0
    %v2839 = vadd.f32 %v2750, %v2838
    %2840 = vmatmul.bf16.gmra.mxu0 %v732
    %v2841 = vpop.f32.mrf.mxu0
    %v2842 = vadd.f32 %v2753, %v2841
    %v2843 = vpop.f32.mrf.mxu0
    %v2844 = vadd.f32 %v2755, %v2843
    %2845 = vmatmul.bf16.gmra.mxu0 %v736
    %v2846 = vpop.f32.mrf.mxu0
    %v2847 = vadd.f32 %v2758, %v2846
    %v2848 = vpop.f32.mrf.mxu0
    %v2849 = vadd.f32 %v2760, %v2848
    %2850 = vdwg.mxu0
    %2851 = vmatpush.bf16.msra.mxu0 %v1387
    %2852 = vmatpush.bf16.msra.mxu0 %v1383
    %2853 = vmatpush.bf16.msra.mxu0 %v1379
    %2854 = vmatpush.bf16.msra.mxu0 %v1375
    %2855 = vmatpush.bf16.msra.mxu0 %v1371
    %2856 = vmatpush.bf16.msra.mxu0 %v1367
    %2857 = vmatpush.bf16.msra.mxu0 %v1363
    %2858 = vmatpush.bf16.msra.mxu0 %v1359
    %2859 = vmatmul.bf16.gmra.mxu0 %v677
    %v2860 = vpop.f32.mrf.mxu0
    %v2861 = vadd.f32 %v2772, %v2860
    %v2862 = vpop.f32.mrf.mxu0
    %v2863 = vadd.f32 %v2774, %v2862
    %2864 = vmatmul.bf16.gmra.mxu0 %v681
    %v2865 = vpop.f32.mrf.mxu0
    %v2866 = vadd.f32 %v2777, %v2865
    %v2867 = vpop.f32.mrf.mxu0
    %v2868 = vadd.f32 %v2779, %v2867
    %2869 = vmatmul.bf16.gmra.mxu0 %v685
    %v2870 = vpop.f32.mrf.mxu0
    %v2871 = vadd.f32 %v2782, %v2870
    %v2872 = vpop.f32.mrf.mxu0
    %v2873 = vadd.f32 %v2784, %v2872
    %2874 = vmatmul.bf16.gmra.mxu0 %v689
    %v2875 = vpop.f32.mrf.mxu0
    %v2876 = vadd.f32 %v2787, %v2875
    %v2877 = vpop.f32.mrf.mxu0
    %v2878 = vadd.f32 %v2789, %v2877
    %2879 = vmatmul.bf16.gmra.mxu0 %v693
    %v2880 = vpop.f32.mrf.mxu0
    %v2881 = vadd.f32 %v2792, %v2880
    %v2882 = vpop.f32.mrf.mxu0
    %v2883 = vadd.f32 %v2794, %v2882
    %2884 = vmatmul.bf16.gmra.mxu0 %v697
    %v2885 = vpop.f32.mrf.mxu0
    %v2886 = vadd.f32 %v2797, %v2885
    %v2887 = vpop.f32.mrf.mxu0
    %v2888 = vadd.f32 %v2799, %v2887
    %2889 = vmatmul.bf16.gmra.mxu0 %v701
    %v2890 = vpop.f32.mrf.mxu0
    %v2891 = vadd.f32 %v2802, %v2890
    %v2892 = vpop.f32.mrf.mxu0
    %v2893 = vadd.f32 %v2804, %v2892
    %2894 = vmatmul.bf16.gmra.mxu0 %v705
    %v2895 = vpop.f32.mrf.mxu0
    %v2896 = vadd.f32 %v2807, %v2895
    %v2897 = vpop.f32.mrf.mxu0
    %v2898 = vadd.f32 %v2809, %v2897
    %2899 = vmatmul.bf16.gmra.mxu0 %v709
    %v2900 = vpop.f32.mrf.mxu0
    %v2901 = vadd.f32 %v2812, %v2900
    %v2902 = vpop.f32.mrf.mxu0
    %v2903 = vadd.f32 %v2814, %v2902
    %2904 = vmatmul.bf16.gmra.mxu0 %v713
    %v2905 = vpop.f32.mrf.mxu0
    %v2906 = vadd.f32 %v2817, %v2905
    %v2907 = vpop.f32.mrf.mxu0
    %v2908 = vadd.f32 %v2819, %v2907
    %2909 = vmatmul.bf16.gmra.mxu0 %v717
    %v2910 = vpop.f32.mrf.mxu0
    %v2911 = vadd.f32 %v2822, %v2910
    %v2912 = vpop.f32.mrf.mxu0
    %v2913 = vadd.f32 %v2824, %v2912
    %2914 = vmatmul.bf16.gmra.mxu0 %v721
    %v2915 = vpop.f32.mrf.mxu0
    %v2916 = vadd.f32 %v2827, %v2915
    %v2917 = vpop.f32.mrf.mxu0
    %v2918 = vadd.f32 %v2829, %v2917
    %2919 = vmatmul.bf16.gmra.mxu0 %v725
    %v2920 = vpop.f32.mrf.mxu0
    %v2921 = vadd.f32 %v2832, %v2920
    %v2922 = vpop.f32.mrf.mxu0
    %v2923 = vadd.f32 %v2834, %v2922
    %2924 = vmatmul.bf16.gmra.mxu0 %v729
    %v2925 = vpop.f32.mrf.mxu0
    %v2926 = vadd.f32 %v2837, %v2925
    %v2927 = vpop.f32.mrf.mxu0
    %v2928 = vadd.f32 %v2839, %v2927
    %2929 = vmatmul.bf16.gmra.mxu0 %v733
    %v2930 = vpop.f32.mrf.mxu0
    %v2931 = vadd.f32 %v2842, %v2930
    %v2932 = vpop.f32.mrf.mxu0
    %v2933 = vadd.f32 %v2844, %v2932
    %2934 = vmatmul.bf16.gmra.mxu0 %v737
    %v2935 = vpop.f32.mrf.mxu0
    %v2936 = vadd.f32 %v2847, %v2935
    %v2937 = vpop.f32.mrf.mxu0
    %v2938 = vadd.f32 %v2849, %v2937
    %2939 = vdwg.mxu0
    %v2940 = vmax.f32 %v1793, 0.0
    %v2941 = vmax.f32 %v2149, 0.0
    %v2942 = vmax.f32 %v2505, 0.0
    %v2943 = vmax.f32 %v2861, 0.0
    %v2944 = vmax.f32 %v1795, 0.0
    %v2945 = vmax.f32 %v2151, 0.0
    %v2946 = vmax.f32 %v2507, 0.0
    %v2947 = vmax.f32 %v2863, 0.0
    %v2948 = vmax.f32 %v1798, 0.0
    %v2949 = vmax.f32 %v2154, 0.0
    %v2950 = vmax.f32 %v2510, 0.0
    %v2951 = vmax.f32 %v2866, 0.0
    %v2952 = vmax.f32 %v1800, 0.0
    %v2953 = vmax.f32 %v2156, 0.0
    %v2954 = vmax.f32 %v2512, 0.0
    %v2955 = vmax.f32 %v2868, 0.0
    %v2956 = vmax.f32 %v1803, 0.0
    %v2957 = vmax.f32 %v2159, 0.0
    %v2958 = vmax.f32 %v2515, 0.0
    %v2959 = vmax.f32 %v2871, 0.0
    %v2960 = vmax.f32 %v1805, 0.0
    %v2961 = vmax.f32 %v2161, 0.0
    %v2962 = vmax.f32 %v2517, 0.0
    %v2963 = vmax.f32 %v2873, 0.0
    %v2964 = vmax.f32 %v1808, 0.0
    %v2965 = vmax.f32 %v2164, 0.0
    %v2966 = vmax.f32 %v2520, 0.0
    %v2967 = vmax.f32 %v2876, 0.0
    %v2968 = vmax.f32 %v1810, 0.0
    %v2969 = vmax.f32 %v2166, 0.0
    %v2970 = vmax.f32 %v2522, 0.0
    %v2971 = vmax.f32 %v2878, 0.0
    %v2972 = vmax.f32 %v1813, 0.0
    %v2973 = vmax.f32 %v2169, 0.0
    %v2974 = vmax.f32 %v2525, 0.0
    %v2975 = vmax.f32 %v2881, 0.0
    %v2976 = vmax.f32 %v1815, 0.0
    %v2977 = vmax.f32 %v2171, 0.0
    %v2978 = vmax.f32 %v2527, 0.0
    %v2979 = vmax.f32 %v2883, 0.0
    %v2980 = vmax.f32 %v1818, 0.0
    %v2981 = vmax.f32 %v2174, 0.0
    %v2982 = vmax.f32 %v2530, 0.0
    %v2983 = vmax.f32 %v2886, 0.0
    %v2984 = vmax.f32 %v1820, 0.0
    %v2985 = vmax.f32 %v2176, 0.0
    %v2986 = vmax.f32 %v2532, 0.0
    %v2987 = vmax.f32 %v2888, 0.0
    %v2988 = vmax.f32 %v1823, 0.0
    %v2989 = vmax.f32 %v2179, 0.0
    %v2990 = vmax.f32 %v2535, 0.0
    %v2991 = vmax.f32 %v2891, 0.0
    %v2992 = vmax.f32 %v1825, 0.0
    %v2993 = vmax.f32 %v2181, 0.0
    %v2994 = vmax.f32 %v2537, 0.0
    %v2995 = vmax.f32 %v2893, 0.0
    %v2996 = vmax.f32 %v1828, 0.0
    %v2997 = vmax.f32 %v2184, 0.0
    %v2998 = vmax.f32 %v2540, 0.0
    %v2999 = vmax.f32 %v2896, 0.0
    %v3000 = vmax.f32 %v1830, 0.0
    %v3001 = vmax.f32 %v2186, 0.0
    %v3002 = vmax.f32 %v2542, 0.0
    %v3003 = vmax.f32 %v2898, 0.0
    %v3004 = vmax.f32 %v1833, 0.0
    %v3005 = vmax.f32 %v2189, 0.0
    %v3006 = vmax.f32 %v2545, 0.0
    %v3007 = vmax.f32 %v2901, 0.0
    %v3008 = vmax.f32 %v1835, 0.0
    %v3009 = vmax.f32 %v2191, 0.0
    %v3010 = vmax.f32 %v2547, 0.0
    %v3011 = vmax.f32 %v2903, 0.0
    %v3012 = vmax.f32 %v1838, 0.0
    %v3013 = vmax.f32 %v2194, 0.0
    %v3014 = vmax.f32 %v2550, 0.0
    %v3015 = vmax.f32 %v2906, 0.0
    %v3016 = vmax.f32 %v1840, 0.0
    %v3017 = vmax.f32 %v2196, 0.0
    %v3018 = vmax.f32 %v2552, 0.0
    %v3019 = vmax.f32 %v2908, 0.0
    %v3020 = vmax.f32 %v1843, 0.0
    %v3021 = vmax.f32 %v2199, 0.0
    %v3022 = vmax.f32 %v2555, 0.0
    %v3023 = vmax.f32 %v2911, 0.0
    %v3024 = vmax.f32 %v1845, 0.0
    %v3025 = vmax.f32 %v2201, 0.0
    %v3026 = vmax.f32 %v2557, 0.0
    %v3027 = vmax.f32 %v2913, 0.0
    %v3028 = vmax.f32 %v1848, 0.0
    %v3029 = vmax.f32 %v2204, 0.0
    %v3030 = vmax.f32 %v2560, 0.0
    %v3031 = vmax.f32 %v2916, 0.0
    %v3032 = vmax.f32 %v1850, 0.0
    %v3033 = vmax.f32 %v2206, 0.0
    %v3034 = vmax.f32 %v2562, 0.0
    %v3035 = vmax.f32 %v2918, 0.0
    %v3036 = vmax.f32 %v1853, 0.0
    %v3037 = vmax.f32 %v2209, 0.0
    %v3038 = vmax.f32 %v2565, 0.0
    %v3039 = vmax.f32 %v2921, 0.0
    %v3040 = vmax.f32 %v1855, 0.0
    %v3041 = vmax.f32 %v2211, 0.0
    %v3042 = vmax.f32 %v2567, 0.0
    %v3043 = vmax.f32 %v2923, 0.0
    %v3044 = vmax.f32 %v1858, 0.0
    %v3045 = vmax.f32 %v2214, 0.0
    %v3046 = vmax.f32 %v2570, 0.0
    %v3047 = vmax.f32 %v2926, 0.0
    %v3048 = vmax.f32 %v1860, 0.0
    %v3049 = vmax.f32 %v2216, 0.0
    %v3050 = vmax.f32 %v2572, 0.0
    %v3051 = vmax.f32 %v2928, 0.0
    %v3052 = vmax.f32 %v1863, 0.0
    %v3053 = vmax.f32 %v2219, 0.0
    %v3054 = vmax.f32 %v2575, 0.0
    %v3055 = vmax.f32 %v2931, 0.0
    %v3056 = vmax.f32 %v1865, 0.0
    %v3057 = vmax.f32 %v2221, 0.0
    %v3058 = vmax.f32 %v2577, 0.0
    %v3059 = vmax.f32 %v2933, 0.0
    %v3060 = vmax.f32 %v1868, 0.0
    %v3061 = vmax.f32 %v2224, 0.0
    %v3062 = vmax.f32 %v2580, 0.0
    %v3063 = vmax.f32 %v2936, 0.0
    %v3064 = vmax.f32 %v1870, 0.0
    %v3065 = vmax.f32 %v2226, 0.0
    %v3066 = vmax.f32 %v2582, 0.0
    %v3067 = vmax.f32 %v2938, 0.0
    %v3068 = vpack.c.bf16 %v2944, %v2940
    %v3069 = vpack.c.bf16 %v2945, %v2941
    %v3070 = vpack.c.bf16 %v2946, %v2942
    %v3071 = vpack.c.bf16 %v2947, %v2943
    %v3072 = vpack.c.bf16 %v2952, %v2948
    %v3073 = vpack.c.bf16 %v2953, %v2949
    %v3074 = vpack.c.bf16 %v2954, %v2950
    %v3075 = vpack.c.bf16 %v2955, %v2951
    %v3076 = vpack.c.bf16 %v2960, %v2956
    %v3077 = vpack.c.bf16 %v2961, %v2957
    %v3078 = vpack.c.bf16 %v2962, %v2958
    %v3079 = vpack.c.bf16 %v2963, %v2959
    %v3080 = vpack.c.bf16 %v2968, %v2964
    %v3081 = vpack.c.bf16 %v2969, %v2965
    %v3082 = vpack.c.bf16 %v2970, %v2966
    %v3083 = vpack.c.bf16 %v2971, %v2967
    %v3084 = vpack.c.bf16 %v2976, %v2972
    %v3085 = vpack.c.bf16 %v2977, %v2973
    %v3086 = vpack.c.bf16 %v2978, %v2974
    %v3087 = vpack.c.bf16 %v2979, %v2975
    %v3088 = vpack.c.bf16 %v2984, %v2980
    %v3089 = vpack.c.bf16 %v2985, %v2981
    %v3090 = vpack.c.bf16 %v2986, %v2982
    %v3091 = vpack.c.bf16 %v2987, %v2983
    %v3092 = vpack.c.bf16 %v2992, %v2988
    %v3093 = vpack.c.bf16 %v2993, %v2989
    %v3094 = vpack.c.bf16 %v2994, %v2990
    %v3095 = vpack.c.bf16 %v2995, %v2991
    %v3096 = vpack.c.bf16 %v3000, %v2996
    %v3097 = vpack.c.bf16 %v3001, %v2997
    %v3098 = vpack.c.bf16 %v3002, %v2998
    %v3099 = vpack.c.bf16 %v3003, %v2999
    %v3100 = vpack.c.bf16 %v3008, %v3004
    %v3101 = vpack.c.bf16 %v3009, %v3005
    %v3102 = vpack.c.bf16 %v3010, %v3006
    %v3103 = vpack.c.bf16 %v3011, %v3007
    %v3104 = vpack.c.bf16 %v3016, %v3012
    %v3105 = vpack.c.bf16 %v3017, %v3013
    %v3106 = vpack.c.bf16 %v3018, %v3014
    %v3107 = vpack.c.bf16 %v3019, %v3015
    %v3108 = vpack.c.bf16 %v3024, %v3020
    %v3109 = vpack.c.bf16 %v3025, %v3021
    %v3110 = vpack.c.bf16 %v3026, %v3022
    %v3111 = vpack.c.bf16 %v3027, %v3023
    %v3112 = vpack.c.bf16 %v3032, %v3028
    %v3113 = vpack.c.bf16 %v3033, %v3029
    %v3114 = vpack.c.bf16 %v3034, %v3030
    %v3115 = vpack.c.bf16 %v3035, %v3031
    %v3116 = vpack.c.bf16 %v3040, %v3036
    %v3117 = vpack.c.bf16 %v3041, %v3037
    %v3118 = vpack.c.bf16 %v3042, %v3038
    %v3119 = vpack.c.bf16 %v3043, %v3039
    %v3120 = vpack.c.bf16 %v3048, %v3044
    %v3121 = vpack.c.bf16 %v3049, %v3045
    %v3122 = vpack.c.bf16 %v3050, %v3046
    %v3123 = vpack.c.bf16 %v3051, %v3047
    %v3124 = vpack.c.bf16 %v3056, %v3052
    %v3125 = vpack.c.bf16 %v3057, %v3053
    %v3126 = vpack.c.bf16 %v3058, %v3054
    %v3127 = vpack.c.bf16 %v3059, %v3055
    %v3128 = vpack.c.bf16 %v3064, %v3060
    %v3129 = vpack.c.bf16 %v3065, %v3061
    %v3130 = vpack.c.bf16 %v3066, %v3062
    %v3131 = vpack.c.bf16 %v3067, %v3063
    %v3132 = vld [vmem:[%s5] sm:$0xf]
    %v3133 = vld [vmem:[%s5 + $0x4] sm:$0xf]
    %v3134 = vld [vmem:[%s5 + $0x8] sm:$0xf]
    %v3135 = vld [vmem:[%s5 + $0xc] sm:$0xf]
    %v3136 = vld [vmem:[%s5 + $0x10] sm:$0xf]
    %v3137 = vld [vmem:[%s5 + $0x14] sm:$0xf]
    %v3138 = vld [vmem:[%s5 + $0x18] sm:$0xf]
    %v3139 = vld [vmem:[%s5 + $0x1c] sm:$0xf]
    %v3140 = vld [vmem:[%s5 + $0x20] sm:$0xf]
    %v3141 = vld [vmem:[%s5 + $0x24] sm:$0xf]
    %v3142 = vld [vmem:[%s5 + $0x28] sm:$0xf]
    %v3143 = vld [vmem:[%s5 + $0x2c] sm:$0xf]
    %v3144 = vld [vmem:[%s5 + $0x30] sm:$0xf]
    %v3145 = vld [vmem:[%s5 + $0x34] sm:$0xf]
    %v3146 = vld [vmem:[%s5 + $0x38] sm:$0xf]
    %v3147 = vld [vmem:[%s5 + $0x3c] sm:$0xf]
    %v3148 = vld [vmem:[%s5 + $0x40] sm:$0xf]
    %v3149 = vld [vmem:[%s5 + $0x44] sm:$0xf]
    %v3150 = vld [vmem:[%s5 + $0x48] sm:$0xf]
    %v3151 = vld [vmem:[%s5 + $0x4c] sm:$0xf]
    %v3152 = vld [vmem:[%s5 + $0x50] sm:$0xf]
    %v3153 = vld [vmem:[%s5 + $0x54] sm:$0xf]
    %v3154 = vld [vmem:[%s5 + $0x58] sm:$0xf]
    %v3155 = vld [vmem:[%s5 + $0x5c] sm:$0xf]
    %v3156 = vld [vmem:[%s5 + $0x60] sm:$0xf]
    %v3157 = vld [vmem:[%s5 + $0x64] sm:$0xf]
    %v3158 = vld [vmem:[%s5 + $0x68] sm:$0xf]
    %v3159 = vld [vmem:[%s5 + $0x6c] sm:$0xf]
    %v3160 = vld [vmem:[%s5 + $0x70] sm:$0xf]
    %v3161 = vld [vmem:[%s5 + $0x74] sm:$0xf]
    %v3162 = vld [vmem:[%s5 + $0x78] sm:$0xf]
    %v3163 = vld [vmem:[%s5 + $0x7c] sm:$0xf]
    %v3164 = vld [vmem:[%s5 + $0x80] sm:$0xf]
    %v3165 = vld [vmem:[%s5 + $0x84] sm:$0xf]
    %v3166 = vld [vmem:[%s5 + $0x88] sm:$0xf]
    %v3167 = vld [vmem:[%s5 + $0x8c] sm:$0xf]
    %v3168 = vld [vmem:[%s5 + $0x90] sm:$0xf]
    %v3169 = vld [vmem:[%s5 + $0x94] sm:$0xf]
    %v3170 = vld [vmem:[%s5 + $0x98] sm:$0xf]
    %v3171 = vld [vmem:[%s5 + $0x9c] sm:$0xf]
    %v3172 = vld [vmem:[%s5 + $0xa0] sm:$0xf]
    %v3173 = vld [vmem:[%s5 + $0xa4] sm:$0xf]
    %v3174 = vld [vmem:[%s5 + $0xa8] sm:$0xf]
    %v3175 = vld [vmem:[%s5 + $0xac] sm:$0xf]
    %v3176 = vld [vmem:[%s5 + $0xb0] sm:$0xf]
    %v3177 = vld [vmem:[%s5 + $0xb4] sm:$0xf]
    %v3178 = vld [vmem:[%s5 + $0xb8] sm:$0xf]
    %v3179 = vld [vmem:[%s5 + $0xbc] sm:$0xf]
    %v3180 = vld [vmem:[%s5 + $0xc0] sm:$0xf]
    %v3181 = vld [vmem:[%s5 + $0xc4] sm:$0xf]
    %v3182 = vld [vmem:[%s5 + $0xc8] sm:$0xf]
    %v3183 = vld [vmem:[%s5 + $0xcc] sm:$0xf]
    %v3184 = vld [vmem:[%s5 + $0xd0] sm:$0xf]
    %v3185 = vld [vmem:[%s5 + $0xd4] sm:$0xf]
    %v3186 = vld [vmem:[%s5 + $0xd8] sm:$0xf]
    %v3187 = vld [vmem:[%s5 + $0xdc] sm:$0xf]
    %v3188 = vld [vmem:[%s5 + $0xe0] sm:$0xf]
    %v3189 = vld [vmem:[%s5 + $0xe4] sm:$0xf]
    %v3190 = vld [vmem:[%s5 + $0xe8] sm:$0xf]
    %v3191 = vld [vmem:[%s5 + $0xec] sm:$0xf]
    %v3192 = vld [vmem:[%s5 + $0xf0] sm:$0xf]
    %v3193 = vld [vmem:[%s5 + $0xf4] sm:$0xf]
    %v3194 = vld [vmem:[%s5 + $0xf8] sm:$0xf]
    %v3195 = vld [vmem:[%s5 + $0xfc] sm:$0xf]
    %v3196 = vld [vmem:[%s6] sm:$0x1]
    %v3198 = vperm.slane %v3196, 0
    %v3264 = vunpack.c.l.b16 %v3132
    %v3265 = vunpack.c.l.b16 %v3133
    %v3266 = vunpack.c.l.b16 %v3134
    %v3267 = vunpack.c.l.b16 %v3135
    %v3268 = vunpack.c.l.b16 %v3136
    %v3269 = vunpack.c.l.b16 %v3137
    %v3270 = vunpack.c.l.b16 %v3138
    %v3271 = vunpack.c.l.b16 %v3139
    %v3272 = vunpack.c.l.b16 %v3140
    %v3273 = vunpack.c.l.b16 %v3141
    %v3274 = vunpack.c.l.b16 %v3142
    %v3275 = vunpack.c.l.b16 %v3143
    %v3276 = vunpack.c.l.b16 %v3144
    %v3277 = vunpack.c.l.b16 %v3145
    %v3278 = vunpack.c.l.b16 %v3146
    %v3279 = vunpack.c.l.b16 %v3147
    %v3280 = vunpack.c.l.b16 %v3148
    %v3281 = vunpack.c.l.b16 %v3149
    %v3282 = vunpack.c.l.b16 %v3150
    %v3283 = vunpack.c.l.b16 %v3151
    %v3284 = vunpack.c.l.b16 %v3152
    %v3285 = vunpack.c.l.b16 %v3153
    %v3286 = vunpack.c.l.b16 %v3154
    %v3287 = vunpack.c.l.b16 %v3155
    %v3288 = vunpack.c.l.b16 %v3156
    %v3289 = vunpack.c.l.b16 %v3157
    %v3290 = vunpack.c.l.b16 %v3158
    %v3291 = vunpack.c.l.b16 %v3159
    %v3292 = vunpack.c.l.b16 %v3160
    %v3293 = vunpack.c.l.b16 %v3161
    %v3294 = vunpack.c.l.b16 %v3162
    %v3295 = vunpack.c.l.b16 %v3163
    %v3296 = vunpack.c.l.b16 %v3164
    %v3297 = vunpack.c.l.b16 %v3165
    %v3298 = vunpack.c.l.b16 %v3166
    %v3299 = vunpack.c.l.b16 %v3167
    %v3300 = vunpack.c.l.b16 %v3168
    %v3301 = vunpack.c.l.b16 %v3169
    %v3302 = vunpack.c.l.b16 %v3170
    %v3303 = vunpack.c.l.b16 %v3171
    %v3304 = vunpack.c.l.b16 %v3172
    %v3305 = vunpack.c.l.b16 %v3173
    %v3306 = vunpack.c.l.b16 %v3174
    %v3307 = vunpack.c.l.b16 %v3175
    %v3308 = vunpack.c.l.b16 %v3176
    %v3309 = vunpack.c.l.b16 %v3177
    %v3310 = vunpack.c.l.b16 %v3178
    %v3311 = vunpack.c.l.b16 %v3179
    %v3312 = vunpack.c.l.b16 %v3180
    %v3313 = vunpack.c.l.b16 %v3181
    %v3314 = vunpack.c.l.b16 %v3182
    %v3315 = vunpack.c.l.b16 %v3183
    %v3316 = vunpack.c.l.b16 %v3184
    %v3317 = vunpack.c.l.b16 %v3185
    %v3318 = vunpack.c.l.b16 %v3186
    %v3319 = vunpack.c.l.b16 %v3187
    %v3320 = vunpack.c.l.b16 %v3188
    %v3321 = vunpack.c.l.b16 %v3189
    %v3322 = vunpack.c.l.b16 %v3190
    %v3323 = vunpack.c.l.b16 %v3191
    %v3324 = vunpack.c.l.b16 %v3192
    %v3325 = vunpack.c.l.b16 %v3193
    %v3326 = vunpack.c.l.b16 %v3194
    %v3327 = vunpack.c.l.b16 %v3195
    %v3328 = vpack.c.b16 %v3265, %v3264
    %v3329 = vpack.c.b16 %v3267, %v3266
    %v3330 = vpack.c.b16 %v3269, %v3268
    %v3331 = vpack.c.b16 %v3271, %v3270
    %v3332 = vpack.c.b16 %v3273, %v3272
    %v3333 = vpack.c.b16 %v3275, %v3274
    %v3334 = vpack.c.b16 %v3277, %v3276
    %v3335 = vpack.c.b16 %v3279, %v3278
    %v3336 = vpack.c.b16 %v3281, %v3280
    %v3337 = vpack.c.b16 %v3283, %v3282
    %v3338 = vpack.c.b16 %v3285, %v3284
    %v3339 = vpack.c.b16 %v3287, %v3286
    %v3340 = vpack.c.b16 %v3289, %v3288
    %v3341 = vpack.c.b16 %v3291, %v3290
    %v3342 = vpack.c.b16 %v3293, %v3292
    %v3343 = vpack.c.b16 %v3295, %v3294
    %v3344 = vpack.c.b16 %v3297, %v3296
    %v3345 = vpack.c.b16 %v3299, %v3298
    %v3346 = vpack.c.b16 %v3301, %v3300
    %v3347 = vpack.c.b16 %v3303, %v3302
    %v3348 = vpack.c.b16 %v3305, %v3304
    %v3349 = vpack.c.b16 %v3307, %v3306
    %v3350 = vpack.c.b16 %v3309, %v3308
    %v3351 = vpack.c.b16 %v3311, %v3310
    %v3352 = vpack.c.b16 %v3313, %v3312
    %v3353 = vpack.c.b16 %v3315, %v3314
    %v3354 = vpack.c.b16 %v3317, %v3316
    %v3355 = vpack.c.b16 %v3319, %v3318
    %v3356 = vpack.c.b16 %v3321, %v3320
    %v3357 = vpack.c.b16 %v3323, %v3322
    %v3358 = vpack.c.b16 %v3325, %v3324
    %v3359 = vpack.c.b16 %v3327, %v3326
    %3392 = vmatpush.bf16.msra.mxu0 %v3335
    %3393 = vmatpush.bf16.msra.mxu0 %v3334
    %3394 = vmatpush.bf16.msra.mxu0 %v3333
    %3395 = vmatpush.bf16.msra.mxu0 %v3332
    %3396 = vmatpush.bf16.msra.mxu0 %v3331
    %3397 = vmatpush.bf16.msra.mxu0 %v3330
    %3398 = vmatpush.bf16.msra.mxu0 %v3329
    %3399 = vmatpush.bf16.msra.mxu0 %v3328
    %3400 = vmatmul.bf16.gmra.mxu0 %v3068
    %v3401 = vpop.f32.mrf.mxu0
    %v3402 = vadd.f32 %v3198, %v3401
    %v3403 = vpop.f32.mrf.mxu0
    %v3404 = vadd.f32 %v3198, %v3403
    %3405 = vmatmul.bf16.gmra.mxu0 %v3072
    %v3406 = vpop.f32.mrf.mxu0
    %v3407 = vadd.f32 %v3198, %v3406
    %v3408 = vpop.f32.mrf.mxu0
    %v3409 = vadd.f32 %v3198, %v3408
    %3410 = vmatmul.bf16.gmra.mxu0 %v3076
    %v3411 = vpop.f32.mrf.mxu0
    %v3412 = vadd.f32 %v3198, %v3411
    %v3413 = vpop.f32.mrf.mxu0
    %v3414 = vadd.f32 %v3198, %v3413
    %3415 = vmatmul.bf16.gmra.mxu0 %v3080
    %v3416 = vpop.f32.mrf.mxu0
    %v3417 = vadd.f32 %v3198, %v3416
    %v3418 = vpop.f32.mrf.mxu0
    %v3419 = vadd.f32 %v3198, %v3418
    %3420 = vmatmul.bf16.gmra.mxu0 %v3084
    %v3421 = vpop.f32.mrf.mxu0
    %v3422 = vadd.f32 %v3198, %v3421
    %v3423 = vpop.f32.mrf.mxu0
    %v3424 = vadd.f32 %v3198, %v3423
    %3425 = vmatmul.bf16.gmra.mxu0 %v3088
    %v3426 = vpop.f32.mrf.mxu0
    %v3427 = vadd.f32 %v3198, %v3426
    %v3428 = vpop.f32.mrf.mxu0
    %v3429 = vadd.f32 %v3198, %v3428
    %3430 = vmatmul.bf16.gmra.mxu0 %v3092
    %v3431 = vpop.f32.mrf.mxu0
    %v3432 = vadd.f32 %v3198, %v3431
    %v3433 = vpop.f32.mrf.mxu0
    %v3434 = vadd.f32 %v3198, %v3433
    %3435 = vmatmul.bf16.gmra.mxu0 %v3096
    %v3436 = vpop.f32.mrf.mxu0
    %v3437 = vadd.f32 %v3198, %v3436
    %v3438 = vpop.f32.mrf.mxu0
    %v3439 = vadd.f32 %v3198, %v3438
    %3440 = vmatmul.bf16.gmra.mxu0 %v3100
    %v3441 = vpop.f32.mrf.mxu0
    %v3442 = vadd.f32 %v3198, %v3441
    %v3443 = vpop.f32.mrf.mxu0
    %v3444 = vadd.f32 %v3198, %v3443
    %3445 = vmatmul.bf16.gmra.mxu0 %v3104
    %v3446 = vpop.f32.mrf.mxu0
    %v3447 = vadd.f32 %v3198, %v3446
    %v3448 = vpop.f32.mrf.mxu0
    %v3449 = vadd.f32 %v3198, %v3448
    %3450 = vmatmul.bf16.gmra.mxu0 %v3108
    %v3451 = vpop.f32.mrf.mxu0
    %v3452 = vadd.f32 %v3198, %v3451
    %v3453 = vpop.f32.mrf.mxu0
    %v3454 = vadd.f32 %v3198, %v3453
    %3455 = vmatmul.bf16.gmra.mxu0 %v3112
    %v3456 = vpop.f32.mrf.mxu0
    %v3457 = vadd.f32 %v3198, %v3456
    %v3458 = vpop.f32.mrf.mxu0
    %v3459 = vadd.f32 %v3198, %v3458
    %3460 = vmatmul.bf16.gmra.mxu0 %v3116
    %v3461 = vpop.f32.mrf.mxu0
    %v3462 = vadd.f32 %v3198, %v3461
    %v3463 = vpop.f32.mrf.mxu0
    %v3464 = vadd.f32 %v3198, %v3463
    %3465 = vmatmul.bf16.gmra.mxu0 %v3120
    %v3466 = vpop.f32.mrf.mxu0
    %v3467 = vadd.f32 %v3198, %v3466
    %v3468 = vpop.f32.mrf.mxu0
    %v3469 = vadd.f32 %v3198, %v3468
    %3470 = vmatmul.bf16.gmra.mxu0 %v3124
    %v3471 = vpop.f32.mrf.mxu0
    %v3472 = vadd.f32 %v3198, %v3471
    %v3473 = vpop.f32.mrf.mxu0
    %v3474 = vadd.f32 %v3198, %v3473
    %3475 = vmatmul.bf16.gmra.mxu0 %v3128
    %v3476 = vpop.f32.mrf.mxu0
    %v3477 = vadd.f32 %v3198, %v3476
    %v3478 = vpop.f32.mrf.mxu0
    %v3479 = vadd.f32 %v3198, %v3478
    %3480 = vdwg.mxu0
    %3481 = vmatpush.bf16.msra.mxu0 %v3343
    %3482 = vmatpush.bf16.msra.mxu0 %v3342
    %3483 = vmatpush.bf16.msra.mxu0 %v3341
    %3484 = vmatpush.bf16.msra.mxu0 %v3340
    %3485 = vmatpush.bf16.msra.mxu0 %v3339
    %3486 = vmatpush.bf16.msra.mxu0 %v3338
    %3487 = vmatpush.bf16.msra.mxu0 %v3337
    %3488 = vmatpush.bf16.msra.mxu0 %v3336
    %3489 = vmatmul.bf16.gmra.mxu0 %v3069
    %v3490 = vpop.f32.mrf.mxu0
    %v3491 = vadd.f32 %v3402, %v3490
    %v3492 = vpop.f32.mrf.mxu0
    %v3493 = vadd.f32 %v3404, %v3492
    %3494 = vmatmul.bf16.gmra.mxu0 %v3073
    %v3495 = vpop.f32.mrf.mxu0
    %v3496 = vadd.f32 %v3407, %v3495
    %v3497 = vpop.f32.mrf.mxu0
    %v3498 = vadd.f32 %v3409, %v3497
    %3499 = vmatmul.bf16.gmra.mxu0 %v3077
    %v3500 = vpop.f32.mrf.mxu0
    %v3501 = vadd.f32 %v3412, %v3500
    %v3502 = vpop.f32.mrf.mxu0
    %v3503 = vadd.f32 %v3414, %v3502
    %3504 = vmatmul.bf16.gmra.mxu0 %v3081
    %v3505 = vpop.f32.mrf.mxu0
    %v3506 = vadd.f32 %v3417, %v3505
    %v3507 = vpop.f32.mrf.mxu0
    %v3508 = vadd.f32 %v3419, %v3507
    %3509 = vmatmul.bf16.gmra.mxu0 %v3085
    %v3510 = vpop.f32.mrf.mxu0
    %v3511 = vadd.f32 %v3422, %v3510
    %v3512 = vpop.f32.mrf.mxu0
    %v3513 = vadd.f32 %v3424, %v3512
    %3514 = vmatmul.bf16.gmra.mxu0 %v3089
    %v3515 = vpop.f32.mrf.mxu0
    %v3516 = vadd.f32 %v3427, %v3515
    %v3517 = vpop.f32.mrf.mxu0
    %v3518 = vadd.f32 %v3429, %v3517
    %3519 = vmatmul.bf16.gmra.mxu0 %v3093
    %v3520 = vpop.f32.mrf.mxu0
    %v3521 = vadd.f32 %v3432, %v3520
    %v3522 = vpop.f32.mrf.mxu0
    %v3523 = vadd.f32 %v3434, %v3522
    %3524 = vmatmul.bf16.gmra.mxu0 %v3097
    %v3525 = vpop.f32.mrf.mxu0
    %v3526 = vadd.f32 %v3437, %v3525
    %v3527 = vpop.f32.mrf.mxu0
    %v3528 = vadd.f32 %v3439, %v3527
    %3529 = vmatmul.bf16.gmra.mxu0 %v3101
    %v3530 = vpop.f32.mrf.mxu0
    %v3531 = vadd.f32 %v3442, %v3530
    %v3532 = vpop.f32.mrf.mxu0
    %v3533 = vadd.f32 %v3444, %v3532
    %3534 = vmatmul.bf16.gmra.mxu0 %v3105
    %v3535 = vpop.f32.mrf.mxu0
    %v3536 = vadd.f32 %v3447, %v3535
    %v3537 = vpop.f32.mrf.mxu0
    %v3538 = vadd.f32 %v3449, %v3537
    %3539 = vmatmul.bf16.gmra.mxu0 %v3109
    %v3540 = vpop.f32.mrf.mxu0
    %v3541 = vadd.f32 %v3452, %v3540
    %v3542 = vpop.f32.mrf.mxu0
    %v3543 = vadd.f32 %v3454, %v3542
    %3544 = vmatmul.bf16.gmra.mxu0 %v3113
    %v3545 = vpop.f32.mrf.mxu0
    %v3546 = vadd.f32 %v3457, %v3545
    %v3547 = vpop.f32.mrf.mxu0
    %v3548 = vadd.f32 %v3459, %v3547
    %3549 = vmatmul.bf16.gmra.mxu0 %v3117
    %v3550 = vpop.f32.mrf.mxu0
    %v3551 = vadd.f32 %v3462, %v3550
    %v3552 = vpop.f32.mrf.mxu0
    %v3553 = vadd.f32 %v3464, %v3552
    %3554 = vmatmul.bf16.gmra.mxu0 %v3121
    %v3555 = vpop.f32.mrf.mxu0
    %v3556 = vadd.f32 %v3467, %v3555
    %v3557 = vpop.f32.mrf.mxu0
    %v3558 = vadd.f32 %v3469, %v3557
    %3559 = vmatmul.bf16.gmra.mxu0 %v3125
    %v3560 = vpop.f32.mrf.mxu0
    %v3561 = vadd.f32 %v3472, %v3560
    %v3562 = vpop.f32.mrf.mxu0
    %v3563 = vadd.f32 %v3474, %v3562
    %3564 = vmatmul.bf16.gmra.mxu0 %v3129
    %v3565 = vpop.f32.mrf.mxu0
    %v3566 = vadd.f32 %v3477, %v3565
    %v3567 = vpop.f32.mrf.mxu0
    %v3568 = vadd.f32 %v3479, %v3567
    %3569 = vdwg.mxu0
    %3570 = vmatpush.bf16.msra.mxu0 %v3351
    %3571 = vmatpush.bf16.msra.mxu0 %v3350
    %3572 = vmatpush.bf16.msra.mxu0 %v3349
    %3573 = vmatpush.bf16.msra.mxu0 %v3348
    %3574 = vmatpush.bf16.msra.mxu0 %v3347
    %3575 = vmatpush.bf16.msra.mxu0 %v3346
    %3576 = vmatpush.bf16.msra.mxu0 %v3345
    %3577 = vmatpush.bf16.msra.mxu0 %v3344
    %3578 = vmatmul.bf16.gmra.mxu0 %v3070
    %v3579 = vpop.f32.mrf.mxu0
    %v3580 = vadd.f32 %v3491, %v3579
    %v3581 = vpop.f32.mrf.mxu0
    %v3582 = vadd.f32 %v3493, %v3581
    %3583 = vmatmul.bf16.gmra.mxu0 %v3074
    %v3584 = vpop.f32.mrf.mxu0
    %v3585 = vadd.f32 %v3496, %v3584
    %v3586 = vpop.f32.mrf.mxu0
    %v3587 = vadd.f32 %v3498, %v3586
    %3588 = vmatmul.bf16.gmra.mxu0 %v3078
    %v3589 = vpop.f32.mrf.mxu0
    %v3590 = vadd.f32 %v3501, %v3589
    %v3591 = vpop.f32.mrf.mxu0
    %v3592 = vadd.f32 %v3503, %v3591
    %3593 = vmatmul.bf16.gmra.mxu0 %v3082
    %v3594 = vpop.f32.mrf.mxu0
    %v3595 = vadd.f32 %v3506, %v3594
    %v3596 = vpop.f32.mrf.mxu0
    %v3597 = vadd.f32 %v3508, %v3596
    %3598 = vmatmul.bf16.gmra.mxu0 %v3086
    %v3599 = vpop.f32.mrf.mxu0
    %v3600 = vadd.f32 %v3511, %v3599
    %v3601 = vpop.f32.mrf.mxu0
    %v3602 = vadd.f32 %v3513, %v3601
    %3603 = vmatmul.bf16.gmra.mxu0 %v3090
    %v3604 = vpop.f32.mrf.mxu0
    %v3605 = vadd.f32 %v3516, %v3604
    %v3606 = vpop.f32.mrf.mxu0
    %v3607 = vadd.f32 %v3518, %v3606
    %3608 = vmatmul.bf16.gmra.mxu0 %v3094
    %v3609 = vpop.f32.mrf.mxu0
    %v3610 = vadd.f32 %v3521, %v3609
    %v3611 = vpop.f32.mrf.mxu0
    %v3612 = vadd.f32 %v3523, %v3611
    %3613 = vmatmul.bf16.gmra.mxu0 %v3098
    %v3614 = vpop.f32.mrf.mxu0
    %v3615 = vadd.f32 %v3526, %v3614
    %v3616 = vpop.f32.mrf.mxu0
    %v3617 = vadd.f32 %v3528, %v3616
    %3618 = vmatmul.bf16.gmra.mxu0 %v3102
    %v3619 = vpop.f32.mrf.mxu0
    %v3620 = vadd.f32 %v3531, %v3619
    %v3621 = vpop.f32.mrf.mxu0
    %v3622 = vadd.f32 %v3533, %v3621
    %3623 = vmatmul.bf16.gmra.mxu0 %v3106
    %v3624 = vpop.f32.mrf.mxu0
    %v3625 = vadd.f32 %v3536, %v3624
    %v3626 = vpop.f32.mrf.mxu0
    %v3627 = vadd.f32 %v3538, %v3626
    %3628 = vmatmul.bf16.gmra.mxu0 %v3110
    %v3629 = vpop.f32.mrf.mxu0
    %v3630 = vadd.f32 %v3541, %v3629
    %v3631 = vpop.f32.mrf.mxu0
    %v3632 = vadd.f32 %v3543, %v3631
    %3633 = vmatmul.bf16.gmra.mxu0 %v3114
    %v3634 = vpop.f32.mrf.mxu0
    %v3635 = vadd.f32 %v3546, %v3634
    %v3636 = vpop.f32.mrf.mxu0
    %v3637 = vadd.f32 %v3548, %v3636
    %3638 = vmatmul.bf16.gmra.mxu0 %v3118
    %v3639 = vpop.f32.mrf.mxu0
    %v3640 = vadd.f32 %v3551, %v3639
    %v3641 = vpop.f32.mrf.mxu0
    %v3642 = vadd.f32 %v3553, %v3641
    %3643 = vmatmul.bf16.gmra.mxu0 %v3122
    %v3644 = vpop.f32.mrf.mxu0
    %v3645 = vadd.f32 %v3556, %v3644
    %v3646 = vpop.f32.mrf.mxu0
    %v3647 = vadd.f32 %v3558, %v3646
    %3648 = vmatmul.bf16.gmra.mxu0 %v3126
    %v3649 = vpop.f32.mrf.mxu0
    %v3650 = vadd.f32 %v3561, %v3649
    %v3651 = vpop.f32.mrf.mxu0
    %v3652 = vadd.f32 %v3563, %v3651
    %3653 = vmatmul.bf16.gmra.mxu0 %v3130
    %v3654 = vpop.f32.mrf.mxu0
    %v3655 = vadd.f32 %v3566, %v3654
    %v3656 = vpop.f32.mrf.mxu0
    %v3657 = vadd.f32 %v3568, %v3656
    %3658 = vdwg.mxu0
    %3659 = vmatpush.bf16.msra.mxu0 %v3359
    %3660 = vmatpush.bf16.msra.mxu0 %v3358
    %3661 = vmatpush.bf16.msra.mxu0 %v3357
    %3662 = vmatpush.bf16.msra.mxu0 %v3356
    %3663 = vmatpush.bf16.msra.mxu0 %v3355
    %3664 = vmatpush.bf16.msra.mxu0 %v3354
    %3665 = vmatpush.bf16.msra.mxu0 %v3353
    %3666 = vmatpush.bf16.msra.mxu0 %v3352
    %3667 = vmatmul.bf16.gmra.mxu0 %v3071
    %v3668 = vpop.f32.mrf.mxu0
    %v3669 = vadd.f32 %v3580, %v3668
    %v3670 = vpop.f32.mrf.mxu0
    %v3671 = vadd.f32 %v3582, %v3670
    %3672 = vmatmul.bf16.gmra.mxu0 %v3075
    %v3673 = vpop.f32.mrf.mxu0
    %v3674 = vadd.f32 %v3585, %v3673
    %v3675 = vpop.f32.mrf.mxu0
    %v3676 = vadd.f32 %v3587, %v3675
    %3677 = vmatmul.bf16.gmra.mxu0 %v3079
    %v3678 = vpop.f32.mrf.mxu0
    %v3679 = vadd.f32 %v3590, %v3678
    %v3680 = vpop.f32.mrf.mxu0
    %v3681 = vadd.f32 %v3592, %v3680
    %3682 = vmatmul.bf16.gmra.mxu0 %v3083
    %v3683 = vpop.f32.mrf.mxu0
    %v3684 = vadd.f32 %v3595, %v3683
    %v3685 = vpop.f32.mrf.mxu0
    %v3686 = vadd.f32 %v3597, %v3685
    %3687 = vmatmul.bf16.gmra.mxu0 %v3087
    %v3688 = vpop.f32.mrf.mxu0
    %v3689 = vadd.f32 %v3600, %v3688
    %v3690 = vpop.f32.mrf.mxu0
    %v3691 = vadd.f32 %v3602, %v3690
    %3692 = vmatmul.bf16.gmra.mxu0 %v3091
    %v3693 = vpop.f32.mrf.mxu0
    %v3694 = vadd.f32 %v3605, %v3693
    %v3695 = vpop.f32.mrf.mxu0
    %v3696 = vadd.f32 %v3607, %v3695
    %3697 = vmatmul.bf16.gmra.mxu0 %v3095
    %v3698 = vpop.f32.mrf.mxu0
    %v3699 = vadd.f32 %v3610, %v3698
    %v3700 = vpop.f32.mrf.mxu0
    %v3701 = vadd.f32 %v3612, %v3700
    %3702 = vmatmul.bf16.gmra.mxu0 %v3099
    %v3703 = vpop.f32.mrf.mxu0
    %v3704 = vadd.f32 %v3615, %v3703
    %v3705 = vpop.f32.mrf.mxu0
    %v3706 = vadd.f32 %v3617, %v3705
    %3707 = vmatmul.bf16.gmra.mxu0 %v3103
    %v3708 = vpop.f32.mrf.mxu0
    %v3709 = vadd.f32 %v3620, %v3708
    %v3710 = vpop.f32.mrf.mxu0
    %v3711 = vadd.f32 %v3622, %v3710
    %3712 = vmatmul.bf16.gmra.mxu0 %v3107
    %v3713 = vpop.f32.mrf.mxu0
    %v3714 = vadd.f32 %v3625, %v3713
    %v3715 = vpop.f32.mrf.mxu0
    %v3716 = vadd.f32 %v3627, %v3715
    %3717 = vmatmul.bf16.gmra.mxu0 %v3111
    %v3718 = vpop.f32.mrf.mxu0
    %v3719 = vadd.f32 %v3630, %v3718
    %v3720 = vpop.f32.mrf.mxu0
    %v3721 = vadd.f32 %v3632, %v3720
    %3722 = vmatmul.bf16.gmra.mxu0 %v3115
    %v3723 = vpop.f32.mrf.mxu0
    %v3724 = vadd.f32 %v3635, %v3723
    %v3725 = vpop.f32.mrf.mxu0
    %v3726 = vadd.f32 %v3637, %v3725
    %3727 = vmatmul.bf16.gmra.mxu0 %v3119
    %v3728 = vpop.f32.mrf.mxu0
    %v3729 = vadd.f32 %v3640, %v3728
    %v3730 = vpop.f32.mrf.mxu0
    %v3731 = vadd.f32 %v3642, %v3730
    %3732 = vmatmul.bf16.gmra.mxu0 %v3123
    %v3733 = vpop.f32.mrf.mxu0
    %v3734 = vadd.f32 %v3645, %v3733
    %v3735 = vpop.f32.mrf.mxu0
    %v3736 = vadd.f32 %v3647, %v3735
    %3737 = vmatmul.bf16.gmra.mxu0 %v3127
    %v3738 = vpop.f32.mrf.mxu0
    %v3739 = vadd.f32 %v3650, %v3738
    %v3740 = vpop.f32.mrf.mxu0
    %v3741 = vadd.f32 %v3652, %v3740
    %3742 = vmatmul.bf16.gmra.mxu0 %v3131
    %v3743 = vpop.f32.mrf.mxu0
    %v3744 = vadd.f32 %v3655, %v3743
    %v3745 = vpop.f32.mrf.mxu0
    %v3746 = vadd.f32 %v3657, %v3745
    %3747 = vdwg.mxu0
    %v3748 = vpack.c.bf16 %v3669, %v3669
    %v3749 = vpack.c.bf16 %v3671, %v3671
    %v3750 = vpack.c.bf16 %v3674, %v3674
    %v3751 = vpack.c.bf16 %v3676, %v3676
    %v3752 = vpack.c.bf16 %v3679, %v3679
    %v3753 = vpack.c.bf16 %v3681, %v3681
    %v3754 = vpack.c.bf16 %v3684, %v3684
    %v3755 = vpack.c.bf16 %v3686, %v3686
    %v3756 = vpack.c.bf16 %v3689, %v3689
    %v3757 = vpack.c.bf16 %v3691, %v3691
    %v3758 = vpack.c.bf16 %v3694, %v3694
    %v3759 = vpack.c.bf16 %v3696, %v3696
    %v3760 = vpack.c.bf16 %v3699, %v3699
    %v3761 = vpack.c.bf16 %v3701, %v3701
    %v3762 = vpack.c.bf16 %v3704, %v3704
    %v3763 = vpack.c.bf16 %v3706, %v3706
    %v3764 = vpack.c.bf16 %v3709, %v3709
    %v3765 = vpack.c.bf16 %v3711, %v3711
    %v3766 = vpack.c.bf16 %v3714, %v3714
    %v3767 = vpack.c.bf16 %v3716, %v3716
    %v3768 = vpack.c.bf16 %v3719, %v3719
    %v3769 = vpack.c.bf16 %v3721, %v3721
    %v3770 = vpack.c.bf16 %v3724, %v3724
    %v3771 = vpack.c.bf16 %v3726, %v3726
    %v3772 = vpack.c.bf16 %v3729, %v3729
    %v3773 = vpack.c.bf16 %v3731, %v3731
    %v3774 = vpack.c.bf16 %v3734, %v3734
    %v3775 = vpack.c.bf16 %v3736, %v3736
    %v3776 = vpack.c.bf16 %v3739, %v3739
    %v3777 = vpack.c.bf16 %v3741, %v3741
    %v3778 = vpack.c.bf16 %v3744, %v3744
    %v3779 = vpack.c.bf16 %v3746, %v3746
    %3780 = vst [vmem:[#allocation7] sm:$0xf] %v3748
    %3781 = vst [vmem:[#allocation7 + $0x4] sm:$0xf] %v3749
    %3782 = vst [vmem:[#allocation7 + $0x8] sm:$0xf] %v3750
    %3783 = vst [vmem:[#allocation7 + $0xc] sm:$0xf] %v3751
    %3784 = vst [vmem:[#allocation7 + $0x10] sm:$0xf] %v3752
    %3785 = vst [vmem:[#allocation7 + $0x14] sm:$0xf] %v3753
    %3786 = vst [vmem:[#allocation7 + $0x18] sm:$0xf] %v3754
    %3787 = vst [vmem:[#allocation7 + $0x1c] sm:$0xf] %v3755
    %3788 = vst [vmem:[#allocation7 + $0x20] sm:$0xf] %v3756
    %3789 = vst [vmem:[#allocation7 + $0x24] sm:$0xf] %v3757
    %3790 = vst [vmem:[#allocation7 + $0x28] sm:$0xf] %v3758
    %3791 = vst [vmem:[#allocation7 + $0x2c] sm:$0xf] %v3759
    %3792 = vst [vmem:[#allocation7 + $0x30] sm:$0xf] %v3760
    %3793 = vst [vmem:[#allocation7 + $0x34] sm:$0xf] %v3761
    %3794 = vst [vmem:[#allocation7 + $0x38] sm:$0xf] %v3762
    %3795 = vst [vmem:[#allocation7 + $0x3c] sm:$0xf] %v3763
    %3796 = vst [vmem:[#allocation7 + $0x40] sm:$0xf] %v3764
    %3797 = vst [vmem:[#allocation7 + $0x44] sm:$0xf] %v3765
    %3798 = vst [vmem:[#allocation7 + $0x48] sm:$0xf] %v3766
    %3799 = vst [vmem:[#allocation7 + $0x4c] sm:$0xf] %v3767
    %3800 = vst [vmem:[#allocation7 + $0x50] sm:$0xf] %v3768
    %3801 = vst [vmem:[#allocation7 + $0x54] sm:$0xf] %v3769
    %3802 = vst [vmem:[#allocation7 + $0x58] sm:$0xf] %v3770
    %3803 = vst [vmem:[#allocation7 + $0x5c] sm:$0xf] %v3771
    %3804 = vst [vmem:[#allocation7 + $0x60] sm:$0xf] %v3772
    %3805 = vst [vmem:[#allocation7 + $0x64] sm:$0xf] %v3773
    %3806 = vst [vmem:[#allocation7 + $0x68] sm:$0xf] %v3774
    %3807 = vst [vmem:[#allocation7 + $0x6c] sm:$0xf] %v3775
    %3808 = vst [vmem:[#allocation7 + $0x70] sm:$0xf] %v3776
    %3809 = vst [vmem:[#allocation7 + $0x74] sm:$0xf] %v3777
    %3810 = vst [vmem:[#allocation7 + $0x78] sm:$0xf] %v3778
    %3811 = vst [vmem:[#allocation7 + $0x7c] sm:$0xf] %v3779
    // Predicated region
    $region38: #{tpu_custom_call.1} parent=1 // pred_check
      _
    $region39: #{tpu_custom_call.1} parent=1 // pred_check_branch
      %3813 = sbr.rel (0) target = $region41
    $region40: #{tpu_custom_call.1} parent=1 // pred_region
      %3815 = vsyncadd [#allocation4], 0
      %s3816 = sshll.u32 [#allocation7], 4
      %s3817 = int_to_ptr.vmem [resolvable:$true] %s3816
      %s3818 = sshll.u32 %s7, 4
      %s3819 = int_to_ptr.hbm [resolvable:$true] %s3818
      %3824 = dma.vmem_to_hbm [thread:$0]  %s3817, 2048, %s3819, [#allocation4], 64, 64, 4
    $region41: #{tpu_custom_call.1} parent=1 // pred_fallthru
      _
    // Predicated region
    $region42: #{tpu_custom_call.1} parent=1 // pred_check
      _
    $region43: #{tpu_custom_call.1} parent=1 // pred_check_branch
      %3826 = sbr.rel (0) target = $region45
    $region44: #{tpu_custom_call.1} parent=1 // pred_region
      %3828 = dma.done [#allocation4], 2048
    $region45: #{tpu_custom_call.1} parent=1 // pred_fallthru
      _
    %3829 = vsyncpa [#allocation3], 1
    %3830 = vsyncpa [#allocation6], 1
    %3831 = vsyncpa [#allocation4], 1

</llo_original>
